<compile_context>
chip_gen: v7x
topology: tpu7x:2x2x1
jax: 0.10.0
libtpu: 0.0.40
codegen_flags: <defaults>
</compile_context>

<pallas_src>
import functools

import jax
import jax.numpy as jnp
from jax.experimental import pallas as pl
from jax.experimental.pallas import tpu as pltpu


def _round_up(v, m):
    return ((v + m - 1) // m) * m


# ----------------------------------------------------------------------------
# Shared fused epilogue: [InstanceNorm(masked, one-pass)] + [activation]
# ----------------------------------------------------------------------------
def _epilogue(acc, mask_ref, n_valid, use_in, act):
    if use_in:  # InstanceNorm2d(affine=False), biased variance, eps=1e-5
        m = mask_ref[...]                                   # (1, Mp) f32 in {0,1}
        z = acc * m
        s1 = jnp.sum(z, axis=-1, keepdims=True)
        s2 = jnp.sum(z * z, axis=-1, keepdims=True)
        inv_n = 1.0 / n_valid
        mean = s1 * inv_n
        var = jnp.maximum(s2 * inv_n - mean * mean, 0.0)
        acc = (acc - mean) * jax.lax.rsqrt(var + 1e-5)
    if act == "relu":
        acc = jnp.maximum(acc, 0.0)
    elif act == "leaky":                                    # LeakyReLU(0.01)
        acc = jnp.where(acc > 0, acc, 0.01 * acc)
    return acc


# ----------------------------------------------------------------------------
# Kernel A (stride-1 convs): in-kernel tap building via flat lane shifts.
#   xp_ref: (Cin, L) bf16   (reflection-padded, flattened, lane-padded)
#   w_ref : (k*k, Cout, Cin) bf16      b_ref: (Cout, 1) f32
#   out   : (Cout, Mp) bf16, Mp multiple of 128
# ----------------------------------------------------------------------------
def _tap_conv_kernel(*refs, offsets, n_valid, use_in, act, add_residual):
    xp_ref, w_ref, b_ref = refs[0], refs[1], refs[2]
    nxt = 3
    mask_ref = None
    r_ref = None
    if use_in:
        mask_ref = refs[nxt]; nxt += 1
    if add_residual:
        r_ref = refs[nxt]; nxt += 1
    o_ref = refs[nxt]

    cout, mp = o_ref.shape
    xp = xp_ref[...]                                        # (Cin, L) bf16, load once
    acc = jnp.zeros((cout, mp), jnp.float32)
    for t, off in enumerate(offsets):                       # static unroll, k*k taps
        a_tap = xp[:, off:off + mp]                         # static flat shift
        acc = acc + jnp.dot(w_ref[t], a_tap, preferred_element_type=jnp.float32)
    acc = acc + b_ref[...]                                  # (Cout,1) broadcast
    acc = _epilogue(acc, mask_ref, n_valid, use_in, act)
    if add_residual:
        acc = acc + r_ref[...].astype(jnp.float32)
    o_ref[...] = acc.astype(o_ref.dtype)


# ----------------------------------------------------------------------------
# Kernel B (stride-2 convs): single long-K matmul over a pre-gathered tap matrix.
#   a_ref: (Kp, Mp) bf16   w_ref: (Cout, Kp) bf16   b_ref: (Cout,1) f32
# ----------------------------------------------------------------------------
def _matmul_conv_kernel(*refs, n_valid, use_in, act):
    a_ref, w_ref, b_ref = refs[0], refs[1], refs[2]
    nxt = 3
    mask_ref = None
    if use_in:
        mask_ref = refs[nxt]; nxt += 1
    o_ref = refs[nxt]

    acc = jnp.dot(w_ref[...], a_ref[...], preferred_element_type=jnp.float32)
    acc = acc + b_ref[...]
    acc = _epilogue(acc, mask_ref, n_valid, use_in, act)
    o_ref[...] = acc.astype(o_ref.dtype)


_COMPILER_PARAMS = pltpu.CompilerParams(
    dimension_semantics=("parallel",),
    vmem_limit_bytes=32 * 1024 * 1024,
)


# ----------------------------------------------------------------------------
# Stride-1 block: ReflectionPad(p) + Conv(k, s=1) [+ IN] [+ act] [+ residual]
# Only the padded activation (no im2col) goes to HBM; taps are built in-kernel.
# ----------------------------------------------------------------------------
def conv_s1_block(x, params, *, k, pad, use_in, act, residual=None):
    w_t, b = params                               # w_t: (k*k, Cout, Cin) bf16
    N, C, H, W = x.shape
    Cout = w_t.shape[1]
    Hp, Wp = H + 2 * pad, W + 2 * pad
    Lp = Hp * Wp
    Mo = (H - 1) * Wp + W                         # flat span covering all valid outputs
    Mp = _round_up(Mo, 128)                       # lane-dense output width
    L = _round_up(Lp + (Mp - Mo), 128)            # padded flat input length

    xp = jnp.pad(x, ((0, 0), (0, 0), (pad, pad), (pad, pad)), mode="reflect")
    xp = xp.reshape(N, C, Lp).astype(jnp.bfloat16)
    xp = jnp.pad(xp, ((0, 0), (0, 0), (0, L - Lp)))

    offsets = tuple(dy * Wp + dx for dy in range(k) for dx in range(k))

    args = [xp, w_t, b]
    in_specs = [
        pl.BlockSpec((None, C, L), lambda n: (n, 0, 0)),
        pl.BlockSpec((k * k, Cout, C), lambda n: (0, 0, 0)),
        pl.BlockSpec((Cout, 1), lambda n: (0, 0)),
    ]
    if use_in:
        cols = jnp.arange(Mp)
        mask = (((cols % Wp) < W) & (cols < Mo)).astype(jnp.float32).reshape(1, Mp)
        args.append(mask)
        in_specs.append(pl.BlockSpec((1, Mp), lambda n: (0, 0)))
    if residual is not None:
        r = jnp.pad(residual.astype(jnp.bfloat16),
                    ((0, 0), (0, 0), (0, 0), (0, Wp - W)))
        r = r.reshape(N, Cout, H * Wp)
        if H * Wp >= Mp:
            r = r[:, :, :Mp]
        else:
            r = jnp.pad(r, ((0, 0), (0, 0), (0, Mp - H * Wp)))
        args.append(r)
        in_specs.append(pl.BlockSpec((None, Cout, Mp), lambda n: (n, 0, 0)))

    kernel = functools.partial(
        _tap_conv_kernel, offsets=offsets, n_valid=float(H * W),
        use_in=use_in, act=act, add_residual=residual is not None)

    out = pl.pallas_call(
        kernel,
        out_shape=jax.ShapeDtypeStruct((N, Cout, Mp), jnp.bfloat16),
        grid=(N,),
        in_specs=in_specs,
        out_specs=pl.BlockSpec((None, Cout, Mp), lambda n: (n, 0, 0)),
        compiler_params=_COMPILER_PARAMS,
    )(*args)

    # Un-flatten: keep the first H*Wp flat columns, drop the junk columns x >= W.
    HWp = H * Wp
    if HWp <= Mp:
        o = out[:, :, :HWp]
    else:
        o = jnp.pad(out, ((0, 0), (0, 0), (0, HWp - Mp)))
    return o.reshape(N, Cout, H, Wp)[:, :, :, :W]


# ----------------------------------------------------------------------------
# Stride-2 block: ReflectionPad(1) + Conv(3, s=2) + IN + ReLU
# Small XLA tap gather (2.25x of the downsampled input), fused matmul kernel.
# ----------------------------------------------------------------------------
def conv_s2_block(x, params, *, k, pad, use_in, act):
    w, b = params                                 # w: (Cout, Kp) bf16
    N, C, H, W = x.shape
    Cout, Kp = w.shape
    xp = jnp.pad(x, ((0, 0), (0, 0), (pad, pad), (pad, pad)), mode="reflect")
    Hp, Wp = H + 2 * pad, W + 2 * pad
    Ho = (Hp - k) // 2 + 1
    Wo = (Wp - k) // 2 + 1
    taps = [xp[:, :, dy:dy + (Ho - 1) * 2 + 1:2, dx:dx + (Wo - 1) * 2 + 1:2]
            for dy in range(k) for dx in range(k)]
    a = jnp.stack(taps, axis=1).reshape(N, k * k * C, Ho * Wo).astype(jnp.bfloat16)
    K = k * k * C
    M = Ho * Wo
    Mp = _round_up(M, 128)
    a = jnp.pad(a, ((0, 0), (0, Kp - K), (0, Mp - M)))

    args = [a, w, b]
    in_specs = [
        pl.BlockSpec((None, Kp, Mp), lambda n: (n, 0, 0)),
        pl.BlockSpec((Cout, Kp), lambda n: (0, 0)),
        pl.BlockSpec((Cout, 1), lambda n: (0, 0)),
    ]
    if use_in:
        mask = (jnp.arange(Mp) < M).astype(jnp.float32).reshape(1, Mp)
        args.append(mask)
        in_specs.append(pl.BlockSpec((1, Mp), lambda n: (0, 0)))

    kernel = functools.partial(_matmul_conv_kernel, n_valid=float(M),
                               use_in=use_in, act=act)
    out = pl.pallas_call(
        kernel,
        out_shape=jax.ShapeDtypeStruct((N, Cout, Mp), jnp.bfloat16),
        grid=(N,),
        in_specs=in_specs,
        out_specs=pl.BlockSpec((None, Cout, Mp), lambda n: (n, 0, 0)),
        compiler_params=_COMPILER_PARAMS,
    )(*args)
    return out[:, :, :M].reshape(N, Cout, Ho, Wo)


# ----------------------------------------------------------------------------
# Module structure: LeakyReLUConv2d / ReLUINSConv2d / INSResBlock / share
# ----------------------------------------------------------------------------
def _res_block(x, p):
    # TODO(synk): fuse both convs of the res-block into one pallas_call with the
    #             intermediate held in a VMEM scratch.
    h = conv_s1_block(x, p[0], k=3, pad=1, use_in=True, act="relu")
    return conv_s1_block(h, p[1], k=3, pad=1, use_in=True, act="none", residual=x)


def _branch(x, p):
    x = x.astype(jnp.bfloat16)
    # LeakyReLUConv2d(n_ch, nf, k=7, s=1, pad=3): reflect pad + conv + LeakyReLU (no norm)
    x = conv_s1_block(x, p["c0"], k=7, pad=3, use_in=False, act="leaky")
    # ReLUINSConv2d(nf, 2nf, k=3, s=2, pad=1) and (2nf, 4nf, k=3, s=2, pad=1)
    x = conv_s2_block(x, p["c1"], k=3, pad=1, use_in=True, act="relu")
    x = conv_s2_block(x, p["c2"], k=3, pad=1, use_in=True, act="relu")
    # 2x INSResBlock(4nf, 4nf)
    x = _res_block(x, p["r1"])
    x = _res_block(x, p["r2"])
    return x


def _share(x, p):
    x = _res_block(x, p["r"])
    # TODO(synk): GaussianNoiseLayer (training mode only) -> identity at inference.
    return x


def encoder_content_reduce_forward(x_LR, x_HR, params):
    out_HR = _branch(x_HR, params["HR"])
    out_LR = _branch(x_LR, params["LR"])
    out_LR = _share(out_LR, params["share"])
    out_HR = _share(out_HR, params["share"])
    return out_LR.astype(jnp.float32), out_HR.astype(jnp.float32)


# ----------------------------------------------------------------------------
# Deterministic parameter initialisation (gaussian_weights_init: N(0, 0.02))
# ----------------------------------------------------------------------------
def _init_conv_taps(key, cin, cout, k):
    kw, kb = jax.random.split(key)
    w = 0.02 * jax.random.normal(kw, (cout, cin, k, k), jnp.float32)
    b = 0.02 * jax.random.normal(kb, (cout,), jnp.float32)
    # (Cout, Cin, kh, kw) -> (kh*kw, Cout, Cin): one (Cout, Cin) matrix per tap.
    w_t = jnp.transpose(w, (2, 3, 0, 1)).reshape(k * k, cout, cin).astype(jnp.bfloat16)
    return (w_t, b.reshape(cout, 1))


def _init_conv_mat(key, cin, cout, k):
    kw, kb = jax.random.split(key)
    w = 0.02 * jax.random.normal(kw, (cout, cin, k, k), jnp.float32)
    b = 0.02 * jax.random.normal(kb, (cout,), jnp.float32)
    K = k * k * cin
    Kp = _round_up(K, 16)                         # bf16 sublane packing
    # (Cout, Cin, kh, kw) -> (Cout, kh, kw, Cin) -> (Cout, K): rows ordered (tap, cin)
    w_m = jnp.transpose(w, (0, 2, 3, 1)).reshape(cout, K)
    w_m = jnp.pad(w_m, ((0, 0), (0, Kp - K))).astype(jnp.bfloat16)
    return (w_m, b.reshape(cout, 1))


def _init_branch(key, n_channels, nf):
    ks = jax.random.split(key, 7)
    return {
        "c0": _init_conv_taps(ks[0], n_channels, nf, 7),
        "c1": _init_conv_mat(ks[1], nf, nf * 2, 3),
        "c2": _init_conv_mat(ks[2], nf * 2, nf * 4, 3),
        "r1": (_init_conv_taps(ks[3], nf * 4, nf * 4, 3),
               _init_conv_taps(ks[4], nf * 4, nf * 4, 3)),
        "r2": (_init_conv_taps(ks[5], nf * 4, nf * 4, 3),
               _init_conv_taps(ks[6], nf * 4, nf * 4, 3)),
    }


def init_encoder_params(key, n_channels, n_features):
    k_lr, k_hr, k_s = jax.random.split(key, 3)
    ksh = jax.random.split(k_s, 2)
    return {
        "LR": _init_branch(k_lr, n_channels, n_features),
        "HR": _init_branch(k_hr, n_channels, n_features),
        "share": {"r": (_init_conv_taps(ksh[0], n_features * 4, n_features * 4, 3),
                        _init_conv_taps(ksh[1], n_features * 4, n_features * 4, 3))},
    }


if __name__ == "__main__":
    # Small, module-consistent shapes: batch=2, n_channels=4, spatial=16, n_features=8.
    # Output channels = 4*n_features = 32, output spatial = 16/4 = 4.
    n_channels, n_features = 4, 8
    key = jax.random.PRNGKey(0)
    k_lr, k_hr, k_p = jax.random.split(key, 3)
    x_LR = jax.random.normal(k_lr, (2, n_channels, 16, 16), jnp.float32)   # NCHW
    x_HR = jax.random.normal(k_hr, (2, n_channels, 16, 16), jnp.float32)   # NCHW
    params = init_encoder_params(k_p, n_channels, n_features)

    fwd = jax.jit(encoder_content_reduce_forward)
    out_LR, out_HR = fwd(x_LR, x_HR, params)
    out_LR, out_HR = jax.block_until_ready((out_LR, out_HR))

    assert out_LR.shape == (2, n_features * 4, 4, 4), out_LR.shape
    assert out_HR.shape == (2, n_features * 4, 4, 4), out_HR.shape
    assert bool(jnp.all(jnp.isfinite(out_LR)))
    assert bool(jnp.all(jnp.isfinite(out_HR)))
    print("KERNEL_OK")
</pallas_src>

<mosaic_0001>
module attributes {stable_mosaic.version = 11 : i64} {
  func.func @_tap_conv_kernel(%arg0: i32, %arg1: memref<1x4x640xbf16, #tpu.memory_space<vmem>>, %arg2: memref<49x8x4xbf16, #tpu.memory_space<vmem>>, %arg3: memref<8x1xf32, #tpu.memory_space<vmem>>, %arg4: memref<1x8x384xbf16, #tpu.memory_space<vmem>>) attributes {dimension_semantics = [#tpu.dimension_semantics<parallel>], iteration_bounds = array<i64: 2>, scalar_prefetch = 0 : i64, scratch_operands = 0 : i64, tpu.core_type = #tpu.core_type<tc>, window_params = [{transform_indices = @transform_0, window_bounds = array<i64: 1, 4, 640>}, {pipeline_mode = #tpu.pipeline_mode<synchronous>, transform_indices = @transform_1, window_bounds = array<i64: 49, 8, 4>}, {pipeline_mode = #tpu.pipeline_mode<synchronous>, transform_indices = @transform_2, window_bounds = array<i64: 8, 1>}, {transform_indices = @transform_3, window_bounds = array<i64: 1, 8, 384>}]} {
    %c0 = arith.constant 0 : index
    %c0_0 = arith.constant 0 : index
    %c0_1 = arith.constant 0 : index
    %0 = vector.load %arg1[%c0, %c0_0, %c0_1] : memref<1x4x640xbf16, #tpu.memory_space<vmem>>, vector<1x4x640xbf16>
    %1 = vector.shape_cast %0 : vector<1x4x640xbf16> to vector<4x640xbf16>
    %cst = arith.constant 0.000000e+00 : f32
    %2 = vector.broadcast %cst : f32 to vector<8x384xf32>
    %3 = vector.extract_strided_slice %1 {offsets = [0, 0], sizes = [4, 384], strides = [1, 1]} : vector<4x640xbf16> to vector<4x384xbf16>
    %c0_2 = arith.constant 0 : index
    %c0_3 = arith.constant 0 : index
    %c0_4 = arith.constant 0 : index
    %4 = vector.load %arg2[%c0_2, %c0_3, %c0_4] : memref<49x8x4xbf16, #tpu.memory_space<vmem>>, vector<1x8x4xbf16>
    %5 = vector.shape_cast %4 : vector<1x8x4xbf16> to vector<8x4xbf16>
    %cst_5 = arith.constant dense<0.000000e+00> : vector<8x384xf32>
    %6 = tpu.matmul %5, %3, %cst_5 {dimension_numbers = #tpu.dot_dimension_numbers<[1], [0], [0], [1], [0, 0, 1, 1], [], []>} : vector<8x4xbf16>, vector<4x384xbf16>, vector<8x384xf32> -> vector<8x384xf32>
    %7 = arith.addf %2, %6 : vector<8x384xf32>
    %8 = vector.extract_strided_slice %1 {offsets = [0, 1], sizes = [4, 384], strides = [1, 1]} : vector<4x640xbf16> to vector<4x384xbf16>
    %c1 = arith.constant 1 : index
    %c0_6 = arith.constant 0 : index
    %c0_7 = arith.constant 0 : index
    %9 = vector.load %arg2[%c1, %c0_6, %c0_7] : memref<49x8x4xbf16, #tpu.memory_space<vmem>>, vector<1x8x4xbf16>
    %10 = vector.shape_cast %9 : vector<1x8x4xbf16> to vector<8x4xbf16>
    %cst_8 = arith.constant dense<0.000000e+00> : vector<8x384xf32>
    %11 = tpu.matmul %10, %8, %cst_8 {dimension_numbers = #tpu.dot_dimension_numbers<[1], [0], [0], [1], [0, 0, 1, 1], [], []>} : vector<8x4xbf16>, vector<4x384xbf16>, vector<8x384xf32> -> vector<8x384xf32>
    %12 = arith.addf %7, %11 : vector<8x384xf32>
    %13 = vector.extract_strided_slice %1 {offsets = [0, 2], sizes = [4, 384], strides = [1, 1]} : vector<4x640xbf16> to vector<4x384xbf16>
    %c2 = arith.constant 2 : index
    %c0_9 = arith.constant 0 : index
    %c0_10 = arith.constant 0 : index
    %14 = vector.load %arg2[%c2, %c0_9, %c0_10] : memref<49x8x4xbf16, #tpu.memory_space<vmem>>, vector<1x8x4xbf16>
    %15 = vector.shape_cast %14 : vector<1x8x4xbf16> to vector<8x4xbf16>
    %cst_11 = arith.constant dense<0.000000e+00> : vector<8x384xf32>
    %16 = tpu.matmul %15, %13, %cst_11 {dimension_numbers = #tpu.dot_dimension_numbers<[1], [0], [0], [1], [0, 0, 1, 1], [], []>} : vector<8x4xbf16>, vector<4x384xbf16>, vector<8x384xf32> -> vector<8x384xf32>
    %17 = arith.addf %12, %16 : vector<8x384xf32>
    %18 = vector.extract_strided_slice %1 {offsets = [0, 3], sizes = [4, 384], strides = [1, 1]} : vector<4x640xbf16> to vector<4x384xbf16>
    %c3 = arith.constant 3 : index
    %c0_12 = arith.constant 0 : index
    %c0_13 = arith.constant 0 : index
    %19 = vector.load %arg2[%c3, %c0_12, %c0_13] : memref<49x8x4xbf16, #tpu.memory_space<vmem>>, vector<1x8x4xbf16>
    %20 = vector.shape_cast %19 : vector<1x8x4xbf16> to vector<8x4xbf16>
    %cst_14 = arith.constant dense<0.000000e+00> : vector<8x384xf32>
    %21 = tpu.matmul %20, %18, %cst_14 {dimension_numbers = #tpu.dot_dimension_numbers<[1], [0], [0], [1], [0, 0, 1, 1], [], []>} : vector<8x4xbf16>, vector<4x384xbf16>, vector<8x384xf32> -> vector<8x384xf32>
    %22 = arith.addf %17, %21 : vector<8x384xf32>
    %23 = vector.extract_strided_slice %1 {offsets = [0, 4], sizes = [4, 384], strides = [1, 1]} : vector<4x640xbf16> to vector<4x384xbf16>
    %c4 = arith.constant 4 : index
    %c0_15 = arith.constant 0 : index
    %c0_16 = arith.constant 0 : index
    %24 = vector.load %arg2[%c4, %c0_15, %c0_16] : memref<49x8x4xbf16, #tpu.memory_space<vmem>>, vector<1x8x4xbf16>
    %25 = vector.shape_cast %24 : vector<1x8x4xbf16> to vector<8x4xbf16>
    %cst_17 = arith.constant dense<0.000000e+00> : vector<8x384xf32>
    %26 = tpu.matmul %25, %23, %cst_17 {dimension_numbers = #tpu.dot_dimension_numbers<[1], [0], [0], [1], [0, 0, 1, 1], [], []>} : vector<8x4xbf16>, vector<4x384xbf16>, vector<8x384xf32> -> vector<8x384xf32>
    %27 = arith.addf %22, %26 : vector<8x384xf32>
    %28 = vector.extract_strided_slice %1 {offsets = [0, 5], sizes = [4, 384], strides = [1, 1]} : vector<4x640xbf16> to vector<4x384xbf16>
    %c5 = arith.constant 5 : index
    %c0_18 = arith.constant 0 : index
    %c0_19 = arith.constant 0 : index
    %29 = vector.load %arg2[%c5, %c0_18, %c0_19] : memref<49x8x4xbf16, #tpu.memory_space<vmem>>, vector<1x8x4xbf16>
    %30 = vector.shape_cast %29 : vector<1x8x4xbf16> to vector<8x4xbf16>
    %cst_20 = arith.constant dense<0.000000e+00> : vector<8x384xf32>
    %31 = tpu.matmul %30, %28, %cst_20 {dimension_numbers = #tpu.dot_dimension_numbers<[1], [0], [0], [1], [0, 0, 1, 1], [], []>} : vector<8x4xbf16>, vector<4x384xbf16>, vector<8x384xf32> -> vector<8x384xf32>
    %32 = arith.addf %27, %31 : vector<8x384xf32>
    %33 = vector.extract_strided_slice %1 {offsets = [0, 6], sizes = [4, 384], strides = [1, 1]} : vector<4x640xbf16> to vector<4x384xbf16>
    %c6 = arith.constant 6 : index
    %c0_21 = arith.constant 0 : index
    %c0_22 = arith.constant 0 : index
    %34 = vector.load %arg2[%c6, %c0_21, %c0_22] : memref<49x8x4xbf16, #tpu.memory_space<vmem>>, vector<1x8x4xbf16>
    %35 = vector.shape_cast %34 : vector<1x8x4xbf16> to vector<8x4xbf16>
    %cst_23 = arith.constant dense<0.000000e+00> : vector<8x384xf32>
    %36 = tpu.matmul %35, %33, %cst_23 {dimension_numbers = #tpu.dot_dimension_numbers<[1], [0], [0], [1], [0, 0, 1, 1], [], []>} : vector<8x4xbf16>, vector<4x384xbf16>, vector<8x384xf32> -> vector<8x384xf32>
    %37 = arith.addf %32, %36 : vector<8x384xf32>
    %38 = vector.extract_strided_slice %1 {offsets = [0, 22], sizes = [4, 384], strides = [1, 1]} : vector<4x640xbf16> to vector<4x384xbf16>
    %c7 = arith.constant 7 : index
    %c0_24 = arith.constant 0 : index
    %c0_25 = arith.constant 0 : index
    %39 = vector.load %arg2[%c7, %c0_24, %c0_25] : memref<49x8x4xbf16, #tpu.memory_space<vmem>>, vector<1x8x4xbf16>
    %40 = vector.shape_cast %39 : vector<1x8x4xbf16> to vector<8x4xbf16>
    %cst_26 = arith.constant dense<0.000000e+00> : vector<8x384xf32>
    %41 = tpu.matmul %40, %38, %cst_26 {dimension_numbers = #tpu.dot_dimension_numbers<[1], [0], [0], [1], [0, 0, 1, 1], [], []>} : vector<8x4xbf16>, vector<4x384xbf16>, vector<8x384xf32> -> vector<8x384xf32>
    %42 = arith.addf %37, %41 : vector<8x384xf32>
    %43 = vector.extract_strided_slice %1 {offsets = [0, 23], sizes = [4, 384], strides = [1, 1]} : vector<4x640xbf16> to vector<4x384xbf16>
    %c8 = arith.constant 8 : index
    %c0_27 = arith.constant 0 : index
    %c0_28 = arith.constant 0 : index
    %44 = vector.load %arg2[%c8, %c0_27, %c0_28] : memref<49x8x4xbf16, #tpu.memory_space<vmem>>, vector<1x8x4xbf16>
    %45 = vector.shape_cast %44 : vector<1x8x4xbf16> to vector<8x4xbf16>
    %cst_29 = arith.constant dense<0.000000e+00> : vector<8x384xf32>
    %46 = tpu.matmul %45, %43, %cst_29 {dimension_numbers = #tpu.dot_dimension_numbers<[1], [0], [0], [1], [0, 0, 1, 1], [], []>} : vector<8x4xbf16>, vector<4x384xbf16>, vector<8x384xf32> -> vector<8x384xf32>
    %47 = arith.addf %42, %46 : vector<8x384xf32>
    %48 = vector.extract_strided_slice %1 {offsets = [0, 24], sizes = [4, 384], strides = [1, 1]} : vector<4x640xbf16> to vector<4x384xbf16>
    %c9 = arith.constant 9 : index
    %c0_30 = arith.constant 0 : index
    %c0_31 = arith.constant 0 : index
    %49 = vector.load %arg2[%c9, %c0_30, %c0_31] : memref<49x8x4xbf16, #tpu.memory_space<vmem>>, vector<1x8x4xbf16>
    %50 = vector.shape_cast %49 : vector<1x8x4xbf16> to vector<8x4xbf16>
    %cst_32 = arith.constant dense<0.000000e+00> : vector<8x384xf32>
    %51 = tpu.matmul %50, %48, %cst_32 {dimension_numbers = #tpu.dot_dimension_numbers<[1], [0], [0], [1], [0, 0, 1, 1], [], []>} : vector<8x4xbf16>, vector<4x384xbf16>, vector<8x384xf32> -> vector<8x384xf32>
    %52 = arith.addf %47, %51 : vector<8x384xf32>
    %53 = vector.extract_strided_slice %1 {offsets = [0, 25], sizes = [4, 384], strides = [1, 1]} : vector<4x640xbf16> to vector<4x384xbf16>
    %c10 = arith.constant 10 : index
    %c0_33 = arith.constant 0 : index
    %c0_34 = arith.constant 0 : index
    %54 = vector.load %arg2[%c10, %c0_33, %c0_34] : memref<49x8x4xbf16, #tpu.memory_space<vmem>>, vector<1x8x4xbf16>
    %55 = vector.shape_cast %54 : vector<1x8x4xbf16> to vector<8x4xbf16>
    %cst_35 = arith.constant dense<0.000000e+00> : vector<8x384xf32>
    %56 = tpu.matmul %55, %53, %cst_35 {dimension_numbers = #tpu.dot_dimension_numbers<[1], [0], [0], [1], [0, 0, 1, 1], [], []>} : vector<8x4xbf16>, vector<4x384xbf16>, vector<8x384xf32> -> vector<8x384xf32>
    %57 = arith.addf %52, %56 : vector<8x384xf32>
    %58 = vector.extract_strided_slice %1 {offsets = [0, 26], sizes = [4, 384], strides = [1, 1]} : vector<4x640xbf16> to vector<4x384xbf16>
    %c11 = arith.constant 11 : index
    %c0_36 = arith.constant 0 : index
    %c0_37 = arith.constant 0 : index
    %59 = vector.load %arg2[%c11, %c0_36, %c0_37] : memref<49x8x4xbf16, #tpu.memory_space<vmem>>, vector<1x8x4xbf16>
    %60 = vector.shape_cast %59 : vector<1x8x4xbf16> to vector<8x4xbf16>
    %cst_38 = arith.constant dense<0.000000e+00> : vector<8x384xf32>
    %61 = tpu.matmul %60, %58, %cst_38 {dimension_numbers = #tpu.dot_dimension_numbers<[1], [0], [0], [1], [0, 0, 1, 1], [], []>} : vector<8x4xbf16>, vector<4x384xbf16>, vector<8x384xf32> -> vector<8x384xf32>
    %62 = arith.addf %57, %61 : vector<8x384xf32>
    %63 = vector.extract_strided_slice %1 {offsets = [0, 27], sizes = [4, 384], strides = [1, 1]} : vector<4x640xbf16> to vector<4x384xbf16>
    %c12 = arith.constant 12 : index
    %c0_39 = arith.constant 0 : index
    %c0_40 = arith.constant 0 : index
    %64 = vector.load %arg2[%c12, %c0_39, %c0_40] : memref<49x8x4xbf16, #tpu.memory_space<vmem>>, vector<1x8x4xbf16>
    %65 = vector.shape_cast %64 : vector<1x8x4xbf16> to vector<8x4xbf16>
    %cst_41 = arith.constant dense<0.000000e+00> : vector<8x384xf32>
    %66 = tpu.matmul %65, %63, %cst_41 {dimension_numbers = #tpu.dot_dimension_numbers<[1], [0], [0], [1], [0, 0, 1, 1], [], []>} : vector<8x4xbf16>, vector<4x384xbf16>, vector<8x384xf32> -> vector<8x384xf32>
    %67 = arith.addf %62, %66 : vector<8x384xf32>
    %68 = vector.extract_strided_slice %1 {offsets = [0, 28], sizes = [4, 384], strides = [1, 1]} : vector<4x640xbf16> to vector<4x384xbf16>
    %c13 = arith.constant 13 : index
    %c0_42 = arith.constant 0 : index
    %c0_43 = arith.constant 0 : index
    %69 = vector.load %arg2[%c13, %c0_42, %c0_43] : memref<49x8x4xbf16, #tpu.memory_space<vmem>>, vector<1x8x4xbf16>
    %70 = vector.shape_cast %69 : vector<1x8x4xbf16> to vector<8x4xbf16>
    %cst_44 = arith.constant dense<0.000000e+00> : vector<8x384xf32>
    %71 = tpu.matmul %70, %68, %cst_44 {dimension_numbers = #tpu.dot_dimension_numbers<[1], [0], [0], [1], [0, 0, 1, 1], [], []>} : vector<8x4xbf16>, vector<4x384xbf16>, vector<8x384xf32> -> vector<8x384xf32>
    %72 = arith.addf %67, %71 : vector<8x384xf32>
    %73 = vector.extract_strided_slice %1 {offsets = [0, 44], sizes = [4, 384], strides = [1, 1]} : vector<4x640xbf16> to vector<4x384xbf16>
    %c14 = arith.constant 14 : index
    %c0_45 = arith.constant 0 : index
    %c0_46 = arith.constant 0 : index
    %74 = vector.load %arg2[%c14, %c0_45, %c0_46] : memref<49x8x4xbf16, #tpu.memory_space<vmem>>, vector<1x8x4xbf16>
    %75 = vector.shape_cast %74 : vector<1x8x4xbf16> to vector<8x4xbf16>
    %cst_47 = arith.constant dense<0.000000e+00> : vector<8x384xf32>
    %76 = tpu.matmul %75, %73, %cst_47 {dimension_numbers = #tpu.dot_dimension_numbers<[1], [0], [0], [1], [0, 0, 1, 1], [], []>} : vector<8x4xbf16>, vector<4x384xbf16>, vector<8x384xf32> -> vector<8x384xf32>
    %77 = arith.addf %72, %76 : vector<8x384xf32>
    %78 = vector.extract_strided_slice %1 {offsets = [0, 45], sizes = [4, 384], strides = [1, 1]} : vector<4x640xbf16> to vector<4x384xbf16>
    %c15 = arith.constant 15 : index
    %c0_48 = arith.constant 0 : index
    %c0_49 = arith.constant 0 : index
    %79 = vector.load %arg2[%c15, %c0_48, %c0_49] : memref<49x8x4xbf16, #tpu.memory_space<vmem>>, vector<1x8x4xbf16>
    %80 = vector.shape_cast %79 : vector<1x8x4xbf16> to vector<8x4xbf16>
    %cst_50 = arith.constant dense<0.000000e+00> : vector<8x384xf32>
    %81 = tpu.matmul %80, %78, %cst_50 {dimension_numbers = #tpu.dot_dimension_numbers<[1], [0], [0], [1], [0, 0, 1, 1], [], []>} : vector<8x4xbf16>, vector<4x384xbf16>, vector<8x384xf32> -> vector<8x384xf32>
    %82 = arith.addf %77, %81 : vector<8x384xf32>
    %83 = vector.extract_strided_slice %1 {offsets = [0, 46], sizes = [4, 384], strides = [1, 1]} : vector<4x640xbf16> to vector<4x384xbf16>
    %c16 = arith.constant 16 : index
    %c0_51 = arith.constant 0 : index
    %c0_52 = arith.constant 0 : index
    %84 = vector.load %arg2[%c16, %c0_51, %c0_52] : memref<49x8x4xbf16, #tpu.memory_space<vmem>>, vector<1x8x4xbf16>
    %85 = vector.shape_cast %84 : vector<1x8x4xbf16> to vector<8x4xbf16>
    %cst_53 = arith.constant dense<0.000000e+00> : vector<8x384xf32>
    %86 = tpu.matmul %85, %83, %cst_53 {dimension_numbers = #tpu.dot_dimension_numbers<[1], [0], [0], [1], [0, 0, 1, 1], [], []>} : vector<8x4xbf16>, vector<4x384xbf16>, vector<8x384xf32> -> vector<8x384xf32>
    %87 = arith.addf %82, %86 : vector<8x384xf32>
    %88 = vector.extract_strided_slice %1 {offsets = [0, 47], sizes = [4, 384], strides = [1, 1]} : vector<4x640xbf16> to vector<4x384xbf16>
    %c17 = arith.constant 17 : index
    %c0_54 = arith.constant 0 : index
    %c0_55 = arith.constant 0 : index
    %89 = vector.load %arg2[%c17, %c0_54, %c0_55] : memref<49x8x4xbf16, #tpu.memory_space<vmem>>, vector<1x8x4xbf16>
    %90 = vector.shape_cast %89 : vector<1x8x4xbf16> to vector<8x4xbf16>
    %cst_56 = arith.constant dense<0.000000e+00> : vector<8x384xf32>
    %91 = tpu.matmul %90, %88, %cst_56 {dimension_numbers = #tpu.dot_dimension_numbers<[1], [0], [0], [1], [0, 0, 1, 1], [], []>} : vector<8x4xbf16>, vector<4x384xbf16>, vector<8x384xf32> -> vector<8x384xf32>
    %92 = arith.addf %87, %91 : vector<8x384xf32>
    %93 = vector.extract_strided_slice %1 {offsets = [0, 48], sizes = [4, 384], strides = [1, 1]} : vector<4x640xbf16> to vector<4x384xbf16>
    %c18 = arith.constant 18 : index
    %c0_57 = arith.constant 0 : index
    %c0_58 = arith.constant 0 : index
    %94 = vector.load %arg2[%c18, %c0_57, %c0_58] : memref<49x8x4xbf16, #tpu.memory_space<vmem>>, vector<1x8x4xbf16>
    %95 = vector.shape_cast %94 : vector<1x8x4xbf16> to vector<8x4xbf16>
    %cst_59 = arith.constant dense<0.000000e+00> : vector<8x384xf32>
    %96 = tpu.matmul %95, %93, %cst_59 {dimension_numbers = #tpu.dot_dimension_numbers<[1], [0], [0], [1], [0, 0, 1, 1], [], []>} : vector<8x4xbf16>, vector<4x384xbf16>, vector<8x384xf32> -> vector<8x384xf32>
    %97 = arith.addf %92, %96 : vector<8x384xf32>
    %98 = vector.extract_strided_slice %1 {offsets = [0, 49], sizes = [4, 384], strides = [1, 1]} : vector<4x640xbf16> to vector<4x384xbf16>
    %c19 = arith.constant 19 : index
    %c0_60 = arith.constant 0 : index
    %c0_61 = arith.constant 0 : index
    %99 = vector.load %arg2[%c19, %c0_60, %c0_61] : memref<49x8x4xbf16, #tpu.memory_space<vmem>>, vector<1x8x4xbf16>
    %100 = vector.shape_cast %99 : vector<1x8x4xbf16> to vector<8x4xbf16>
    %cst_62 = arith.constant dense<0.000000e+00> : vector<8x384xf32>
    %101 = tpu.matmul %100, %98, %cst_62 {dimension_numbers = #tpu.dot_dimension_numbers<[1], [0], [0], [1], [0, 0, 1, 1], [], []>} : vector<8x4xbf16>, vector<4x384xbf16>, vector<8x384xf32> -> vector<8x384xf32>
    %102 = arith.addf %97, %101 : vector<8x384xf32>
    %103 = vector.extract_strided_slice %1 {offsets = [0, 50], sizes = [4, 384], strides = [1, 1]} : vector<4x640xbf16> to vector<4x384xbf16>
    %c20 = arith.constant 20 : index
    %c0_63 = arith.constant 0 : index
    %c0_64 = arith.constant 0 : index
    %104 = vector.load %arg2[%c20, %c0_63, %c0_64] : memref<49x8x4xbf16, #tpu.memory_space<vmem>>, vector<1x8x4xbf16>
    %105 = vector.shape_cast %104 : vector<1x8x4xbf16> to vector<8x4xbf16>
    %cst_65 = arith.constant dense<0.000000e+00> : vector<8x384xf32>
    %106 = tpu.matmul %105, %103, %cst_65 {dimension_numbers = #tpu.dot_dimension_numbers<[1], [0], [0], [1], [0, 0, 1, 1], [], []>} : vector<8x4xbf16>, vector<4x384xbf16>, vector<8x384xf32> -> vector<8x384xf32>
    %107 = arith.addf %102, %106 : vector<8x384xf32>
    %108 = vector.extract_strided_slice %1 {offsets = [0, 66], sizes = [4, 384], strides = [1, 1]} : vector<4x640xbf16> to vector<4x384xbf16>
    %c21 = arith.constant 21 : index
    %c0_66 = arith.constant 0 : index
    %c0_67 = arith.constant 0 : index
    %109 = vector.load %arg2[%c21, %c0_66, %c0_67] : memref<49x8x4xbf16, #tpu.memory_space<vmem>>, vector<1x8x4xbf16>
    %110 = vector.shape_cast %109 : vector<1x8x4xbf16> to vector<8x4xbf16>
    %cst_68 = arith.constant dense<0.000000e+00> : vector<8x384xf32>
    %111 = tpu.matmul %110, %108, %cst_68 {dimension_numbers = #tpu.dot_dimension_numbers<[1], [0], [0], [1], [0, 0, 1, 1], [], []>} : vector<8x4xbf16>, vector<4x384xbf16>, vector<8x384xf32> -> vector<8x384xf32>
    %112 = arith.addf %107, %111 : vector<8x384xf32>
    %113 = vector.extract_strided_slice %1 {offsets = [0, 67], sizes = [4, 384], strides = [1, 1]} : vector<4x640xbf16> to vector<4x384xbf16>
    %c22 = arith.constant 22 : index
    %c0_69 = arith.constant 0 : index
    %c0_70 = arith.constant 0 : index
    %114 = vector.load %arg2[%c22, %c0_69, %c0_70] : memref<49x8x4xbf16, #tpu.memory_space<vmem>>, vector<1x8x4xbf16>
    %115 = vector.shape_cast %114 : vector<1x8x4xbf16> to vector<8x4xbf16>
    %cst_71 = arith.constant dense<0.000000e+00> : vector<8x384xf32>
    %116 = tpu.matmul %115, %113, %cst_71 {dimension_numbers = #tpu.dot_dimension_numbers<[1], [0], [0], [1], [0, 0, 1, 1], [], []>} : vector<8x4xbf16>, vector<4x384xbf16>, vector<8x384xf32> -> vector<8x384xf32>
    %117 = arith.addf %112, %116 : vector<8x384xf32>
    %118 = vector.extract_strided_slice %1 {offsets = [0, 68], sizes = [4, 384], strides = [1, 1]} : vector<4x640xbf16> to vector<4x384xbf16>
    %c23 = arith.constant 23 : index
    %c0_72 = arith.constant 0 : index
    %c0_73 = arith.constant 0 : index
    %119 = vector.load %arg2[%c23, %c0_72, %c0_73] : memref<49x8x4xbf16, #tpu.memory_space<vmem>>, vector<1x8x4xbf16>
    %120 = vector.shape_cast %119 : vector<1x8x4xbf16> to vector<8x4xbf16>
    %cst_74 = arith.constant dense<0.000000e+00> : vector<8x384xf32>
    %121 = tpu.matmul %120, %118, %cst_74 {dimension_numbers = #tpu.dot_dimension_numbers<[1], [0], [0], [1], [0, 0, 1, 1], [], []>} : vector<8x4xbf16>, vector<4x384xbf16>, vector<8x384xf32> -> vector<8x384xf32>
    %122 = arith.addf %117, %121 : vector<8x384xf32>
    %123 = vector.extract_strided_slice %1 {offsets = [0, 69], sizes = [4, 384], strides = [1, 1]} : vector<4x640xbf16> to vector<4x384xbf16>
    %c24 = arith.constant 24 : index
    %c0_75 = arith.constant 0 : index
    %c0_76 = arith.constant 0 : index
    %124 = vector.load %arg2[%c24, %c0_75, %c0_76] : memref<49x8x4xbf16, #tpu.memory_space<vmem>>, vector<1x8x4xbf16>
    %125 = vector.shape_cast %124 : vector<1x8x4xbf16> to vector<8x4xbf16>
    %cst_77 = arith.constant dense<0.000000e+00> : vector<8x384xf32>
    %126 = tpu.matmul %125, %123, %cst_77 {dimension_numbers = #tpu.dot_dimension_numbers<[1], [0], [0], [1], [0, 0, 1, 1], [], []>} : vector<8x4xbf16>, vector<4x384xbf16>, vector<8x384xf32> -> vector<8x384xf32>
    %127 = arith.addf %122, %126 : vector<8x384xf32>
    %128 = vector.extract_strided_slice %1 {offsets = [0, 70], sizes = [4, 384], strides = [1, 1]} : vector<4x640xbf16> to vector<4x384xbf16>
    %c25 = arith.constant 25 : index
    %c0_78 = arith.constant 0 : index
    %c0_79 = arith.constant 0 : index
    %129 = vector.load %arg2[%c25, %c0_78, %c0_79] : memref<49x8x4xbf16, #tpu.memory_space<vmem>>, vector<1x8x4xbf16>
    %130 = vector.shape_cast %129 : vector<1x8x4xbf16> to vector<8x4xbf16>
    %cst_80 = arith.constant dense<0.000000e+00> : vector<8x384xf32>
    %131 = tpu.matmul %130, %128, %cst_80 {dimension_numbers = #tpu.dot_dimension_numbers<[1], [0], [0], [1], [0, 0, 1, 1], [], []>} : vector<8x4xbf16>, vector<4x384xbf16>, vector<8x384xf32> -> vector<8x384xf32>
    %132 = arith.addf %127, %131 : vector<8x384xf32>
    %133 = vector.extract_strided_slice %1 {offsets = [0, 71], sizes = [4, 384], strides = [1, 1]} : vector<4x640xbf16> to vector<4x384xbf16>
    %c26 = arith.constant 26 : index
    %c0_81 = arith.constant 0 : index
    %c0_82 = arith.constant 0 : index
    %134 = vector.load %arg2[%c26, %c0_81, %c0_82] : memref<49x8x4xbf16, #tpu.memory_space<vmem>>, vector<1x8x4xbf16>
    %135 = vector.shape_cast %134 : vector<1x8x4xbf16> to vector<8x4xbf16>
    %cst_83 = arith.constant dense<0.000000e+00> : vector<8x384xf32>
    %136 = tpu.matmul %135, %133, %cst_83 {dimension_numbers = #tpu.dot_dimension_numbers<[1], [0], [0], [1], [0, 0, 1, 1], [], []>} : vector<8x4xbf16>, vector<4x384xbf16>, vector<8x384xf32> -> vector<8x384xf32>
    %137 = arith.addf %132, %136 : vector<8x384xf32>
    %138 = vector.extract_strided_slice %1 {offsets = [0, 72], sizes = [4, 384], strides = [1, 1]} : vector<4x640xbf16> to vector<4x384xbf16>
    %c27 = arith.constant 27 : index
    %c0_84 = arith.constant 0 : index
    %c0_85 = arith.constant 0 : index
    %139 = vector.load %arg2[%c27, %c0_84, %c0_85] : memref<49x8x4xbf16, #tpu.memory_space<vmem>>, vector<1x8x4xbf16>
    %140 = vector.shape_cast %139 : vector<1x8x4xbf16> to vector<8x4xbf16>
    %cst_86 = arith.constant dense<0.000000e+00> : vector<8x384xf32>
    %141 = tpu.matmul %140, %138, %cst_86 {dimension_numbers = #tpu.dot_dimension_numbers<[1], [0], [0], [1], [0, 0, 1, 1], [], []>} : vector<8x4xbf16>, vector<4x384xbf16>, vector<8x384xf32> -> vector<8x384xf32>
    %142 = arith.addf %137, %141 : vector<8x384xf32>
    %143 = vector.extract_strided_slice %1 {offsets = [0, 88], sizes = [4, 384], strides = [1, 1]} : vector<4x640xbf16> to vector<4x384xbf16>
    %c28 = arith.constant 28 : index
    %c0_87 = arith.constant 0 : index
    %c0_88 = arith.constant 0 : index
    %144 = vector.load %arg2[%c28, %c0_87, %c0_88] : memref<49x8x4xbf16, #tpu.memory_space<vmem>>, vector<1x8x4xbf16>
    %145 = vector.shape_cast %144 : vector<1x8x4xbf16> to vector<8x4xbf16>
    %cst_89 = arith.constant dense<0.000000e+00> : vector<8x384xf32>
    %146 = tpu.matmul %145, %143, %cst_89 {dimension_numbers = #tpu.dot_dimension_numbers<[1], [0], [0], [1], [0, 0, 1, 1], [], []>} : vector<8x4xbf16>, vector<4x384xbf16>, vector<8x384xf32> -> vector<8x384xf32>
    %147 = arith.addf %142, %146 : vector<8x384xf32>
    %148 = vector.extract_strided_slice %1 {offsets = [0, 89], sizes = [4, 384], strides = [1, 1]} : vector<4x640xbf16> to vector<4x384xbf16>
    %c29 = arith.constant 29 : index
    %c0_90 = arith.constant 0 : index
    %c0_91 = arith.constant 0 : index
    %149 = vector.load %arg2[%c29, %c0_90, %c0_91] : memref<49x8x4xbf16, #tpu.memory_space<vmem>>, vector<1x8x4xbf16>
    %150 = vector.shape_cast %149 : vector<1x8x4xbf16> to vector<8x4xbf16>
    %cst_92 = arith.constant dense<0.000000e+00> : vector<8x384xf32>
    %151 = tpu.matmul %150, %148, %cst_92 {dimension_numbers = #tpu.dot_dimension_numbers<[1], [0], [0], [1], [0, 0, 1, 1], [], []>} : vector<8x4xbf16>, vector<4x384xbf16>, vector<8x384xf32> -> vector<8x384xf32>
    %152 = arith.addf %147, %151 : vector<8x384xf32>
    %153 = vector.extract_strided_slice %1 {offsets = [0, 90], sizes = [4, 384], strides = [1, 1]} : vector<4x640xbf16> to vector<4x384xbf16>
    %c30 = arith.constant 30 : index
    %c0_93 = arith.constant 0 : index
    %c0_94 = arith.constant 0 : index
    %154 = vector.load %arg2[%c30, %c0_93, %c0_94] : memref<49x8x4xbf16, #tpu.memory_space<vmem>>, vector<1x8x4xbf16>
    %155 = vector.shape_cast %154 : vector<1x8x4xbf16> to vector<8x4xbf16>
    %cst_95 = arith.constant dense<0.000000e+00> : vector<8x384xf32>
    %156 = tpu.matmul %155, %153, %cst_95 {dimension_numbers = #tpu.dot_dimension_numbers<[1], [0], [0], [1], [0, 0, 1, 1], [], []>} : vector<8x4xbf16>, vector<4x384xbf16>, vector<8x384xf32> -> vector<8x384xf32>
    %157 = arith.addf %152, %156 : vector<8x384xf32>
    %158 = vector.extract_strided_slice %1 {offsets = [0, 91], sizes = [4, 384], strides = [1, 1]} : vector<4x640xbf16> to vector<4x384xbf16>
    %c31 = arith.constant 31 : index
    %c0_96 = arith.constant 0 : index
    %c0_97 = arith.constant 0 : index
    %159 = vector.load %arg2[%c31, %c0_96, %c0_97] : memref<49x8x4xbf16, #tpu.memory_space<vmem>>, vector<1x8x4xbf16>
    %160 = vector.shape_cast %159 : vector<1x8x4xbf16> to vector<8x4xbf16>
    %cst_98 = arith.constant dense<0.000000e+00> : vector<8x384xf32>
    %161 = tpu.matmul %160, %158, %cst_98 {dimension_numbers = #tpu.dot_dimension_numbers<[1], [0], [0], [1], [0, 0, 1, 1], [], []>} : vector<8x4xbf16>, vector<4x384xbf16>, vector<8x384xf32> -> vector<8x384xf32>
    %162 = arith.addf %157, %161 : vector<8x384xf32>
    %163 = vector.extract_strided_slice %1 {offsets = [0, 92], sizes = [4, 384], strides = [1, 1]} : vector<4x640xbf16> to vector<4x384xbf16>
    %c32 = arith.constant 32 : index
    %c0_99 = arith.constant 0 : index
    %c0_100 = arith.constant 0 : index
    %164 = vector.load %arg2[%c32, %c0_99, %c0_100] : memref<49x8x4xbf16, #tpu.memory_space<vmem>>, vector<1x8x4xbf16>
    %165 = vector.shape_cast %164 : vector<1x8x4xbf16> to vector<8x4xbf16>
    %cst_101 = arith.constant dense<0.000000e+00> : vector<8x384xf32>
    %166 = tpu.matmul %165, %163, %cst_101 {dimension_numbers = #tpu.dot_dimension_numbers<[1], [0], [0], [1], [0, 0, 1, 1], [], []>} : vector<8x4xbf16>, vector<4x384xbf16>, vector<8x384xf32> -> vector<8x384xf32>
    %167 = arith.addf %162, %166 : vector<8x384xf32>
    %168 = vector.extract_strided_slice %1 {offsets = [0, 93], sizes = [4, 384], strides = [1, 1]} : vector<4x640xbf16> to vector<4x384xbf16>
    %c33 = arith.constant 33 : index
    %c0_102 = arith.constant 0 : index
    %c0_103 = arith.constant 0 : index
    %169 = vector.load %arg2[%c33, %c0_102, %c0_103] : memref<49x8x4xbf16, #tpu.memory_space<vmem>>, vector<1x8x4xbf16>
    %170 = vector.shape_cast %169 : vector<1x8x4xbf16> to vector<8x4xbf16>
    %cst_104 = arith.constant dense<0.000000e+00> : vector<8x384xf32>
    %171 = tpu.matmul %170, %168, %cst_104 {dimension_numbers = #tpu.dot_dimension_numbers<[1], [0], [0], [1], [0, 0, 1, 1], [], []>} : vector<8x4xbf16>, vector<4x384xbf16>, vector<8x384xf32> -> vector<8x384xf32>
    %172 = arith.addf %167, %171 : vector<8x384xf32>
    %173 = vector.extract_strided_slice %1 {offsets = [0, 94], sizes = [4, 384], strides = [1, 1]} : vector<4x640xbf16> to vector<4x384xbf16>
    %c34 = arith.constant 34 : index
    %c0_105 = arith.constant 0 : index
    %c0_106 = arith.constant 0 : index
    %174 = vector.load %arg2[%c34, %c0_105, %c0_106] : memref<49x8x4xbf16, #tpu.memory_space<vmem>>, vector<1x8x4xbf16>
    %175 = vector.shape_cast %174 : vector<1x8x4xbf16> to vector<8x4xbf16>
    %cst_107 = arith.constant dense<0.000000e+00> : vector<8x384xf32>
    %176 = tpu.matmul %175, %173, %cst_107 {dimension_numbers = #tpu.dot_dimension_numbers<[1], [0], [0], [1], [0, 0, 1, 1], [], []>} : vector<8x4xbf16>, vector<4x384xbf16>, vector<8x384xf32> -> vector<8x384xf32>
    %177 = arith.addf %172, %176 : vector<8x384xf32>
    %178 = vector.extract_strided_slice %1 {offsets = [0, 110], sizes = [4, 384], strides = [1, 1]} : vector<4x640xbf16> to vector<4x384xbf16>
    %c35 = arith.constant 35 : index
    %c0_108 = arith.constant 0 : index
    %c0_109 = arith.constant 0 : index
    %179 = vector.load %arg2[%c35, %c0_108, %c0_109] : memref<49x8x4xbf16, #tpu.memory_space<vmem>>, vector<1x8x4xbf16>
    %180 = vector.shape_cast %179 : vector<1x8x4xbf16> to vector<8x4xbf16>
    %cst_110 = arith.constant dense<0.000000e+00> : vector<8x384xf32>
    %181 = tpu.matmul %180, %178, %cst_110 {dimension_numbers = #tpu.dot_dimension_numbers<[1], [0], [0], [1], [0, 0, 1, 1], [], []>} : vector<8x4xbf16>, vector<4x384xbf16>, vector<8x384xf32> -> vector<8x384xf32>
    %182 = arith.addf %177, %181 : vector<8x384xf32>
    %183 = vector.extract_strided_slice %1 {offsets = [0, 111], sizes = [4, 384], strides = [1, 1]} : vector<4x640xbf16> to vector<4x384xbf16>
    %c36 = arith.constant 36 : index
    %c0_111 = arith.constant 0 : index
    %c0_112 = arith.constant 0 : index
    %184 = vector.load %arg2[%c36, %c0_111, %c0_112] : memref<49x8x4xbf16, #tpu.memory_space<vmem>>, vector<1x8x4xbf16>
    %185 = vector.shape_cast %184 : vector<1x8x4xbf16> to vector<8x4xbf16>
    %cst_113 = arith.constant dense<0.000000e+00> : vector<8x384xf32>
    %186 = tpu.matmul %185, %183, %cst_113 {dimension_numbers = #tpu.dot_dimension_numbers<[1], [0], [0], [1], [0, 0, 1, 1], [], []>} : vector<8x4xbf16>, vector<4x384xbf16>, vector<8x384xf32> -> vector<8x384xf32>
    %187 = arith.addf %182, %186 : vector<8x384xf32>
    %188 = vector.extract_strided_slice %1 {offsets = [0, 112], sizes = [4, 384], strides = [1, 1]} : vector<4x640xbf16> to vector<4x384xbf16>
    %c37 = arith.constant 37 : index
    %c0_114 = arith.constant 0 : index
    %c0_115 = arith.constant 0 : index
    %189 = vector.load %arg2[%c37, %c0_114, %c0_115] : memref<49x8x4xbf16, #tpu.memory_space<vmem>>, vector<1x8x4xbf16>
    %190 = vector.shape_cast %189 : vector<1x8x4xbf16> to vector<8x4xbf16>
    %cst_116 = arith.constant dense<0.000000e+00> : vector<8x384xf32>
    %191 = tpu.matmul %190, %188, %cst_116 {dimension_numbers = #tpu.dot_dimension_numbers<[1], [0], [0], [1], [0, 0, 1, 1], [], []>} : vector<8x4xbf16>, vector<4x384xbf16>, vector<8x384xf32> -> vector<8x384xf32>
    %192 = arith.addf %187, %191 : vector<8x384xf32>
    %193 = vector.extract_strided_slice %1 {offsets = [0, 113], sizes = [4, 384], strides = [1, 1]} : vector<4x640xbf16> to vector<4x384xbf16>
    %c38 = arith.constant 38 : index
    %c0_117 = arith.constant 0 : index
    %c0_118 = arith.constant 0 : index
    %194 = vector.load %arg2[%c38, %c0_117, %c0_118] : memref<49x8x4xbf16, #tpu.memory_space<vmem>>, vector<1x8x4xbf16>
    %195 = vector.shape_cast %194 : vector<1x8x4xbf16> to vector<8x4xbf16>
    %cst_119 = arith.constant dense<0.000000e+00> : vector<8x384xf32>
    %196 = tpu.matmul %195, %193, %cst_119 {dimension_numbers = #tpu.dot_dimension_numbers<[1], [0], [0], [1], [0, 0, 1, 1], [], []>} : vector<8x4xbf16>, vector<4x384xbf16>, vector<8x384xf32> -> vector<8x384xf32>
    %197 = arith.addf %192, %196 : vector<8x384xf32>
    %198 = vector.extract_strided_slice %1 {offsets = [0, 114], sizes = [4, 384], strides = [1, 1]} : vector<4x640xbf16> to vector<4x384xbf16>
    %c39 = arith.constant 39 : index
    %c0_120 = arith.constant 0 : index
    %c0_121 = arith.constant 0 : index
    %199 = vector.load %arg2[%c39, %c0_120, %c0_121] : memref<49x8x4xbf16, #tpu.memory_space<vmem>>, vector<1x8x4xbf16>
    %200 = vector.shape_cast %199 : vector<1x8x4xbf16> to vector<8x4xbf16>
    %cst_122 = arith.constant dense<0.000000e+00> : vector<8x384xf32>
    %201 = tpu.matmul %200, %198, %cst_122 {dimension_numbers = #tpu.dot_dimension_numbers<[1], [0], [0], [1], [0, 0, 1, 1], [], []>} : vector<8x4xbf16>, vector<4x384xbf16>, vector<8x384xf32> -> vector<8x384xf32>
    %202 = arith.addf %197, %201 : vector<8x384xf32>
    %203 = vector.extract_strided_slice %1 {offsets = [0, 115], sizes = [4, 384], strides = [1, 1]} : vector<4x640xbf16> to vector<4x384xbf16>
    %c40 = arith.constant 40 : index
    %c0_123 = arith.constant 0 : index
    %c0_124 = arith.constant 0 : index
    %204 = vector.load %arg2[%c40, %c0_123, %c0_124] : memref<49x8x4xbf16, #tpu.memory_space<vmem>>, vector<1x8x4xbf16>
    %205 = vector.shape_cast %204 : vector<1x8x4xbf16> to vector<8x4xbf16>
    %cst_125 = arith.constant dense<0.000000e+00> : vector<8x384xf32>
    %206 = tpu.matmul %205, %203, %cst_125 {dimension_numbers = #tpu.dot_dimension_numbers<[1], [0], [0], [1], [0, 0, 1, 1], [], []>} : vector<8x4xbf16>, vector<4x384xbf16>, vector<8x384xf32> -> vector<8x384xf32>
    %207 = arith.addf %202, %206 : vector<8x384xf32>
    %208 = vector.extract_strided_slice %1 {offsets = [0, 116], sizes = [4, 384], strides = [1, 1]} : vector<4x640xbf16> to vector<4x384xbf16>
    %c41 = arith.constant 41 : index
    %c0_126 = arith.constant 0 : index
    %c0_127 = arith.constant 0 : index
    %209 = vector.load %arg2[%c41, %c0_126, %c0_127] : memref<49x8x4xbf16, #tpu.memory_space<vmem>>, vector<1x8x4xbf16>
    %210 = vector.shape_cast %209 : vector<1x8x4xbf16> to vector<8x4xbf16>
    %cst_128 = arith.constant dense<0.000000e+00> : vector<8x384xf32>
    %211 = tpu.matmul %210, %208, %cst_128 {dimension_numbers = #tpu.dot_dimension_numbers<[1], [0], [0], [1], [0, 0, 1, 1], [], []>} : vector<8x4xbf16>, vector<4x384xbf16>, vector<8x384xf32> -> vector<8x384xf32>
    %212 = arith.addf %207, %211 : vector<8x384xf32>
    %213 = vector.extract_strided_slice %1 {offsets = [0, 132], sizes = [4, 384], strides = [1, 1]} : vector<4x640xbf16> to vector<4x384xbf16>
    %c42 = arith.constant 42 : index
    %c0_129 = arith.constant 0 : index
    %c0_130 = arith.constant 0 : index
    %214 = vector.load %arg2[%c42, %c0_129, %c0_130] : memref<49x8x4xbf16, #tpu.memory_space<vmem>>, vector<1x8x4xbf16>
    %215 = vector.shape_cast %214 : vector<1x8x4xbf16> to vector<8x4xbf16>
    %cst_131 = arith.constant dense<0.000000e+00> : vector<8x384xf32>
    %216 = tpu.matmul %215, %213, %cst_131 {dimension_numbers = #tpu.dot_dimension_numbers<[1], [0], [0], [1], [0, 0, 1, 1], [], []>} : vector<8x4xbf16>, vector<4x384xbf16>, vector<8x384xf32> -> vector<8x384xf32>
    %217 = arith.addf %212, %216 : vector<8x384xf32>
    %218 = vector.extract_strided_slice %1 {offsets = [0, 133], sizes = [4, 384], strides = [1, 1]} : vector<4x640xbf16> to vector<4x384xbf16>
    %c43 = arith.constant 43 : index
    %c0_132 = arith.constant 0 : index
    %c0_133 = arith.constant 0 : index
    %219 = vector.load %arg2[%c43, %c0_132, %c0_133] : memref<49x8x4xbf16, #tpu.memory_space<vmem>>, vector<1x8x4xbf16>
    %220 = vector.shape_cast %219 : vector<1x8x4xbf16> to vector<8x4xbf16>
    %cst_134 = arith.constant dense<0.000000e+00> : vector<8x384xf32>
    %221 = tpu.matmul %220, %218, %cst_134 {dimension_numbers = #tpu.dot_dimension_numbers<[1], [0], [0], [1], [0, 0, 1, 1], [], []>} : vector<8x4xbf16>, vector<4x384xbf16>, vector<8x384xf32> -> vector<8x384xf32>
    %222 = arith.addf %217, %221 : vector<8x384xf32>
    %223 = vector.extract_strided_slice %1 {offsets = [0, 134], sizes = [4, 384], strides = [1, 1]} : vector<4x640xbf16> to vector<4x384xbf16>
    %c44 = arith.constant 44 : index
    %c0_135 = arith.constant 0 : index
    %c0_136 = arith.constant 0 : index
    %224 = vector.load %arg2[%c44, %c0_135, %c0_136] : memref<49x8x4xbf16, #tpu.memory_space<vmem>>, vector<1x8x4xbf16>
    %225 = vector.shape_cast %224 : vector<1x8x4xbf16> to vector<8x4xbf16>
    %cst_137 = arith.constant dense<0.000000e+00> : vector<8x384xf32>
    %226 = tpu.matmul %225, %223, %cst_137 {dimension_numbers = #tpu.dot_dimension_numbers<[1], [0], [0], [1], [0, 0, 1, 1], [], []>} : vector<8x4xbf16>, vector<4x384xbf16>, vector<8x384xf32> -> vector<8x384xf32>
    %227 = arith.addf %222, %226 : vector<8x384xf32>
    %228 = vector.extract_strided_slice %1 {offsets = [0, 135], sizes = [4, 384], strides = [1, 1]} : vector<4x640xbf16> to vector<4x384xbf16>
    %c45 = arith.constant 45 : index
    %c0_138 = arith.constant 0 : index
    %c0_139 = arith.constant 0 : index
    %229 = vector.load %arg2[%c45, %c0_138, %c0_139] : memref<49x8x4xbf16, #tpu.memory_space<vmem>>, vector<1x8x4xbf16>
    %230 = vector.shape_cast %229 : vector<1x8x4xbf16> to vector<8x4xbf16>
    %cst_140 = arith.constant dense<0.000000e+00> : vector<8x384xf32>
    %231 = tpu.matmul %230, %228, %cst_140 {dimension_numbers = #tpu.dot_dimension_numbers<[1], [0], [0], [1], [0, 0, 1, 1], [], []>} : vector<8x4xbf16>, vector<4x384xbf16>, vector<8x384xf32> -> vector<8x384xf32>
    %232 = arith.addf %227, %231 : vector<8x384xf32>
    %233 = vector.extract_strided_slice %1 {offsets = [0, 136], sizes = [4, 384], strides = [1, 1]} : vector<4x640xbf16> to vector<4x384xbf16>
    %c46 = arith.constant 46 : index
    %c0_141 = arith.constant 0 : index
    %c0_142 = arith.constant 0 : index
    %234 = vector.load %arg2[%c46, %c0_141, %c0_142] : memref<49x8x4xbf16, #tpu.memory_space<vmem>>, vector<1x8x4xbf16>
    %235 = vector.shape_cast %234 : vector<1x8x4xbf16> to vector<8x4xbf16>
    %cst_143 = arith.constant dense<0.000000e+00> : vector<8x384xf32>
    %236 = tpu.matmul %235, %233, %cst_143 {dimension_numbers = #tpu.dot_dimension_numbers<[1], [0], [0], [1], [0, 0, 1, 1], [], []>} : vector<8x4xbf16>, vector<4x384xbf16>, vector<8x384xf32> -> vector<8x384xf32>
    %237 = arith.addf %232, %236 : vector<8x384xf32>
    %238 = vector.extract_strided_slice %1 {offsets = [0, 137], sizes = [4, 384], strides = [1, 1]} : vector<4x640xbf16> to vector<4x384xbf16>
    %c47 = arith.constant 47 : index
    %c0_144 = arith.constant 0 : index
    %c0_145 = arith.constant 0 : index
    %239 = vector.load %arg2[%c47, %c0_144, %c0_145] : memref<49x8x4xbf16, #tpu.memory_space<vmem>>, vector<1x8x4xbf16>
    %240 = vector.shape_cast %239 : vector<1x8x4xbf16> to vector<8x4xbf16>
    %cst_146 = arith.constant dense<0.000000e+00> : vector<8x384xf32>
    %241 = tpu.matmul %240, %238, %cst_146 {dimension_numbers = #tpu.dot_dimension_numbers<[1], [0], [0], [1], [0, 0, 1, 1], [], []>} : vector<8x4xbf16>, vector<4x384xbf16>, vector<8x384xf32> -> vector<8x384xf32>
    %242 = arith.addf %237, %241 : vector<8x384xf32>
    %243 = vector.extract_strided_slice %1 {offsets = [0, 138], sizes = [4, 384], strides = [1, 1]} : vector<4x640xbf16> to vector<4x384xbf16>
    %c48 = arith.constant 48 : index
    %c0_147 = arith.constant 0 : index
    %c0_148 = arith.constant 0 : index
    %244 = vector.load %arg2[%c48, %c0_147, %c0_148] : memref<49x8x4xbf16, #tpu.memory_space<vmem>>, vector<1x8x4xbf16>
    %245 = vector.shape_cast %244 : vector<1x8x4xbf16> to vector<8x4xbf16>
    %cst_149 = arith.constant dense<0.000000e+00> : vector<8x384xf32>
    %246 = tpu.matmul %245, %243, %cst_149 {dimension_numbers = #tpu.dot_dimension_numbers<[1], [0], [0], [1], [0, 0, 1, 1], [], []>} : vector<8x4xbf16>, vector<4x384xbf16>, vector<8x384xf32> -> vector<8x384xf32>
    %247 = arith.addf %242, %246 : vector<8x384xf32>
    %c0_150 = arith.constant 0 : index
    %c0_151 = arith.constant 0 : index
    %248 = vector.load %arg3[%c0_150, %c0_151] : memref<8x1xf32, #tpu.memory_space<vmem>>, vector<8x1xf32>
    %249 = vector.broadcast %248 : vector<8x1xf32> to vector<8x384xf32>
    %250 = arith.addf %247, %249 : vector<8x384xf32>
    %cst_152 = arith.constant 0.000000e+00 : f32
    %251 = vector.broadcast %cst_152 : f32 to vector<8x384xf32>
    %252 = arith.cmpf ogt, %250, %251 : vector<8x384xf32>
    %cst_153 = arith.constant 0.00999999977 : f32
    %253 = vector.broadcast %cst_153 : f32 to vector<8x384xf32>
    %254 = arith.mulf %253, %250 : vector<8x384xf32>
    %255 = arith.select %252, %250, %254 : vector<8x384xi1>, vector<8x384xf32>
    %256 = arith.truncf %255 : vector<8x384xf32> to vector<8x384xbf16>
    %c0_154 = arith.constant 0 : index
    %c0_155 = arith.constant 0 : index
    %c0_156 = arith.constant 0 : index
    %257 = vector.load %arg4[%c0_154, %c0_155, %c0_156] : memref<1x8x384xbf16, #tpu.memory_space<vmem>>, vector<1x8x384xbf16>
    %258 = vector.shape_cast %257 : vector<1x8x384xbf16> to vector<8x384xbf16>
    %259 = vector.shape_cast %256 : vector<8x384xbf16> to vector<1x8x384xbf16>
    tpu.vector_store %arg4[%c0_154, %c0_155, %c0_156], %259 {strides = array<i32>} : memref<1x8x384xbf16, #tpu.memory_space<vmem>>, vector<1x8x384xbf16>,
    return
  }
  func.func @transform_0(%arg0: i32) -> (i32, i32, i32) {
    %c0_i32 = arith.constant 0 : i32
    %c0_i32_0 = arith.constant 0 : i32
    %c0_i32_1 = arith.constant 0 : i32
    return %arg0, %c0_i32, %c0_i32_0 : i32, i32, i32
  }
  func.func @transform_1(%arg0: i32) -> (i32, i32, i32) {
    %c0_i32 = arith.constant 0 : i32
    %c0_i32_0 = arith.constant 0 : i32
    %c0_i32_1 = arith.constant 0 : i32
    %c0_i32_2 = arith.constant 0 : i32
    return %c0_i32, %c0_i32_0, %c0_i32_1 : i32, i32, i32
  }
  func.func @transform_2(%arg0: i32) -> (i32, i32) {
    %c0_i32 = arith.constant 0 : i32
    %c0_i32_0 = arith.constant 0 : i32
    %c0_i32_1 = arith.constant 0 : i32
    return %c0_i32, %c0_i32_0 : i32, i32
  }
  func.func @transform_3(%arg0: i32) -> (i32, i32, i32) {
    %c0_i32 = arith.constant 0 : i32
    %c0_i32_0 = arith.constant 0 : i32
    %c0_i32_1 = arith.constant 0 : i32
    return %arg0, %c0_i32, %c0_i32_0 : i32, i32, i32
  }
}

module attributes {stable_mosaic.version = 11 : i64} {
  func.func @_matmul_conv_kernel(%arg0: i32, %arg1: memref<1x80x128xbf16, #tpu.memory_space<vmem>>, %arg2: memref<16x80xbf16, #tpu.memory_space<vmem>>, %arg3: memref<16x1xf32, #tpu.memory_space<vmem>>, %arg4: memref<1x128xf32, #tpu.memory_space<vmem>>, %arg5: memref<1x16x128xbf16, #tpu.memory_space<vmem>>) attributes {dimension_semantics = [#tpu.dimension_semantics<parallel>], iteration_bounds = array<i64: 2>, scalar_prefetch = 0 : i64, scratch_operands = 0 : i64, tpu.core_type = #tpu.core_type<tc>, window_params = [{transform_indices = @transform_0, window_bounds = array<i64: 1, 80, 128>}, {pipeline_mode = #tpu.pipeline_mode<synchronous>, transform_indices = @transform_1, window_bounds = array<i64: 16, 80>}, {pipeline_mode = #tpu.pipeline_mode<synchronous>, transform_indices = @transform_2, window_bounds = array<i64: 16, 1>}, {pipeline_mode = #tpu.pipeline_mode<synchronous>, transform_indices = @transform_3, window_bounds = array<i64: 1, 128>}, {transform_indices = @transform_4, window_bounds = array<i64: 1, 16, 128>}]} {
    %c0 = arith.constant 0 : index
    %c0_0 = arith.constant 0 : index
    %0 = vector.load %arg2[%c0, %c0_0] : memref<16x80xbf16, #tpu.memory_space<vmem>>, vector<16x80xbf16>
    %c0_1 = arith.constant 0 : index
    %c0_2 = arith.constant 0 : index
    %c0_3 = arith.constant 0 : index
    %1 = vector.load %arg1[%c0_1, %c0_2, %c0_3] : memref<1x80x128xbf16, #tpu.memory_space<vmem>>, vector<1x80x128xbf16>
    %2 = vector.shape_cast %1 : vector<1x80x128xbf16> to vector<80x128xbf16>
    %cst = arith.constant dense<0.000000e+00> : vector<16x128xf32>
    %3 = tpu.matmul %0, %2, %cst {dimension_numbers = #tpu.dot_dimension_numbers<[1], [0], [0], [1], [0, 0, 1, 1], [], []>} : vector<16x80xbf16>, vector<80x128xbf16>, vector<16x128xf32> -> vector<16x128xf32>
    %c0_4 = arith.constant 0 : index
    %c0_5 = arith.constant 0 : index
    %4 = vector.load %arg3[%c0_4, %c0_5] : memref<16x1xf32, #tpu.memory_space<vmem>>, vector<16x1xf32>
    %5 = vector.broadcast %4 : vector<16x1xf32> to vector<16x128xf32>
    %6 = arith.addf %3, %5 : vector<16x128xf32>
    %c0_6 = arith.constant 0 : index
    %c0_7 = arith.constant 0 : index
    %7 = vector.load %arg4[%c0_6, %c0_7] : memref<1x128xf32, #tpu.memory_space<vmem>>, vector<1x128xf32>
    %8 = vector.broadcast %7 : vector<1x128xf32> to vector<16x128xf32>
    %9 = arith.mulf %6, %8 : vector<16x128xf32>
    %cst_8 = arith.constant dense<0.000000e+00> : vector<16xf32>
    %10 = vector.multi_reduction <add>, %9, %cst_8 [1] : vector<16x128xf32> to vector<16xf32>
    %11 = vector.shape_cast %10 : vector<16xf32> to vector<16x1xf32>
    %12 = arith.mulf %9, %9 : vector<16x128xf32>
    %cst_9 = arith.constant dense<0.000000e+00> : vector<16xf32>
    %13 = vector.multi_reduction <add>, %12, %cst_9 [1] : vector<16x128xf32> to vector<16xf32>
    %14 = vector.shape_cast %13 : vector<16xf32> to vector<16x1xf32>
    %cst_10 = arith.constant 1.562500e-02 : f32
    %15 = vector.broadcast %cst_10 : f32 to vector<16x1xf32>
    %16 = arith.mulf %11, %15 : vector<16x1xf32>
    %cst_11 = arith.constant 1.562500e-02 : f32
    %17 = vector.broadcast %cst_11 : f32 to vector<16x1xf32>
    %18 = arith.mulf %14, %17 : vector<16x1xf32>
    %19 = arith.mulf %16, %16 : vector<16x1xf32>
    %20 = arith.subf %18, %19 : vector<16x1xf32>
    %cst_12 = arith.constant 0.000000e+00 : f32
    %21 = vector.broadcast %cst_12 : f32 to vector<16x1xf32>
    %22 = arith.maximumf %20, %21 : vector<16x1xf32>
    %23 = vector.broadcast %16 : vector<16x1xf32> to vector<16x128xf32>
    %24 = arith.subf %6, %23 : vector<16x128xf32>
    %cst_13 = arith.constant 9.99999974E-6 : f32
    %25 = vector.broadcast %cst_13 : f32 to vector<16x1xf32>
    %26 = arith.addf %22, %25 : vector<16x1xf32>
    %27 = math.rsqrt %26 : vector<16x1xf32>
    %28 = vector.broadcast %27 : vector<16x1xf32> to vector<16x128xf32>
    %29 = arith.mulf %24, %28 : vector<16x128xf32>
    %cst_14 = arith.constant 0.000000e+00 : f32
    %30 = vector.broadcast %cst_14 : f32 to vector<16x128xf32>
    %31 = arith.maximumf %29, %30 : vector<16x128xf32>
    %32 = arith.truncf %31 : vector<16x128xf32> to vector<16x128xbf16>
    %c0_15 = arith.constant 0 : index
    %c0_16 = arith.constant 0 : index
    %c0_17 = arith.constant 0 : index
    %33 = vector.load %arg5[%c0_15, %c0_16, %c0_17] : memref<1x16x128xbf16, #tpu.memory_space<vmem>>, vector<1x16x128xbf16>
    %34 = vector.shape_cast %33 : vector<1x16x128xbf16> to vector<16x128xbf16>
    %35 = vector.shape_cast %32 : vector<16x128xbf16> to vector<1x16x128xbf16>
    tpu.vector_store %arg5[%c0_15, %c0_16, %c0_17], %35 {strides = array<i32>} : memref<1x16x128xbf16, #tpu.memory_space<vmem>>, vector<1x16x128xbf16>,
    return
  }
  func.func @transform_0(%arg0: i32) -> (i32, i32, i32) {
    %c0_i32 = arith.constant 0 : i32
    %c0_i32_0 = arith.constant 0 : i32
    %c0_i32_1 = arith.constant 0 : i32
    return %arg0, %c0_i32, %c0_i32_0 : i32, i32, i32
  }
  func.func @transform_1(%arg0: i32) -> (i32, i32) {
    %c0_i32 = arith.constant 0 : i32
    %c0_i32_0 = arith.constant 0 : i32
    %c0_i32_1 = arith.constant 0 : i32
    return %c0_i32, %c0_i32_0 : i32, i32
  }
  func.func @transform_2(%arg0: i32) -> (i32, i32) {
    %c0_i32 = arith.constant 0 : i32
    %c0_i32_0 = arith.constant 0 : i32
    %c0_i32_1 = arith.constant 0 : i32
    return %c0_i32, %c0_i32_0 : i32, i32
  }
  func.func @transform_3(%arg0: i32) -> (i32, i32) {
    %c0_i32 = arith.constant 0 : i32
    %c0_i32_0 = arith.constant 0 : i32
    %c0_i32_1 = arith.constant 0 : i32
    return %c0_i32, %c0_i32_0 : i32, i32
  }
  func.func @transform_4(%arg0: i32) -> (i32, i32, i32) {
    %c0_i32 = arith.constant 0 : i32
    %c0_i32_0 = arith.constant 0 : i32
    %c0_i32_1 = arith.constant 0 : i32
    return %arg0, %c0_i32, %c0_i32_0 : i32, i32, i32
  }
}

module attributes {stable_mosaic.version = 11 : i64} {
  func.func @_matmul_conv_kernel(%arg0: i32, %arg1: memref<1x144x128xbf16, #tpu.memory_space<vmem>>, %arg2: memref<32x144xbf16, #tpu.memory_space<vmem>>, %arg3: memref<32x1xf32, #tpu.memory_space<vmem>>, %arg4: memref<1x128xf32, #tpu.memory_space<vmem>>, %arg5: memref<1x32x128xbf16, #tpu.memory_space<vmem>>) attributes {dimension_semantics = [#tpu.dimension_semantics<parallel>], iteration_bounds = array<i64: 2>, scalar_prefetch = 0 : i64, scratch_operands = 0 : i64, tpu.core_type = #tpu.core_type<tc>, window_params = [{transform_indices = @transform_0, window_bounds = array<i64: 1, 144, 128>}, {pipeline_mode = #tpu.pipeline_mode<synchronous>, transform_indices = @transform_1, window_bounds = array<i64: 32, 144>}, {pipeline_mode = #tpu.pipeline_mode<synchronous>, transform_indices = @transform_2, window_bounds = array<i64: 32, 1>}, {pipeline_mode = #tpu.pipeline_mode<synchronous>, transform_indices = @transform_3, window_bounds = array<i64: 1, 128>}, {transform_indices = @transform_4, window_bounds = array<i64: 1, 32, 128>}]} {
    %c0 = arith.constant 0 : index
    %c0_0 = arith.constant 0 : index
    %0 = vector.load %arg2[%c0, %c0_0] : memref<32x144xbf16, #tpu.memory_space<vmem>>, vector<32x144xbf16>
    %c0_1 = arith.constant 0 : index
    %c0_2 = arith.constant 0 : index
    %c0_3 = arith.constant 0 : index
    %1 = vector.load %arg1[%c0_1, %c0_2, %c0_3] : memref<1x144x128xbf16, #tpu.memory_space<vmem>>, vector<1x144x128xbf16>
    %2 = vector.shape_cast %1 : vector<1x144x128xbf16> to vector<144x128xbf16>
    %cst = arith.constant dense<0.000000e+00> : vector<32x128xf32>
    %3 = tpu.matmul %0, %2, %cst {dimension_numbers = #tpu.dot_dimension_numbers<[1], [0], [0], [1], [0, 0, 1, 1], [], []>} : vector<32x144xbf16>, vector<144x128xbf16>, vector<32x128xf32> -> vector<32x128xf32>
    %c0_4 = arith.constant 0 : index
    %c0_5 = arith.constant 0 : index
    %4 = vector.load %arg3[%c0_4, %c0_5] : memref<32x1xf32, #tpu.memory_space<vmem>>, vector<32x1xf32>
    %5 = vector.broadcast %4 : vector<32x1xf32> to vector<32x128xf32>
    %6 = arith.addf %3, %5 : vector<32x128xf32>
    %c0_6 = arith.constant 0 : index
    %c0_7 = arith.constant 0 : index
    %7 = vector.load %arg4[%c0_6, %c0_7] : memref<1x128xf32, #tpu.memory_space<vmem>>, vector<1x128xf32>
    %8 = vector.broadcast %7 : vector<1x128xf32> to vector<32x128xf32>
    %9 = arith.mulf %6, %8 : vector<32x128xf32>
    %cst_8 = arith.constant dense<0.000000e+00> : vector<32xf32>
    %10 = vector.multi_reduction <add>, %9, %cst_8 [1] : vector<32x128xf32> to vector<32xf32>
    %11 = vector.shape_cast %10 : vector<32xf32> to vector<32x1xf32>
    %12 = arith.mulf %9, %9 : vector<32x128xf32>
    %cst_9 = arith.constant dense<0.000000e+00> : vector<32xf32>
    %13 = vector.multi_reduction <add>, %12, %cst_9 [1] : vector<32x128xf32> to vector<32xf32>
    %14 = vector.shape_cast %13 : vector<32xf32> to vector<32x1xf32>
    %cst_10 = arith.constant 6.250000e-02 : f32
    %15 = vector.broadcast %cst_10 : f32 to vector<32x1xf32>
    %16 = arith.mulf %11, %15 : vector<32x1xf32>
    %cst_11 = arith.constant 6.250000e-02 : f32
    %17 = vector.broadcast %cst_11 : f32 to vector<32x1xf32>
    %18 = arith.mulf %14, %17 : vector<32x1xf32>
    %19 = arith.mulf %16, %16 : vector<32x1xf32>
    %20 = arith.subf %18, %19 : vector<32x1xf32>
    %cst_12 = arith.constant 0.000000e+00 : f32
    %21 = vector.broadcast %cst_12 : f32 to vector<32x1xf32>
    %22 = arith.maximumf %20, %21 : vector<32x1xf32>
    %23 = vector.broadcast %16 : vector<32x1xf32> to vector<32x128xf32>
    %24 = arith.subf %6, %23 : vector<32x128xf32>
    %cst_13 = arith.constant 9.99999974E-6 : f32
    %25 = vector.broadcast %cst_13 : f32 to vector<32x1xf32>
    %26 = arith.addf %22, %25 : vector<32x1xf32>
    %27 = math.rsqrt %26 : vector<32x1xf32>
    %28 = vector.broadcast %27 : vector<32x1xf32> to vector<32x128xf32>
    %29 = arith.mulf %24, %28 : vector<32x128xf32>
    %cst_14 = arith.constant 0.000000e+00 : f32
    %30 = vector.broadcast %cst_14 : f32 to vector<32x128xf32>
    %31 = arith.maximumf %29, %30 : vector<32x128xf32>
    %32 = arith.truncf %31 : vector<32x128xf32> to vector<32x128xbf16>
    %c0_15 = arith.constant 0 : index
    %c0_16 = arith.constant 0 : index
    %c0_17 = arith.constant 0 : index
    %33 = vector.load %arg5[%c0_15, %c0_16, %c0_17] : memref<1x32x128xbf16, #tpu.memory_space<vmem>>, vector<1x32x128xbf16>
    %34 = vector.shape_cast %33 : vector<1x32x128xbf16> to vector<32x128xbf16>
    %35 = vector.shape_cast %32 : vector<32x128xbf16> to vector<1x32x128xbf16>
    tpu.vector_store %arg5[%c0_15, %c0_16, %c0_17], %35 {strides = array<i32>} : memref<1x32x128xbf16, #tpu.memory_space<vmem>>, vector<1x32x128xbf16>,
    return
  }
  func.func @transform_0(%arg0: i32) -> (i32, i32, i32) {
    %c0_i32 = arith.constant 0 : i32
    %c0_i32_0 = arith.constant 0 : i32
    %c0_i32_1 = arith.constant 0 : i32
    return %arg0, %c0_i32, %c0_i32_0 : i32, i32, i32
  }
  func.func @transform_1(%arg0: i32) -> (i32, i32) {
    %c0_i32 = arith.constant 0 : i32
    %c0_i32_0 = arith.constant 0 : i32
    %c0_i32_1 = arith.constant 0 : i32
    return %c0_i32, %c0_i32_0 : i32, i32
  }
  func.func @transform_2(%arg0: i32) -> (i32, i32) {
    %c0_i32 = arith.constant 0 : i32
    %c0_i32_0 = arith.constant 0 : i32
    %c0_i32_1 = arith.constant 0 : i32
    return %c0_i32, %c0_i32_0 : i32, i32
  }
  func.func @transform_3(%arg0: i32) -> (i32, i32) {
    %c0_i32 = arith.constant 0 : i32
    %c0_i32_0 = arith.constant 0 : i32
    %c0_i32_1 = arith.constant 0 : i32
    return %c0_i32, %c0_i32_0 : i32, i32
  }
  func.func @transform_4(%arg0: i32) -> (i32, i32, i32) {
    %c0_i32 = arith.constant 0 : i32
    %c0_i32_0 = arith.constant 0 : i32
    %c0_i32_1 = arith.constant 0 : i32
    return %arg0, %c0_i32, %c0_i32_0 : i32, i32, i32
  }
}

module attributes {stable_mosaic.version = 11 : i64} {
  func.func @_tap_conv_kernel(%arg0: i32, %arg1: memref<1x32x256xbf16, #tpu.memory_space<vmem>>, %arg2: memref<9x32x32xbf16, #tpu.memory_space<vmem>>, %arg3: memref<32x1xf32, #tpu.memory_space<vmem>>, %arg4: memref<1x128xf32, #tpu.memory_space<vmem>>, %arg5: memref<1x32x128xbf16, #tpu.memory_space<vmem>>) attributes {dimension_semantics = [#tpu.dimension_semantics<parallel>], iteration_bounds = array<i64: 2>, scalar_prefetch = 0 : i64, scratch_operands = 0 : i64, tpu.core_type = #tpu.core_type<tc>, window_params = [{transform_indices = @transform_0, window_bounds = array<i64: 1, 32, 256>}, {pipeline_mode = #tpu.pipeline_mode<synchronous>, transform_indices = @transform_1, window_bounds = array<i64: 9, 32, 32>}, {pipeline_mode = #tpu.pipeline_mode<synchronous>, transform_indices = @transform_2, window_bounds = array<i64: 32, 1>}, {pipeline_mode = #tpu.pipeline_mode<synchronous>, transform_indices = @transform_3, window_bounds = array<i64: 1, 128>}, {transform_indices = @transform_4, window_bounds = array<i64: 1, 32, 128>}]} {
    %c0 = arith.constant 0 : index
    %c0_0 = arith.constant 0 : index
    %c0_1 = arith.constant 0 : index
    %0 = vector.load %arg1[%c0, %c0_0, %c0_1] : memref<1x32x256xbf16, #tpu.memory_space<vmem>>, vector<1x32x256xbf16>
    %1 = vector.shape_cast %0 : vector<1x32x256xbf16> to vector<32x256xbf16>
    %cst = arith.constant 0.000000e+00 : f32
    %2 = vector.broadcast %cst : f32 to vector<32x128xf32>
    %3 = vector.extract_strided_slice %1 {offsets = [0, 0], sizes = [32, 128], strides = [1, 1]} : vector<32x256xbf16> to vector<32x128xbf16>
    %c0_2 = arith.constant 0 : index
    %c0_3 = arith.constant 0 : index
    %c0_4 = arith.constant 0 : index
    %4 = vector.load %arg2[%c0_2, %c0_3, %c0_4] : memref<9x32x32xbf16, #tpu.memory_space<vmem>>, vector<1x32x32xbf16>
    %5 = vector.shape_cast %4 : vector<1x32x32xbf16> to vector<32x32xbf16>
    %cst_5 = arith.constant dense<0.000000e+00> : vector<32x128xf32>
    %6 = tpu.matmul %5, %3, %cst_5 {dimension_numbers = #tpu.dot_dimension_numbers<[1], [0], [0], [1], [0, 0, 1, 1], [], []>} : vector<32x32xbf16>, vector<32x128xbf16>, vector<32x128xf32> -> vector<32x128xf32>
    %7 = arith.addf %2, %6 : vector<32x128xf32>
    %8 = vector.extract_strided_slice %1 {offsets = [0, 1], sizes = [32, 128], strides = [1, 1]} : vector<32x256xbf16> to vector<32x128xbf16>
    %c1 = arith.constant 1 : index
    %c0_6 = arith.constant 0 : index
    %c0_7 = arith.constant 0 : index
    %9 = vector.load %arg2[%c1, %c0_6, %c0_7] : memref<9x32x32xbf16, #tpu.memory_space<vmem>>, vector<1x32x32xbf16>
    %10 = vector.shape_cast %9 : vector<1x32x32xbf16> to vector<32x32xbf16>
    %cst_8 = arith.constant dense<0.000000e+00> : vector<32x128xf32>
    %11 = tpu.matmul %10, %8, %cst_8 {dimension_numbers = #tpu.dot_dimension_numbers<[1], [0], [0], [1], [0, 0, 1, 1], [], []>} : vector<32x32xbf16>, vector<32x128xbf16>, vector<32x128xf32> -> vector<32x128xf32>
    %12 = arith.addf %7, %11 : vector<32x128xf32>
    %13 = vector.extract_strided_slice %1 {offsets = [0, 2], sizes = [32, 128], strides = [1, 1]} : vector<32x256xbf16> to vector<32x128xbf16>
    %c2 = arith.constant 2 : index
    %c0_9 = arith.constant 0 : index
    %c0_10 = arith.constant 0 : index
    %14 = vector.load %arg2[%c2, %c0_9, %c0_10] : memref<9x32x32xbf16, #tpu.memory_space<vmem>>, vector<1x32x32xbf16>
    %15 = vector.shape_cast %14 : vector<1x32x32xbf16> to vector<32x32xbf16>
    %cst_11 = arith.constant dense<0.000000e+00> : vector<32x128xf32>
    %16 = tpu.matmul %15, %13, %cst_11 {dimension_numbers = #tpu.dot_dimension_numbers<[1], [0], [0], [1], [0, 0, 1, 1], [], []>} : vector<32x32xbf16>, vector<32x128xbf16>, vector<32x128xf32> -> vector<32x128xf32>
    %17 = arith.addf %12, %16 : vector<32x128xf32>
    %18 = vector.extract_strided_slice %1 {offsets = [0, 6], sizes = [32, 128], strides = [1, 1]} : vector<32x256xbf16> to vector<32x128xbf16>
    %c3 = arith.constant 3 : index
    %c0_12 = arith.constant 0 : index
    %c0_13 = arith.constant 0 : index
    %19 = vector.load %arg2[%c3, %c0_12, %c0_13] : memref<9x32x32xbf16, #tpu.memory_space<vmem>>, vector<1x32x32xbf16>
    %20 = vector.shape_cast %19 : vector<1x32x32xbf16> to vector<32x32xbf16>
    %cst_14 = arith.constant dense<0.000000e+00> : vector<32x128xf32>
    %21 = tpu.matmul %20, %18, %cst_14 {dimension_numbers = #tpu.dot_dimension_numbers<[1], [0], [0], [1], [0, 0, 1, 1], [], []>} : vector<32x32xbf16>, vector<32x128xbf16>, vector<32x128xf32> -> vector<32x128xf32>
    %22 = arith.addf %17, %21 : vector<32x128xf32>
    %23 = vector.extract_strided_slice %1 {offsets = [0, 7], sizes = [32, 128], strides = [1, 1]} : vector<32x256xbf16> to vector<32x128xbf16>
    %c4 = arith.constant 4 : index
    %c0_15 = arith.constant 0 : index
    %c0_16 = arith.constant 0 : index
    %24 = vector.load %arg2[%c4, %c0_15, %c0_16] : memref<9x32x32xbf16, #tpu.memory_space<vmem>>, vector<1x32x32xbf16>
    %25 = vector.shape_cast %24 : vector<1x32x32xbf16> to vector<32x32xbf16>
    %cst_17 = arith.constant dense<0.000000e+00> : vector<32x128xf32>
    %26 = tpu.matmul %25, %23, %cst_17 {dimension_numbers = #tpu.dot_dimension_numbers<[1], [0], [0], [1], [0, 0, 1, 1], [], []>} : vector<32x32xbf16>, vector<32x128xbf16>, vector<32x128xf32> -> vector<32x128xf32>
    %27 = arith.addf %22, %26 : vector<32x128xf32>
    %28 = vector.extract_strided_slice %1 {offsets = [0, 8], sizes = [32, 128], strides = [1, 1]} : vector<32x256xbf16> to vector<32x128xbf16>
    %c5 = arith.constant 5 : index
    %c0_18 = arith.constant 0 : index
    %c0_19 = arith.constant 0 : index
    %29 = vector.load %arg2[%c5, %c0_18, %c0_19] : memref<9x32x32xbf16, #tpu.memory_space<vmem>>, vector<1x32x32xbf16>
    %30 = vector.shape_cast %29 : vector<1x32x32xbf16> to vector<32x32xbf16>
    %cst_20 = arith.constant dense<0.000000e+00> : vector<32x128xf32>
    %31 = tpu.matmul %30, %28, %cst_20 {dimension_numbers = #tpu.dot_dimension_numbers<[1], [0], [0], [1], [0, 0, 1, 1], [], []>} : vector<32x32xbf16>, vector<32x128xbf16>, vector<32x128xf32> -> vector<32x128xf32>
    %32 = arith.addf %27, %31 : vector<32x128xf32>
    %33 = vector.extract_strided_slice %1 {offsets = [0, 12], sizes = [32, 128], strides = [1, 1]} : vector<32x256xbf16> to vector<32x128xbf16>
    %c6 = arith.constant 6 : index
    %c0_21 = arith.constant 0 : index
    %c0_22 = arith.constant 0 : index
    %34 = vector.load %arg2[%c6, %c0_21, %c0_22] : memref<9x32x32xbf16, #tpu.memory_space<vmem>>, vector<1x32x32xbf16>
    %35 = vector.shape_cast %34 : vector<1x32x32xbf16> to vector<32x32xbf16>
    %cst_23 = arith.constant dense<0.000000e+00> : vector<32x128xf32>
    %36 = tpu.matmul %35, %33, %cst_23 {dimension_numbers = #tpu.dot_dimension_numbers<[1], [0], [0], [1], [0, 0, 1, 1], [], []>} : vector<32x32xbf16>, vector<32x128xbf16>, vector<32x128xf32> -> vector<32x128xf32>
    %37 = arith.addf %32, %36 : vector<32x128xf32>
    %38 = vector.extract_strided_slice %1 {offsets = [0, 13], sizes = [32, 128], strides = [1, 1]} : vector<32x256xbf16> to vector<32x128xbf16>
    %c7 = arith.constant 7 : index
    %c0_24 = arith.constant 0 : index
    %c0_25 = arith.constant 0 : index
    %39 = vector.load %arg2[%c7, %c0_24, %c0_25] : memref<9x32x32xbf16, #tpu.memory_space<vmem>>, vector<1x32x32xbf16>
    %40 = vector.shape_cast %39 : vector<1x32x32xbf16> to vector<32x32xbf16>
    %cst_26 = arith.constant dense<0.000000e+00> : vector<32x128xf32>
    %41 = tpu.matmul %40, %38, %cst_26 {dimension_numbers = #tpu.dot_dimension_numbers<[1], [0], [0], [1], [0, 0, 1, 1], [], []>} : vector<32x32xbf16>, vector<32x128xbf16>, vector<32x128xf32> -> vector<32x128xf32>
    %42 = arith.addf %37, %41 : vector<32x128xf32>
    %43 = vector.extract_strided_slice %1 {offsets = [0, 14], sizes = [32, 128], strides = [1, 1]} : vector<32x256xbf16> to vector<32x128xbf16>
    %c8 = arith.constant 8 : index
    %c0_27 = arith.constant 0 : index
    %c0_28 = arith.constant 0 : index
    %44 = vector.load %arg2[%c8, %c0_27, %c0_28] : memref<9x32x32xbf16, #tpu.memory_space<vmem>>, vector<1x32x32xbf16>
    %45 = vector.shape_cast %44 : vector<1x32x32xbf16> to vector<32x32xbf16>
    %cst_29 = arith.constant dense<0.000000e+00> : vector<32x128xf32>
    %46 = tpu.matmul %45, %43, %cst_29 {dimension_numbers = #tpu.dot_dimension_numbers<[1], [0], [0], [1], [0, 0, 1, 1], [], []>} : vector<32x32xbf16>, vector<32x128xbf16>, vector<32x128xf32> -> vector<32x128xf32>
    %47 = arith.addf %42, %46 : vector<32x128xf32>
    %c0_30 = arith.constant 0 : index
    %c0_31 = arith.constant 0 : index
    %48 = vector.load %arg3[%c0_30, %c0_31] : memref<32x1xf32, #tpu.memory_space<vmem>>, vector<32x1xf32>
    %49 = vector.broadcast %48 : vector<32x1xf32> to vector<32x128xf32>
    %50 = arith.addf %47, %49 : vector<32x128xf32>
    %c0_32 = arith.constant 0 : index
    %c0_33 = arith.constant 0 : index
    %51 = vector.load %arg4[%c0_32, %c0_33] : memref<1x128xf32, #tpu.memory_space<vmem>>, vector<1x128xf32>
    %52 = vector.broadcast %51 : vector<1x128xf32> to vector<32x128xf32>
    %53 = arith.mulf %50, %52 : vector<32x128xf32>
    %cst_34 = arith.constant dense<0.000000e+00> : vector<32xf32>
    %54 = vector.multi_reduction <add>, %53, %cst_34 [1] : vector<32x128xf32> to vector<32xf32>
    %55 = vector.shape_cast %54 : vector<32xf32> to vector<32x1xf32>
    %56 = arith.mulf %53, %53 : vector<32x128xf32>
    %cst_35 = arith.constant dense<0.000000e+00> : vector<32xf32>
    %57 = vector.multi_reduction <add>, %56, %cst_35 [1] : vector<32x128xf32> to vector<32xf32>
    %58 = vector.shape_cast %57 : vector<32xf32> to vector<32x1xf32>
    %cst_36 = arith.constant 6.250000e-02 : f32
    %59 = vector.broadcast %cst_36 : f32 to vector<32x1xf32>
    %60 = arith.mulf %55, %59 : vector<32x1xf32>
    %cst_37 = arith.constant 6.250000e-02 : f32
    %61 = vector.broadcast %cst_37 : f32 to vector<32x1xf32>
    %62 = arith.mulf %58, %61 : vector<32x1xf32>
    %63 = arith.mulf %60, %60 : vector<32x1xf32>
    %64 = arith.subf %62, %63 : vector<32x1xf32>
    %cst_38 = arith.constant 0.000000e+00 : f32
    %65 = vector.broadcast %cst_38 : f32 to vector<32x1xf32>
    %66 = arith.maximumf %64, %65 : vector<32x1xf32>
    %67 = vector.broadcast %60 : vector<32x1xf32> to vector<32x128xf32>
    %68 = arith.subf %50, %67 : vector<32x128xf32>
    %cst_39 = arith.constant 9.99999974E-6 : f32
    %69 = vector.broadcast %cst_39 : f32 to vector<32x1xf32>
    %70 = arith.addf %66, %69 : vector<32x1xf32>
    %71 = math.rsqrt %70 : vector<32x1xf32>
    %72 = vector.broadcast %71 : vector<32x1xf32> to vector<32x128xf32>
    %73 = arith.mulf %68, %72 : vector<32x128xf32>
    %cst_40 = arith.constant 0.000000e+00 : f32
    %74 = vector.broadcast %cst_40 : f32 to vector<32x128xf32>
    %75 = arith.maximumf %73, %74 : vector<32x128xf32>
    %76 = arith.truncf %75 : vector<32x128xf32> to vector<32x128xbf16>
    %c0_41 = arith.constant 0 : index
    %c0_42 = arith.constant 0 : index
    %c0_43 = arith.constant 0 : index
    %77 = vector.load %arg5[%c0_41, %c0_42, %c0_43] : memref<1x32x128xbf16, #tpu.memory_space<vmem>>, vector<1x32x128xbf16>
    %78 = vector.shape_cast %77 : vector<1x32x128xbf16> to vector<32x128xbf16>
    %79 = vector.shape_cast %76 : vector<32x128xbf16> to vector<1x32x128xbf16>
    tpu.vector_store %arg5[%c0_41, %c0_42, %c0_43], %79 {strides = array<i32>} : memref<1x32x128xbf16, #tpu.memory_space<vmem>>, vector<1x32x128xbf16>,
    return
  }
  func.func @transform_0(%arg0: i32) -> (i32, i32, i32) {
    %c0_i32 = arith.constant 0 : i32
    %c0_i32_0 = arith.constant 0 : i32
    %c0_i32_1 = arith.constant 0 : i32
    return %arg0, %c0_i32, %c0_i32_0 : i32, i32, i32
  }
  func.func @transform_1(%arg0: i32) -> (i32, i32, i32) {
    %c0_i32 = arith.constant 0 : i32
    %c0_i32_0 = arith.constant 0 : i32
    %c0_i32_1 = arith.constant 0 : i32
    %c0_i32_2 = arith.constant 0 : i32
    return %c0_i32, %c0_i32_0, %c0_i32_1 : i32, i32, i32
  }
  func.func @transform_2(%arg0: i32) -> (i32, i32) {
    %c0_i32 = arith.constant 0 : i32
    %c0_i32_0 = arith.constant 0 : i32
    %c0_i32_1 = arith.constant 0 : i32
    return %c0_i32, %c0_i32_0 : i32, i32
  }
  func.func @transform_3(%arg0: i32) -> (i32, i32) {
    %c0_i32 = arith.constant 0 : i32
    %c0_i32_0 = arith.constant 0 : i32
    %c0_i32_1 = arith.constant 0 : i32
    return %c0_i32, %c0_i32_0 : i32, i32
  }
  func.func @transform_4(%arg0: i32) -> (i32, i32, i32) {
    %c0_i32 = arith.constant 0 : i32
    %c0_i32_0 = arith.constant 0 : i32
    %c0_i32_1 = arith.constant 0 : i32
    return %arg0, %c0_i32, %c0_i32_0 : i32, i32, i32
  }
}

module attributes {stable_mosaic.version = 11 : i64} {
  func.func @_tap_conv_kernel(%arg0: i32, %arg1: memref<1x32x256xbf16, #tpu.memory_space<vmem>>, %arg2: memref<9x32x32xbf16, #tpu.memory_space<vmem>>, %arg3: memref<32x1xf32, #tpu.memory_space<vmem>>, %arg4: memref<1x128xf32, #tpu.memory_space<vmem>>, %arg5: memref<1x32x128xbf16, #tpu.memory_space<vmem>>, %arg6: memref<1x32x128xbf16, #tpu.memory_space<vmem>>) attributes {dimension_semantics = [#tpu.dimension_semantics<parallel>], iteration_bounds = array<i64: 2>, scalar_prefetch = 0 : i64, scratch_operands = 0 : i64, tpu.core_type = #tpu.core_type<tc>, window_params = [{transform_indices = @transform_0, window_bounds = array<i64: 1, 32, 256>}, {pipeline_mode = #tpu.pipeline_mode<synchronous>, transform_indices = @transform_1, window_bounds = array<i64: 9, 32, 32>}, {pipeline_mode = #tpu.pipeline_mode<synchronous>, transform_indices = @transform_2, window_bounds = array<i64: 32, 1>}, {pipeline_mode = #tpu.pipeline_mode<synchronous>, transform_indices = @transform_3, window_bounds = array<i64: 1, 128>}, {transform_indices = @transform_4, window_bounds = array<i64: 1, 32, 128>}, {transform_indices = @transform_5, window_bounds = array<i64: 1, 32, 128>}]} {
    %c0 = arith.constant 0 : index
    %c0_0 = arith.constant 0 : index
    %c0_1 = arith.constant 0 : index
    %0 = vector.load %arg1[%c0, %c0_0, %c0_1] : memref<1x32x256xbf16, #tpu.memory_space<vmem>>, vector<1x32x256xbf16>
    %1 = vector.shape_cast %0 : vector<1x32x256xbf16> to vector<32x256xbf16>
    %cst = arith.constant 0.000000e+00 : f32
    %2 = vector.broadcast %cst : f32 to vector<32x128xf32>
    %3 = vector.extract_strided_slice %1 {offsets = [0, 0], sizes = [32, 128], strides = [1, 1]} : vector<32x256xbf16> to vector<32x128xbf16>
    %c0_2 = arith.constant 0 : index
    %c0_3 = arith.constant 0 : index
    %c0_4 = arith.constant 0 : index
    %4 = vector.load %arg2[%c0_2, %c0_3, %c0_4] : memref<9x32x32xbf16, #tpu.memory_space<vmem>>, vector<1x32x32xbf16>
    %5 = vector.shape_cast %4 : vector<1x32x32xbf16> to vector<32x32xbf16>
    %cst_5 = arith.constant dense<0.000000e+00> : vector<32x128xf32>
    %6 = tpu.matmul %5, %3, %cst_5 {dimension_numbers = #tpu.dot_dimension_numbers<[1], [0], [0], [1], [0, 0, 1, 1], [], []>} : vector<32x32xbf16>, vector<32x128xbf16>, vector<32x128xf32> -> vector<32x128xf32>
    %7 = arith.addf %2, %6 : vector<32x128xf32>
    %8 = vector.extract_strided_slice %1 {offsets = [0, 1], sizes = [32, 128], strides = [1, 1]} : vector<32x256xbf16> to vector<32x128xbf16>
    %c1 = arith.constant 1 : index
    %c0_6 = arith.constant 0 : index
    %c0_7 = arith.constant 0 : index
    %9 = vector.load %arg2[%c1, %c0_6, %c0_7] : memref<9x32x32xbf16, #tpu.memory_space<vmem>>, vector<1x32x32xbf16>
    %10 = vector.shape_cast %9 : vector<1x32x32xbf16> to vector<32x32xbf16>
    %cst_8 = arith.constant dense<0.000000e+00> : vector<32x128xf32>
    %11 = tpu.matmul %10, %8, %cst_8 {dimension_numbers = #tpu.dot_dimension_numbers<[1], [0], [0], [1], [0, 0, 1, 1], [], []>} : vector<32x32xbf16>, vector<32x128xbf16>, vector<32x128xf32> -> vector<32x128xf32>
    %12 = arith.addf %7, %11 : vector<32x128xf32>
    %13 = vector.extract_strided_slice %1 {offsets = [0, 2], sizes = [32, 128], strides = [1, 1]} : vector<32x256xbf16> to vector<32x128xbf16>
    %c2 = arith.constant 2 : index
    %c0_9 = arith.constant 0 : index
    %c0_10 = arith.constant 0 : index
    %14 = vector.load %arg2[%c2, %c0_9, %c0_10] : memref<9x32x32xbf16, #tpu.memory_space<vmem>>, vector<1x32x32xbf16>
    %15 = vector.shape_cast %14 : vector<1x32x32xbf16> to vector<32x32xbf16>
    %cst_11 = arith.constant dense<0.000000e+00> : vector<32x128xf32>
    %16 = tpu.matmul %15, %13, %cst_11 {dimension_numbers = #tpu.dot_dimension_numbers<[1], [0], [0], [1], [0, 0, 1, 1], [], []>} : vector<32x32xbf16>, vector<32x128xbf16>, vector<32x128xf32> -> vector<32x128xf32>
    %17 = arith.addf %12, %16 : vector<32x128xf32>
    %18 = vector.extract_strided_slice %1 {offsets = [0, 6], sizes = [32, 128], strides = [1, 1]} : vector<32x256xbf16> to vector<32x128xbf16>
    %c3 = arith.constant 3 : index
    %c0_12 = arith.constant 0 : index
    %c0_13 = arith.constant 0 : index
    %19 = vector.load %arg2[%c3, %c0_12, %c0_13] : memref<9x32x32xbf16, #tpu.memory_space<vmem>>, vector<1x32x32xbf16>
    %20 = vector.shape_cast %19 : vector<1x32x32xbf16> to vector<32x32xbf16>
    %cst_14 = arith.constant dense<0.000000e+00> : vector<32x128xf32>
    %21 = tpu.matmul %20, %18, %cst_14 {dimension_numbers = #tpu.dot_dimension_numbers<[1], [0], [0], [1], [0, 0, 1, 1], [], []>} : vector<32x32xbf16>, vector<32x128xbf16>, vector<32x128xf32> -> vector<32x128xf32>
    %22 = arith.addf %17, %21 : vector<32x128xf32>
    %23 = vector.extract_strided_slice %1 {offsets = [0, 7], sizes = [32, 128], strides = [1, 1]} : vector<32x256xbf16> to vector<32x128xbf16>
    %c4 = arith.constant 4 : index
    %c0_15 = arith.constant 0 : index
    %c0_16 = arith.constant 0 : index
    %24 = vector.load %arg2[%c4, %c0_15, %c0_16] : memref<9x32x32xbf16, #tpu.memory_space<vmem>>, vector<1x32x32xbf16>
    %25 = vector.shape_cast %24 : vector<1x32x32xbf16> to vector<32x32xbf16>
    %cst_17 = arith.constant dense<0.000000e+00> : vector<32x128xf32>
    %26 = tpu.matmul %25, %23, %cst_17 {dimension_numbers = #tpu.dot_dimension_numbers<[1], [0], [0], [1], [0, 0, 1, 1], [], []>} : vector<32x32xbf16>, vector<32x128xbf16>, vector<32x128xf32> -> vector<32x128xf32>
    %27 = arith.addf %22, %26 : vector<32x128xf32>
    %28 = vector.extract_strided_slice %1 {offsets = [0, 8], sizes = [32, 128], strides = [1, 1]} : vector<32x256xbf16> to vector<32x128xbf16>
    %c5 = arith.constant 5 : index
    %c0_18 = arith.constant 0 : index
    %c0_19 = arith.constant 0 : index
    %29 = vector.load %arg2[%c5, %c0_18, %c0_19] : memref<9x32x32xbf16, #tpu.memory_space<vmem>>, vector<1x32x32xbf16>
    %30 = vector.shape_cast %29 : vector<1x32x32xbf16> to vector<32x32xbf16>
    %cst_20 = arith.constant dense<0.000000e+00> : vector<32x128xf32>
    %31 = tpu.matmul %30, %28, %cst_20 {dimension_numbers = #tpu.dot_dimension_numbers<[1], [0], [0], [1], [0, 0, 1, 1], [], []>} : vector<32x32xbf16>, vector<32x128xbf16>, vector<32x128xf32> -> vector<32x128xf32>
    %32 = arith.addf %27, %31 : vector<32x128xf32>
    %33 = vector.extract_strided_slice %1 {offsets = [0, 12], sizes = [32, 128], strides = [1, 1]} : vector<32x256xbf16> to vector<32x128xbf16>
    %c6 = arith.constant 6 : index
    %c0_21 = arith.constant 0 : index
    %c0_22 = arith.constant 0 : index
    %34 = vector.load %arg2[%c6, %c0_21, %c0_22] : memref<9x32x32xbf16, #tpu.memory_space<vmem>>, vector<1x32x32xbf16>
    %35 = vector.shape_cast %34 : vector<1x32x32xbf16> to vector<32x32xbf16>
    %cst_23 = arith.constant dense<0.000000e+00> : vector<32x128xf32>
    %36 = tpu.matmul %35, %33, %cst_23 {dimension_numbers = #tpu.dot_dimension_numbers<[1], [0], [0], [1], [0, 0, 1, 1], [], []>} : vector<32x32xbf16>, vector<32x128xbf16>, vector<32x128xf32> -> vector<32x128xf32>
    %37 = arith.addf %32, %36 : vector<32x128xf32>
    %38 = vector.extract_strided_slice %1 {offsets = [0, 13], sizes = [32, 128], strides = [1, 1]} : vector<32x256xbf16> to vector<32x128xbf16>
    %c7 = arith.constant 7 : index
    %c0_24 = arith.constant 0 : index
    %c0_25 = arith.constant 0 : index
    %39 = vector.load %arg2[%c7, %c0_24, %c0_25] : memref<9x32x32xbf16, #tpu.memory_space<vmem>>, vector<1x32x32xbf16>
    %40 = vector.shape_cast %39 : vector<1x32x32xbf16> to vector<32x32xbf16>
    %cst_26 = arith.constant dense<0.000000e+00> : vector<32x128xf32>
    %41 = tpu.matmul %40, %38, %cst_26 {dimension_numbers = #tpu.dot_dimension_numbers<[1], [0], [0], [1], [0, 0, 1, 1], [], []>} : vector<32x32xbf16>, vector<32x128xbf16>, vector<32x128xf32> -> vector<32x128xf32>
    %42 = arith.addf %37, %41 : vector<32x128xf32>
    %43 = vector.extract_strided_slice %1 {offsets = [0, 14], sizes = [32, 128], strides = [1, 1]} : vector<32x256xbf16> to vector<32x128xbf16>
    %c8 = arith.constant 8 : index
    %c0_27 = arith.constant 0 : index
    %c0_28 = arith.constant 0 : index
    %44 = vector.load %arg2[%c8, %c0_27, %c0_28] : memref<9x32x32xbf16, #tpu.memory_space<vmem>>, vector<1x32x32xbf16>
    %45 = vector.shape_cast %44 : vector<1x32x32xbf16> to vector<32x32xbf16>
    %cst_29 = arith.constant dense<0.000000e+00> : vector<32x128xf32>
    %46 = tpu.matmul %45, %43, %cst_29 {dimension_numbers = #tpu.dot_dimension_numbers<[1], [0], [0], [1], [0, 0, 1, 1], [], []>} : vector<32x32xbf16>, vector<32x128xbf16>, vector<32x128xf32> -> vector<32x128xf32>
    %47 = arith.addf %42, %46 : vector<32x128xf32>
    %c0_30 = arith.constant 0 : index
    %c0_31 = arith.constant 0 : index
    %48 = vector.load %arg3[%c0_30, %c0_31] : memref<32x1xf32, #tpu.memory_space<vmem>>, vector<32x1xf32>
    %49 = vector.broadcast %48 : vector<32x1xf32> to vector<32x128xf32>
    %50 = arith.addf %47, %49 : vector<32x128xf32>
    %c0_32 = arith.constant 0 : index
    %c0_33 = arith.constant 0 : index
    %51 = vector.load %arg4[%c0_32, %c0_33] : memref<1x128xf32, #tpu.memory_space<vmem>>, vector<1x128xf32>
    %52 = vector.broadcast %51 : vector<1x128xf32> to vector<32x128xf32>
    %53 = arith.mulf %50, %52 : vector<32x128xf32>
    %cst_34 = arith.constant dense<0.000000e+00> : vector<32xf32>
    %54 = vector.multi_reduction <add>, %53, %cst_34 [1] : vector<32x128xf32> to vector<32xf32>
    %55 = vector.shape_cast %54 : vector<32xf32> to vector<32x1xf32>
    %56 = arith.mulf %53, %53 : vector<32x128xf32>
    %cst_35 = arith.constant dense<0.000000e+00> : vector<32xf32>
    %57 = vector.multi_reduction <add>, %56, %cst_35 [1] : vector<32x128xf32> to vector<32xf32>
    %58 = vector.shape_cast %57 : vector<32xf32> to vector<32x1xf32>
    %cst_36 = arith.constant 6.250000e-02 : f32
    %59 = vector.broadcast %cst_36 : f32 to vector<32x1xf32>
    %60 = arith.mulf %55, %59 : vector<32x1xf32>
    %cst_37 = arith.constant 6.250000e-02 : f32
    %61 = vector.broadcast %cst_37 : f32 to vector<32x1xf32>
    %62 = arith.mulf %58, %61 : vector<32x1xf32>
    %63 = arith.mulf %60, %60 : vector<32x1xf32>
    %64 = arith.subf %62, %63 : vector<32x1xf32>
    %cst_38 = arith.constant 0.000000e+00 : f32
    %65 = vector.broadcast %cst_38 : f32 to vector<32x1xf32>
    %66 = arith.maximumf %64, %65 : vector<32x1xf32>
    %67 = vector.broadcast %60 : vector<32x1xf32> to vector<32x128xf32>
    %68 = arith.subf %50, %67 : vector<32x128xf32>
    %cst_39 = arith.constant 9.99999974E-6 : f32
    %69 = vector.broadcast %cst_39 : f32 to vector<32x1xf32>
    %70 = arith.addf %66, %69 : vector<32x1xf32>
    %71 = math.rsqrt %70 : vector<32x1xf32>
    %72 = vector.broadcast %71 : vector<32x1xf32> to vector<32x128xf32>
    %73 = arith.mulf %68, %72 : vector<32x128xf32>
    %c0_40 = arith.constant 0 : index
    %c0_41 = arith.constant 0 : index
    %c0_42 = arith.constant 0 : index
    %74 = vector.load %arg5[%c0_40, %c0_41, %c0_42] : memref<1x32x128xbf16, #tpu.memory_space<vmem>>, vector<1x32x128xbf16>
    %75 = vector.shape_cast %74 : vector<1x32x128xbf16> to vector<32x128xbf16>
    %76 = arith.extf %75 : vector<32x128xbf16> to vector<32x128xf32>
    %77 = arith.addf %73, %76 : vector<32x128xf32>
    %78 = arith.truncf %77 : vector<32x128xf32> to vector<32x128xbf16>
    %c0_43 = arith.constant 0 : index
    %c0_44 = arith.constant 0 : index
    %c0_45 = arith.constant 0 : index
    %79 = vector.load %arg6[%c0_43, %c0_44, %c0_45] : memref<1x32x128xbf16, #tpu.memory_space<vmem>>, vector<1x32x128xbf16>
    %80 = vector.shape_cast %79 : vector<1x32x128xbf16> to vector<32x128xbf16>
    %81 = vector.shape_cast %78 : vector<32x128xbf16> to vector<1x32x128xbf16>
    tpu.vector_store %arg6[%c0_43, %c0_44, %c0_45], %81 {strides = array<i32>} : memref<1x32x128xbf16, #tpu.memory_space<vmem>>, vector<1x32x128xbf16>,
    return
  }
  func.func @transform_0(%arg0: i32) -> (i32, i32, i32) {
    %c0_i32 = arith.constant 0 : i32
    %c0_i32_0 = arith.constant 0 : i32
    %c0_i32_1 = arith.constant 0 : i32
    return %arg0, %c0_i32, %c0_i32_0 : i32, i32, i32
  }
  func.func @transform_1(%arg0: i32) -> (i32, i32, i32) {
    %c0_i32 = arith.constant 0 : i32
    %c0_i32_0 = arith.constant 0 : i32
    %c0_i32_1 = arith.constant 0 : i32
    %c0_i32_2 = arith.constant 0 : i32
    return %c0_i32, %c0_i32_0, %c0_i32_1 : i32, i32, i32
  }
  func.func @transform_2(%arg0: i32) -> (i32, i32) {
    %c0_i32 = arith.constant 0 : i32
    %c0_i32_0 = arith.constant 0 : i32
    %c0_i32_1 = arith.constant 0 : i32
    return %c0_i32, %c0_i32_0 : i32, i32
  }
  func.func @transform_3(%arg0: i32) -> (i32, i32) {
    %c0_i32 = arith.constant 0 : i32
    %c0_i32_0 = arith.constant 0 : i32
    %c0_i32_1 = arith.constant 0 : i32
    return %c0_i32, %c0_i32_0 : i32, i32
  }
  func.func @transform_4(%arg0: i32) -> (i32, i32, i32) {
    %c0_i32 = arith.constant 0 : i32
    %c0_i32_0 = arith.constant 0 : i32
    %c0_i32_1 = arith.constant 0 : i32
    return %arg0, %c0_i32, %c0_i32_0 : i32, i32, i32
  }
  func.func @transform_5(%arg0: i32) -> (i32, i32, i32) {
    %c0_i32 = arith.constant 0 : i32
    %c0_i32_0 = arith.constant 0 : i32
    %c0_i32_1 = arith.constant 0 : i32
    return %arg0, %c0_i32, %c0_i32_0 : i32, i32, i32
  }
}

</mosaic_0001>

<llo_original>
// kernel: encoder_content_reduce_forward.25
$region0: #{encoder_content_reduce_forward.25}
  #allocation0 [shape = 'u32[]', space=smem, size = 0x4, offset = 0x4, fixed_abs, tag = 'smem constant byte address 0x4 - core index']
  #allocation1 [shape = 'u32[144,128]{1,0:T(1,128)}', space=vmem, size = 0x12000, scoped, tag = 'internal scratch']
  %s0 = inlined_call_operand.vmem [shape: bf16[2,4,640], index: 0, kind: input, shape index: {}]
  %s1 = inlined_call_operand.vmem [shape: bf16[49,8,4], index: 1, kind: input, shape index: {}]
  %s2 = inlined_call_operand.vmem [shape: f32[8,1], index: 2, kind: input, shape index: {}]
  %s3 = inlined_call_operand.vmem [shape: bf16[2,8,384], index: 3, kind: output, shape index: {}]
  %s4 = sld [smem:[#allocation0]]
  $region45: #{encoder_content_reduce_forward.25} parent=0
    _
  %s6 = ssub.s32 1, %s4
  %s7 = scalar_select 0, %s6, %s4
  loop: start=0, step=1, limit=4
  $region2: #{encoder_content_reduce_forward.25} parent=0 // loop_pre_header
    _
  $region3: #{encoder_content_reduce_forward.25} parent=0 // loop_header
    %s9 = sphi 0, %s13
    %p10 = scmp.ge.s32.totalorder %s9, 4
    %s19 = sphi 0, %s21
    %s22 = sphi 0, %s19
    %s23 = sphi 0, %s22
    %s39 = sphi 0, %s23
    %s43 = sphi 0, %s43
    %s45 = sphi 0, %s43
    %s46 = sphi 0, %s45
    %s60 = sphi 0, %s46
    %s64 = sphi 0, %s64
    %s66 = sphi 0, %s64
    %s67 = sphi 0, %s66
    %s81 = sphi 0, %s67
    %s87 = sphi 0, %s89
    %s90 = sphi 0, %s87
    %s91 = sphi 0, %s90
    %s107 = sphi 0, %s91
  $region4: #{encoder_content_reduce_forward.25} parent=0 // loop_header_branch
    %12 = sbr.rel (%p10) target = $region8
  $region5: #{encoder_content_reduce_forward.25} parent=0 // loop_body
    %s14 = ssub.s32 %s9, 1
    %s15 = ssub.s32 %s9, 2
    %s16 = sadd.s32 %s9, 1
    %s17 = ssub.s32 %s9, %s16
    %p18 = scmp.eq.s32.totalorder %s17, 0
    %s20 = sadd.s32 %s19, 1
    %s21 = scalar_select %p18, %s19, %s20
    %p24 = pneg %p18
    %p25 = scmp.eq.s32.totalorder %s9, 1
    %p26 = por %p24, %p25
    %p27 = scmp.ne.s32.totalorder %s19, %s22
    %p28 = scmp.eq.s32.totalorder %s9, 0
    %p29 = por %p27, %p28
    %p30 = scmp.ne.s32.totalorder %s19, %s22
    %p31 = scmp.eq.s32.totalorder %s14, 1
    %p32 = por %p30, %p31
    %p33 = scmp.ne.s32.totalorder %s22, %s23
    %p34 = scmp.eq.s32.totalorder %s14, 0
    %p35 = por %p33, %p34
    %p36 = scmp.ne.s32.totalorder %s22, %s23
    %p37 = scmp.eq.s32.totalorder %s15, 1
    %p38 = por %p36, %p37
    %p40 = scmp.ne.s32.totalorder %s23, %s39
    %p41 = scmp.eq.s32.totalorder %s15, 0
    %p42 = por %p40, %p41
    %s44 = sadd.s32 %s43, 1
    %p47 = scmp.eq.s32.totalorder %s9, 1
    %p48 = scmp.ne.s32.totalorder %s43, %s45
    %p49 = scmp.eq.s32.totalorder %s9, 0
    %p50 = por %p48, %p49
    %p51 = scmp.ne.s32.totalorder %s43, %s45
    %p52 = scmp.eq.s32.totalorder %s14, 1
    %p53 = por %p51, %p52
    %p54 = scmp.ne.s32.totalorder %s45, %s46
    %p55 = scmp.eq.s32.totalorder %s14, 0
    %p56 = por %p54, %p55
    %p57 = scmp.ne.s32.totalorder %s45, %s46
    %p58 = scmp.eq.s32.totalorder %s15, 1
    %p59 = por %p57, %p58
    %p61 = scmp.ne.s32.totalorder %s46, %s60
    %p62 = scmp.eq.s32.totalorder %s15, 0
    %p63 = por %p61, %p62
    %s65 = sadd.s32 %s64, 1
    %p68 = scmp.eq.s32.totalorder %s9, 1
    %p69 = scmp.ne.s32.totalorder %s64, %s66
    %p70 = scmp.eq.s32.totalorder %s9, 0
    %p71 = por %p69, %p70
    %p72 = scmp.ne.s32.totalorder %s64, %s66
    %p73 = scmp.eq.s32.totalorder %s14, 1
    %p74 = por %p72, %p73
    %p75 = scmp.ne.s32.totalorder %s66, %s67
    %p76 = scmp.eq.s32.totalorder %s14, 0
    %p77 = por %p75, %p76
    %p78 = scmp.ne.s32.totalorder %s66, %s67
    %p79 = scmp.eq.s32.totalorder %s15, 1
    %p80 = por %p78, %p79
    %p82 = scmp.ne.s32.totalorder %s67, %s81
    %p83 = scmp.eq.s32.totalorder %s15, 0
    %p84 = por %p82, %p83
    %s85 = ssub.s32 %s9, %s16
    %p86 = scmp.eq.s32.totalorder %s85, 0
    %s88 = sadd.s32 %s87, 1
    %s89 = scalar_select %p86, %s87, %s88
    %p92 = pneg %p86
    %p93 = scmp.eq.s32.totalorder %s9, 1
    %p94 = por %p92, %p93
    %p95 = scmp.ne.s32.totalorder %s87, %s90
    %p96 = scmp.eq.s32.totalorder %s9, 0
    %p97 = por %p95, %p96
    %p98 = scmp.ne.s32.totalorder %s87, %s90
    %p99 = scmp.eq.s32.totalorder %s14, 1
    %p100 = por %p98, %p99
    %p101 = scmp.ne.s32.totalorder %s90, %s91
    %p102 = scmp.eq.s32.totalorder %s14, 0
    %p103 = por %p101, %p102
    %p104 = scmp.ne.s32.totalorder %s90, %s91
    %p105 = scmp.eq.s32.totalorder %s15, 1
    %p106 = por %p104, %p105
    %p108 = scmp.ne.s32.totalorder %s91, %s107
    %p109 = scmp.eq.s32.totalorder %s15, 0
    %p110 = por %p108, %p109
    %p111 = scmp.le.s32.totalorder 1, %s9
    %p112 = scmp.lt.s32.totalorder %s9, 3
    %p113 = pnand %p111, %p112
    %p114 = pneg %p113
    // Predicated region
    $region9: #{encoder_content_reduce_forward.25} parent=5 // pred_check
      _
    $region10: #{encoder_content_reduce_forward.25} parent=5 // pred_check_branch
      %116 = sbr.rel (%p113) target = $region12
    $region11: #{encoder_content_reduce_forward.25} parent=5 // pred_region
      %s117 = ssub.s32 %s9, 1
      // Predicated region
      $region13: #{encoder_content_reduce_forward.25} parent=11 // pred_check
        %p118 = pneg %p56
      $region14: #{encoder_content_reduce_forward.25} parent=11 // pred_check_branch
        %120 = sbr.rel (%p118) target = $region16
      $region15: #{encoder_content_reduce_forward.25} parent=11 // pred_region
        _
      $region16: #{encoder_content_reduce_forward.25} parent=11 // pred_fallthru
        _
      // Predicated region
      $region17: #{encoder_content_reduce_forward.25} parent=11 // pred_check
        %p121 = pneg %p77
      $region18: #{encoder_content_reduce_forward.25} parent=11 // pred_check_branch
        %123 = sbr.rel (%p121) target = $region20
      $region19: #{encoder_content_reduce_forward.25} parent=11 // pred_region
        _
      $region20: #{encoder_content_reduce_forward.25} parent=11 // pred_fallthru
        _
    $region12: #{encoder_content_reduce_forward.25} parent=5 // pred_fallthru
      _
    %p124 = scmp.lt.s32.totalorder %s9, 2
    // Predicated region
    $region21: #{encoder_content_reduce_forward.25} parent=5 // pred_check
      %p125 = pneg %p124
    $region22: #{encoder_content_reduce_forward.25} parent=5 // pred_check_branch
      %127 = sbr.rel (%p125) target = $region24
    $region23: #{encoder_content_reduce_forward.25} parent=5 // pred_region
      // Predicated region
      $region25: #{encoder_content_reduce_forward.25} parent=23 // pred_check
        %p128 = pneg %p29
      $region26: #{encoder_content_reduce_forward.25} parent=23 // pred_check_branch
        %130 = sbr.rel (%p128) target = $region28
      $region27: #{encoder_content_reduce_forward.25} parent=23 // pred_region
        %p131 = scmp.lt.s32.totalorder %s9, 1
        %s132 = scalar_select %p131, %s9, 1
        %s133 = smul.addr %s132, 5
        %s134 = smul.addr %s133, 2
        %s135 = scalar_lea.vmem %s0, %s134
      $region28: #{encoder_content_reduce_forward.25} parent=23 // pred_fallthru
        _
    $region24: #{encoder_content_reduce_forward.25} parent=5 // pred_fallthru
      _
    %p136 = scmp.le.s32.totalorder 1, %s9
    %p137 = scmp.lt.s32.totalorder %s9, 3
    %p138 = pnand %p136, %p137
    %p139 = pneg %p138
    // Predicated region
    $region29: #{encoder_content_reduce_forward.25} parent=5 // pred_check
      _
    $region30: #{encoder_content_reduce_forward.25} parent=5 // pred_check_branch
      %141 = sbr.rel (%p138) target = $region32
    $region31: #{encoder_content_reduce_forward.25} parent=5 // pred_region
      %s142 = ssub.s32 %s9, 1
      %p143 = scmp.lt.s32.totalorder %s14, 1
      %s144 = scalar_select %p143, %s14, 1
      %s145 = smul.addr %s144, 5
      %s146 = smul.addr %s145, 2
      %s147 = scalar_lea.vmem %s0, %s146
      %p148 = pneg %p35
      %p149 = pneg %p32
      %p150 = pneg %p56
      %p151 = pneg %p53
      %p152 = pneg %p77
      %p153 = pneg %p74
      %p154 = pneg %p103
      %p155 = pneg %p100
      %p156 = scmp.lt.s32.totalorder %s14, 1
      %s157 = scalar_select %p156, %s14, 1
      %s158 = smul.addr %s157, 3
      %s159 = smul.addr %s158, 4
      %s160 = scalar_lea.vmem %s3, %s159
      %p161 = scmp.lt.s32.totalorder %s14, 1
      %s162 = scalar_select %p161, %s14, 1
      %s163 = smul.addr %s162, 5
      %s164 = smul.addr %s163, 2
      %s165 = scalar_lea.vmem %s0, %s164
      %p166 = scmp.lt.s32.totalorder %s14, 1
      %s167 = scalar_select %p166, %s14, 1
      %s168 = smul.addr %s167, 3
      %s169 = smul.addr %s168, 4
      %s170 = scalar_lea.vmem %s3, %s169
      %v172 = vld [vmem:[%s165] sm:$0xff]
      %v173 = vld [vmem:[%s165 + $0x8] sm:$0x3]
      %v174 = vld [vmem:[%s1] sm:$0xf]
      %s175 = scalar_lea.vmem %s1, 4
      %v176 = vld [vmem:[%s175] sm:$0xf]
      %v178 = vcombine.high %v172, %v172
      %v180 = vunpack.c.l.s4 1983009808
      %v181 = vunpack.c.0.s8 %v180
      %v182 = vlaneseq
      %v183 = vshrl.u32 %v182, 7
      %v184 = vsub.s32 %v181, %v183
      %v185 = vrot.slane %v172, %v184
      %v187 = vunpack.c.l.s4 1983009808
      %v188 = vunpack.c.0.s8 %v187
      %v189 = vlaneseq
      %v190 = vshrl.u32 %v189, 7
      %v191 = vsub.s32 %v188, %v190
      %v192 = vrot.slane %v178, %v191
      %v193 = vcombine.high %v185, %v185
      %v194 = vcombine.high %v192, %v192
      %195 = vrot.lane.b32.xlu0 %v185, 127
      %v196 = vpop.permute.xlu0 %195
      %197 = vrot.lane.b32.xlu0 %v193, 127
      %v198 = vpop.permute.xlu0 %197
      %199 = vrot.lane.b32.xlu0 %v192, 127
      %v200 = vpop.permute.xlu0 %199
      %201 = vrot.lane.b32.xlu0 %v194, 127
      %v202 = vpop.permute.xlu0 %201
      %vm203 = vcmask 1039360
      %v204 = vsel %vm203, %v196, %v198
      %v205 = vsel %vm203, %v198, %v200
      %v206 = vsel %vm203, %v200, %v202
      %vm207 = vcmask 31744
      %v209 = vsel %vm207, %v176, 0
      %vm211 = vcmask 1041408
      %v213 = vsel %vm211, %v204, 0
      %v216 = vsel %vm211, %v205, 0
      %v219 = vsel %vm211, %v206, 0
      %221 = vmatprep.subr.bf16.mxu0 %v216
      %222 = vmatpush1.bf16.msra.mxu0 %v213
      %223 = vmatprep.subr.bf16.mxu0 0
      %224 = vmatpush1.bf16.msra.mxu0 0
      %225 = vmatprep.subr.bf16.mxu0 0
      %226 = vmatpush1.bf16.msra.mxu0 0
      %227 = vmatprep.subr.bf16.mxu0 0
      %228 = vmatpush1.bf16.msra.mxu0 0
      %229 = vmatprep.subr.bf16.mxu0 0
      %230 = vmatpush1.bf16.msra.mxu0 0
      %231 = vmatprep.subr.bf16.mxu0 0
      %232 = vmatpush1.bf16.msra.mxu0 0
      %233 = vmatprep.subr.bf16.mxu0 0
      %234 = vmatpush1.bf16.msra.mxu0 0
      %235 = vmatprep.subr.bf16.mxu0 0
      %236 = vmatpush1.bf16.msra.mxu0 0
      %237 = vmatprep.subr.bf16.mxu0 0
      %238 = vmatpush1.bf16.msra.mxu0 0
      %239 = vmatprep.subr.bf16.mxu0 0
      %240 = vmatpush1.bf16.msra.mxu0 0
      %241 = vmatprep.subr.bf16.mxu0 0
      %242 = vmatpush1.bf16.msra.mxu0 0
      %243 = vmatprep.subr.bf16.mxu0 0
      %244 = vmatpush1.bf16.msra.mxu0 0
      %245 = vmatprep.subr.bf16.mxu0 0
      %246 = vmatpush1.bf16.msra.mxu0 0
      %247 = vmatprep.subr.bf16.mxu0 0
      %248 = vmatpush1.bf16.msra.mxu0 0
      %249 = vmatprep.subr.bf16.mxu0 0
      %250 = vmatpush1.bf16.msra.mxu0 0
      %251 = vmatprep.subr.bf16.mxu0 0
      %252 = vmatpush1.bf16.msra.mxu0 0
      %253 = vmatprep.mubr.bf16.mxu0 0
      %254 = vmatmul.mubr.bf16.gmra.mrb[0].mxu0 %v209
      %v255 = vpop.f32.mrb[0].mxu0
      %v256 = vadd.f32 0.0, %v255
      %v257 = vpop.f32.mrb[0].mxu0
      %v258 = vadd.f32 0.0, %v257
      %v259 = vpop.f32.mrb[0].mxu0
      %v260 = vpop.f32.mrb[0].mxu0
      %261 = vdwg.mxu0
      %262 = vmatprep.subr.bf16.mxu0 0
      %263 = vmatpush1.bf16.msra.mxu0 %v219
      %264 = vmatprep.subr.bf16.mxu0 0
      %265 = vmatpush1.bf16.msra.mxu0 0
      %266 = vmatprep.subr.bf16.mxu0 0
      %267 = vmatpush1.bf16.msra.mxu0 0
      %268 = vmatprep.subr.bf16.mxu0 0
      %269 = vmatpush1.bf16.msra.mxu0 0
      %270 = vmatprep.subr.bf16.mxu0 0
      %271 = vmatpush1.bf16.msra.mxu0 0
      %272 = vmatprep.subr.bf16.mxu0 0
      %273 = vmatpush1.bf16.msra.mxu0 0
      %274 = vmatprep.subr.bf16.mxu0 0
      %275 = vmatpush1.bf16.msra.mxu0 0
      %276 = vmatprep.subr.bf16.mxu0 0
      %277 = vmatpush1.bf16.msra.mxu0 0
      %278 = vmatprep.subr.bf16.mxu0 0
      %279 = vmatpush1.bf16.msra.mxu0 0
      %280 = vmatprep.subr.bf16.mxu0 0
      %281 = vmatpush1.bf16.msra.mxu0 0
      %282 = vmatprep.subr.bf16.mxu0 0
      %283 = vmatpush1.bf16.msra.mxu0 0
      %284 = vmatprep.subr.bf16.mxu0 0
      %285 = vmatpush1.bf16.msra.mxu0 0
      %286 = vmatprep.subr.bf16.mxu0 0
      %287 = vmatpush1.bf16.msra.mxu0 0
      %288 = vmatprep.subr.bf16.mxu0 0
      %289 = vmatpush1.bf16.msra.mxu0 0
      %290 = vmatprep.subr.bf16.mxu0 0
      %291 = vmatpush1.bf16.msra.mxu0 0
      %292 = vmatprep.subr.bf16.mxu0 0
      %293 = vmatpush1.bf16.msra.mxu0 0
      %294 = vmatprep.mubr.bf16.mxu0 0
      %295 = vmatmul.mubr.bf16.gmra.mrb[0].mxu0 %v209
      %v296 = vpop.f32.mrb[0].mxu0
      %v297 = vadd.f32 0.0, %v296
      %v298 = vpop.f32.mrb[0].mxu0
      %v299 = vpop.f32.mrb[0].mxu0
      %v300 = vpop.f32.mrb[0].mxu0
      %301 = vdwg.mxu0
      %v303 = vsel %vm207, %v174, 0
      %v306 = vsel %vm211, %v185, 0
      %v309 = vsel %vm211, %v193, 0
      %v312 = vsel %vm211, %v192, 0
      %314 = vmatprep.subr.bf16.mxu0 %v309
      %315 = vmatpush1.bf16.msra.mxu0 %v306
      %316 = vmatprep.subr.bf16.mxu0 0
      %317 = vmatpush1.bf16.msra.mxu0 0
      %318 = vmatprep.subr.bf16.mxu0 0
      %319 = vmatpush1.bf16.msra.mxu0 0
      %320 = vmatprep.subr.bf16.mxu0 0
      %321 = vmatpush1.bf16.msra.mxu0 0
      %322 = vmatprep.subr.bf16.mxu0 0
      %323 = vmatpush1.bf16.msra.mxu0 0
      %324 = vmatprep.subr.bf16.mxu0 0
      %325 = vmatpush1.bf16.msra.mxu0 0
      %326 = vmatprep.subr.bf16.mxu0 0
      %327 = vmatpush1.bf16.msra.mxu0 0
      %328 = vmatprep.subr.bf16.mxu0 0
      %329 = vmatpush1.bf16.msra.mxu0 0
      %330 = vmatprep.subr.bf16.mxu0 0
      %331 = vmatpush1.bf16.msra.mxu0 0
      %332 = vmatprep.subr.bf16.mxu0 0
      %333 = vmatpush1.bf16.msra.mxu0 0
      %334 = vmatprep.subr.bf16.mxu0 0
      %335 = vmatpush1.bf16.msra.mxu0 0
      %336 = vmatprep.subr.bf16.mxu0 0
      %337 = vmatpush1.bf16.msra.mxu0 0
      %338 = vmatprep.subr.bf16.mxu0 0
      %339 = vmatpush1.bf16.msra.mxu0 0
      %340 = vmatprep.subr.bf16.mxu0 0
      %341 = vmatpush1.bf16.msra.mxu0 0
      %342 = vmatprep.subr.bf16.mxu0 0
      %343 = vmatpush1.bf16.msra.mxu0 0
      %344 = vmatprep.subr.bf16.mxu0 0
      %345 = vmatpush1.bf16.msra.mxu0 0
      %346 = vmatprep.mubr.bf16.mxu0 0
      %347 = vmatmul.mubr.bf16.gmra.mrb[0].mxu0 %v303
      %v348 = vpop.f32.mrb[0].mxu0
      %v349 = vadd.f32 %v256, %v348
      %v350 = vpop.f32.mrb[0].mxu0
      %v351 = vadd.f32 %v258, %v350
      %v352 = vpop.f32.mrb[0].mxu0
      %v353 = vpop.f32.mrb[0].mxu0
      %354 = vdwg.mxu0
      %355 = vmatprep.subr.bf16.mxu0 0
      %356 = vmatpush1.bf16.msra.mxu0 %v312
      %357 = vmatprep.subr.bf16.mxu0 0
      %358 = vmatpush1.bf16.msra.mxu0 0
      %359 = vmatprep.subr.bf16.mxu0 0
      %360 = vmatpush1.bf16.msra.mxu0 0
      %361 = vmatprep.subr.bf16.mxu0 0
      %362 = vmatpush1.bf16.msra.mxu0 0
      %363 = vmatprep.subr.bf16.mxu0 0
      %364 = vmatpush1.bf16.msra.mxu0 0
      %365 = vmatprep.subr.bf16.mxu0 0
      %366 = vmatpush1.bf16.msra.mxu0 0
      %367 = vmatprep.subr.bf16.mxu0 0
      %368 = vmatpush1.bf16.msra.mxu0 0
      %369 = vmatprep.subr.bf16.mxu0 0
      %370 = vmatpush1.bf16.msra.mxu0 0
      %371 = vmatprep.subr.bf16.mxu0 0
      %372 = vmatpush1.bf16.msra.mxu0 0
      %373 = vmatprep.subr.bf16.mxu0 0
      %374 = vmatpush1.bf16.msra.mxu0 0
      %375 = vmatprep.subr.bf16.mxu0 0
      %376 = vmatpush1.bf16.msra.mxu0 0
      %377 = vmatprep.subr.bf16.mxu0 0
      %378 = vmatpush1.bf16.msra.mxu0 0
      %379 = vmatprep.subr.bf16.mxu0 0
      %380 = vmatpush1.bf16.msra.mxu0 0
      %381 = vmatprep.subr.bf16.mxu0 0
      %382 = vmatpush1.bf16.msra.mxu0 0
      %383 = vmatprep.subr.bf16.mxu0 0
      %384 = vmatpush1.bf16.msra.mxu0 0
      %385 = vmatprep.subr.bf16.mxu0 0
      %386 = vmatpush1.bf16.msra.mxu0 0
      %387 = vmatprep.mubr.bf16.mxu0 0
      %388 = vmatmul.mubr.bf16.gmra.mrb[0].mxu0 %v303
      %v389 = vpop.f32.mrb[0].mxu0
      %v390 = vadd.f32 %v297, %v389
      %v391 = vpop.f32.mrb[0].mxu0
      %v392 = vpop.f32.mrb[0].mxu0
      %v393 = vpop.f32.mrb[0].mxu0
      %394 = vdwg.mxu0
      %s395 = scalar_lea.vmem %s1, 8
      %v396 = vld [vmem:[%s395] sm:$0xf]
      %397 = vrot.lane.b32.xlu0 %v185, 126
      %v398 = vpop.permute.xlu0 %397
      %399 = vrot.lane.b32.xlu0 %v193, 126
      %v400 = vpop.permute.xlu0 %399
      %401 = vrot.lane.b32.xlu0 %v192, 126
      %v402 = vpop.permute.xlu0 %401
      %403 = vrot.lane.b32.xlu0 %v194, 126
      %v404 = vpop.permute.xlu0 %403
      %vm405 = vcmask 1031168
      %v406 = vsel %vm405, %v398, %v400
      %v407 = vsel %vm405, %v400, %v402
      %v408 = vsel %vm405, %v402, %v404
      %v410 = vsel %vm207, %v396, 0
      %v413 = vsel %vm211, %v406, 0
      %v416 = vsel %vm211, %v407, 0
      %v419 = vsel %vm211, %v408, 0
      %421 = vmatprep.subr.bf16.mxu0 %v416
      %422 = vmatpush1.bf16.msra.mxu0 %v413
      %423 = vmatprep.subr.bf16.mxu0 0
      %424 = vmatpush1.bf16.msra.mxu0 0
      %425 = vmatprep.subr.bf16.mxu0 0
      %426 = vmatpush1.bf16.msra.mxu0 0
      %427 = vmatprep.subr.bf16.mxu0 0
      %428 = vmatpush1.bf16.msra.mxu0 0
      %429 = vmatprep.subr.bf16.mxu0 0
      %430 = vmatpush1.bf16.msra.mxu0 0
      %431 = vmatprep.subr.bf16.mxu0 0
      %432 = vmatpush1.bf16.msra.mxu0 0
      %433 = vmatprep.subr.bf16.mxu0 0
      %434 = vmatpush1.bf16.msra.mxu0 0
      %435 = vmatprep.subr.bf16.mxu0 0
      %436 = vmatpush1.bf16.msra.mxu0 0
      %437 = vmatprep.subr.bf16.mxu0 0
      %438 = vmatpush1.bf16.msra.mxu0 0
      %439 = vmatprep.subr.bf16.mxu0 0
      %440 = vmatpush1.bf16.msra.mxu0 0
      %441 = vmatprep.subr.bf16.mxu0 0
      %442 = vmatpush1.bf16.msra.mxu0 0
      %443 = vmatprep.subr.bf16.mxu0 0
      %444 = vmatpush1.bf16.msra.mxu0 0
      %445 = vmatprep.subr.bf16.mxu0 0
      %446 = vmatpush1.bf16.msra.mxu0 0
      %447 = vmatprep.subr.bf16.mxu0 0
      %448 = vmatpush1.bf16.msra.mxu0 0
      %449 = vmatprep.subr.bf16.mxu0 0
      %450 = vmatpush1.bf16.msra.mxu0 0
      %451 = vmatprep.subr.bf16.mxu0 0
      %452 = vmatpush1.bf16.msra.mxu0 0
      %453 = vmatprep.mubr.bf16.mxu0 0
      %454 = vmatmul.mubr.bf16.gmra.mrb[0].mxu0 %v410
      %v455 = vpop.f32.mrb[0].mxu0
      %v456 = vadd.f32 0.0, %v455
      %v457 = vpop.f32.mrb[0].mxu0
      %v458 = vadd.f32 0.0, %v457
      %v459 = vpop.f32.mrb[0].mxu0
      %v460 = vpop.f32.mrb[0].mxu0
      %461 = vdwg.mxu0
      %462 = vmatprep.subr.bf16.mxu0 0
      %463 = vmatpush1.bf16.msra.mxu0 %v419
      %464 = vmatprep.subr.bf16.mxu0 0
      %465 = vmatpush1.bf16.msra.mxu0 0
      %466 = vmatprep.subr.bf16.mxu0 0
      %467 = vmatpush1.bf16.msra.mxu0 0
      %468 = vmatprep.subr.bf16.mxu0 0
      %469 = vmatpush1.bf16.msra.mxu0 0
      %470 = vmatprep.subr.bf16.mxu0 0
      %471 = vmatpush1.bf16.msra.mxu0 0
      %472 = vmatprep.subr.bf16.mxu0 0
      %473 = vmatpush1.bf16.msra.mxu0 0
      %474 = vmatprep.subr.bf16.mxu0 0
      %475 = vmatpush1.bf16.msra.mxu0 0
      %476 = vmatprep.subr.bf16.mxu0 0
      %477 = vmatpush1.bf16.msra.mxu0 0
      %478 = vmatprep.subr.bf16.mxu0 0
      %479 = vmatpush1.bf16.msra.mxu0 0
      %480 = vmatprep.subr.bf16.mxu0 0
      %481 = vmatpush1.bf16.msra.mxu0 0
      %482 = vmatprep.subr.bf16.mxu0 0
      %483 = vmatpush1.bf16.msra.mxu0 0
      %484 = vmatprep.subr.bf16.mxu0 0
      %485 = vmatpush1.bf16.msra.mxu0 0
      %486 = vmatprep.subr.bf16.mxu0 0
      %487 = vmatpush1.bf16.msra.mxu0 0
      %488 = vmatprep.subr.bf16.mxu0 0
      %489 = vmatpush1.bf16.msra.mxu0 0
      %490 = vmatprep.subr.bf16.mxu0 0
      %491 = vmatpush1.bf16.msra.mxu0 0
      %492 = vmatprep.subr.bf16.mxu0 0
      %493 = vmatpush1.bf16.msra.mxu0 0
      %494 = vmatprep.mubr.bf16.mxu0 0
      %495 = vmatmul.mubr.bf16.gmra.mrb[0].mxu0 %v410
      %v496 = vpop.f32.mrb[0].mxu0
      %v497 = vadd.f32 0.0, %v496
      %v498 = vpop.f32.mrb[0].mxu0
      %v499 = vpop.f32.mrb[0].mxu0
      %v500 = vpop.f32.mrb[0].mxu0
      %501 = vdwg.mxu0
      %v502 = vadd.f32 %v349, %v456
      %v503 = vadd.f32 %v351, %v458
      %v504 = vadd.f32 %v390, %v497
      %s505 = scalar_lea.vmem %s1, 12
      %v506 = vld [vmem:[%s505] sm:$0xf]
      %507 = vrot.lane.b32.xlu0 %v185, 125
      %v508 = vpop.permute.xlu0 %507
      %509 = vrot.lane.b32.xlu0 %v193, 125
      %v510 = vpop.permute.xlu0 %509
      %511 = vrot.lane.b32.xlu0 %v192, 125
      %v512 = vpop.permute.xlu0 %511
      %513 = vrot.lane.b32.xlu0 %v194, 125
      %v514 = vpop.permute.xlu0 %513
      %vm515 = vcmask 1022976
      %v516 = vsel %vm515, %v508, %v510
      %v517 = vsel %vm515, %v510, %v512
      %v518 = vsel %vm515, %v512, %v514
      %v520 = vsel %vm207, %v506, 0
      %v523 = vsel %vm211, %v516, 0
      %v526 = vsel %vm211, %v517, 0
      %v529 = vsel %vm211, %v518, 0
      %531 = vmatprep.subr.bf16.mxu0 %v526
      %532 = vmatpush1.bf16.msra.mxu0 %v523
      %533 = vmatprep.subr.bf16.mxu0 0
      %534 = vmatpush1.bf16.msra.mxu0 0
      %535 = vmatprep.subr.bf16.mxu0 0
      %536 = vmatpush1.bf16.msra.mxu0 0
      %537 = vmatprep.subr.bf16.mxu0 0
      %538 = vmatpush1.bf16.msra.mxu0 0
      %539 = vmatprep.subr.bf16.mxu0 0
      %540 = vmatpush1.bf16.msra.mxu0 0
      %541 = vmatprep.subr.bf16.mxu0 0
      %542 = vmatpush1.bf16.msra.mxu0 0
      %543 = vmatprep.subr.bf16.mxu0 0
      %544 = vmatpush1.bf16.msra.mxu0 0
      %545 = vmatprep.subr.bf16.mxu0 0
      %546 = vmatpush1.bf16.msra.mxu0 0
      %547 = vmatprep.subr.bf16.mxu0 0
      %548 = vmatpush1.bf16.msra.mxu0 0
      %549 = vmatprep.subr.bf16.mxu0 0
      %550 = vmatpush1.bf16.msra.mxu0 0
      %551 = vmatprep.subr.bf16.mxu0 0
      %552 = vmatpush1.bf16.msra.mxu0 0
      %553 = vmatprep.subr.bf16.mxu0 0
      %554 = vmatpush1.bf16.msra.mxu0 0
      %555 = vmatprep.subr.bf16.mxu0 0
      %556 = vmatpush1.bf16.msra.mxu0 0
      %557 = vmatprep.subr.bf16.mxu0 0
      %558 = vmatpush1.bf16.msra.mxu0 0
      %559 = vmatprep.subr.bf16.mxu0 0
      %560 = vmatpush1.bf16.msra.mxu0 0
      %561 = vmatprep.subr.bf16.mxu0 0
      %562 = vmatpush1.bf16.msra.mxu0 0
      %563 = vmatprep.mubr.bf16.mxu0 0
      %564 = vmatmul.mubr.bf16.gmra.mrb[0].mxu0 %v520
      %v565 = vpop.f32.mrb[0].mxu0
      %v566 = vadd.f32 0.0, %v565
      %v567 = vpop.f32.mrb[0].mxu0
      %v568 = vadd.f32 0.0, %v567
      %v569 = vpop.f32.mrb[0].mxu0
      %v570 = vpop.f32.mrb[0].mxu0
      %571 = vdwg.mxu0
      %572 = vmatprep.subr.bf16.mxu0 0
      %573 = vmatpush1.bf16.msra.mxu0 %v529
      %574 = vmatprep.subr.bf16.mxu0 0
      %575 = vmatpush1.bf16.msra.mxu0 0
      %576 = vmatprep.subr.bf16.mxu0 0
      %577 = vmatpush1.bf16.msra.mxu0 0
      %578 = vmatprep.subr.bf16.mxu0 0
      %579 = vmatpush1.bf16.msra.mxu0 0
      %580 = vmatprep.subr.bf16.mxu0 0
      %581 = vmatpush1.bf16.msra.mxu0 0
      %582 = vmatprep.subr.bf16.mxu0 0
      %583 = vmatpush1.bf16.msra.mxu0 0
      %584 = vmatprep.subr.bf16.mxu0 0
      %585 = vmatpush1.bf16.msra.mxu0 0
      %586 = vmatprep.subr.bf16.mxu0 0
      %587 = vmatpush1.bf16.msra.mxu0 0
      %588 = vmatprep.subr.bf16.mxu0 0
      %589 = vmatpush1.bf16.msra.mxu0 0
      %590 = vmatprep.subr.bf16.mxu0 0
      %591 = vmatpush1.bf16.msra.mxu0 0
      %592 = vmatprep.subr.bf16.mxu0 0
      %593 = vmatpush1.bf16.msra.mxu0 0
      %594 = vmatprep.subr.bf16.mxu0 0
      %595 = vmatpush1.bf16.msra.mxu0 0
      %596 = vmatprep.subr.bf16.mxu0 0
      %597 = vmatpush1.bf16.msra.mxu0 0
      %598 = vmatprep.subr.bf16.mxu0 0
      %599 = vmatpush1.bf16.msra.mxu0 0
      %600 = vmatprep.subr.bf16.mxu0 0
      %601 = vmatpush1.bf16.msra.mxu0 0
      %602 = vmatprep.subr.bf16.mxu0 0
      %603 = vmatpush1.bf16.msra.mxu0 0
      %604 = vmatprep.mubr.bf16.mxu0 0
      %605 = vmatmul.mubr.bf16.gmra.mrb[0].mxu0 %v520
      %v606 = vpop.f32.mrb[0].mxu0
      %v607 = vadd.f32 0.0, %v606
      %v608 = vpop.f32.mrb[0].mxu0
      %v609 = vpop.f32.mrb[0].mxu0
      %v610 = vpop.f32.mrb[0].mxu0
      %611 = vdwg.mxu0
      %v612 = vadd.f32 %v502, %v566
      %v613 = vadd.f32 %v503, %v568
      %v614 = vadd.f32 %v504, %v607
      %s615 = scalar_lea.vmem %s1, 16
      %v616 = vld [vmem:[%s615] sm:$0xf]
      %617 = vrot.lane.b32.xlu0 %v185, 124
      %v618 = vpop.permute.xlu0 %617
      %619 = vrot.lane.b32.xlu0 %v193, 124
      %v620 = vpop.permute.xlu0 %619
      %621 = vrot.lane.b32.xlu0 %v192, 124
      %v622 = vpop.permute.xlu0 %621
      %623 = vrot.lane.b32.xlu0 %v194, 124
      %v624 = vpop.permute.xlu0 %623
      %vm625 = vcmask 1014784
      %v626 = vsel %vm625, %v618, %v620
      %v627 = vsel %vm625, %v620, %v622
      %v628 = vsel %vm625, %v622, %v624
      %v630 = vsel %vm207, %v616, 0
      %v633 = vsel %vm211, %v626, 0
      %v636 = vsel %vm211, %v627, 0
      %v639 = vsel %vm211, %v628, 0
      %641 = vmatprep.subr.bf16.mxu0 %v636
      %642 = vmatpush1.bf16.msra.mxu0 %v633
      %643 = vmatprep.subr.bf16.mxu0 0
      %644 = vmatpush1.bf16.msra.mxu0 0
      %645 = vmatprep.subr.bf16.mxu0 0
      %646 = vmatpush1.bf16.msra.mxu0 0
      %647 = vmatprep.subr.bf16.mxu0 0
      %648 = vmatpush1.bf16.msra.mxu0 0
      %649 = vmatprep.subr.bf16.mxu0 0
      %650 = vmatpush1.bf16.msra.mxu0 0
      %651 = vmatprep.subr.bf16.mxu0 0
      %652 = vmatpush1.bf16.msra.mxu0 0
      %653 = vmatprep.subr.bf16.mxu0 0
      %654 = vmatpush1.bf16.msra.mxu0 0
      %655 = vmatprep.subr.bf16.mxu0 0
      %656 = vmatpush1.bf16.msra.mxu0 0
      %657 = vmatprep.subr.bf16.mxu0 0
      %658 = vmatpush1.bf16.msra.mxu0 0
      %659 = vmatprep.subr.bf16.mxu0 0
      %660 = vmatpush1.bf16.msra.mxu0 0
      %661 = vmatprep.subr.bf16.mxu0 0
      %662 = vmatpush1.bf16.msra.mxu0 0
      %663 = vmatprep.subr.bf16.mxu0 0
      %664 = vmatpush1.bf16.msra.mxu0 0
      %665 = vmatprep.subr.bf16.mxu0 0
      %666 = vmatpush1.bf16.msra.mxu0 0
      %667 = vmatprep.subr.bf16.mxu0 0
      %668 = vmatpush1.bf16.msra.mxu0 0
      %669 = vmatprep.subr.bf16.mxu0 0
      %670 = vmatpush1.bf16.msra.mxu0 0
      %671 = vmatprep.subr.bf16.mxu0 0
      %672 = vmatpush1.bf16.msra.mxu0 0
      %673 = vmatprep.mubr.bf16.mxu0 0
      %674 = vmatmul.mubr.bf16.gmra.mrb[0].mxu0 %v630
      %v675 = vpop.f32.mrb[0].mxu0
      %v676 = vadd.f32 0.0, %v675
      %v677 = vpop.f32.mrb[0].mxu0
      %v678 = vadd.f32 0.0, %v677
      %v679 = vpop.f32.mrb[0].mxu0
      %v680 = vpop.f32.mrb[0].mxu0
      %681 = vdwg.mxu0
      %682 = vmatprep.subr.bf16.mxu0 0
      %683 = vmatpush1.bf16.msra.mxu0 %v639
      %684 = vmatprep.subr.bf16.mxu0 0
      %685 = vmatpush1.bf16.msra.mxu0 0
      %686 = vmatprep.subr.bf16.mxu0 0
      %687 = vmatpush1.bf16.msra.mxu0 0
      %688 = vmatprep.subr.bf16.mxu0 0
      %689 = vmatpush1.bf16.msra.mxu0 0
      %690 = vmatprep.subr.bf16.mxu0 0
      %691 = vmatpush1.bf16.msra.mxu0 0
      %692 = vmatprep.subr.bf16.mxu0 0
      %693 = vmatpush1.bf16.msra.mxu0 0
      %694 = vmatprep.subr.bf16.mxu0 0
      %695 = vmatpush1.bf16.msra.mxu0 0
      %696 = vmatprep.subr.bf16.mxu0 0
      %697 = vmatpush1.bf16.msra.mxu0 0
      %698 = vmatprep.subr.bf16.mxu0 0
      %699 = vmatpush1.bf16.msra.mxu0 0
      %700 = vmatprep.subr.bf16.mxu0 0
      %701 = vmatpush1.bf16.msra.mxu0 0
      %702 = vmatprep.subr.bf16.mxu0 0
      %703 = vmatpush1.bf16.msra.mxu0 0
      %704 = vmatprep.subr.bf16.mxu0 0
      %705 = vmatpush1.bf16.msra.mxu0 0
      %706 = vmatprep.subr.bf16.mxu0 0
      %707 = vmatpush1.bf16.msra.mxu0 0
      %708 = vmatprep.subr.bf16.mxu0 0
      %709 = vmatpush1.bf16.msra.mxu0 0
      %710 = vmatprep.subr.bf16.mxu0 0
      %711 = vmatpush1.bf16.msra.mxu0 0
      %712 = vmatprep.subr.bf16.mxu0 0
      %713 = vmatpush1.bf16.msra.mxu0 0
      %714 = vmatprep.mubr.bf16.mxu0 0
      %715 = vmatmul.mubr.bf16.gmra.mrb[0].mxu0 %v630
      %v716 = vpop.f32.mrb[0].mxu0
      %v717 = vadd.f32 0.0, %v716
      %v718 = vpop.f32.mrb[0].mxu0
      %v719 = vpop.f32.mrb[0].mxu0
      %v720 = vpop.f32.mrb[0].mxu0
      %721 = vdwg.mxu0
      %v722 = vadd.f32 %v612, %v676
      %v723 = vadd.f32 %v613, %v678
      %v724 = vadd.f32 %v614, %v717
      %s725 = scalar_lea.vmem %s1, 20
      %v726 = vld [vmem:[%s725] sm:$0xf]
      %727 = vrot.lane.b32.xlu0 %v185, 123
      %v728 = vpop.permute.xlu0 %727
      %729 = vrot.lane.b32.xlu0 %v193, 123
      %v730 = vpop.permute.xlu0 %729
      %731 = vrot.lane.b32.xlu0 %v192, 123
      %v732 = vpop.permute.xlu0 %731
      %733 = vrot.lane.b32.xlu0 %v194, 123
      %v734 = vpop.permute.xlu0 %733
      %vm735 = vcmask 1006592
      %v736 = vsel %vm735, %v728, %v730
      %v737 = vsel %vm735, %v730, %v732
      %v738 = vsel %vm735, %v732, %v734
      %v740 = vsel %vm207, %v726, 0
      %v743 = vsel %vm211, %v736, 0
      %v746 = vsel %vm211, %v737, 0
      %v749 = vsel %vm211, %v738, 0
      %751 = vmatprep.subr.bf16.mxu0 %v746
      %752 = vmatpush1.bf16.msra.mxu0 %v743
      %753 = vmatprep.subr.bf16.mxu0 0
      %754 = vmatpush1.bf16.msra.mxu0 0
      %755 = vmatprep.subr.bf16.mxu0 0
      %756 = vmatpush1.bf16.msra.mxu0 0
      %757 = vmatprep.subr.bf16.mxu0 0
      %758 = vmatpush1.bf16.msra.mxu0 0
      %759 = vmatprep.subr.bf16.mxu0 0
      %760 = vmatpush1.bf16.msra.mxu0 0
      %761 = vmatprep.subr.bf16.mxu0 0
      %762 = vmatpush1.bf16.msra.mxu0 0
      %763 = vmatprep.subr.bf16.mxu0 0
      %764 = vmatpush1.bf16.msra.mxu0 0
      %765 = vmatprep.subr.bf16.mxu0 0
      %766 = vmatpush1.bf16.msra.mxu0 0
      %767 = vmatprep.subr.bf16.mxu0 0
      %768 = vmatpush1.bf16.msra.mxu0 0
      %769 = vmatprep.subr.bf16.mxu0 0
      %770 = vmatpush1.bf16.msra.mxu0 0
      %771 = vmatprep.subr.bf16.mxu0 0
      %772 = vmatpush1.bf16.msra.mxu0 0
      %773 = vmatprep.subr.bf16.mxu0 0
      %774 = vmatpush1.bf16.msra.mxu0 0
      %775 = vmatprep.subr.bf16.mxu0 0
      %776 = vmatpush1.bf16.msra.mxu0 0
      %777 = vmatprep.subr.bf16.mxu0 0
      %778 = vmatpush1.bf16.msra.mxu0 0
      %779 = vmatprep.subr.bf16.mxu0 0
      %780 = vmatpush1.bf16.msra.mxu0 0
      %781 = vmatprep.subr.bf16.mxu0 0
      %782 = vmatpush1.bf16.msra.mxu0 0
      %783 = vmatprep.mubr.bf16.mxu0 0
      %784 = vmatmul.mubr.bf16.gmra.mrb[0].mxu0 %v740
      %v785 = vpop.f32.mrb[0].mxu0
      %v786 = vadd.f32 0.0, %v785
      %v787 = vpop.f32.mrb[0].mxu0
      %v788 = vadd.f32 0.0, %v787
      %v789 = vpop.f32.mrb[0].mxu0
      %v790 = vpop.f32.mrb[0].mxu0
      %791 = vdwg.mxu0
      %792 = vmatprep.subr.bf16.mxu0 0
      %793 = vmatpush1.bf16.msra.mxu0 %v749
      %794 = vmatprep.subr.bf16.mxu0 0
      %795 = vmatpush1.bf16.msra.mxu0 0
      %796 = vmatprep.subr.bf16.mxu0 0
      %797 = vmatpush1.bf16.msra.mxu0 0
      %798 = vmatprep.subr.bf16.mxu0 0
      %799 = vmatpush1.bf16.msra.mxu0 0
      %800 = vmatprep.subr.bf16.mxu0 0
      %801 = vmatpush1.bf16.msra.mxu0 0
      %802 = vmatprep.subr.bf16.mxu0 0
      %803 = vmatpush1.bf16.msra.mxu0 0
      %804 = vmatprep.subr.bf16.mxu0 0
      %805 = vmatpush1.bf16.msra.mxu0 0
      %806 = vmatprep.subr.bf16.mxu0 0
      %807 = vmatpush1.bf16.msra.mxu0 0
      %808 = vmatprep.subr.bf16.mxu0 0
      %809 = vmatpush1.bf16.msra.mxu0 0
      %810 = vmatprep.subr.bf16.mxu0 0
      %811 = vmatpush1.bf16.msra.mxu0 0
      %812 = vmatprep.subr.bf16.mxu0 0
      %813 = vmatpush1.bf16.msra.mxu0 0
      %814 = vmatprep.subr.bf16.mxu0 0
      %815 = vmatpush1.bf16.msra.mxu0 0
      %816 = vmatprep.subr.bf16.mxu0 0
      %817 = vmatpush1.bf16.msra.mxu0 0
      %818 = vmatprep.subr.bf16.mxu0 0
      %819 = vmatpush1.bf16.msra.mxu0 0
      %820 = vmatprep.subr.bf16.mxu0 0
      %821 = vmatpush1.bf16.msra.mxu0 0
      %822 = vmatprep.subr.bf16.mxu0 0
      %823 = vmatpush1.bf16.msra.mxu0 0
      %824 = vmatprep.mubr.bf16.mxu0 0
      %825 = vmatmul.mubr.bf16.gmra.mrb[0].mxu0 %v740
      %v826 = vpop.f32.mrb[0].mxu0
      %v827 = vadd.f32 0.0, %v826
      %v828 = vpop.f32.mrb[0].mxu0
      %v829 = vpop.f32.mrb[0].mxu0
      %v830 = vpop.f32.mrb[0].mxu0
      %831 = vdwg.mxu0
      %v832 = vadd.f32 %v722, %v786
      %v833 = vadd.f32 %v723, %v788
      %v834 = vadd.f32 %v724, %v827
      %s835 = scalar_lea.vmem %s1, 24
      %v836 = vld [vmem:[%s835] sm:$0xf]
      %837 = vrot.lane.b32.xlu0 %v185, 122
      %v838 = vpop.permute.xlu0 %837
      %839 = vrot.lane.b32.xlu0 %v193, 122
      %v840 = vpop.permute.xlu0 %839
      %841 = vrot.lane.b32.xlu0 %v192, 122
      %v842 = vpop.permute.xlu0 %841
      %843 = vrot.lane.b32.xlu0 %v194, 122
      %v844 = vpop.permute.xlu0 %843
      %vm845 = vcmask 998400
      %v846 = vsel %vm845, %v838, %v840
      %v847 = vsel %vm845, %v840, %v842
      %v848 = vsel %vm845, %v842, %v844
      %v850 = vsel %vm207, %v836, 0
      %v853 = vsel %vm211, %v846, 0
      %v856 = vsel %vm211, %v847, 0
      %v859 = vsel %vm211, %v848, 0
      %861 = vmatprep.subr.bf16.mxu0 %v856
      %862 = vmatpush1.bf16.msra.mxu0 %v853
      %863 = vmatprep.subr.bf16.mxu0 0
      %864 = vmatpush1.bf16.msra.mxu0 0
      %865 = vmatprep.subr.bf16.mxu0 0
      %866 = vmatpush1.bf16.msra.mxu0 0
      %867 = vmatprep.subr.bf16.mxu0 0
      %868 = vmatpush1.bf16.msra.mxu0 0
      %869 = vmatprep.subr.bf16.mxu0 0
      %870 = vmatpush1.bf16.msra.mxu0 0
      %871 = vmatprep.subr.bf16.mxu0 0
      %872 = vmatpush1.bf16.msra.mxu0 0
      %873 = vmatprep.subr.bf16.mxu0 0
      %874 = vmatpush1.bf16.msra.mxu0 0
      %875 = vmatprep.subr.bf16.mxu0 0
      %876 = vmatpush1.bf16.msra.mxu0 0
      %877 = vmatprep.subr.bf16.mxu0 0
      %878 = vmatpush1.bf16.msra.mxu0 0
      %879 = vmatprep.subr.bf16.mxu0 0
      %880 = vmatpush1.bf16.msra.mxu0 0
      %881 = vmatprep.subr.bf16.mxu0 0
      %882 = vmatpush1.bf16.msra.mxu0 0
      %883 = vmatprep.subr.bf16.mxu0 0
      %884 = vmatpush1.bf16.msra.mxu0 0
      %885 = vmatprep.subr.bf16.mxu0 0
      %886 = vmatpush1.bf16.msra.mxu0 0
      %887 = vmatprep.subr.bf16.mxu0 0
      %888 = vmatpush1.bf16.msra.mxu0 0
      %889 = vmatprep.subr.bf16.mxu0 0
      %890 = vmatpush1.bf16.msra.mxu0 0
      %891 = vmatprep.subr.bf16.mxu0 0
      %892 = vmatpush1.bf16.msra.mxu0 0
      %893 = vmatprep.mubr.bf16.mxu0 0
      %894 = vmatmul.mubr.bf16.gmra.mrb[0].mxu0 %v850
      %v895 = vpop.f32.mrb[0].mxu0
      %v896 = vadd.f32 0.0, %v895
      %v897 = vpop.f32.mrb[0].mxu0
      %v898 = vadd.f32 0.0, %v897
      %v899 = vpop.f32.mrb[0].mxu0
      %v900 = vpop.f32.mrb[0].mxu0
      %901 = vdwg.mxu0
      %902 = vmatprep.subr.bf16.mxu0 0
      %903 = vmatpush1.bf16.msra.mxu0 %v859
      %904 = vmatprep.subr.bf16.mxu0 0
      %905 = vmatpush1.bf16.msra.mxu0 0
      %906 = vmatprep.subr.bf16.mxu0 0
      %907 = vmatpush1.bf16.msra.mxu0 0
      %908 = vmatprep.subr.bf16.mxu0 0
      %909 = vmatpush1.bf16.msra.mxu0 0
      %910 = vmatprep.subr.bf16.mxu0 0
      %911 = vmatpush1.bf16.msra.mxu0 0
      %912 = vmatprep.subr.bf16.mxu0 0
      %913 = vmatpush1.bf16.msra.mxu0 0
      %914 = vmatprep.subr.bf16.mxu0 0
      %915 = vmatpush1.bf16.msra.mxu0 0
      %916 = vmatprep.subr.bf16.mxu0 0
      %917 = vmatpush1.bf16.msra.mxu0 0
      %918 = vmatprep.subr.bf16.mxu0 0
      %919 = vmatpush1.bf16.msra.mxu0 0
      %920 = vmatprep.subr.bf16.mxu0 0
      %921 = vmatpush1.bf16.msra.mxu0 0
      %922 = vmatprep.subr.bf16.mxu0 0
      %923 = vmatpush1.bf16.msra.mxu0 0
      %924 = vmatprep.subr.bf16.mxu0 0
      %925 = vmatpush1.bf16.msra.mxu0 0
      %926 = vmatprep.subr.bf16.mxu0 0
      %927 = vmatpush1.bf16.msra.mxu0 0
      %928 = vmatprep.subr.bf16.mxu0 0
      %929 = vmatpush1.bf16.msra.mxu0 0
      %930 = vmatprep.subr.bf16.mxu0 0
      %931 = vmatpush1.bf16.msra.mxu0 0
      %932 = vmatprep.subr.bf16.mxu0 0
      %933 = vmatpush1.bf16.msra.mxu0 0
      %934 = vmatprep.mubr.bf16.mxu0 0
      %935 = vmatmul.mubr.bf16.gmra.mrb[0].mxu0 %v850
      %v936 = vpop.f32.mrb[0].mxu0
      %v937 = vadd.f32 0.0, %v936
      %v938 = vpop.f32.mrb[0].mxu0
      %v939 = vpop.f32.mrb[0].mxu0
      %v940 = vpop.f32.mrb[0].mxu0
      %941 = vdwg.mxu0
      %v942 = vadd.f32 %v832, %v896
      %v943 = vadd.f32 %v833, %v898
      %v944 = vadd.f32 %v834, %v937
      %s945 = scalar_lea.vmem %s1, 28
      %v946 = vld [vmem:[%s945] sm:$0xf]
      %947 = vrot.lane.b32.xlu0 %v185, 106
      %v948 = vpop.permute.xlu0 %947
      %949 = vrot.lane.b32.xlu0 %v193, 106
      %v950 = vpop.permute.xlu0 %949
      %951 = vrot.lane.b32.xlu0 %v192, 106
      %v952 = vpop.permute.xlu0 %951
      %953 = vrot.lane.b32.xlu0 %v194, 106
      %v954 = vpop.permute.xlu0 %953
      %vm955 = vcmask 867328
      %v956 = vsel %vm955, %v948, %v950
      %v957 = vsel %vm955, %v950, %v952
      %v958 = vsel %vm955, %v952, %v954
      %v960 = vsel %vm207, %v946, 0
      %v963 = vsel %vm211, %v956, 0
      %v966 = vsel %vm211, %v957, 0
      %v969 = vsel %vm211, %v958, 0
      %971 = vmatprep.subr.bf16.mxu0 %v966
      %972 = vmatpush1.bf16.msra.mxu0 %v963
      %973 = vmatprep.subr.bf16.mxu0 0
      %974 = vmatpush1.bf16.msra.mxu0 0
      %975 = vmatprep.subr.bf16.mxu0 0
      %976 = vmatpush1.bf16.msra.mxu0 0
      %977 = vmatprep.subr.bf16.mxu0 0
      %978 = vmatpush1.bf16.msra.mxu0 0
      %979 = vmatprep.subr.bf16.mxu0 0
      %980 = vmatpush1.bf16.msra.mxu0 0
      %981 = vmatprep.subr.bf16.mxu0 0
      %982 = vmatpush1.bf16.msra.mxu0 0
      %983 = vmatprep.subr.bf16.mxu0 0
      %984 = vmatpush1.bf16.msra.mxu0 0
      %985 = vmatprep.subr.bf16.mxu0 0
      %986 = vmatpush1.bf16.msra.mxu0 0
      %987 = vmatprep.subr.bf16.mxu0 0
      %988 = vmatpush1.bf16.msra.mxu0 0
      %989 = vmatprep.subr.bf16.mxu0 0
      %990 = vmatpush1.bf16.msra.mxu0 0
      %991 = vmatprep.subr.bf16.mxu0 0
      %992 = vmatpush1.bf16.msra.mxu0 0
      %993 = vmatprep.subr.bf16.mxu0 0
      %994 = vmatpush1.bf16.msra.mxu0 0
      %995 = vmatprep.subr.bf16.mxu0 0
      %996 = vmatpush1.bf16.msra.mxu0 0
      %997 = vmatprep.subr.bf16.mxu0 0
      %998 = vmatpush1.bf16.msra.mxu0 0
      %999 = vmatprep.subr.bf16.mxu0 0
      %1000 = vmatpush1.bf16.msra.mxu0 0
      %1001 = vmatprep.subr.bf16.mxu0 0
      %1002 = vmatpush1.bf16.msra.mxu0 0
      %1003 = vmatprep.mubr.bf16.mxu0 0
      %1004 = vmatmul.mubr.bf16.gmra.mrb[0].mxu0 %v960
      %v1005 = vpop.f32.mrb[0].mxu0
      %v1006 = vadd.f32 0.0, %v1005
      %v1007 = vpop.f32.mrb[0].mxu0
      %v1008 = vadd.f32 0.0, %v1007
      %v1009 = vpop.f32.mrb[0].mxu0
      %v1010 = vpop.f32.mrb[0].mxu0
      %1011 = vdwg.mxu0
      %1012 = vmatprep.subr.bf16.mxu0 0
      %1013 = vmatpush1.bf16.msra.mxu0 %v969
      %1014 = vmatprep.subr.bf16.mxu0 0
      %1015 = vmatpush1.bf16.msra.mxu0 0
      %1016 = vmatprep.subr.bf16.mxu0 0
      %1017 = vmatpush1.bf16.msra.mxu0 0
      %1018 = vmatprep.subr.bf16.mxu0 0
      %1019 = vmatpush1.bf16.msra.mxu0 0
      %1020 = vmatprep.subr.bf16.mxu0 0
      %1021 = vmatpush1.bf16.msra.mxu0 0
      %1022 = vmatprep.subr.bf16.mxu0 0
      %1023 = vmatpush1.bf16.msra.mxu0 0
      %1024 = vmatprep.subr.bf16.mxu0 0
      %1025 = vmatpush1.bf16.msra.mxu0 0
      %1026 = vmatprep.subr.bf16.mxu0 0
      %1027 = vmatpush1.bf16.msra.mxu0 0
      %1028 = vmatprep.subr.bf16.mxu0 0
      %1029 = vmatpush1.bf16.msra.mxu0 0
      %1030 = vmatprep.subr.bf16.mxu0 0
      %1031 = vmatpush1.bf16.msra.mxu0 0
      %1032 = vmatprep.subr.bf16.mxu0 0
      %1033 = vmatpush1.bf16.msra.mxu0 0
      %1034 = vmatprep.subr.bf16.mxu0 0
      %1035 = vmatpush1.bf16.msra.mxu0 0
      %1036 = vmatprep.subr.bf16.mxu0 0
      %1037 = vmatpush1.bf16.msra.mxu0 0
      %1038 = vmatprep.subr.bf16.mxu0 0
      %1039 = vmatpush1.bf16.msra.mxu0 0
      %1040 = vmatprep.subr.bf16.mxu0 0
      %1041 = vmatpush1.bf16.msra.mxu0 0
      %1042 = vmatprep.subr.bf16.mxu0 0
      %1043 = vmatpush1.bf16.msra.mxu0 0
      %1044 = vmatprep.mubr.bf16.mxu0 0
      %1045 = vmatmul.mubr.bf16.gmra.mrb[0].mxu0 %v960
      %v1046 = vpop.f32.mrb[0].mxu0
      %v1047 = vadd.f32 0.0, %v1046
      %v1048 = vpop.f32.mrb[0].mxu0
      %v1049 = vpop.f32.mrb[0].mxu0
      %v1050 = vpop.f32.mrb[0].mxu0
      %1051 = vdwg.mxu0
      %v1052 = vadd.f32 %v942, %v1006
      %v1053 = vadd.f32 %v943, %v1008
      %v1054 = vadd.f32 %v944, %v1047
      %s1055 = scalar_lea.vmem %s1, 32
      %v1056 = vld [vmem:[%s1055] sm:$0xf]
      %1057 = vrot.lane.b32.xlu0 %v185, 105
      %v1058 = vpop.permute.xlu0 %1057
      %1059 = vrot.lane.b32.xlu0 %v193, 105
      %v1060 = vpop.permute.xlu0 %1059
      %1061 = vrot.lane.b32.xlu0 %v192, 105
      %v1062 = vpop.permute.xlu0 %1061
      %1063 = vrot.lane.b32.xlu0 %v194, 105
      %v1064 = vpop.permute.xlu0 %1063
      %vm1065 = vcmask 859136
      %v1066 = vsel %vm1065, %v1058, %v1060
      %v1067 = vsel %vm1065, %v1060, %v1062
      %v1068 = vsel %vm1065, %v1062, %v1064
      %v1070 = vsel %vm207, %v1056, 0
      %v1073 = vsel %vm211, %v1066, 0
      %v1076 = vsel %vm211, %v1067, 0
      %v1079 = vsel %vm211, %v1068, 0
      %1081 = vmatprep.subr.bf16.mxu0 %v1076
      %1082 = vmatpush1.bf16.msra.mxu0 %v1073
      %1083 = vmatprep.subr.bf16.mxu0 0
      %1084 = vmatpush1.bf16.msra.mxu0 0
      %1085 = vmatprep.subr.bf16.mxu0 0
      %1086 = vmatpush1.bf16.msra.mxu0 0
      %1087 = vmatprep.subr.bf16.mxu0 0
      %1088 = vmatpush1.bf16.msra.mxu0 0
      %1089 = vmatprep.subr.bf16.mxu0 0
      %1090 = vmatpush1.bf16.msra.mxu0 0
      %1091 = vmatprep.subr.bf16.mxu0 0
      %1092 = vmatpush1.bf16.msra.mxu0 0
      %1093 = vmatprep.subr.bf16.mxu0 0
      %1094 = vmatpush1.bf16.msra.mxu0 0
      %1095 = vmatprep.subr.bf16.mxu0 0
      %1096 = vmatpush1.bf16.msra.mxu0 0
      %1097 = vmatprep.subr.bf16.mxu0 0
      %1098 = vmatpush1.bf16.msra.mxu0 0
      %1099 = vmatprep.subr.bf16.mxu0 0
      %1100 = vmatpush1.bf16.msra.mxu0 0
      %1101 = vmatprep.subr.bf16.mxu0 0
      %1102 = vmatpush1.bf16.msra.mxu0 0
      %1103 = vmatprep.subr.bf16.mxu0 0
      %1104 = vmatpush1.bf16.msra.mxu0 0
      %1105 = vmatprep.subr.bf16.mxu0 0
      %1106 = vmatpush1.bf16.msra.mxu0 0
      %1107 = vmatprep.subr.bf16.mxu0 0
      %1108 = vmatpush1.bf16.msra.mxu0 0
      %1109 = vmatprep.subr.bf16.mxu0 0
      %1110 = vmatpush1.bf16.msra.mxu0 0
      %1111 = vmatprep.subr.bf16.mxu0 0
      %1112 = vmatpush1.bf16.msra.mxu0 0
      %1113 = vmatprep.mubr.bf16.mxu0 0
      %1114 = vmatmul.mubr.bf16.gmra.mrb[0].mxu0 %v1070
      %v1115 = vpop.f32.mrb[0].mxu0
      %v1116 = vadd.f32 0.0, %v1115
      %v1117 = vpop.f32.mrb[0].mxu0
      %v1118 = vadd.f32 0.0, %v1117
      %v1119 = vpop.f32.mrb[0].mxu0
      %v1120 = vpop.f32.mrb[0].mxu0
      %1121 = vdwg.mxu0
      %1122 = vmatprep.subr.bf16.mxu0 0
      %1123 = vmatpush1.bf16.msra.mxu0 %v1079
      %1124 = vmatprep.subr.bf16.mxu0 0
      %1125 = vmatpush1.bf16.msra.mxu0 0
      %1126 = vmatprep.subr.bf16.mxu0 0
      %1127 = vmatpush1.bf16.msra.mxu0 0
      %1128 = vmatprep.subr.bf16.mxu0 0
      %1129 = vmatpush1.bf16.msra.mxu0 0
      %1130 = vmatprep.subr.bf16.mxu0 0
      %1131 = vmatpush1.bf16.msra.mxu0 0
      %1132 = vmatprep.subr.bf16.mxu0 0
      %1133 = vmatpush1.bf16.msra.mxu0 0
      %1134 = vmatprep.subr.bf16.mxu0 0
      %1135 = vmatpush1.bf16.msra.mxu0 0
      %1136 = vmatprep.subr.bf16.mxu0 0
      %1137 = vmatpush1.bf16.msra.mxu0 0
      %1138 = vmatprep.subr.bf16.mxu0 0
      %1139 = vmatpush1.bf16.msra.mxu0 0
      %1140 = vmatprep.subr.bf16.mxu0 0
      %1141 = vmatpush1.bf16.msra.mxu0 0
      %1142 = vmatprep.subr.bf16.mxu0 0
      %1143 = vmatpush1.bf16.msra.mxu0 0
      %1144 = vmatprep.subr.bf16.mxu0 0
      %1145 = vmatpush1.bf16.msra.mxu0 0
      %1146 = vmatprep.subr.bf16.mxu0 0
      %1147 = vmatpush1.bf16.msra.mxu0 0
      %1148 = vmatprep.subr.bf16.mxu0 0
      %1149 = vmatpush1.bf16.msra.mxu0 0
      %1150 = vmatprep.subr.bf16.mxu0 0
      %1151 = vmatpush1.bf16.msra.mxu0 0
      %1152 = vmatprep.subr.bf16.mxu0 0
      %1153 = vmatpush1.bf16.msra.mxu0 0
      %1154 = vmatprep.mubr.bf16.mxu0 0
      %1155 = vmatmul.mubr.bf16.gmra.mrb[0].mxu0 %v1070
      %v1156 = vpop.f32.mrb[0].mxu0
      %v1157 = vadd.f32 0.0, %v1156
      %v1158 = vpop.f32.mrb[0].mxu0
      %v1159 = vpop.f32.mrb[0].mxu0
      %v1160 = vpop.f32.mrb[0].mxu0
      %1161 = vdwg.mxu0
      %v1162 = vadd.f32 %v1052, %v1116
      %v1163 = vadd.f32 %v1053, %v1118
      %v1164 = vadd.f32 %v1054, %v1157
      %s1165 = scalar_lea.vmem %s1, 36
      %v1166 = vld [vmem:[%s1165] sm:$0xf]
      %1167 = vrot.lane.b32.xlu0 %v185, 104
      %v1168 = vpop.permute.xlu0 %1167
      %1169 = vrot.lane.b32.xlu0 %v193, 104
      %v1170 = vpop.permute.xlu0 %1169
      %1171 = vrot.lane.b32.xlu0 %v192, 104
      %v1172 = vpop.permute.xlu0 %1171
      %1173 = vrot.lane.b32.xlu0 %v194, 104
      %v1174 = vpop.permute.xlu0 %1173
      %vm1175 = vcmask 850944
      %v1176 = vsel %vm1175, %v1168, %v1170
      %v1177 = vsel %vm1175, %v1170, %v1172
      %v1178 = vsel %vm1175, %v1172, %v1174
      %v1180 = vsel %vm207, %v1166, 0
      %v1183 = vsel %vm211, %v1176, 0
      %v1186 = vsel %vm211, %v1177, 0
      %v1189 = vsel %vm211, %v1178, 0
      %1191 = vmatprep.subr.bf16.mxu0 %v1186
      %1192 = vmatpush1.bf16.msra.mxu0 %v1183
      %1193 = vmatprep.subr.bf16.mxu0 0
      %1194 = vmatpush1.bf16.msra.mxu0 0
      %1195 = vmatprep.subr.bf16.mxu0 0
      %1196 = vmatpush1.bf16.msra.mxu0 0
      %1197 = vmatprep.subr.bf16.mxu0 0
      %1198 = vmatpush1.bf16.msra.mxu0 0
      %1199 = vmatprep.subr.bf16.mxu0 0
      %1200 = vmatpush1.bf16.msra.mxu0 0
      %1201 = vmatprep.subr.bf16.mxu0 0
      %1202 = vmatpush1.bf16.msra.mxu0 0
      %1203 = vmatprep.subr.bf16.mxu0 0
      %1204 = vmatpush1.bf16.msra.mxu0 0
      %1205 = vmatprep.subr.bf16.mxu0 0
      %1206 = vmatpush1.bf16.msra.mxu0 0
      %1207 = vmatprep.subr.bf16.mxu0 0
      %1208 = vmatpush1.bf16.msra.mxu0 0
      %1209 = vmatprep.subr.bf16.mxu0 0
      %1210 = vmatpush1.bf16.msra.mxu0 0
      %1211 = vmatprep.subr.bf16.mxu0 0
      %1212 = vmatpush1.bf16.msra.mxu0 0
      %1213 = vmatprep.subr.bf16.mxu0 0
      %1214 = vmatpush1.bf16.msra.mxu0 0
      %1215 = vmatprep.subr.bf16.mxu0 0
      %1216 = vmatpush1.bf16.msra.mxu0 0
      %1217 = vmatprep.subr.bf16.mxu0 0
      %1218 = vmatpush1.bf16.msra.mxu0 0
      %1219 = vmatprep.subr.bf16.mxu0 0
      %1220 = vmatpush1.bf16.msra.mxu0 0
      %1221 = vmatprep.subr.bf16.mxu0 0
      %1222 = vmatpush1.bf16.msra.mxu0 0
      %1223 = vmatprep.mubr.bf16.mxu0 0
      %1224 = vmatmul.mubr.bf16.gmra.mrb[0].mxu0 %v1180
      %v1225 = vpop.f32.mrb[0].mxu0
      %v1226 = vadd.f32 0.0, %v1225
      %v1227 = vpop.f32.mrb[0].mxu0
      %v1228 = vadd.f32 0.0, %v1227
      %v1229 = vpop.f32.mrb[0].mxu0
      %v1230 = vpop.f32.mrb[0].mxu0
      %1231 = vdwg.mxu0
      %1232 = vmatprep.subr.bf16.mxu0 0
      %1233 = vmatpush1.bf16.msra.mxu0 %v1189
      %1234 = vmatprep.subr.bf16.mxu0 0
      %1235 = vmatpush1.bf16.msra.mxu0 0
      %1236 = vmatprep.subr.bf16.mxu0 0
      %1237 = vmatpush1.bf16.msra.mxu0 0
      %1238 = vmatprep.subr.bf16.mxu0 0
      %1239 = vmatpush1.bf16.msra.mxu0 0
      %1240 = vmatprep.subr.bf16.mxu0 0
      %1241 = vmatpush1.bf16.msra.mxu0 0
      %1242 = vmatprep.subr.bf16.mxu0 0
      %1243 = vmatpush1.bf16.msra.mxu0 0
      %1244 = vmatprep.subr.bf16.mxu0 0
      %1245 = vmatpush1.bf16.msra.mxu0 0
      %1246 = vmatprep.subr.bf16.mxu0 0
      %1247 = vmatpush1.bf16.msra.mxu0 0
      %1248 = vmatprep.subr.bf16.mxu0 0
      %1249 = vmatpush1.bf16.msra.mxu0 0
      %1250 = vmatprep.subr.bf16.mxu0 0
      %1251 = vmatpush1.bf16.msra.mxu0 0
      %1252 = vmatprep.subr.bf16.mxu0 0
      %1253 = vmatpush1.bf16.msra.mxu0 0
      %1254 = vmatprep.subr.bf16.mxu0 0
      %1255 = vmatpush1.bf16.msra.mxu0 0
      %1256 = vmatprep.subr.bf16.mxu0 0
      %1257 = vmatpush1.bf16.msra.mxu0 0
      %1258 = vmatprep.subr.bf16.mxu0 0
      %1259 = vmatpush1.bf16.msra.mxu0 0
      %1260 = vmatprep.subr.bf16.mxu0 0
      %1261 = vmatpush1.bf16.msra.mxu0 0
      %1262 = vmatprep.subr.bf16.mxu0 0
      %1263 = vmatpush1.bf16.msra.mxu0 0
      %1264 = vmatprep.mubr.bf16.mxu0 0
      %1265 = vmatmul.mubr.bf16.gmra.mrb[0].mxu0 %v1180
      %v1266 = vpop.f32.mrb[0].mxu0
      %v1267 = vadd.f32 0.0, %v1266
      %v1268 = vpop.f32.mrb[0].mxu0
      %v1269 = vpop.f32.mrb[0].mxu0
      %v1270 = vpop.f32.mrb[0].mxu0
      %1271 = vdwg.mxu0
      %v1272 = vadd.f32 %v1162, %v1226
      %v1273 = vadd.f32 %v1163, %v1228
      %v1274 = vadd.f32 %v1164, %v1267
      %s1275 = scalar_lea.vmem %s1, 40
      %v1276 = vld [vmem:[%s1275] sm:$0xf]
      %1277 = vrot.lane.b32.xlu0 %v185, 103
      %v1278 = vpop.permute.xlu0 %1277
      %1279 = vrot.lane.b32.xlu0 %v193, 103
      %v1280 = vpop.permute.xlu0 %1279
      %1281 = vrot.lane.b32.xlu0 %v192, 103
      %v1282 = vpop.permute.xlu0 %1281
      %1283 = vrot.lane.b32.xlu0 %v194, 103
      %v1284 = vpop.permute.xlu0 %1283
      %vm1285 = vcmask 842752
      %v1286 = vsel %vm1285, %v1278, %v1280
      %v1287 = vsel %vm1285, %v1280, %v1282
      %v1288 = vsel %vm1285, %v1282, %v1284
      %v1290 = vsel %vm207, %v1276, 0
      %v1293 = vsel %vm211, %v1286, 0
      %v1296 = vsel %vm211, %v1287, 0
      %v1299 = vsel %vm211, %v1288, 0
      %1301 = vmatprep.subr.bf16.mxu0 %v1296
      %1302 = vmatpush1.bf16.msra.mxu0 %v1293
      %1303 = vmatprep.subr.bf16.mxu0 0
      %1304 = vmatpush1.bf16.msra.mxu0 0
      %1305 = vmatprep.subr.bf16.mxu0 0
      %1306 = vmatpush1.bf16.msra.mxu0 0
      %1307 = vmatprep.subr.bf16.mxu0 0
      %1308 = vmatpush1.bf16.msra.mxu0 0
      %1309 = vmatprep.subr.bf16.mxu0 0
      %1310 = vmatpush1.bf16.msra.mxu0 0
      %1311 = vmatprep.subr.bf16.mxu0 0
      %1312 = vmatpush1.bf16.msra.mxu0 0
      %1313 = vmatprep.subr.bf16.mxu0 0
      %1314 = vmatpush1.bf16.msra.mxu0 0
      %1315 = vmatprep.subr.bf16.mxu0 0
      %1316 = vmatpush1.bf16.msra.mxu0 0
      %1317 = vmatprep.subr.bf16.mxu0 0
      %1318 = vmatpush1.bf16.msra.mxu0 0
      %1319 = vmatprep.subr.bf16.mxu0 0
      %1320 = vmatpush1.bf16.msra.mxu0 0
      %1321 = vmatprep.subr.bf16.mxu0 0
      %1322 = vmatpush1.bf16.msra.mxu0 0
      %1323 = vmatprep.subr.bf16.mxu0 0
      %1324 = vmatpush1.bf16.msra.mxu0 0
      %1325 = vmatprep.subr.bf16.mxu0 0
      %1326 = vmatpush1.bf16.msra.mxu0 0
      %1327 = vmatprep.subr.bf16.mxu0 0
      %1328 = vmatpush1.bf16.msra.mxu0 0
      %1329 = vmatprep.subr.bf16.mxu0 0
      %1330 = vmatpush1.bf16.msra.mxu0 0
      %1331 = vmatprep.subr.bf16.mxu0 0
      %1332 = vmatpush1.bf16.msra.mxu0 0
      %1333 = vmatprep.mubr.bf16.mxu0 0
      %1334 = vmatmul.mubr.bf16.gmra.mrb[0].mxu0 %v1290
      %v1335 = vpop.f32.mrb[0].mxu0
      %v1336 = vadd.f32 0.0, %v1335
      %v1337 = vpop.f32.mrb[0].mxu0
      %v1338 = vadd.f32 0.0, %v1337
      %v1339 = vpop.f32.mrb[0].mxu0
      %v1340 = vpop.f32.mrb[0].mxu0
      %1341 = vdwg.mxu0
      %1342 = vmatprep.subr.bf16.mxu0 0
      %1343 = vmatpush1.bf16.msra.mxu0 %v1299
      %1344 = vmatprep.subr.bf16.mxu0 0
      %1345 = vmatpush1.bf16.msra.mxu0 0
      %1346 = vmatprep.subr.bf16.mxu0 0
      %1347 = vmatpush1.bf16.msra.mxu0 0
      %1348 = vmatprep.subr.bf16.mxu0 0
      %1349 = vmatpush1.bf16.msra.mxu0 0
      %1350 = vmatprep.subr.bf16.mxu0 0
      %1351 = vmatpush1.bf16.msra.mxu0 0
      %1352 = vmatprep.subr.bf16.mxu0 0
      %1353 = vmatpush1.bf16.msra.mxu0 0
      %1354 = vmatprep.subr.bf16.mxu0 0
      %1355 = vmatpush1.bf16.msra.mxu0 0
      %1356 = vmatprep.subr.bf16.mxu0 0
      %1357 = vmatpush1.bf16.msra.mxu0 0
      %1358 = vmatprep.subr.bf16.mxu0 0
      %1359 = vmatpush1.bf16.msra.mxu0 0
      %1360 = vmatprep.subr.bf16.mxu0 0
      %1361 = vmatpush1.bf16.msra.mxu0 0
      %1362 = vmatprep.subr.bf16.mxu0 0
      %1363 = vmatpush1.bf16.msra.mxu0 0
      %1364 = vmatprep.subr.bf16.mxu0 0
      %1365 = vmatpush1.bf16.msra.mxu0 0
      %1366 = vmatprep.subr.bf16.mxu0 0
      %1367 = vmatpush1.bf16.msra.mxu0 0
      %1368 = vmatprep.subr.bf16.mxu0 0
      %1369 = vmatpush1.bf16.msra.mxu0 0
      %1370 = vmatprep.subr.bf16.mxu0 0
      %1371 = vmatpush1.bf16.msra.mxu0 0
      %1372 = vmatprep.subr.bf16.mxu0 0
      %1373 = vmatpush1.bf16.msra.mxu0 0
      %1374 = vmatprep.mubr.bf16.mxu0 0
      %1375 = vmatmul.mubr.bf16.gmra.mrb[0].mxu0 %v1290
      %v1376 = vpop.f32.mrb[0].mxu0
      %v1377 = vadd.f32 0.0, %v1376
      %v1378 = vpop.f32.mrb[0].mxu0
      %v1379 = vpop.f32.mrb[0].mxu0
      %v1380 = vpop.f32.mrb[0].mxu0
      %1381 = vdwg.mxu0
      %v1382 = vadd.f32 %v1272, %v1336
      %v1383 = vadd.f32 %v1273, %v1338
      %v1384 = vadd.f32 %v1274, %v1377
      %s1385 = scalar_lea.vmem %s1, 44
      %v1386 = vld [vmem:[%s1385] sm:$0xf]
      %1387 = vrot.lane.b32.xlu0 %v185, 102
      %v1388 = vpop.permute.xlu0 %1387
      %1389 = vrot.lane.b32.xlu0 %v193, 102
      %v1390 = vpop.permute.xlu0 %1389
      %1391 = vrot.lane.b32.xlu0 %v192, 102
      %v1392 = vpop.permute.xlu0 %1391
      %1393 = vrot.lane.b32.xlu0 %v194, 102
      %v1394 = vpop.permute.xlu0 %1393
      %vm1395 = vcmask 834560
      %v1396 = vsel %vm1395, %v1388, %v1390
      %v1397 = vsel %vm1395, %v1390, %v1392
      %v1398 = vsel %vm1395, %v1392, %v1394
      %v1400 = vsel %vm207, %v1386, 0
      %v1403 = vsel %vm211, %v1396, 0
      %v1406 = vsel %vm211, %v1397, 0
      %v1409 = vsel %vm211, %v1398, 0
      %1411 = vmatprep.subr.bf16.mxu0 %v1406
      %1412 = vmatpush1.bf16.msra.mxu0 %v1403
      %1413 = vmatprep.subr.bf16.mxu0 0
      %1414 = vmatpush1.bf16.msra.mxu0 0
      %1415 = vmatprep.subr.bf16.mxu0 0
      %1416 = vmatpush1.bf16.msra.mxu0 0
      %1417 = vmatprep.subr.bf16.mxu0 0
      %1418 = vmatpush1.bf16.msra.mxu0 0
      %1419 = vmatprep.subr.bf16.mxu0 0
      %1420 = vmatpush1.bf16.msra.mxu0 0
      %1421 = vmatprep.subr.bf16.mxu0 0
      %1422 = vmatpush1.bf16.msra.mxu0 0
      %1423 = vmatprep.subr.bf16.mxu0 0
      %1424 = vmatpush1.bf16.msra.mxu0 0
      %1425 = vmatprep.subr.bf16.mxu0 0
      %1426 = vmatpush1.bf16.msra.mxu0 0
      %1427 = vmatprep.subr.bf16.mxu0 0
      %1428 = vmatpush1.bf16.msra.mxu0 0
      %1429 = vmatprep.subr.bf16.mxu0 0
      %1430 = vmatpush1.bf16.msra.mxu0 0
      %1431 = vmatprep.subr.bf16.mxu0 0
      %1432 = vmatpush1.bf16.msra.mxu0 0
      %1433 = vmatprep.subr.bf16.mxu0 0
      %1434 = vmatpush1.bf16.msra.mxu0 0
      %1435 = vmatprep.subr.bf16.mxu0 0
      %1436 = vmatpush1.bf16.msra.mxu0 0
      %1437 = vmatprep.subr.bf16.mxu0 0
      %1438 = vmatpush1.bf16.msra.mxu0 0
      %1439 = vmatprep.subr.bf16.mxu0 0
      %1440 = vmatpush1.bf16.msra.mxu0 0
      %1441 = vmatprep.subr.bf16.mxu0 0
      %1442 = vmatpush1.bf16.msra.mxu0 0
      %1443 = vmatprep.mubr.bf16.mxu0 0
      %1444 = vmatmul.mubr.bf16.gmra.mrb[0].mxu0 %v1400
      %v1445 = vpop.f32.mrb[0].mxu0
      %v1446 = vadd.f32 0.0, %v1445
      %v1447 = vpop.f32.mrb[0].mxu0
      %v1448 = vadd.f32 0.0, %v1447
      %v1449 = vpop.f32.mrb[0].mxu0
      %v1450 = vpop.f32.mrb[0].mxu0
      %1451 = vdwg.mxu0
      %1452 = vmatprep.subr.bf16.mxu0 0
      %1453 = vmatpush1.bf16.msra.mxu0 %v1409
      %1454 = vmatprep.subr.bf16.mxu0 0
      %1455 = vmatpush1.bf16.msra.mxu0 0
      %1456 = vmatprep.subr.bf16.mxu0 0
      %1457 = vmatpush1.bf16.msra.mxu0 0
      %1458 = vmatprep.subr.bf16.mxu0 0
      %1459 = vmatpush1.bf16.msra.mxu0 0
      %1460 = vmatprep.subr.bf16.mxu0 0
      %1461 = vmatpush1.bf16.msra.mxu0 0
      %1462 = vmatprep.subr.bf16.mxu0 0
      %1463 = vmatpush1.bf16.msra.mxu0 0
      %1464 = vmatprep.subr.bf16.mxu0 0
      %1465 = vmatpush1.bf16.msra.mxu0 0
      %1466 = vmatprep.subr.bf16.mxu0 0
      %1467 = vmatpush1.bf16.msra.mxu0 0
      %1468 = vmatprep.subr.bf16.mxu0 0
      %1469 = vmatpush1.bf16.msra.mxu0 0
      %1470 = vmatprep.subr.bf16.mxu0 0
      %1471 = vmatpush1.bf16.msra.mxu0 0
      %1472 = vmatprep.subr.bf16.mxu0 0
      %1473 = vmatpush1.bf16.msra.mxu0 0
      %1474 = vmatprep.subr.bf16.mxu0 0
      %1475 = vmatpush1.bf16.msra.mxu0 0
      %1476 = vmatprep.subr.bf16.mxu0 0
      %1477 = vmatpush1.bf16.msra.mxu0 0
      %1478 = vmatprep.subr.bf16.mxu0 0
      %1479 = vmatpush1.bf16.msra.mxu0 0
      %1480 = vmatprep.subr.bf16.mxu0 0
      %1481 = vmatpush1.bf16.msra.mxu0 0
      %1482 = vmatprep.subr.bf16.mxu0 0
      %1483 = vmatpush1.bf16.msra.mxu0 0
      %1484 = vmatprep.mubr.bf16.mxu0 0
      %1485 = vmatmul.mubr.bf16.gmra.mrb[0].mxu0 %v1400
      %v1486 = vpop.f32.mrb[0].mxu0
      %v1487 = vadd.f32 0.0, %v1486
      %v1488 = vpop.f32.mrb[0].mxu0
      %v1489 = vpop.f32.mrb[0].mxu0
      %v1490 = vpop.f32.mrb[0].mxu0
      %1491 = vdwg.mxu0
      %v1492 = vadd.f32 %v1382, %v1446
      %v1493 = vadd.f32 %v1383, %v1448
      %v1494 = vadd.f32 %v1384, %v1487
      %s1495 = scalar_lea.vmem %s1, 48
      %v1496 = vld [vmem:[%s1495] sm:$0xf]
      %1497 = vrot.lane.b32.xlu0 %v185, 101
      %v1498 = vpop.permute.xlu0 %1497
      %1499 = vrot.lane.b32.xlu0 %v193, 101
      %v1500 = vpop.permute.xlu0 %1499
      %1501 = vrot.lane.b32.xlu0 %v192, 101
      %v1502 = vpop.permute.xlu0 %1501
      %1503 = vrot.lane.b32.xlu0 %v194, 101
      %v1504 = vpop.permute.xlu0 %1503
      %vm1505 = vcmask 826368
      %v1506 = vsel %vm1505, %v1498, %v1500
      %v1507 = vsel %vm1505, %v1500, %v1502
      %v1508 = vsel %vm1505, %v1502, %v1504
      %v1510 = vsel %vm207, %v1496, 0
      %v1513 = vsel %vm211, %v1506, 0
      %v1516 = vsel %vm211, %v1507, 0
      %v1519 = vsel %vm211, %v1508, 0
      %1521 = vmatprep.subr.bf16.mxu0 %v1516
      %1522 = vmatpush1.bf16.msra.mxu0 %v1513
      %1523 = vmatprep.subr.bf16.mxu0 0
      %1524 = vmatpush1.bf16.msra.mxu0 0
      %1525 = vmatprep.subr.bf16.mxu0 0
      %1526 = vmatpush1.bf16.msra.mxu0 0
      %1527 = vmatprep.subr.bf16.mxu0 0
      %1528 = vmatpush1.bf16.msra.mxu0 0
      %1529 = vmatprep.subr.bf16.mxu0 0
      %1530 = vmatpush1.bf16.msra.mxu0 0
      %1531 = vmatprep.subr.bf16.mxu0 0
      %1532 = vmatpush1.bf16.msra.mxu0 0
      %1533 = vmatprep.subr.bf16.mxu0 0
      %1534 = vmatpush1.bf16.msra.mxu0 0
      %1535 = vmatprep.subr.bf16.mxu0 0
      %1536 = vmatpush1.bf16.msra.mxu0 0
      %1537 = vmatprep.subr.bf16.mxu0 0
      %1538 = vmatpush1.bf16.msra.mxu0 0
      %1539 = vmatprep.subr.bf16.mxu0 0
      %1540 = vmatpush1.bf16.msra.mxu0 0
      %1541 = vmatprep.subr.bf16.mxu0 0
      %1542 = vmatpush1.bf16.msra.mxu0 0
      %1543 = vmatprep.subr.bf16.mxu0 0
      %1544 = vmatpush1.bf16.msra.mxu0 0
      %1545 = vmatprep.subr.bf16.mxu0 0
      %1546 = vmatpush1.bf16.msra.mxu0 0
      %1547 = vmatprep.subr.bf16.mxu0 0
      %1548 = vmatpush1.bf16.msra.mxu0 0
      %1549 = vmatprep.subr.bf16.mxu0 0
      %1550 = vmatpush1.bf16.msra.mxu0 0
      %1551 = vmatprep.subr.bf16.mxu0 0
      %1552 = vmatpush1.bf16.msra.mxu0 0
      %1553 = vmatprep.mubr.bf16.mxu0 0
      %1554 = vmatmul.mubr.bf16.gmra.mrb[0].mxu0 %v1510
      %v1555 = vpop.f32.mrb[0].mxu0
      %v1556 = vadd.f32 0.0, %v1555
      %v1557 = vpop.f32.mrb[0].mxu0
      %v1558 = vadd.f32 0.0, %v1557
      %v1559 = vpop.f32.mrb[0].mxu0
      %v1560 = vpop.f32.mrb[0].mxu0
      %1561 = vdwg.mxu0
      %1562 = vmatprep.subr.bf16.mxu0 0
      %1563 = vmatpush1.bf16.msra.mxu0 %v1519
      %1564 = vmatprep.subr.bf16.mxu0 0
      %1565 = vmatpush1.bf16.msra.mxu0 0
      %1566 = vmatprep.subr.bf16.mxu0 0
      %1567 = vmatpush1.bf16.msra.mxu0 0
      %1568 = vmatprep.subr.bf16.mxu0 0
      %1569 = vmatpush1.bf16.msra.mxu0 0
      %1570 = vmatprep.subr.bf16.mxu0 0
      %1571 = vmatpush1.bf16.msra.mxu0 0
      %1572 = vmatprep.subr.bf16.mxu0 0
      %1573 = vmatpush1.bf16.msra.mxu0 0
      %1574 = vmatprep.subr.bf16.mxu0 0
      %1575 = vmatpush1.bf16.msra.mxu0 0
      %1576 = vmatprep.subr.bf16.mxu0 0
      %1577 = vmatpush1.bf16.msra.mxu0 0
      %1578 = vmatprep.subr.bf16.mxu0 0
      %1579 = vmatpush1.bf16.msra.mxu0 0
      %1580 = vmatprep.subr.bf16.mxu0 0
      %1581 = vmatpush1.bf16.msra.mxu0 0
      %1582 = vmatprep.subr.bf16.mxu0 0
      %1583 = vmatpush1.bf16.msra.mxu0 0
      %1584 = vmatprep.subr.bf16.mxu0 0
      %1585 = vmatpush1.bf16.msra.mxu0 0
      %1586 = vmatprep.subr.bf16.mxu0 0
      %1587 = vmatpush1.bf16.msra.mxu0 0
      %1588 = vmatprep.subr.bf16.mxu0 0
      %1589 = vmatpush1.bf16.msra.mxu0 0
      %1590 = vmatprep.subr.bf16.mxu0 0
      %1591 = vmatpush1.bf16.msra.mxu0 0
      %1592 = vmatprep.subr.bf16.mxu0 0
      %1593 = vmatpush1.bf16.msra.mxu0 0
      %1594 = vmatprep.mubr.bf16.mxu0 0
      %1595 = vmatmul.mubr.bf16.gmra.mrb[0].mxu0 %v1510
      %v1596 = vpop.f32.mrb[0].mxu0
      %v1597 = vadd.f32 0.0, %v1596
      %v1598 = vpop.f32.mrb[0].mxu0
      %v1599 = vpop.f32.mrb[0].mxu0
      %v1600 = vpop.f32.mrb[0].mxu0
      %1601 = vdwg.mxu0
      %v1602 = vadd.f32 %v1492, %v1556
      %v1603 = vadd.f32 %v1493, %v1558
      %v1604 = vadd.f32 %v1494, %v1597
      %s1605 = scalar_lea.vmem %s1, 52
      %v1606 = vld [vmem:[%s1605] sm:$0xf]
      %1607 = vrot.lane.b32.xlu0 %v185, 100
      %v1608 = vpop.permute.xlu0 %1607
      %1609 = vrot.lane.b32.xlu0 %v193, 100
      %v1610 = vpop.permute.xlu0 %1609
      %1611 = vrot.lane.b32.xlu0 %v192, 100
      %v1612 = vpop.permute.xlu0 %1611
      %1613 = vrot.lane.b32.xlu0 %v194, 100
      %v1614 = vpop.permute.xlu0 %1613
      %vm1615 = vcmask 818176
      %v1616 = vsel %vm1615, %v1608, %v1610
      %v1617 = vsel %vm1615, %v1610, %v1612
      %v1618 = vsel %vm1615, %v1612, %v1614
      %v1620 = vsel %vm207, %v1606, 0
      %v1623 = vsel %vm211, %v1616, 0
      %v1626 = vsel %vm211, %v1617, 0
      %v1629 = vsel %vm211, %v1618, 0
      %1631 = vmatprep.subr.bf16.mxu0 %v1626
      %1632 = vmatpush1.bf16.msra.mxu0 %v1623
      %1633 = vmatprep.subr.bf16.mxu0 0
      %1634 = vmatpush1.bf16.msra.mxu0 0
      %1635 = vmatprep.subr.bf16.mxu0 0
      %1636 = vmatpush1.bf16.msra.mxu0 0
      %1637 = vmatprep.subr.bf16.mxu0 0
      %1638 = vmatpush1.bf16.msra.mxu0 0
      %1639 = vmatprep.subr.bf16.mxu0 0
      %1640 = vmatpush1.bf16.msra.mxu0 0
      %1641 = vmatprep.subr.bf16.mxu0 0
      %1642 = vmatpush1.bf16.msra.mxu0 0
      %1643 = vmatprep.subr.bf16.mxu0 0
      %1644 = vmatpush1.bf16.msra.mxu0 0
      %1645 = vmatprep.subr.bf16.mxu0 0
      %1646 = vmatpush1.bf16.msra.mxu0 0
      %1647 = vmatprep.subr.bf16.mxu0 0
      %1648 = vmatpush1.bf16.msra.mxu0 0
      %1649 = vmatprep.subr.bf16.mxu0 0
      %1650 = vmatpush1.bf16.msra.mxu0 0
      %1651 = vmatprep.subr.bf16.mxu0 0
      %1652 = vmatpush1.bf16.msra.mxu0 0
      %1653 = vmatprep.subr.bf16.mxu0 0
      %1654 = vmatpush1.bf16.msra.mxu0 0
      %1655 = vmatprep.subr.bf16.mxu0 0
      %1656 = vmatpush1.bf16.msra.mxu0 0
      %1657 = vmatprep.subr.bf16.mxu0 0
      %1658 = vmatpush1.bf16.msra.mxu0 0
      %1659 = vmatprep.subr.bf16.mxu0 0
      %1660 = vmatpush1.bf16.msra.mxu0 0
      %1661 = vmatprep.subr.bf16.mxu0 0
      %1662 = vmatpush1.bf16.msra.mxu0 0
      %1663 = vmatprep.mubr.bf16.mxu0 0
      %1664 = vmatmul.mubr.bf16.gmra.mrb[0].mxu0 %v1620
      %v1665 = vpop.f32.mrb[0].mxu0
      %v1666 = vadd.f32 0.0, %v1665
      %v1667 = vpop.f32.mrb[0].mxu0
      %v1668 = vadd.f32 0.0, %v1667
      %v1669 = vpop.f32.mrb[0].mxu0
      %v1670 = vpop.f32.mrb[0].mxu0
      %1671 = vdwg.mxu0
      %1672 = vmatprep.subr.bf16.mxu0 0
      %1673 = vmatpush1.bf16.msra.mxu0 %v1629
      %1674 = vmatprep.subr.bf16.mxu0 0
      %1675 = vmatpush1.bf16.msra.mxu0 0
      %1676 = vmatprep.subr.bf16.mxu0 0
      %1677 = vmatpush1.bf16.msra.mxu0 0
      %1678 = vmatprep.subr.bf16.mxu0 0
      %1679 = vmatpush1.bf16.msra.mxu0 0
      %1680 = vmatprep.subr.bf16.mxu0 0
      %1681 = vmatpush1.bf16.msra.mxu0 0
      %1682 = vmatprep.subr.bf16.mxu0 0
      %1683 = vmatpush1.bf16.msra.mxu0 0
      %1684 = vmatprep.subr.bf16.mxu0 0
      %1685 = vmatpush1.bf16.msra.mxu0 0
      %1686 = vmatprep.subr.bf16.mxu0 0
      %1687 = vmatpush1.bf16.msra.mxu0 0
      %1688 = vmatprep.subr.bf16.mxu0 0
      %1689 = vmatpush1.bf16.msra.mxu0 0
      %1690 = vmatprep.subr.bf16.mxu0 0
      %1691 = vmatpush1.bf16.msra.mxu0 0
      %1692 = vmatprep.subr.bf16.mxu0 0
      %1693 = vmatpush1.bf16.msra.mxu0 0
      %1694 = vmatprep.subr.bf16.mxu0 0
      %1695 = vmatpush1.bf16.msra.mxu0 0
      %1696 = vmatprep.subr.bf16.mxu0 0
      %1697 = vmatpush1.bf16.msra.mxu0 0
      %1698 = vmatprep.subr.bf16.mxu0 0
      %1699 = vmatpush1.bf16.msra.mxu0 0
      %1700 = vmatprep.subr.bf16.mxu0 0
      %1701 = vmatpush1.bf16.msra.mxu0 0
      %1702 = vmatprep.subr.bf16.mxu0 0
      %1703 = vmatpush1.bf16.msra.mxu0 0
      %1704 = vmatprep.mubr.bf16.mxu0 0
      %1705 = vmatmul.mubr.bf16.gmra.mrb[0].mxu0 %v1620
      %v1706 = vpop.f32.mrb[0].mxu0
      %v1707 = vadd.f32 0.0, %v1706
      %v1708 = vpop.f32.mrb[0].mxu0
      %v1709 = vpop.f32.mrb[0].mxu0
      %v1710 = vpop.f32.mrb[0].mxu0
      %1711 = vdwg.mxu0
      %v1712 = vadd.f32 %v1602, %v1666
      %v1713 = vadd.f32 %v1603, %v1668
      %v1714 = vadd.f32 %v1604, %v1707
      %s1715 = scalar_lea.vmem %s1, 56
      %v1716 = vld [vmem:[%s1715] sm:$0xf]
      %1717 = vrot.lane.b32.xlu0 %v185, 84
      %v1718 = vpop.permute.xlu0 %1717
      %1719 = vrot.lane.b32.xlu0 %v193, 84
      %v1720 = vpop.permute.xlu0 %1719
      %1721 = vrot.lane.b32.xlu0 %v192, 84
      %v1722 = vpop.permute.xlu0 %1721
      %1723 = vrot.lane.b32.xlu0 %v194, 84
      %v1724 = vpop.permute.xlu0 %1723
      %vm1725 = vcmask 687104
      %v1726 = vsel %vm1725, %v1718, %v1720
      %v1727 = vsel %vm1725, %v1720, %v1722
      %v1728 = vsel %vm1725, %v1722, %v1724
      %v1730 = vsel %vm207, %v1716, 0
      %v1733 = vsel %vm211, %v1726, 0
      %v1736 = vsel %vm211, %v1727, 0
      %v1739 = vsel %vm211, %v1728, 0
      %1741 = vmatprep.subr.bf16.mxu0 %v1736
      %1742 = vmatpush1.bf16.msra.mxu0 %v1733
      %1743 = vmatprep.subr.bf16.mxu0 0
      %1744 = vmatpush1.bf16.msra.mxu0 0
      %1745 = vmatprep.subr.bf16.mxu0 0
      %1746 = vmatpush1.bf16.msra.mxu0 0
      %1747 = vmatprep.subr.bf16.mxu0 0
      %1748 = vmatpush1.bf16.msra.mxu0 0
      %1749 = vmatprep.subr.bf16.mxu0 0
      %1750 = vmatpush1.bf16.msra.mxu0 0
      %1751 = vmatprep.subr.bf16.mxu0 0
      %1752 = vmatpush1.bf16.msra.mxu0 0
      %1753 = vmatprep.subr.bf16.mxu0 0
      %1754 = vmatpush1.bf16.msra.mxu0 0
      %1755 = vmatprep.subr.bf16.mxu0 0
      %1756 = vmatpush1.bf16.msra.mxu0 0
      %1757 = vmatprep.subr.bf16.mxu0 0
      %1758 = vmatpush1.bf16.msra.mxu0 0
      %1759 = vmatprep.subr.bf16.mxu0 0
      %1760 = vmatpush1.bf16.msra.mxu0 0
      %1761 = vmatprep.subr.bf16.mxu0 0
      %1762 = vmatpush1.bf16.msra.mxu0 0
      %1763 = vmatprep.subr.bf16.mxu0 0
      %1764 = vmatpush1.bf16.msra.mxu0 0
      %1765 = vmatprep.subr.bf16.mxu0 0
      %1766 = vmatpush1.bf16.msra.mxu0 0
      %1767 = vmatprep.subr.bf16.mxu0 0
      %1768 = vmatpush1.bf16.msra.mxu0 0
      %1769 = vmatprep.subr.bf16.mxu0 0
      %1770 = vmatpush1.bf16.msra.mxu0 0
      %1771 = vmatprep.subr.bf16.mxu0 0
      %1772 = vmatpush1.bf16.msra.mxu0 0
      %1773 = vmatprep.mubr.bf16.mxu0 0
      %1774 = vmatmul.mubr.bf16.gmra.mrb[0].mxu0 %v1730
      %v1775 = vpop.f32.mrb[0].mxu0
      %v1776 = vadd.f32 0.0, %v1775
      %v1777 = vpop.f32.mrb[0].mxu0
      %v1778 = vadd.f32 0.0, %v1777
      %v1779 = vpop.f32.mrb[0].mxu0
      %v1780 = vpop.f32.mrb[0].mxu0
      %1781 = vdwg.mxu0
      %1782 = vmatprep.subr.bf16.mxu0 0
      %1783 = vmatpush1.bf16.msra.mxu0 %v1739
      %1784 = vmatprep.subr.bf16.mxu0 0
      %1785 = vmatpush1.bf16.msra.mxu0 0
      %1786 = vmatprep.subr.bf16.mxu0 0
      %1787 = vmatpush1.bf16.msra.mxu0 0
      %1788 = vmatprep.subr.bf16.mxu0 0
      %1789 = vmatpush1.bf16.msra.mxu0 0
      %1790 = vmatprep.subr.bf16.mxu0 0
      %1791 = vmatpush1.bf16.msra.mxu0 0
      %1792 = vmatprep.subr.bf16.mxu0 0
      %1793 = vmatpush1.bf16.msra.mxu0 0
      %1794 = vmatprep.subr.bf16.mxu0 0
      %1795 = vmatpush1.bf16.msra.mxu0 0
      %1796 = vmatprep.subr.bf16.mxu0 0
      %1797 = vmatpush1.bf16.msra.mxu0 0
      %1798 = vmatprep.subr.bf16.mxu0 0
      %1799 = vmatpush1.bf16.msra.mxu0 0
      %1800 = vmatprep.subr.bf16.mxu0 0
      %1801 = vmatpush1.bf16.msra.mxu0 0
      %1802 = vmatprep.subr.bf16.mxu0 0
      %1803 = vmatpush1.bf16.msra.mxu0 0
      %1804 = vmatprep.subr.bf16.mxu0 0
      %1805 = vmatpush1.bf16.msra.mxu0 0
      %1806 = vmatprep.subr.bf16.mxu0 0
      %1807 = vmatpush1.bf16.msra.mxu0 0
      %1808 = vmatprep.subr.bf16.mxu0 0
      %1809 = vmatpush1.bf16.msra.mxu0 0
      %1810 = vmatprep.subr.bf16.mxu0 0
      %1811 = vmatpush1.bf16.msra.mxu0 0
      %1812 = vmatprep.subr.bf16.mxu0 0
      %1813 = vmatpush1.bf16.msra.mxu0 0
      %1814 = vmatprep.mubr.bf16.mxu0 0
      %1815 = vmatmul.mubr.bf16.gmra.mrb[0].mxu0 %v1730
      %v1816 = vpop.f32.mrb[0].mxu0
      %v1817 = vadd.f32 0.0, %v1816
      %v1818 = vpop.f32.mrb[0].mxu0
      %v1819 = vpop.f32.mrb[0].mxu0
      %v1820 = vpop.f32.mrb[0].mxu0
      %1821 = vdwg.mxu0
      %v1822 = vadd.f32 %v1712, %v1776
      %v1823 = vadd.f32 %v1713, %v1778
      %v1824 = vadd.f32 %v1714, %v1817
      %s1825 = scalar_lea.vmem %s1, 60
      %v1826 = vld [vmem:[%s1825] sm:$0xf]
      %1827 = vrot.lane.b32.xlu0 %v185, 83
      %v1828 = vpop.permute.xlu0 %1827
      %1829 = vrot.lane.b32.xlu0 %v193, 83
      %v1830 = vpop.permute.xlu0 %1829
      %1831 = vrot.lane.b32.xlu0 %v192, 83
      %v1832 = vpop.permute.xlu0 %1831
      %1833 = vrot.lane.b32.xlu0 %v194, 83
      %v1834 = vpop.permute.xlu0 %1833
      %vm1835 = vcmask 678912
      %v1836 = vsel %vm1835, %v1828, %v1830
      %v1837 = vsel %vm1835, %v1830, %v1832
      %v1838 = vsel %vm1835, %v1832, %v1834
      %v1840 = vsel %vm207, %v1826, 0
      %v1843 = vsel %vm211, %v1836, 0
      %v1846 = vsel %vm211, %v1837, 0
      %v1849 = vsel %vm211, %v1838, 0
      %1851 = vmatprep.subr.bf16.mxu0 %v1846
      %1852 = vmatpush1.bf16.msra.mxu0 %v1843
      %1853 = vmatprep.subr.bf16.mxu0 0
      %1854 = vmatpush1.bf16.msra.mxu0 0
      %1855 = vmatprep.subr.bf16.mxu0 0
      %1856 = vmatpush1.bf16.msra.mxu0 0
      %1857 = vmatprep.subr.bf16.mxu0 0
      %1858 = vmatpush1.bf16.msra.mxu0 0
      %1859 = vmatprep.subr.bf16.mxu0 0
      %1860 = vmatpush1.bf16.msra.mxu0 0
      %1861 = vmatprep.subr.bf16.mxu0 0
      %1862 = vmatpush1.bf16.msra.mxu0 0
      %1863 = vmatprep.subr.bf16.mxu0 0
      %1864 = vmatpush1.bf16.msra.mxu0 0
      %1865 = vmatprep.subr.bf16.mxu0 0
      %1866 = vmatpush1.bf16.msra.mxu0 0
      %1867 = vmatprep.subr.bf16.mxu0 0
      %1868 = vmatpush1.bf16.msra.mxu0 0
      %1869 = vmatprep.subr.bf16.mxu0 0
      %1870 = vmatpush1.bf16.msra.mxu0 0
      %1871 = vmatprep.subr.bf16.mxu0 0
      %1872 = vmatpush1.bf16.msra.mxu0 0
      %1873 = vmatprep.subr.bf16.mxu0 0
      %1874 = vmatpush1.bf16.msra.mxu0 0
      %1875 = vmatprep.subr.bf16.mxu0 0
      %1876 = vmatpush1.bf16.msra.mxu0 0
      %1877 = vmatprep.subr.bf16.mxu0 0
      %1878 = vmatpush1.bf16.msra.mxu0 0
      %1879 = vmatprep.subr.bf16.mxu0 0
      %1880 = vmatpush1.bf16.msra.mxu0 0
      %1881 = vmatprep.subr.bf16.mxu0 0
      %1882 = vmatpush1.bf16.msra.mxu0 0
      %1883 = vmatprep.mubr.bf16.mxu0 0
      %1884 = vmatmul.mubr.bf16.gmra.mrb[0].mxu0 %v1840
      %v1885 = vpop.f32.mrb[0].mxu0
      %v1886 = vadd.f32 0.0, %v1885
      %v1887 = vpop.f32.mrb[0].mxu0
      %v1888 = vadd.f32 0.0, %v1887
      %v1889 = vpop.f32.mrb[0].mxu0
      %v1890 = vpop.f32.mrb[0].mxu0
      %1891 = vdwg.mxu0
      %1892 = vmatprep.subr.bf16.mxu0 0
      %1893 = vmatpush1.bf16.msra.mxu0 %v1849
      %1894 = vmatprep.subr.bf16.mxu0 0
      %1895 = vmatpush1.bf16.msra.mxu0 0
      %1896 = vmatprep.subr.bf16.mxu0 0
      %1897 = vmatpush1.bf16.msra.mxu0 0
      %1898 = vmatprep.subr.bf16.mxu0 0
      %1899 = vmatpush1.bf16.msra.mxu0 0
      %1900 = vmatprep.subr.bf16.mxu0 0
      %1901 = vmatpush1.bf16.msra.mxu0 0
      %1902 = vmatprep.subr.bf16.mxu0 0
      %1903 = vmatpush1.bf16.msra.mxu0 0
      %1904 = vmatprep.subr.bf16.mxu0 0
      %1905 = vmatpush1.bf16.msra.mxu0 0
      %1906 = vmatprep.subr.bf16.mxu0 0
      %1907 = vmatpush1.bf16.msra.mxu0 0
      %1908 = vmatprep.subr.bf16.mxu0 0
      %1909 = vmatpush1.bf16.msra.mxu0 0
      %1910 = vmatprep.subr.bf16.mxu0 0
      %1911 = vmatpush1.bf16.msra.mxu0 0
      %1912 = vmatprep.subr.bf16.mxu0 0
      %1913 = vmatpush1.bf16.msra.mxu0 0
      %1914 = vmatprep.subr.bf16.mxu0 0
      %1915 = vmatpush1.bf16.msra.mxu0 0
      %1916 = vmatprep.subr.bf16.mxu0 0
      %1917 = vmatpush1.bf16.msra.mxu0 0
      %1918 = vmatprep.subr.bf16.mxu0 0
      %1919 = vmatpush1.bf16.msra.mxu0 0
      %1920 = vmatprep.subr.bf16.mxu0 0
      %1921 = vmatpush1.bf16.msra.mxu0 0
      %1922 = vmatprep.subr.bf16.mxu0 0
      %1923 = vmatpush1.bf16.msra.mxu0 0
      %1924 = vmatprep.mubr.bf16.mxu0 0
      %1925 = vmatmul.mubr.bf16.gmra.mrb[0].mxu0 %v1840
      %v1926 = vpop.f32.mrb[0].mxu0
      %v1927 = vadd.f32 0.0, %v1926
      %v1928 = vpop.f32.mrb[0].mxu0
      %v1929 = vpop.f32.mrb[0].mxu0
      %v1930 = vpop.f32.mrb[0].mxu0
      %1931 = vdwg.mxu0
      %v1932 = vadd.f32 %v1822, %v1886
      %v1933 = vadd.f32 %v1823, %v1888
      %v1934 = vadd.f32 %v1824, %v1927
      %s1935 = scalar_lea.vmem %s1, 64
      %v1936 = vld [vmem:[%s1935] sm:$0xf]
      %1937 = vrot.lane.b32.xlu0 %v185, 82
      %v1938 = vpop.permute.xlu0 %1937
      %1939 = vrot.lane.b32.xlu0 %v193, 82
      %v1940 = vpop.permute.xlu0 %1939
      %1941 = vrot.lane.b32.xlu0 %v192, 82
      %v1942 = vpop.permute.xlu0 %1941
      %1943 = vrot.lane.b32.xlu0 %v194, 82
      %v1944 = vpop.permute.xlu0 %1943
      %vm1945 = vcmask 670720
      %v1946 = vsel %vm1945, %v1938, %v1940
      %v1947 = vsel %vm1945, %v1940, %v1942
      %v1948 = vsel %vm1945, %v1942, %v1944
      %v1950 = vsel %vm207, %v1936, 0
      %v1953 = vsel %vm211, %v1946, 0
      %v1956 = vsel %vm211, %v1947, 0
      %v1959 = vsel %vm211, %v1948, 0
      %1961 = vmatprep.subr.bf16.mxu0 %v1956
      %1962 = vmatpush1.bf16.msra.mxu0 %v1953
      %1963 = vmatprep.subr.bf16.mxu0 0
      %1964 = vmatpush1.bf16.msra.mxu0 0
      %1965 = vmatprep.subr.bf16.mxu0 0
      %1966 = vmatpush1.bf16.msra.mxu0 0
      %1967 = vmatprep.subr.bf16.mxu0 0
      %1968 = vmatpush1.bf16.msra.mxu0 0
      %1969 = vmatprep.subr.bf16.mxu0 0
      %1970 = vmatpush1.bf16.msra.mxu0 0
      %1971 = vmatprep.subr.bf16.mxu0 0
      %1972 = vmatpush1.bf16.msra.mxu0 0
      %1973 = vmatprep.subr.bf16.mxu0 0
      %1974 = vmatpush1.bf16.msra.mxu0 0
      %1975 = vmatprep.subr.bf16.mxu0 0
      %1976 = vmatpush1.bf16.msra.mxu0 0
      %1977 = vmatprep.subr.bf16.mxu0 0
      %1978 = vmatpush1.bf16.msra.mxu0 0
      %1979 = vmatprep.subr.bf16.mxu0 0
      %1980 = vmatpush1.bf16.msra.mxu0 0
      %1981 = vmatprep.subr.bf16.mxu0 0
      %1982 = vmatpush1.bf16.msra.mxu0 0
      %1983 = vmatprep.subr.bf16.mxu0 0
      %1984 = vmatpush1.bf16.msra.mxu0 0
      %1985 = vmatprep.subr.bf16.mxu0 0
      %1986 = vmatpush1.bf16.msra.mxu0 0
      %1987 = vmatprep.subr.bf16.mxu0 0
      %1988 = vmatpush1.bf16.msra.mxu0 0
      %1989 = vmatprep.subr.bf16.mxu0 0
      %1990 = vmatpush1.bf16.msra.mxu0 0
      %1991 = vmatprep.subr.bf16.mxu0 0
      %1992 = vmatpush1.bf16.msra.mxu0 0
      %1993 = vmatprep.mubr.bf16.mxu0 0
      %1994 = vmatmul.mubr.bf16.gmra.mrb[0].mxu0 %v1950
      %v1995 = vpop.f32.mrb[0].mxu0
      %v1996 = vadd.f32 0.0, %v1995
      %v1997 = vpop.f32.mrb[0].mxu0
      %v1998 = vadd.f32 0.0, %v1997
      %v1999 = vpop.f32.mrb[0].mxu0
      %v2000 = vpop.f32.mrb[0].mxu0
      %2001 = vdwg.mxu0
      %2002 = vmatprep.subr.bf16.mxu0 0
      %2003 = vmatpush1.bf16.msra.mxu0 %v1959
      %2004 = vmatprep.subr.bf16.mxu0 0
      %2005 = vmatpush1.bf16.msra.mxu0 0
      %2006 = vmatprep.subr.bf16.mxu0 0
      %2007 = vmatpush1.bf16.msra.mxu0 0
      %2008 = vmatprep.subr.bf16.mxu0 0
      %2009 = vmatpush1.bf16.msra.mxu0 0
      %2010 = vmatprep.subr.bf16.mxu0 0
      %2011 = vmatpush1.bf16.msra.mxu0 0
      %2012 = vmatprep.subr.bf16.mxu0 0
      %2013 = vmatpush1.bf16.msra.mxu0 0
      %2014 = vmatprep.subr.bf16.mxu0 0
      %2015 = vmatpush1.bf16.msra.mxu0 0
      %2016 = vmatprep.subr.bf16.mxu0 0
      %2017 = vmatpush1.bf16.msra.mxu0 0
      %2018 = vmatprep.subr.bf16.mxu0 0
      %2019 = vmatpush1.bf16.msra.mxu0 0
      %2020 = vmatprep.subr.bf16.mxu0 0
      %2021 = vmatpush1.bf16.msra.mxu0 0
      %2022 = vmatprep.subr.bf16.mxu0 0
      %2023 = vmatpush1.bf16.msra.mxu0 0
      %2024 = vmatprep.subr.bf16.mxu0 0
      %2025 = vmatpush1.bf16.msra.mxu0 0
      %2026 = vmatprep.subr.bf16.mxu0 0
      %2027 = vmatpush1.bf16.msra.mxu0 0
      %2028 = vmatprep.subr.bf16.mxu0 0
      %2029 = vmatpush1.bf16.msra.mxu0 0
      %2030 = vmatprep.subr.bf16.mxu0 0
      %2031 = vmatpush1.bf16.msra.mxu0 0
      %2032 = vmatprep.subr.bf16.mxu0 0
      %2033 = vmatpush1.bf16.msra.mxu0 0
      %2034 = vmatprep.mubr.bf16.mxu0 0
      %2035 = vmatmul.mubr.bf16.gmra.mrb[0].mxu0 %v1950
      %v2036 = vpop.f32.mrb[0].mxu0
      %v2037 = vadd.f32 0.0, %v2036
      %v2038 = vpop.f32.mrb[0].mxu0
      %v2039 = vpop.f32.mrb[0].mxu0
      %v2040 = vpop.f32.mrb[0].mxu0
      %2041 = vdwg.mxu0
      %v2042 = vadd.f32 %v1932, %v1996
      %v2043 = vadd.f32 %v1933, %v1998
      %v2044 = vadd.f32 %v1934, %v2037
      %s2045 = scalar_lea.vmem %s1, 68
      %v2046 = vld [vmem:[%s2045] sm:$0xf]
      %2047 = vrot.lane.b32.xlu0 %v185, 81
      %v2048 = vpop.permute.xlu0 %2047
      %2049 = vrot.lane.b32.xlu0 %v193, 81
      %v2050 = vpop.permute.xlu0 %2049
      %2051 = vrot.lane.b32.xlu0 %v192, 81
      %v2052 = vpop.permute.xlu0 %2051
      %2053 = vrot.lane.b32.xlu0 %v194, 81
      %v2054 = vpop.permute.xlu0 %2053
      %vm2055 = vcmask 662528
      %v2056 = vsel %vm2055, %v2048, %v2050
      %v2057 = vsel %vm2055, %v2050, %v2052
      %v2058 = vsel %vm2055, %v2052, %v2054
      %v2060 = vsel %vm207, %v2046, 0
      %v2063 = vsel %vm211, %v2056, 0
      %v2066 = vsel %vm211, %v2057, 0
      %v2069 = vsel %vm211, %v2058, 0
      %2071 = vmatprep.subr.bf16.mxu0 %v2066
      %2072 = vmatpush1.bf16.msra.mxu0 %v2063
      %2073 = vmatprep.subr.bf16.mxu0 0
      %2074 = vmatpush1.bf16.msra.mxu0 0
      %2075 = vmatprep.subr.bf16.mxu0 0
      %2076 = vmatpush1.bf16.msra.mxu0 0
      %2077 = vmatprep.subr.bf16.mxu0 0
      %2078 = vmatpush1.bf16.msra.mxu0 0
      %2079 = vmatprep.subr.bf16.mxu0 0
      %2080 = vmatpush1.bf16.msra.mxu0 0
      %2081 = vmatprep.subr.bf16.mxu0 0
      %2082 = vmatpush1.bf16.msra.mxu0 0
      %2083 = vmatprep.subr.bf16.mxu0 0
      %2084 = vmatpush1.bf16.msra.mxu0 0
      %2085 = vmatprep.subr.bf16.mxu0 0
      %2086 = vmatpush1.bf16.msra.mxu0 0
      %2087 = vmatprep.subr.bf16.mxu0 0
      %2088 = vmatpush1.bf16.msra.mxu0 0
      %2089 = vmatprep.subr.bf16.mxu0 0
      %2090 = vmatpush1.bf16.msra.mxu0 0
      %2091 = vmatprep.subr.bf16.mxu0 0
      %2092 = vmatpush1.bf16.msra.mxu0 0
      %2093 = vmatprep.subr.bf16.mxu0 0
      %2094 = vmatpush1.bf16.msra.mxu0 0
      %2095 = vmatprep.subr.bf16.mxu0 0
      %2096 = vmatpush1.bf16.msra.mxu0 0
      %2097 = vmatprep.subr.bf16.mxu0 0
      %2098 = vmatpush1.bf16.msra.mxu0 0
      %2099 = vmatprep.subr.bf16.mxu0 0
      %2100 = vmatpush1.bf16.msra.mxu0 0
      %2101 = vmatprep.subr.bf16.mxu0 0
      %2102 = vmatpush1.bf16.msra.mxu0 0
      %2103 = vmatprep.mubr.bf16.mxu0 0
      %2104 = vmatmul.mubr.bf16.gmra.mrb[0].mxu0 %v2060
      %v2105 = vpop.f32.mrb[0].mxu0
      %v2106 = vadd.f32 0.0, %v2105
      %v2107 = vpop.f32.mrb[0].mxu0
      %v2108 = vadd.f32 0.0, %v2107
      %v2109 = vpop.f32.mrb[0].mxu0
      %v2110 = vpop.f32.mrb[0].mxu0
      %2111 = vdwg.mxu0
      %2112 = vmatprep.subr.bf16.mxu0 0
      %2113 = vmatpush1.bf16.msra.mxu0 %v2069
      %2114 = vmatprep.subr.bf16.mxu0 0
      %2115 = vmatpush1.bf16.msra.mxu0 0
      %2116 = vmatprep.subr.bf16.mxu0 0
      %2117 = vmatpush1.bf16.msra.mxu0 0
      %2118 = vmatprep.subr.bf16.mxu0 0
      %2119 = vmatpush1.bf16.msra.mxu0 0
      %2120 = vmatprep.subr.bf16.mxu0 0
      %2121 = vmatpush1.bf16.msra.mxu0 0
      %2122 = vmatprep.subr.bf16.mxu0 0
      %2123 = vmatpush1.bf16.msra.mxu0 0
      %2124 = vmatprep.subr.bf16.mxu0 0
      %2125 = vmatpush1.bf16.msra.mxu0 0
      %2126 = vmatprep.subr.bf16.mxu0 0
      %2127 = vmatpush1.bf16.msra.mxu0 0
      %2128 = vmatprep.subr.bf16.mxu0 0
      %2129 = vmatpush1.bf16.msra.mxu0 0
      %2130 = vmatprep.subr.bf16.mxu0 0
      %2131 = vmatpush1.bf16.msra.mxu0 0
      %2132 = vmatprep.subr.bf16.mxu0 0
      %2133 = vmatpush1.bf16.msra.mxu0 0
      %2134 = vmatprep.subr.bf16.mxu0 0
      %2135 = vmatpush1.bf16.msra.mxu0 0
      %2136 = vmatprep.subr.bf16.mxu0 0
      %2137 = vmatpush1.bf16.msra.mxu0 0
      %2138 = vmatprep.subr.bf16.mxu0 0
      %2139 = vmatpush1.bf16.msra.mxu0 0
      %2140 = vmatprep.subr.bf16.mxu0 0
      %2141 = vmatpush1.bf16.msra.mxu0 0
      %2142 = vmatprep.subr.bf16.mxu0 0
      %2143 = vmatpush1.bf16.msra.mxu0 0
      %2144 = vmatprep.mubr.bf16.mxu0 0
      %2145 = vmatmul.mubr.bf16.gmra.mrb[0].mxu0 %v2060
      %v2146 = vpop.f32.mrb[0].mxu0
      %v2147 = vadd.f32 0.0, %v2146
      %v2148 = vpop.f32.mrb[0].mxu0
      %v2149 = vpop.f32.mrb[0].mxu0
      %v2150 = vpop.f32.mrb[0].mxu0
      %2151 = vdwg.mxu0
      %v2152 = vadd.f32 %v2042, %v2106
      %v2153 = vadd.f32 %v2043, %v2108
      %v2154 = vadd.f32 %v2044, %v2147
      %s2155 = scalar_lea.vmem %s1, 72
      %v2156 = vld [vmem:[%s2155] sm:$0xf]
      %2157 = vrot.lane.b32.xlu0 %v185, 80
      %v2158 = vpop.permute.xlu0 %2157
      %2159 = vrot.lane.b32.xlu0 %v193, 80
      %v2160 = vpop.permute.xlu0 %2159
      %2161 = vrot.lane.b32.xlu0 %v192, 80
      %v2162 = vpop.permute.xlu0 %2161
      %2163 = vrot.lane.b32.xlu0 %v194, 80
      %v2164 = vpop.permute.xlu0 %2163
      %vm2165 = vcmask 654336
      %v2166 = vsel %vm2165, %v2158, %v2160
      %v2167 = vsel %vm2165, %v2160, %v2162
      %v2168 = vsel %vm2165, %v2162, %v2164
      %v2170 = vsel %vm207, %v2156, 0
      %v2173 = vsel %vm211, %v2166, 0
      %v2176 = vsel %vm211, %v2167, 0
      %v2179 = vsel %vm211, %v2168, 0
      %2181 = vmatprep.subr.bf16.mxu0 %v2176
      %2182 = vmatpush1.bf16.msra.mxu0 %v2173
      %2183 = vmatprep.subr.bf16.mxu0 0
      %2184 = vmatpush1.bf16.msra.mxu0 0
      %2185 = vmatprep.subr.bf16.mxu0 0
      %2186 = vmatpush1.bf16.msra.mxu0 0
      %2187 = vmatprep.subr.bf16.mxu0 0
      %2188 = vmatpush1.bf16.msra.mxu0 0
      %2189 = vmatprep.subr.bf16.mxu0 0
      %2190 = vmatpush1.bf16.msra.mxu0 0
      %2191 = vmatprep.subr.bf16.mxu0 0
      %2192 = vmatpush1.bf16.msra.mxu0 0
      %2193 = vmatprep.subr.bf16.mxu0 0
      %2194 = vmatpush1.bf16.msra.mxu0 0
      %2195 = vmatprep.subr.bf16.mxu0 0
      %2196 = vmatpush1.bf16.msra.mxu0 0
      %2197 = vmatprep.subr.bf16.mxu0 0
      %2198 = vmatpush1.bf16.msra.mxu0 0
      %2199 = vmatprep.subr.bf16.mxu0 0
      %2200 = vmatpush1.bf16.msra.mxu0 0
      %2201 = vmatprep.subr.bf16.mxu0 0
      %2202 = vmatpush1.bf16.msra.mxu0 0
      %2203 = vmatprep.subr.bf16.mxu0 0
      %2204 = vmatpush1.bf16.msra.mxu0 0
      %2205 = vmatprep.subr.bf16.mxu0 0
      %2206 = vmatpush1.bf16.msra.mxu0 0
      %2207 = vmatprep.subr.bf16.mxu0 0
      %2208 = vmatpush1.bf16.msra.mxu0 0
      %2209 = vmatprep.subr.bf16.mxu0 0
      %2210 = vmatpush1.bf16.msra.mxu0 0
      %2211 = vmatprep.subr.bf16.mxu0 0
      %2212 = vmatpush1.bf16.msra.mxu0 0
      %2213 = vmatprep.mubr.bf16.mxu0 0
      %2214 = vmatmul.mubr.bf16.gmra.mrb[0].mxu0 %v2170
      %v2215 = vpop.f32.mrb[0].mxu0
      %v2216 = vadd.f32 0.0, %v2215
      %v2217 = vpop.f32.mrb[0].mxu0
      %v2218 = vadd.f32 0.0, %v2217
      %v2219 = vpop.f32.mrb[0].mxu0
      %v2220 = vpop.f32.mrb[0].mxu0
      %2221 = vdwg.mxu0
      %2222 = vmatprep.subr.bf16.mxu0 0
      %2223 = vmatpush1.bf16.msra.mxu0 %v2179
      %2224 = vmatprep.subr.bf16.mxu0 0
      %2225 = vmatpush1.bf16.msra.mxu0 0
      %2226 = vmatprep.subr.bf16.mxu0 0
      %2227 = vmatpush1.bf16.msra.mxu0 0
      %2228 = vmatprep.subr.bf16.mxu0 0
      %2229 = vmatpush1.bf16.msra.mxu0 0
      %2230 = vmatprep.subr.bf16.mxu0 0
      %2231 = vmatpush1.bf16.msra.mxu0 0
      %2232 = vmatprep.subr.bf16.mxu0 0
      %2233 = vmatpush1.bf16.msra.mxu0 0
      %2234 = vmatprep.subr.bf16.mxu0 0
      %2235 = vmatpush1.bf16.msra.mxu0 0
      %2236 = vmatprep.subr.bf16.mxu0 0
      %2237 = vmatpush1.bf16.msra.mxu0 0
      %2238 = vmatprep.subr.bf16.mxu0 0
      %2239 = vmatpush1.bf16.msra.mxu0 0
      %2240 = vmatprep.subr.bf16.mxu0 0
      %2241 = vmatpush1.bf16.msra.mxu0 0
      %2242 = vmatprep.subr.bf16.mxu0 0
      %2243 = vmatpush1.bf16.msra.mxu0 0
      %2244 = vmatprep.subr.bf16.mxu0 0
      %2245 = vmatpush1.bf16.msra.mxu0 0
      %2246 = vmatprep.subr.bf16.mxu0 0
      %2247 = vmatpush1.bf16.msra.mxu0 0
      %2248 = vmatprep.subr.bf16.mxu0 0
      %2249 = vmatpush1.bf16.msra.mxu0 0
      %2250 = vmatprep.subr.bf16.mxu0 0
      %2251 = vmatpush1.bf16.msra.mxu0 0
      %2252 = vmatprep.subr.bf16.mxu0 0
      %2253 = vmatpush1.bf16.msra.mxu0 0
      %2254 = vmatprep.mubr.bf16.mxu0 0
      %2255 = vmatmul.mubr.bf16.gmra.mrb[0].mxu0 %v2170
      %v2256 = vpop.f32.mrb[0].mxu0
      %v2257 = vadd.f32 0.0, %v2256
      %v2258 = vpop.f32.mrb[0].mxu0
      %v2259 = vpop.f32.mrb[0].mxu0
      %v2260 = vpop.f32.mrb[0].mxu0
      %2261 = vdwg.mxu0
      %v2262 = vadd.f32 %v2152, %v2216
      %v2263 = vadd.f32 %v2153, %v2218
      %v2264 = vadd.f32 %v2154, %v2257
      %s2265 = scalar_lea.vmem %s1, 76
      %v2266 = vld [vmem:[%s2265] sm:$0xf]
      %2267 = vrot.lane.b32.xlu0 %v185, 79
      %v2268 = vpop.permute.xlu0 %2267
      %2269 = vrot.lane.b32.xlu0 %v193, 79
      %v2270 = vpop.permute.xlu0 %2269
      %2271 = vrot.lane.b32.xlu0 %v192, 79
      %v2272 = vpop.permute.xlu0 %2271
      %2273 = vrot.lane.b32.xlu0 %v194, 79
      %v2274 = vpop.permute.xlu0 %2273
      %vm2275 = vcmask 646144
      %v2276 = vsel %vm2275, %v2268, %v2270
      %v2277 = vsel %vm2275, %v2270, %v2272
      %v2278 = vsel %vm2275, %v2272, %v2274
      %v2280 = vsel %vm207, %v2266, 0
      %v2283 = vsel %vm211, %v2276, 0
      %v2286 = vsel %vm211, %v2277, 0
      %v2289 = vsel %vm211, %v2278, 0
      %2291 = vmatprep.subr.bf16.mxu0 %v2286
      %2292 = vmatpush1.bf16.msra.mxu0 %v2283
      %2293 = vmatprep.subr.bf16.mxu0 0
      %2294 = vmatpush1.bf16.msra.mxu0 0
      %2295 = vmatprep.subr.bf16.mxu0 0
      %2296 = vmatpush1.bf16.msra.mxu0 0
      %2297 = vmatprep.subr.bf16.mxu0 0
      %2298 = vmatpush1.bf16.msra.mxu0 0
      %2299 = vmatprep.subr.bf16.mxu0 0
      %2300 = vmatpush1.bf16.msra.mxu0 0
      %2301 = vmatprep.subr.bf16.mxu0 0
      %2302 = vmatpush1.bf16.msra.mxu0 0
      %2303 = vmatprep.subr.bf16.mxu0 0
      %2304 = vmatpush1.bf16.msra.mxu0 0
      %2305 = vmatprep.subr.bf16.mxu0 0
      %2306 = vmatpush1.bf16.msra.mxu0 0
      %2307 = vmatprep.subr.bf16.mxu0 0
      %2308 = vmatpush1.bf16.msra.mxu0 0
      %2309 = vmatprep.subr.bf16.mxu0 0
      %2310 = vmatpush1.bf16.msra.mxu0 0
      %2311 = vmatprep.subr.bf16.mxu0 0
      %2312 = vmatpush1.bf16.msra.mxu0 0
      %2313 = vmatprep.subr.bf16.mxu0 0
      %2314 = vmatpush1.bf16.msra.mxu0 0
      %2315 = vmatprep.subr.bf16.mxu0 0
      %2316 = vmatpush1.bf16.msra.mxu0 0
      %2317 = vmatprep.subr.bf16.mxu0 0
      %2318 = vmatpush1.bf16.msra.mxu0 0
      %2319 = vmatprep.subr.bf16.mxu0 0
      %2320 = vmatpush1.bf16.msra.mxu0 0
      %2321 = vmatprep.subr.bf16.mxu0 0
      %2322 = vmatpush1.bf16.msra.mxu0 0
      %2323 = vmatprep.mubr.bf16.mxu0 0
      %2324 = vmatmul.mubr.bf16.gmra.mrb[0].mxu0 %v2280
      %v2325 = vpop.f32.mrb[0].mxu0
      %v2326 = vadd.f32 0.0, %v2325
      %v2327 = vpop.f32.mrb[0].mxu0
      %v2328 = vadd.f32 0.0, %v2327
      %v2329 = vpop.f32.mrb[0].mxu0
      %v2330 = vpop.f32.mrb[0].mxu0
      %2331 = vdwg.mxu0
      %2332 = vmatprep.subr.bf16.mxu0 0
      %2333 = vmatpush1.bf16.msra.mxu0 %v2289
      %2334 = vmatprep.subr.bf16.mxu0 0
      %2335 = vmatpush1.bf16.msra.mxu0 0
      %2336 = vmatprep.subr.bf16.mxu0 0
      %2337 = vmatpush1.bf16.msra.mxu0 0
      %2338 = vmatprep.subr.bf16.mxu0 0
      %2339 = vmatpush1.bf16.msra.mxu0 0
      %2340 = vmatprep.subr.bf16.mxu0 0
      %2341 = vmatpush1.bf16.msra.mxu0 0
      %2342 = vmatprep.subr.bf16.mxu0 0
      %2343 = vmatpush1.bf16.msra.mxu0 0
      %2344 = vmatprep.subr.bf16.mxu0 0
      %2345 = vmatpush1.bf16.msra.mxu0 0
      %2346 = vmatprep.subr.bf16.mxu0 0
      %2347 = vmatpush1.bf16.msra.mxu0 0
      %2348 = vmatprep.subr.bf16.mxu0 0
      %2349 = vmatpush1.bf16.msra.mxu0 0
      %2350 = vmatprep.subr.bf16.mxu0 0
      %2351 = vmatpush1.bf16.msra.mxu0 0
      %2352 = vmatprep.subr.bf16.mxu0 0
      %2353 = vmatpush1.bf16.msra.mxu0 0
      %2354 = vmatprep.subr.bf16.mxu0 0
      %2355 = vmatpush1.bf16.msra.mxu0 0
      %2356 = vmatprep.subr.bf16.mxu0 0
      %2357 = vmatpush1.bf16.msra.mxu0 0
      %2358 = vmatprep.subr.bf16.mxu0 0
      %2359 = vmatpush1.bf16.msra.mxu0 0
      %2360 = vmatprep.subr.bf16.mxu0 0
      %2361 = vmatpush1.bf16.msra.mxu0 0
      %2362 = vmatprep.subr.bf16.mxu0 0
      %2363 = vmatpush1.bf16.msra.mxu0 0
      %2364 = vmatprep.mubr.bf16.mxu0 0
      %2365 = vmatmul.mubr.bf16.gmra.mrb[0].mxu0 %v2280
      %v2366 = vpop.f32.mrb[0].mxu0
      %v2367 = vadd.f32 0.0, %v2366
      %v2368 = vpop.f32.mrb[0].mxu0
      %v2369 = vpop.f32.mrb[0].mxu0
      %v2370 = vpop.f32.mrb[0].mxu0
      %2371 = vdwg.mxu0
      %v2372 = vadd.f32 %v2262, %v2326
      %v2373 = vadd.f32 %v2263, %v2328
      %v2374 = vadd.f32 %v2264, %v2367
      %s2375 = scalar_lea.vmem %s1, 80
      %v2376 = vld [vmem:[%s2375] sm:$0xf]
      %2377 = vrot.lane.b32.xlu0 %v185, 78
      %v2378 = vpop.permute.xlu0 %2377
      %2379 = vrot.lane.b32.xlu0 %v193, 78
      %v2380 = vpop.permute.xlu0 %2379
      %2381 = vrot.lane.b32.xlu0 %v192, 78
      %v2382 = vpop.permute.xlu0 %2381
      %2383 = vrot.lane.b32.xlu0 %v194, 78
      %v2384 = vpop.permute.xlu0 %2383
      %vm2385 = vcmask 637952
      %v2386 = vsel %vm2385, %v2378, %v2380
      %v2387 = vsel %vm2385, %v2380, %v2382
      %v2388 = vsel %vm2385, %v2382, %v2384
      %v2390 = vsel %vm207, %v2376, 0
      %v2393 = vsel %vm211, %v2386, 0
      %v2396 = vsel %vm211, %v2387, 0
      %v2399 = vsel %vm211, %v2388, 0
      %2401 = vmatprep.subr.bf16.mxu0 %v2396
      %2402 = vmatpush1.bf16.msra.mxu0 %v2393
      %2403 = vmatprep.subr.bf16.mxu0 0
      %2404 = vmatpush1.bf16.msra.mxu0 0
      %2405 = vmatprep.subr.bf16.mxu0 0
      %2406 = vmatpush1.bf16.msra.mxu0 0
      %2407 = vmatprep.subr.bf16.mxu0 0
      %2408 = vmatpush1.bf16.msra.mxu0 0
      %2409 = vmatprep.subr.bf16.mxu0 0
      %2410 = vmatpush1.bf16.msra.mxu0 0
      %2411 = vmatprep.subr.bf16.mxu0 0
      %2412 = vmatpush1.bf16.msra.mxu0 0
      %2413 = vmatprep.subr.bf16.mxu0 0
      %2414 = vmatpush1.bf16.msra.mxu0 0
      %2415 = vmatprep.subr.bf16.mxu0 0
      %2416 = vmatpush1.bf16.msra.mxu0 0
      %2417 = vmatprep.subr.bf16.mxu0 0
      %2418 = vmatpush1.bf16.msra.mxu0 0
      %2419 = vmatprep.subr.bf16.mxu0 0
      %2420 = vmatpush1.bf16.msra.mxu0 0
      %2421 = vmatprep.subr.bf16.mxu0 0
      %2422 = vmatpush1.bf16.msra.mxu0 0
      %2423 = vmatprep.subr.bf16.mxu0 0
      %2424 = vmatpush1.bf16.msra.mxu0 0
      %2425 = vmatprep.subr.bf16.mxu0 0
      %2426 = vmatpush1.bf16.msra.mxu0 0
      %2427 = vmatprep.subr.bf16.mxu0 0
      %2428 = vmatpush1.bf16.msra.mxu0 0
      %2429 = vmatprep.subr.bf16.mxu0 0
      %2430 = vmatpush1.bf16.msra.mxu0 0
      %2431 = vmatprep.subr.bf16.mxu0 0
      %2432 = vmatpush1.bf16.msra.mxu0 0
      %2433 = vmatprep.mubr.bf16.mxu0 0
      %2434 = vmatmul.mubr.bf16.gmra.mrb[0].mxu0 %v2390
      %v2435 = vpop.f32.mrb[0].mxu0
      %v2436 = vadd.f32 0.0, %v2435
      %v2437 = vpop.f32.mrb[0].mxu0
      %v2438 = vadd.f32 0.0, %v2437
      %v2439 = vpop.f32.mrb[0].mxu0
      %v2440 = vpop.f32.mrb[0].mxu0
      %2441 = vdwg.mxu0
      %2442 = vmatprep.subr.bf16.mxu0 0
      %2443 = vmatpush1.bf16.msra.mxu0 %v2399
      %2444 = vmatprep.subr.bf16.mxu0 0
      %2445 = vmatpush1.bf16.msra.mxu0 0
      %2446 = vmatprep.subr.bf16.mxu0 0
      %2447 = vmatpush1.bf16.msra.mxu0 0
      %2448 = vmatprep.subr.bf16.mxu0 0
      %2449 = vmatpush1.bf16.msra.mxu0 0
      %2450 = vmatprep.subr.bf16.mxu0 0
      %2451 = vmatpush1.bf16.msra.mxu0 0
      %2452 = vmatprep.subr.bf16.mxu0 0
      %2453 = vmatpush1.bf16.msra.mxu0 0
      %2454 = vmatprep.subr.bf16.mxu0 0
      %2455 = vmatpush1.bf16.msra.mxu0 0
      %2456 = vmatprep.subr.bf16.mxu0 0
      %2457 = vmatpush1.bf16.msra.mxu0 0
      %2458 = vmatprep.subr.bf16.mxu0 0
      %2459 = vmatpush1.bf16.msra.mxu0 0
      %2460 = vmatprep.subr.bf16.mxu0 0
      %2461 = vmatpush1.bf16.msra.mxu0 0
      %2462 = vmatprep.subr.bf16.mxu0 0
      %2463 = vmatpush1.bf16.msra.mxu0 0
      %2464 = vmatprep.subr.bf16.mxu0 0
      %2465 = vmatpush1.bf16.msra.mxu0 0
      %2466 = vmatprep.subr.bf16.mxu0 0
      %2467 = vmatpush1.bf16.msra.mxu0 0
      %2468 = vmatprep.subr.bf16.mxu0 0
      %2469 = vmatpush1.bf16.msra.mxu0 0
      %2470 = vmatprep.subr.bf16.mxu0 0
      %2471 = vmatpush1.bf16.msra.mxu0 0
      %2472 = vmatprep.subr.bf16.mxu0 0
      %2473 = vmatpush1.bf16.msra.mxu0 0
      %2474 = vmatprep.mubr.bf16.mxu0 0
      %2475 = vmatmul.mubr.bf16.gmra.mrb[0].mxu0 %v2390
      %v2476 = vpop.f32.mrb[0].mxu0
      %v2477 = vadd.f32 0.0, %v2476
      %v2478 = vpop.f32.mrb[0].mxu0
      %v2479 = vpop.f32.mrb[0].mxu0
      %v2480 = vpop.f32.mrb[0].mxu0
      %2481 = vdwg.mxu0
      %v2482 = vadd.f32 %v2372, %v2436
      %v2483 = vadd.f32 %v2373, %v2438
      %v2484 = vadd.f32 %v2374, %v2477
      %s2485 = scalar_lea.vmem %s1, 84
      %v2486 = vld [vmem:[%s2485] sm:$0xf]
      %2487 = vrot.lane.b32.xlu0 %v185, 62
      %v2488 = vpop.permute.xlu0 %2487
      %2489 = vrot.lane.b32.xlu0 %v193, 62
      %v2490 = vpop.permute.xlu0 %2489
      %2491 = vrot.lane.b32.xlu0 %v192, 62
      %v2492 = vpop.permute.xlu0 %2491
      %2493 = vrot.lane.b32.xlu0 %v194, 62
      %v2494 = vpop.permute.xlu0 %2493
      %vm2495 = vcmask 506880
      %v2496 = vsel %vm2495, %v2488, %v2490
      %v2497 = vsel %vm2495, %v2490, %v2492
      %v2498 = vsel %vm2495, %v2492, %v2494
      %v2500 = vsel %vm207, %v2486, 0
      %v2503 = vsel %vm211, %v2496, 0
      %v2506 = vsel %vm211, %v2497, 0
      %v2509 = vsel %vm211, %v2498, 0
      %2511 = vmatprep.subr.bf16.mxu0 %v2506
      %2512 = vmatpush1.bf16.msra.mxu0 %v2503
      %2513 = vmatprep.subr.bf16.mxu0 0
      %2514 = vmatpush1.bf16.msra.mxu0 0
      %2515 = vmatprep.subr.bf16.mxu0 0
      %2516 = vmatpush1.bf16.msra.mxu0 0
      %2517 = vmatprep.subr.bf16.mxu0 0
      %2518 = vmatpush1.bf16.msra.mxu0 0
      %2519 = vmatprep.subr.bf16.mxu0 0
      %2520 = vmatpush1.bf16.msra.mxu0 0
      %2521 = vmatprep.subr.bf16.mxu0 0
      %2522 = vmatpush1.bf16.msra.mxu0 0
      %2523 = vmatprep.subr.bf16.mxu0 0
      %2524 = vmatpush1.bf16.msra.mxu0 0
      %2525 = vmatprep.subr.bf16.mxu0 0
      %2526 = vmatpush1.bf16.msra.mxu0 0
      %2527 = vmatprep.subr.bf16.mxu0 0
      %2528 = vmatpush1.bf16.msra.mxu0 0
      %2529 = vmatprep.subr.bf16.mxu0 0
      %2530 = vmatpush1.bf16.msra.mxu0 0
      %2531 = vmatprep.subr.bf16.mxu0 0
      %2532 = vmatpush1.bf16.msra.mxu0 0
      %2533 = vmatprep.subr.bf16.mxu0 0
      %2534 = vmatpush1.bf16.msra.mxu0 0
      %2535 = vmatprep.subr.bf16.mxu0 0
      %2536 = vmatpush1.bf16.msra.mxu0 0
      %2537 = vmatprep.subr.bf16.mxu0 0
      %2538 = vmatpush1.bf16.msra.mxu0 0
      %2539 = vmatprep.subr.bf16.mxu0 0
      %2540 = vmatpush1.bf16.msra.mxu0 0
      %2541 = vmatprep.subr.bf16.mxu0 0
      %2542 = vmatpush1.bf16.msra.mxu0 0
      %2543 = vmatprep.mubr.bf16.mxu0 0
      %2544 = vmatmul.mubr.bf16.gmra.mrb[0].mxu0 %v2500
      %v2545 = vpop.f32.mrb[0].mxu0
      %v2546 = vadd.f32 0.0, %v2545
      %v2547 = vpop.f32.mrb[0].mxu0
      %v2548 = vadd.f32 0.0, %v2547
      %v2549 = vpop.f32.mrb[0].mxu0
      %v2550 = vpop.f32.mrb[0].mxu0
      %2551 = vdwg.mxu0
      %2552 = vmatprep.subr.bf16.mxu0 0
      %2553 = vmatpush1.bf16.msra.mxu0 %v2509
      %2554 = vmatprep.subr.bf16.mxu0 0
      %2555 = vmatpush1.bf16.msra.mxu0 0
      %2556 = vmatprep.subr.bf16.mxu0 0
      %2557 = vmatpush1.bf16.msra.mxu0 0
      %2558 = vmatprep.subr.bf16.mxu0 0
      %2559 = vmatpush1.bf16.msra.mxu0 0
      %2560 = vmatprep.subr.bf16.mxu0 0
      %2561 = vmatpush1.bf16.msra.mxu0 0
      %2562 = vmatprep.subr.bf16.mxu0 0
      %2563 = vmatpush1.bf16.msra.mxu0 0
      %2564 = vmatprep.subr.bf16.mxu0 0
      %2565 = vmatpush1.bf16.msra.mxu0 0
      %2566 = vmatprep.subr.bf16.mxu0 0
      %2567 = vmatpush1.bf16.msra.mxu0 0
      %2568 = vmatprep.subr.bf16.mxu0 0
      %2569 = vmatpush1.bf16.msra.mxu0 0
      %2570 = vmatprep.subr.bf16.mxu0 0
      %2571 = vmatpush1.bf16.msra.mxu0 0
      %2572 = vmatprep.subr.bf16.mxu0 0
      %2573 = vmatpush1.bf16.msra.mxu0 0
      %2574 = vmatprep.subr.bf16.mxu0 0
      %2575 = vmatpush1.bf16.msra.mxu0 0
      %2576 = vmatprep.subr.bf16.mxu0 0
      %2577 = vmatpush1.bf16.msra.mxu0 0
      %2578 = vmatprep.subr.bf16.mxu0 0
      %2579 = vmatpush1.bf16.msra.mxu0 0
      %2580 = vmatprep.subr.bf16.mxu0 0
      %2581 = vmatpush1.bf16.msra.mxu0 0
      %2582 = vmatprep.subr.bf16.mxu0 0
      %2583 = vmatpush1.bf16.msra.mxu0 0
      %2584 = vmatprep.mubr.bf16.mxu0 0
      %2585 = vmatmul.mubr.bf16.gmra.mrb[0].mxu0 %v2500
      %v2586 = vpop.f32.mrb[0].mxu0
      %v2587 = vadd.f32 0.0, %v2586
      %v2588 = vpop.f32.mrb[0].mxu0
      %v2589 = vpop.f32.mrb[0].mxu0
      %v2590 = vpop.f32.mrb[0].mxu0
      %2591 = vdwg.mxu0
      %v2592 = vadd.f32 %v2482, %v2546
      %v2593 = vadd.f32 %v2483, %v2548
      %v2594 = vadd.f32 %v2484, %v2587
      %s2595 = scalar_lea.vmem %s1, 88
      %v2596 = vld [vmem:[%s2595] sm:$0xf]
      %2597 = vrot.lane.b32.xlu0 %v185, 61
      %v2598 = vpop.permute.xlu0 %2597
      %2599 = vrot.lane.b32.xlu0 %v193, 61
      %v2600 = vpop.permute.xlu0 %2599
      %2601 = vrot.lane.b32.xlu0 %v192, 61
      %v2602 = vpop.permute.xlu0 %2601
      %2603 = vrot.lane.b32.xlu0 %v194, 61
      %v2604 = vpop.permute.xlu0 %2603
      %vm2605 = vcmask 498688
      %v2606 = vsel %vm2605, %v2598, %v2600
      %v2607 = vsel %vm2605, %v2600, %v2602
      %v2608 = vsel %vm2605, %v2602, %v2604
      %v2610 = vsel %vm207, %v2596, 0
      %v2613 = vsel %vm211, %v2606, 0
      %v2616 = vsel %vm211, %v2607, 0
      %v2619 = vsel %vm211, %v2608, 0
      %2621 = vmatprep.subr.bf16.mxu0 %v2616
      %2622 = vmatpush1.bf16.msra.mxu0 %v2613
      %2623 = vmatprep.subr.bf16.mxu0 0
      %2624 = vmatpush1.bf16.msra.mxu0 0
      %2625 = vmatprep.subr.bf16.mxu0 0
      %2626 = vmatpush1.bf16.msra.mxu0 0
      %2627 = vmatprep.subr.bf16.mxu0 0
      %2628 = vmatpush1.bf16.msra.mxu0 0
      %2629 = vmatprep.subr.bf16.mxu0 0
      %2630 = vmatpush1.bf16.msra.mxu0 0
      %2631 = vmatprep.subr.bf16.mxu0 0
      %2632 = vmatpush1.bf16.msra.mxu0 0
      %2633 = vmatprep.subr.bf16.mxu0 0
      %2634 = vmatpush1.bf16.msra.mxu0 0
      %2635 = vmatprep.subr.bf16.mxu0 0
      %2636 = vmatpush1.bf16.msra.mxu0 0
      %2637 = vmatprep.subr.bf16.mxu0 0
      %2638 = vmatpush1.bf16.msra.mxu0 0
      %2639 = vmatprep.subr.bf16.mxu0 0
      %2640 = vmatpush1.bf16.msra.mxu0 0
      %2641 = vmatprep.subr.bf16.mxu0 0
      %2642 = vmatpush1.bf16.msra.mxu0 0
      %2643 = vmatprep.subr.bf16.mxu0 0
      %2644 = vmatpush1.bf16.msra.mxu0 0
      %2645 = vmatprep.subr.bf16.mxu0 0
      %2646 = vmatpush1.bf16.msra.mxu0 0
      %2647 = vmatprep.subr.bf16.mxu0 0
      %2648 = vmatpush1.bf16.msra.mxu0 0
      %2649 = vmatprep.subr.bf16.mxu0 0
      %2650 = vmatpush1.bf16.msra.mxu0 0
      %2651 = vmatprep.subr.bf16.mxu0 0
      %2652 = vmatpush1.bf16.msra.mxu0 0
      %2653 = vmatprep.mubr.bf16.mxu0 0
      %2654 = vmatmul.mubr.bf16.gmra.mrb[0].mxu0 %v2610
      %v2655 = vpop.f32.mrb[0].mxu0
      %v2656 = vadd.f32 0.0, %v2655
      %v2657 = vpop.f32.mrb[0].mxu0
      %v2658 = vadd.f32 0.0, %v2657
      %v2659 = vpop.f32.mrb[0].mxu0
      %v2660 = vpop.f32.mrb[0].mxu0
      %2661 = vdwg.mxu0
      %2662 = vmatprep.subr.bf16.mxu0 0
      %2663 = vmatpush1.bf16.msra.mxu0 %v2619
      %2664 = vmatprep.subr.bf16.mxu0 0
      %2665 = vmatpush1.bf16.msra.mxu0 0
      %2666 = vmatprep.subr.bf16.mxu0 0
      %2667 = vmatpush1.bf16.msra.mxu0 0
      %2668 = vmatprep.subr.bf16.mxu0 0
      %2669 = vmatpush1.bf16.msra.mxu0 0
      %2670 = vmatprep.subr.bf16.mxu0 0
      %2671 = vmatpush1.bf16.msra.mxu0 0
      %2672 = vmatprep.subr.bf16.mxu0 0
      %2673 = vmatpush1.bf16.msra.mxu0 0
      %2674 = vmatprep.subr.bf16.mxu0 0
      %2675 = vmatpush1.bf16.msra.mxu0 0
      %2676 = vmatprep.subr.bf16.mxu0 0
      %2677 = vmatpush1.bf16.msra.mxu0 0
      %2678 = vmatprep.subr.bf16.mxu0 0
      %2679 = vmatpush1.bf16.msra.mxu0 0
      %2680 = vmatprep.subr.bf16.mxu0 0
      %2681 = vmatpush1.bf16.msra.mxu0 0
      %2682 = vmatprep.subr.bf16.mxu0 0
      %2683 = vmatpush1.bf16.msra.mxu0 0
      %2684 = vmatprep.subr.bf16.mxu0 0
      %2685 = vmatpush1.bf16.msra.mxu0 0
      %2686 = vmatprep.subr.bf16.mxu0 0
      %2687 = vmatpush1.bf16.msra.mxu0 0
      %2688 = vmatprep.subr.bf16.mxu0 0
      %2689 = vmatpush1.bf16.msra.mxu0 0
      %2690 = vmatprep.subr.bf16.mxu0 0
      %2691 = vmatpush1.bf16.msra.mxu0 0
      %2692 = vmatprep.subr.bf16.mxu0 0
      %2693 = vmatpush1.bf16.msra.mxu0 0
      %2694 = vmatprep.mubr.bf16.mxu0 0
      %2695 = vmatmul.mubr.bf16.gmra.mrb[0].mxu0 %v2610
      %v2696 = vpop.f32.mrb[0].mxu0
      %v2697 = vadd.f32 0.0, %v2696
      %v2698 = vpop.f32.mrb[0].mxu0
      %v2699 = vpop.f32.mrb[0].mxu0
      %v2700 = vpop.f32.mrb[0].mxu0
      %2701 = vdwg.mxu0
      %v2702 = vadd.f32 %v2592, %v2656
      %v2703 = vadd.f32 %v2593, %v2658
      %v2704 = vadd.f32 %v2594, %v2697
      %s2705 = scalar_lea.vmem %s1, 92
      %v2706 = vld [vmem:[%s2705] sm:$0xf]
      %2707 = vrot.lane.b32.xlu0 %v185, 60
      %v2708 = vpop.permute.xlu0 %2707
      %2709 = vrot.lane.b32.xlu0 %v193, 60
      %v2710 = vpop.permute.xlu0 %2709
      %2711 = vrot.lane.b32.xlu0 %v192, 60
      %v2712 = vpop.permute.xlu0 %2711
      %2713 = vrot.lane.b32.xlu0 %v194, 60
      %v2714 = vpop.permute.xlu0 %2713
      %vm2715 = vcmask 490496
      %v2716 = vsel %vm2715, %v2708, %v2710
      %v2717 = vsel %vm2715, %v2710, %v2712
      %v2718 = vsel %vm2715, %v2712, %v2714
      %v2720 = vsel %vm207, %v2706, 0
      %v2723 = vsel %vm211, %v2716, 0
      %v2726 = vsel %vm211, %v2717, 0
      %v2729 = vsel %vm211, %v2718, 0
      %2731 = vmatprep.subr.bf16.mxu0 %v2726
      %2732 = vmatpush1.bf16.msra.mxu0 %v2723
      %2733 = vmatprep.subr.bf16.mxu0 0
      %2734 = vmatpush1.bf16.msra.mxu0 0
      %2735 = vmatprep.subr.bf16.mxu0 0
      %2736 = vmatpush1.bf16.msra.mxu0 0
      %2737 = vmatprep.subr.bf16.mxu0 0
      %2738 = vmatpush1.bf16.msra.mxu0 0
      %2739 = vmatprep.subr.bf16.mxu0 0
      %2740 = vmatpush1.bf16.msra.mxu0 0
      %2741 = vmatprep.subr.bf16.mxu0 0
      %2742 = vmatpush1.bf16.msra.mxu0 0
      %2743 = vmatprep.subr.bf16.mxu0 0
      %2744 = vmatpush1.bf16.msra.mxu0 0
      %2745 = vmatprep.subr.bf16.mxu0 0
      %2746 = vmatpush1.bf16.msra.mxu0 0
      %2747 = vmatprep.subr.bf16.mxu0 0
      %2748 = vmatpush1.bf16.msra.mxu0 0
      %2749 = vmatprep.subr.bf16.mxu0 0
      %2750 = vmatpush1.bf16.msra.mxu0 0
      %2751 = vmatprep.subr.bf16.mxu0 0
      %2752 = vmatpush1.bf16.msra.mxu0 0
      %2753 = vmatprep.subr.bf16.mxu0 0
      %2754 = vmatpush1.bf16.msra.mxu0 0
      %2755 = vmatprep.subr.bf16.mxu0 0
      %2756 = vmatpush1.bf16.msra.mxu0 0
      %2757 = vmatprep.subr.bf16.mxu0 0
      %2758 = vmatpush1.bf16.msra.mxu0 0
      %2759 = vmatprep.subr.bf16.mxu0 0
      %2760 = vmatpush1.bf16.msra.mxu0 0
      %2761 = vmatprep.subr.bf16.mxu0 0
      %2762 = vmatpush1.bf16.msra.mxu0 0
      %2763 = vmatprep.mubr.bf16.mxu0 0
      %2764 = vmatmul.mubr.bf16.gmra.mrb[0].mxu0 %v2720
      %v2765 = vpop.f32.mrb[0].mxu0
      %v2766 = vadd.f32 0.0, %v2765
      %v2767 = vpop.f32.mrb[0].mxu0
      %v2768 = vadd.f32 0.0, %v2767
      %v2769 = vpop.f32.mrb[0].mxu0
      %v2770 = vpop.f32.mrb[0].mxu0
      %2771 = vdwg.mxu0
      %2772 = vmatprep.subr.bf16.mxu0 0
      %2773 = vmatpush1.bf16.msra.mxu0 %v2729
      %2774 = vmatprep.subr.bf16.mxu0 0
      %2775 = vmatpush1.bf16.msra.mxu0 0
      %2776 = vmatprep.subr.bf16.mxu0 0
      %2777 = vmatpush1.bf16.msra.mxu0 0
      %2778 = vmatprep.subr.bf16.mxu0 0
      %2779 = vmatpush1.bf16.msra.mxu0 0
      %2780 = vmatprep.subr.bf16.mxu0 0
      %2781 = vmatpush1.bf16.msra.mxu0 0
      %2782 = vmatprep.subr.bf16.mxu0 0
      %2783 = vmatpush1.bf16.msra.mxu0 0
      %2784 = vmatprep.subr.bf16.mxu0 0
      %2785 = vmatpush1.bf16.msra.mxu0 0
      %2786 = vmatprep.subr.bf16.mxu0 0
      %2787 = vmatpush1.bf16.msra.mxu0 0
      %2788 = vmatprep.subr.bf16.mxu0 0
      %2789 = vmatpush1.bf16.msra.mxu0 0
      %2790 = vmatprep.subr.bf16.mxu0 0
      %2791 = vmatpush1.bf16.msra.mxu0 0
      %2792 = vmatprep.subr.bf16.mxu0 0
      %2793 = vmatpush1.bf16.msra.mxu0 0
      %2794 = vmatprep.subr.bf16.mxu0 0
      %2795 = vmatpush1.bf16.msra.mxu0 0
      %2796 = vmatprep.subr.bf16.mxu0 0
      %2797 = vmatpush1.bf16.msra.mxu0 0
      %2798 = vmatprep.subr.bf16.mxu0 0
      %2799 = vmatpush1.bf16.msra.mxu0 0
      %2800 = vmatprep.subr.bf16.mxu0 0
      %2801 = vmatpush1.bf16.msra.mxu0 0
      %2802 = vmatprep.subr.bf16.mxu0 0
      %2803 = vmatpush1.bf16.msra.mxu0 0
      %2804 = vmatprep.mubr.bf16.mxu0 0
      %2805 = vmatmul.mubr.bf16.gmra.mrb[0].mxu0 %v2720
      %v2806 = vpop.f32.mrb[0].mxu0
      %v2807 = vadd.f32 0.0, %v2806
      %v2808 = vpop.f32.mrb[0].mxu0
      %v2809 = vpop.f32.mrb[0].mxu0
      %v2810 = vpop.f32.mrb[0].mxu0
      %2811 = vdwg.mxu0
      %v2812 = vadd.f32 %v2702, %v2766
      %v2813 = vadd.f32 %v2703, %v2768
      %v2814 = vadd.f32 %v2704, %v2807
      %s2815 = scalar_lea.vmem %s1, 96
      %v2816 = vld [vmem:[%s2815] sm:$0xf]
      %2817 = vrot.lane.b32.xlu0 %v185, 59
      %v2818 = vpop.permute.xlu0 %2817
      %2819 = vrot.lane.b32.xlu0 %v193, 59
      %v2820 = vpop.permute.xlu0 %2819
      %2821 = vrot.lane.b32.xlu0 %v192, 59
      %v2822 = vpop.permute.xlu0 %2821
      %2823 = vrot.lane.b32.xlu0 %v194, 59
      %v2824 = vpop.permute.xlu0 %2823
      %vm2825 = vcmask 482304
      %v2826 = vsel %vm2825, %v2818, %v2820
      %v2827 = vsel %vm2825, %v2820, %v2822
      %v2828 = vsel %vm2825, %v2822, %v2824
      %v2830 = vsel %vm207, %v2816, 0
      %v2833 = vsel %vm211, %v2826, 0
      %v2836 = vsel %vm211, %v2827, 0
      %v2839 = vsel %vm211, %v2828, 0
      %2841 = vmatprep.subr.bf16.mxu0 %v2836
      %2842 = vmatpush1.bf16.msra.mxu0 %v2833
      %2843 = vmatprep.subr.bf16.mxu0 0
      %2844 = vmatpush1.bf16.msra.mxu0 0
      %2845 = vmatprep.subr.bf16.mxu0 0
      %2846 = vmatpush1.bf16.msra.mxu0 0
      %2847 = vmatprep.subr.bf16.mxu0 0
      %2848 = vmatpush1.bf16.msra.mxu0 0
      %2849 = vmatprep.subr.bf16.mxu0 0
      %2850 = vmatpush1.bf16.msra.mxu0 0
      %2851 = vmatprep.subr.bf16.mxu0 0
      %2852 = vmatpush1.bf16.msra.mxu0 0
      %2853 = vmatprep.subr.bf16.mxu0 0
      %2854 = vmatpush1.bf16.msra.mxu0 0
      %2855 = vmatprep.subr.bf16.mxu0 0
      %2856 = vmatpush1.bf16.msra.mxu0 0
      %2857 = vmatprep.subr.bf16.mxu0 0
      %2858 = vmatpush1.bf16.msra.mxu0 0
      %2859 = vmatprep.subr.bf16.mxu0 0
      %2860 = vmatpush1.bf16.msra.mxu0 0
      %2861 = vmatprep.subr.bf16.mxu0 0
      %2862 = vmatpush1.bf16.msra.mxu0 0
      %2863 = vmatprep.subr.bf16.mxu0 0
      %2864 = vmatpush1.bf16.msra.mxu0 0
      %2865 = vmatprep.subr.bf16.mxu0 0
      %2866 = vmatpush1.bf16.msra.mxu0 0
      %2867 = vmatprep.subr.bf16.mxu0 0
      %2868 = vmatpush1.bf16.msra.mxu0 0
      %2869 = vmatprep.subr.bf16.mxu0 0
      %2870 = vmatpush1.bf16.msra.mxu0 0
      %2871 = vmatprep.subr.bf16.mxu0 0
      %2872 = vmatpush1.bf16.msra.mxu0 0
      %2873 = vmatprep.mubr.bf16.mxu0 0
      %2874 = vmatmul.mubr.bf16.gmra.mrb[0].mxu0 %v2830
      %v2875 = vpop.f32.mrb[0].mxu0
      %v2876 = vadd.f32 0.0, %v2875
      %v2877 = vpop.f32.mrb[0].mxu0
      %v2878 = vadd.f32 0.0, %v2877
      %v2879 = vpop.f32.mrb[0].mxu0
      %v2880 = vpop.f32.mrb[0].mxu0
      %2881 = vdwg.mxu0
      %2882 = vmatprep.subr.bf16.mxu0 0
      %2883 = vmatpush1.bf16.msra.mxu0 %v2839
      %2884 = vmatprep.subr.bf16.mxu0 0
      %2885 = vmatpush1.bf16.msra.mxu0 0
      %2886 = vmatprep.subr.bf16.mxu0 0
      %2887 = vmatpush1.bf16.msra.mxu0 0
      %2888 = vmatprep.subr.bf16.mxu0 0
      %2889 = vmatpush1.bf16.msra.mxu0 0
      %2890 = vmatprep.subr.bf16.mxu0 0
      %2891 = vmatpush1.bf16.msra.mxu0 0
      %2892 = vmatprep.subr.bf16.mxu0 0
      %2893 = vmatpush1.bf16.msra.mxu0 0
      %2894 = vmatprep.subr.bf16.mxu0 0
      %2895 = vmatpush1.bf16.msra.mxu0 0
      %2896 = vmatprep.subr.bf16.mxu0 0
      %2897 = vmatpush1.bf16.msra.mxu0 0
      %2898 = vmatprep.subr.bf16.mxu0 0
      %2899 = vmatpush1.bf16.msra.mxu0 0
      %2900 = vmatprep.subr.bf16.mxu0 0
      %2901 = vmatpush1.bf16.msra.mxu0 0
      %2902 = vmatprep.subr.bf16.mxu0 0
      %2903 = vmatpush1.bf16.msra.mxu0 0
      %2904 = vmatprep.subr.bf16.mxu0 0
      %2905 = vmatpush1.bf16.msra.mxu0 0
      %2906 = vmatprep.subr.bf16.mxu0 0
      %2907 = vmatpush1.bf16.msra.mxu0 0
      %2908 = vmatprep.subr.bf16.mxu0 0
      %2909 = vmatpush1.bf16.msra.mxu0 0
      %2910 = vmatprep.subr.bf16.mxu0 0
      %2911 = vmatpush1.bf16.msra.mxu0 0
      %2912 = vmatprep.subr.bf16.mxu0 0
      %2913 = vmatpush1.bf16.msra.mxu0 0
      %2914 = vmatprep.mubr.bf16.mxu0 0
      %2915 = vmatmul.mubr.bf16.gmra.mrb[0].mxu0 %v2830
      %v2916 = vpop.f32.mrb[0].mxu0
      %v2917 = vadd.f32 0.0, %v2916
      %v2918 = vpop.f32.mrb[0].mxu0
      %v2919 = vpop.f32.mrb[0].mxu0
      %v2920 = vpop.f32.mrb[0].mxu0
      %2921 = vdwg.mxu0
      %v2922 = vadd.f32 %v2812, %v2876
      %v2923 = vadd.f32 %v2813, %v2878
      %v2924 = vadd.f32 %v2814, %v2917
      %s2925 = scalar_lea.vmem %s1, 100
      %v2926 = vld [vmem:[%s2925] sm:$0xf]
      %2927 = vrot.lane.b32.xlu0 %v185, 58
      %v2928 = vpop.permute.xlu0 %2927
      %2929 = vrot.lane.b32.xlu0 %v193, 58
      %v2930 = vpop.permute.xlu0 %2929
      %2931 = vrot.lane.b32.xlu0 %v192, 58
      %v2932 = vpop.permute.xlu0 %2931
      %2933 = vrot.lane.b32.xlu0 %v194, 58
      %v2934 = vpop.permute.xlu0 %2933
      %vm2935 = vcmask 474112
      %v2936 = vsel %vm2935, %v2928, %v2930
      %v2937 = vsel %vm2935, %v2930, %v2932
      %v2938 = vsel %vm2935, %v2932, %v2934
      %v2940 = vsel %vm207, %v2926, 0
      %v2943 = vsel %vm211, %v2936, 0
      %v2946 = vsel %vm211, %v2937, 0
      %v2949 = vsel %vm211, %v2938, 0
      %2951 = vmatprep.subr.bf16.mxu0 %v2946
      %2952 = vmatpush1.bf16.msra.mxu0 %v2943
      %2953 = vmatprep.subr.bf16.mxu0 0
      %2954 = vmatpush1.bf16.msra.mxu0 0
      %2955 = vmatprep.subr.bf16.mxu0 0
      %2956 = vmatpush1.bf16.msra.mxu0 0
      %2957 = vmatprep.subr.bf16.mxu0 0
      %2958 = vmatpush1.bf16.msra.mxu0 0
      %2959 = vmatprep.subr.bf16.mxu0 0
      %2960 = vmatpush1.bf16.msra.mxu0 0
      %2961 = vmatprep.subr.bf16.mxu0 0
      %2962 = vmatpush1.bf16.msra.mxu0 0
      %2963 = vmatprep.subr.bf16.mxu0 0
      %2964 = vmatpush1.bf16.msra.mxu0 0
      %2965 = vmatprep.subr.bf16.mxu0 0
      %2966 = vmatpush1.bf16.msra.mxu0 0
      %2967 = vmatprep.subr.bf16.mxu0 0
      %2968 = vmatpush1.bf16.msra.mxu0 0
      %2969 = vmatprep.subr.bf16.mxu0 0
      %2970 = vmatpush1.bf16.msra.mxu0 0
      %2971 = vmatprep.subr.bf16.mxu0 0
      %2972 = vmatpush1.bf16.msra.mxu0 0
      %2973 = vmatprep.subr.bf16.mxu0 0
      %2974 = vmatpush1.bf16.msra.mxu0 0
      %2975 = vmatprep.subr.bf16.mxu0 0
      %2976 = vmatpush1.bf16.msra.mxu0 0
      %2977 = vmatprep.subr.bf16.mxu0 0
      %2978 = vmatpush1.bf16.msra.mxu0 0
      %2979 = vmatprep.subr.bf16.mxu0 0
      %2980 = vmatpush1.bf16.msra.mxu0 0
      %2981 = vmatprep.subr.bf16.mxu0 0
      %2982 = vmatpush1.bf16.msra.mxu0 0
      %2983 = vmatprep.mubr.bf16.mxu0 0
      %2984 = vmatmul.mubr.bf16.gmra.mrb[0].mxu0 %v2940
      %v2985 = vpop.f32.mrb[0].mxu0
      %v2986 = vadd.f32 0.0, %v2985
      %v2987 = vpop.f32.mrb[0].mxu0
      %v2988 = vadd.f32 0.0, %v2987
      %v2989 = vpop.f32.mrb[0].mxu0
      %v2990 = vpop.f32.mrb[0].mxu0
      %2991 = vdwg.mxu0
      %2992 = vmatprep.subr.bf16.mxu0 0
      %2993 = vmatpush1.bf16.msra.mxu0 %v2949
      %2994 = vmatprep.subr.bf16.mxu0 0
      %2995 = vmatpush1.bf16.msra.mxu0 0
      %2996 = vmatprep.subr.bf16.mxu0 0
      %2997 = vmatpush1.bf16.msra.mxu0 0
      %2998 = vmatprep.subr.bf16.mxu0 0
      %2999 = vmatpush1.bf16.msra.mxu0 0
      %3000 = vmatprep.subr.bf16.mxu0 0
      %3001 = vmatpush1.bf16.msra.mxu0 0
      %3002 = vmatprep.subr.bf16.mxu0 0
      %3003 = vmatpush1.bf16.msra.mxu0 0
      %3004 = vmatprep.subr.bf16.mxu0 0
      %3005 = vmatpush1.bf16.msra.mxu0 0
      %3006 = vmatprep.subr.bf16.mxu0 0
      %3007 = vmatpush1.bf16.msra.mxu0 0
      %3008 = vmatprep.subr.bf16.mxu0 0
      %3009 = vmatpush1.bf16.msra.mxu0 0
      %3010 = vmatprep.subr.bf16.mxu0 0
      %3011 = vmatpush1.bf16.msra.mxu0 0
      %3012 = vmatprep.subr.bf16.mxu0 0
      %3013 = vmatpush1.bf16.msra.mxu0 0
      %3014 = vmatprep.subr.bf16.mxu0 0
      %3015 = vmatpush1.bf16.msra.mxu0 0
      %3016 = vmatprep.subr.bf16.mxu0 0
      %3017 = vmatpush1.bf16.msra.mxu0 0
      %3018 = vmatprep.subr.bf16.mxu0 0
      %3019 = vmatpush1.bf16.msra.mxu0 0
      %3020 = vmatprep.subr.bf16.mxu0 0
      %3021 = vmatpush1.bf16.msra.mxu0 0
      %3022 = vmatprep.subr.bf16.mxu0 0
      %3023 = vmatpush1.bf16.msra.mxu0 0
      %3024 = vmatprep.mubr.bf16.mxu0 0
      %3025 = vmatmul.mubr.bf16.gmra.mrb[0].mxu0 %v2940
      %v3026 = vpop.f32.mrb[0].mxu0
      %v3027 = vadd.f32 0.0, %v3026
      %v3028 = vpop.f32.mrb[0].mxu0
      %v3029 = vpop.f32.mrb[0].mxu0
      %v3030 = vpop.f32.mrb[0].mxu0
      %3031 = vdwg.mxu0
      %v3032 = vadd.f32 %v2922, %v2986
      %v3033 = vadd.f32 %v2923, %v2988
      %v3034 = vadd.f32 %v2924, %v3027
      %s3035 = scalar_lea.vmem %s1, 104
      %v3036 = vld [vmem:[%s3035] sm:$0xf]
      %3037 = vrot.lane.b32.xlu0 %v185, 57
      %v3038 = vpop.permute.xlu0 %3037
      %3039 = vrot.lane.b32.xlu0 %v193, 57
      %v3040 = vpop.permute.xlu0 %3039
      %3041 = vrot.lane.b32.xlu0 %v192, 57
      %v3042 = vpop.permute.xlu0 %3041
      %3043 = vrot.lane.b32.xlu0 %v194, 57
      %v3044 = vpop.permute.xlu0 %3043
      %vm3045 = vcmask 465920
      %v3046 = vsel %vm3045, %v3038, %v3040
      %v3047 = vsel %vm3045, %v3040, %v3042
      %v3048 = vsel %vm3045, %v3042, %v3044
      %v3050 = vsel %vm207, %v3036, 0
      %v3053 = vsel %vm211, %v3046, 0
      %v3056 = vsel %vm211, %v3047, 0
      %v3059 = vsel %vm211, %v3048, 0
      %3061 = vmatprep.subr.bf16.mxu0 %v3056
      %3062 = vmatpush1.bf16.msra.mxu0 %v3053
      %3063 = vmatprep.subr.bf16.mxu0 0
      %3064 = vmatpush1.bf16.msra.mxu0 0
      %3065 = vmatprep.subr.bf16.mxu0 0
      %3066 = vmatpush1.bf16.msra.mxu0 0
      %3067 = vmatprep.subr.bf16.mxu0 0
      %3068 = vmatpush1.bf16.msra.mxu0 0
      %3069 = vmatprep.subr.bf16.mxu0 0
      %3070 = vmatpush1.bf16.msra.mxu0 0
      %3071 = vmatprep.subr.bf16.mxu0 0
      %3072 = vmatpush1.bf16.msra.mxu0 0
      %3073 = vmatprep.subr.bf16.mxu0 0
      %3074 = vmatpush1.bf16.msra.mxu0 0
      %3075 = vmatprep.subr.bf16.mxu0 0
      %3076 = vmatpush1.bf16.msra.mxu0 0
      %3077 = vmatprep.subr.bf16.mxu0 0
      %3078 = vmatpush1.bf16.msra.mxu0 0
      %3079 = vmatprep.subr.bf16.mxu0 0
      %3080 = vmatpush1.bf16.msra.mxu0 0
      %3081 = vmatprep.subr.bf16.mxu0 0
      %3082 = vmatpush1.bf16.msra.mxu0 0
      %3083 = vmatprep.subr.bf16.mxu0 0
      %3084 = vmatpush1.bf16.msra.mxu0 0
      %3085 = vmatprep.subr.bf16.mxu0 0
      %3086 = vmatpush1.bf16.msra.mxu0 0
      %3087 = vmatprep.subr.bf16.mxu0 0
      %3088 = vmatpush1.bf16.msra.mxu0 0
      %3089 = vmatprep.subr.bf16.mxu0 0
      %3090 = vmatpush1.bf16.msra.mxu0 0
      %3091 = vmatprep.subr.bf16.mxu0 0
      %3092 = vmatpush1.bf16.msra.mxu0 0
      %3093 = vmatprep.mubr.bf16.mxu0 0
      %3094 = vmatmul.mubr.bf16.gmra.mrb[0].mxu0 %v3050
      %v3095 = vpop.f32.mrb[0].mxu0
      %v3096 = vadd.f32 0.0, %v3095
      %v3097 = vpop.f32.mrb[0].mxu0
      %v3098 = vadd.f32 0.0, %v3097
      %v3099 = vpop.f32.mrb[0].mxu0
      %v3100 = vpop.f32.mrb[0].mxu0
      %3101 = vdwg.mxu0
      %3102 = vmatprep.subr.bf16.mxu0 0
      %3103 = vmatpush1.bf16.msra.mxu0 %v3059
      %3104 = vmatprep.subr.bf16.mxu0 0
      %3105 = vmatpush1.bf16.msra.mxu0 0
      %3106 = vmatprep.subr.bf16.mxu0 0
      %3107 = vmatpush1.bf16.msra.mxu0 0
      %3108 = vmatprep.subr.bf16.mxu0 0
      %3109 = vmatpush1.bf16.msra.mxu0 0
      %3110 = vmatprep.subr.bf16.mxu0 0
      %3111 = vmatpush1.bf16.msra.mxu0 0
      %3112 = vmatprep.subr.bf16.mxu0 0
      %3113 = vmatpush1.bf16.msra.mxu0 0
      %3114 = vmatprep.subr.bf16.mxu0 0
      %3115 = vmatpush1.bf16.msra.mxu0 0
      %3116 = vmatprep.subr.bf16.mxu0 0
      %3117 = vmatpush1.bf16.msra.mxu0 0
      %3118 = vmatprep.subr.bf16.mxu0 0
      %3119 = vmatpush1.bf16.msra.mxu0 0
      %3120 = vmatprep.subr.bf16.mxu0 0
      %3121 = vmatpush1.bf16.msra.mxu0 0
      %3122 = vmatprep.subr.bf16.mxu0 0
      %3123 = vmatpush1.bf16.msra.mxu0 0
      %3124 = vmatprep.subr.bf16.mxu0 0
      %3125 = vmatpush1.bf16.msra.mxu0 0
      %3126 = vmatprep.subr.bf16.mxu0 0
      %3127 = vmatpush1.bf16.msra.mxu0 0
      %3128 = vmatprep.subr.bf16.mxu0 0
      %3129 = vmatpush1.bf16.msra.mxu0 0
      %3130 = vmatprep.subr.bf16.mxu0 0
      %3131 = vmatpush1.bf16.msra.mxu0 0
      %3132 = vmatprep.subr.bf16.mxu0 0
      %3133 = vmatpush1.bf16.msra.mxu0 0
      %3134 = vmatprep.mubr.bf16.mxu0 0
      %3135 = vmatmul.mubr.bf16.gmra.mrb[0].mxu0 %v3050
      %v3136 = vpop.f32.mrb[0].mxu0
      %v3137 = vadd.f32 0.0, %v3136
      %v3138 = vpop.f32.mrb[0].mxu0
      %v3139 = vpop.f32.mrb[0].mxu0
      %v3140 = vpop.f32.mrb[0].mxu0
      %3141 = vdwg.mxu0
      %v3142 = vadd.f32 %v3032, %v3096
      %v3143 = vadd.f32 %v3033, %v3098
      %v3144 = vadd.f32 %v3034, %v3137
      %s3145 = scalar_lea.vmem %s1, 108
      %v3146 = vld [vmem:[%s3145] sm:$0xf]
      %3147 = vrot.lane.b32.xlu0 %v185, 56
      %v3148 = vpop.permute.xlu0 %3147
      %3149 = vrot.lane.b32.xlu0 %v193, 56
      %v3150 = vpop.permute.xlu0 %3149
      %3151 = vrot.lane.b32.xlu0 %v192, 56
      %v3152 = vpop.permute.xlu0 %3151
      %3153 = vrot.lane.b32.xlu0 %v194, 56
      %v3154 = vpop.permute.xlu0 %3153
      %vm3155 = vcmask 457728
      %v3156 = vsel %vm3155, %v3148, %v3150
      %v3157 = vsel %vm3155, %v3150, %v3152
      %v3158 = vsel %vm3155, %v3152, %v3154
      %v3160 = vsel %vm207, %v3146, 0
      %v3163 = vsel %vm211, %v3156, 0
      %v3166 = vsel %vm211, %v3157, 0
      %v3169 = vsel %vm211, %v3158, 0
      %3171 = vmatprep.subr.bf16.mxu0 %v3166
      %3172 = vmatpush1.bf16.msra.mxu0 %v3163
      %3173 = vmatprep.subr.bf16.mxu0 0
      %3174 = vmatpush1.bf16.msra.mxu0 0
      %3175 = vmatprep.subr.bf16.mxu0 0
      %3176 = vmatpush1.bf16.msra.mxu0 0
      %3177 = vmatprep.subr.bf16.mxu0 0
      %3178 = vmatpush1.bf16.msra.mxu0 0
      %3179 = vmatprep.subr.bf16.mxu0 0
      %3180 = vmatpush1.bf16.msra.mxu0 0
      %3181 = vmatprep.subr.bf16.mxu0 0
      %3182 = vmatpush1.bf16.msra.mxu0 0
      %3183 = vmatprep.subr.bf16.mxu0 0
      %3184 = vmatpush1.bf16.msra.mxu0 0
      %3185 = vmatprep.subr.bf16.mxu0 0
      %3186 = vmatpush1.bf16.msra.mxu0 0
      %3187 = vmatprep.subr.bf16.mxu0 0
      %3188 = vmatpush1.bf16.msra.mxu0 0
      %3189 = vmatprep.subr.bf16.mxu0 0
      %3190 = vmatpush1.bf16.msra.mxu0 0
      %3191 = vmatprep.subr.bf16.mxu0 0
      %3192 = vmatpush1.bf16.msra.mxu0 0
      %3193 = vmatprep.subr.bf16.mxu0 0
      %3194 = vmatpush1.bf16.msra.mxu0 0
      %3195 = vmatprep.subr.bf16.mxu0 0
      %3196 = vmatpush1.bf16.msra.mxu0 0
      %3197 = vmatprep.subr.bf16.mxu0 0
      %3198 = vmatpush1.bf16.msra.mxu0 0
      %3199 = vmatprep.subr.bf16.mxu0 0
      %3200 = vmatpush1.bf16.msra.mxu0 0
      %3201 = vmatprep.subr.bf16.mxu0 0
      %3202 = vmatpush1.bf16.msra.mxu0 0
      %3203 = vmatprep.mubr.bf16.mxu0 0
      %3204 = vmatmul.mubr.bf16.gmra.mrb[0].mxu0 %v3160
      %v3205 = vpop.f32.mrb[0].mxu0
      %v3206 = vadd.f32 0.0, %v3205
      %v3207 = vpop.f32.mrb[0].mxu0
      %v3208 = vadd.f32 0.0, %v3207
      %v3209 = vpop.f32.mrb[0].mxu0
      %v3210 = vpop.f32.mrb[0].mxu0
      %3211 = vdwg.mxu0
      %3212 = vmatprep.subr.bf16.mxu0 0
      %3213 = vmatpush1.bf16.msra.mxu0 %v3169
      %3214 = vmatprep.subr.bf16.mxu0 0
      %3215 = vmatpush1.bf16.msra.mxu0 0
      %3216 = vmatprep.subr.bf16.mxu0 0
      %3217 = vmatpush1.bf16.msra.mxu0 0
      %3218 = vmatprep.subr.bf16.mxu0 0
      %3219 = vmatpush1.bf16.msra.mxu0 0
      %3220 = vmatprep.subr.bf16.mxu0 0
      %3221 = vmatpush1.bf16.msra.mxu0 0
      %3222 = vmatprep.subr.bf16.mxu0 0
      %3223 = vmatpush1.bf16.msra.mxu0 0
      %3224 = vmatprep.subr.bf16.mxu0 0
      %3225 = vmatpush1.bf16.msra.mxu0 0
      %3226 = vmatprep.subr.bf16.mxu0 0
      %3227 = vmatpush1.bf16.msra.mxu0 0
      %3228 = vmatprep.subr.bf16.mxu0 0
      %3229 = vmatpush1.bf16.msra.mxu0 0
      %3230 = vmatprep.subr.bf16.mxu0 0
      %3231 = vmatpush1.bf16.msra.mxu0 0
      %3232 = vmatprep.subr.bf16.mxu0 0
      %3233 = vmatpush1.bf16.msra.mxu0 0
      %3234 = vmatprep.subr.bf16.mxu0 0
      %3235 = vmatpush1.bf16.msra.mxu0 0
      %3236 = vmatprep.subr.bf16.mxu0 0
      %3237 = vmatpush1.bf16.msra.mxu0 0
      %3238 = vmatprep.subr.bf16.mxu0 0
      %3239 = vmatpush1.bf16.msra.mxu0 0
      %3240 = vmatprep.subr.bf16.mxu0 0
      %3241 = vmatpush1.bf16.msra.mxu0 0
      %3242 = vmatprep.subr.bf16.mxu0 0
      %3243 = vmatpush1.bf16.msra.mxu0 0
      %3244 = vmatprep.mubr.bf16.mxu0 0
      %3245 = vmatmul.mubr.bf16.gmra.mrb[0].mxu0 %v3160
      %v3246 = vpop.f32.mrb[0].mxu0
      %v3247 = vadd.f32 0.0, %v3246
      %v3248 = vpop.f32.mrb[0].mxu0
      %v3249 = vpop.f32.mrb[0].mxu0
      %v3250 = vpop.f32.mrb[0].mxu0
      %3251 = vdwg.mxu0
      %v3252 = vadd.f32 %v3142, %v3206
      %v3253 = vadd.f32 %v3143, %v3208
      %v3254 = vadd.f32 %v3144, %v3247
      %s3255 = scalar_lea.vmem %s1, 112
      %v3256 = vld [vmem:[%s3255] sm:$0xf]
      %3257 = vrot.lane.b32.xlu0 %v185, 40
      %v3258 = vpop.permute.xlu0 %3257
      %3259 = vrot.lane.b32.xlu0 %v193, 40
      %v3260 = vpop.permute.xlu0 %3259
      %3261 = vrot.lane.b32.xlu0 %v192, 40
      %v3262 = vpop.permute.xlu0 %3261
      %3263 = vrot.lane.b32.xlu0 %v194, 40
      %v3264 = vpop.permute.xlu0 %3263
      %vm3265 = vcmask 326656
      %v3266 = vsel %vm3265, %v3258, %v3260
      %v3267 = vsel %vm3265, %v3260, %v3262
      %v3268 = vsel %vm3265, %v3262, %v3264
      %v3270 = vsel %vm207, %v3256, 0
      %v3273 = vsel %vm211, %v3266, 0
      %v3276 = vsel %vm211, %v3267, 0
      %v3279 = vsel %vm211, %v3268, 0
      %3281 = vmatprep.subr.bf16.mxu0 %v3276
      %3282 = vmatpush1.bf16.msra.mxu0 %v3273
      %3283 = vmatprep.subr.bf16.mxu0 0
      %3284 = vmatpush1.bf16.msra.mxu0 0
      %3285 = vmatprep.subr.bf16.mxu0 0
      %3286 = vmatpush1.bf16.msra.mxu0 0
      %3287 = vmatprep.subr.bf16.mxu0 0
      %3288 = vmatpush1.bf16.msra.mxu0 0
      %3289 = vmatprep.subr.bf16.mxu0 0
      %3290 = vmatpush1.bf16.msra.mxu0 0
      %3291 = vmatprep.subr.bf16.mxu0 0
      %3292 = vmatpush1.bf16.msra.mxu0 0
      %3293 = vmatprep.subr.bf16.mxu0 0
      %3294 = vmatpush1.bf16.msra.mxu0 0
      %3295 = vmatprep.subr.bf16.mxu0 0
      %3296 = vmatpush1.bf16.msra.mxu0 0
      %3297 = vmatprep.subr.bf16.mxu0 0
      %3298 = vmatpush1.bf16.msra.mxu0 0
      %3299 = vmatprep.subr.bf16.mxu0 0
      %3300 = vmatpush1.bf16.msra.mxu0 0
      %3301 = vmatprep.subr.bf16.mxu0 0
      %3302 = vmatpush1.bf16.msra.mxu0 0
      %3303 = vmatprep.subr.bf16.mxu0 0
      %3304 = vmatpush1.bf16.msra.mxu0 0
      %3305 = vmatprep.subr.bf16.mxu0 0
      %3306 = vmatpush1.bf16.msra.mxu0 0
      %3307 = vmatprep.subr.bf16.mxu0 0
      %3308 = vmatpush1.bf16.msra.mxu0 0
      %3309 = vmatprep.subr.bf16.mxu0 0
      %3310 = vmatpush1.bf16.msra.mxu0 0
      %3311 = vmatprep.subr.bf16.mxu0 0
      %3312 = vmatpush1.bf16.msra.mxu0 0
      %3313 = vmatprep.mubr.bf16.mxu0 0
      %3314 = vmatmul.mubr.bf16.gmra.mrb[0].mxu0 %v3270
      %v3315 = vpop.f32.mrb[0].mxu0
      %v3316 = vadd.f32 0.0, %v3315
      %v3317 = vpop.f32.mrb[0].mxu0
      %v3318 = vadd.f32 0.0, %v3317
      %v3319 = vpop.f32.mrb[0].mxu0
      %v3320 = vpop.f32.mrb[0].mxu0
      %3321 = vdwg.mxu0
      %3322 = vmatprep.subr.bf16.mxu0 0
      %3323 = vmatpush1.bf16.msra.mxu0 %v3279
      %3324 = vmatprep.subr.bf16.mxu0 0
      %3325 = vmatpush1.bf16.msra.mxu0 0
      %3326 = vmatprep.subr.bf16.mxu0 0
      %3327 = vmatpush1.bf16.msra.mxu0 0
      %3328 = vmatprep.subr.bf16.mxu0 0
      %3329 = vmatpush1.bf16.msra.mxu0 0
      %3330 = vmatprep.subr.bf16.mxu0 0
      %3331 = vmatpush1.bf16.msra.mxu0 0
      %3332 = vmatprep.subr.bf16.mxu0 0
      %3333 = vmatpush1.bf16.msra.mxu0 0
      %3334 = vmatprep.subr.bf16.mxu0 0
      %3335 = vmatpush1.bf16.msra.mxu0 0
      %3336 = vmatprep.subr.bf16.mxu0 0
      %3337 = vmatpush1.bf16.msra.mxu0 0
      %3338 = vmatprep.subr.bf16.mxu0 0
      %3339 = vmatpush1.bf16.msra.mxu0 0
      %3340 = vmatprep.subr.bf16.mxu0 0
      %3341 = vmatpush1.bf16.msra.mxu0 0
      %3342 = vmatprep.subr.bf16.mxu0 0
      %3343 = vmatpush1.bf16.msra.mxu0 0
      %3344 = vmatprep.subr.bf16.mxu0 0
      %3345 = vmatpush1.bf16.msra.mxu0 0
      %3346 = vmatprep.subr.bf16.mxu0 0
      %3347 = vmatpush1.bf16.msra.mxu0 0
      %3348 = vmatprep.subr.bf16.mxu0 0
      %3349 = vmatpush1.bf16.msra.mxu0 0
      %3350 = vmatprep.subr.bf16.mxu0 0
      %3351 = vmatpush1.bf16.msra.mxu0 0
      %3352 = vmatprep.subr.bf16.mxu0 0
      %3353 = vmatpush1.bf16.msra.mxu0 0
      %3354 = vmatprep.mubr.bf16.mxu0 0
      %3355 = vmatmul.mubr.bf16.gmra.mrb[0].mxu0 %v3270
      %v3356 = vpop.f32.mrb[0].mxu0
      %v3357 = vadd.f32 0.0, %v3356
      %v3358 = vpop.f32.mrb[0].mxu0
      %v3359 = vpop.f32.mrb[0].mxu0
      %v3360 = vpop.f32.mrb[0].mxu0
      %3361 = vdwg.mxu0
      %v3362 = vadd.f32 %v3252, %v3316
      %v3363 = vadd.f32 %v3253, %v3318
      %v3364 = vadd.f32 %v3254, %v3357
      %s3365 = scalar_lea.vmem %s1, 116
      %v3366 = vld [vmem:[%s3365] sm:$0xf]
      %3367 = vrot.lane.b32.xlu0 %v185, 39
      %v3368 = vpop.permute.xlu0 %3367
      %3369 = vrot.lane.b32.xlu0 %v193, 39
      %v3370 = vpop.permute.xlu0 %3369
      %3371 = vrot.lane.b32.xlu0 %v192, 39
      %v3372 = vpop.permute.xlu0 %3371
      %3373 = vrot.lane.b32.xlu0 %v194, 39
      %v3374 = vpop.permute.xlu0 %3373
      %vm3375 = vcmask 318464
      %v3376 = vsel %vm3375, %v3368, %v3370
      %v3377 = vsel %vm3375, %v3370, %v3372
      %v3378 = vsel %vm3375, %v3372, %v3374
      %v3380 = vsel %vm207, %v3366, 0
      %v3383 = vsel %vm211, %v3376, 0
      %v3386 = vsel %vm211, %v3377, 0
      %v3389 = vsel %vm211, %v3378, 0
      %3391 = vmatprep.subr.bf16.mxu0 %v3386
      %3392 = vmatpush1.bf16.msra.mxu0 %v3383
      %3393 = vmatprep.subr.bf16.mxu0 0
      %3394 = vmatpush1.bf16.msra.mxu0 0
      %3395 = vmatprep.subr.bf16.mxu0 0
      %3396 = vmatpush1.bf16.msra.mxu0 0
      %3397 = vmatprep.subr.bf16.mxu0 0
      %3398 = vmatpush1.bf16.msra.mxu0 0
      %3399 = vmatprep.subr.bf16.mxu0 0
      %3400 = vmatpush1.bf16.msra.mxu0 0
      %3401 = vmatprep.subr.bf16.mxu0 0
      %3402 = vmatpush1.bf16.msra.mxu0 0
      %3403 = vmatprep.subr.bf16.mxu0 0
      %3404 = vmatpush1.bf16.msra.mxu0 0
      %3405 = vmatprep.subr.bf16.mxu0 0
      %3406 = vmatpush1.bf16.msra.mxu0 0
      %3407 = vmatprep.subr.bf16.mxu0 0
      %3408 = vmatpush1.bf16.msra.mxu0 0
      %3409 = vmatprep.subr.bf16.mxu0 0
      %3410 = vmatpush1.bf16.msra.mxu0 0
      %3411 = vmatprep.subr.bf16.mxu0 0
      %3412 = vmatpush1.bf16.msra.mxu0 0
      %3413 = vmatprep.subr.bf16.mxu0 0
      %3414 = vmatpush1.bf16.msra.mxu0 0
      %3415 = vmatprep.subr.bf16.mxu0 0
      %3416 = vmatpush1.bf16.msra.mxu0 0
      %3417 = vmatprep.subr.bf16.mxu0 0
      %3418 = vmatpush1.bf16.msra.mxu0 0
      %3419 = vmatprep.subr.bf16.mxu0 0
      %3420 = vmatpush1.bf16.msra.mxu0 0
      %3421 = vmatprep.subr.bf16.mxu0 0
      %3422 = vmatpush1.bf16.msra.mxu0 0
      %3423 = vmatprep.mubr.bf16.mxu0 0
      %3424 = vmatmul.mubr.bf16.gmra.mrb[0].mxu0 %v3380
      %v3425 = vpop.f32.mrb[0].mxu0
      %v3426 = vadd.f32 0.0, %v3425
      %v3427 = vpop.f32.mrb[0].mxu0
      %v3428 = vadd.f32 0.0, %v3427
      %v3429 = vpop.f32.mrb[0].mxu0
      %v3430 = vpop.f32.mrb[0].mxu0
      %3431 = vdwg.mxu0
      %3432 = vmatprep.subr.bf16.mxu0 0
      %3433 = vmatpush1.bf16.msra.mxu0 %v3389
      %3434 = vmatprep.subr.bf16.mxu0 0
      %3435 = vmatpush1.bf16.msra.mxu0 0
      %3436 = vmatprep.subr.bf16.mxu0 0
      %3437 = vmatpush1.bf16.msra.mxu0 0
      %3438 = vmatprep.subr.bf16.mxu0 0
      %3439 = vmatpush1.bf16.msra.mxu0 0
      %3440 = vmatprep.subr.bf16.mxu0 0
      %3441 = vmatpush1.bf16.msra.mxu0 0
      %3442 = vmatprep.subr.bf16.mxu0 0
      %3443 = vmatpush1.bf16.msra.mxu0 0
      %3444 = vmatprep.subr.bf16.mxu0 0
      %3445 = vmatpush1.bf16.msra.mxu0 0
      %3446 = vmatprep.subr.bf16.mxu0 0
      %3447 = vmatpush1.bf16.msra.mxu0 0
      %3448 = vmatprep.subr.bf16.mxu0 0
      %3449 = vmatpush1.bf16.msra.mxu0 0
      %3450 = vmatprep.subr.bf16.mxu0 0
      %3451 = vmatpush1.bf16.msra.mxu0 0
      %3452 = vmatprep.subr.bf16.mxu0 0
      %3453 = vmatpush1.bf16.msra.mxu0 0
      %3454 = vmatprep.subr.bf16.mxu0 0
      %3455 = vmatpush1.bf16.msra.mxu0 0
      %3456 = vmatprep.subr.bf16.mxu0 0
      %3457 = vmatpush1.bf16.msra.mxu0 0
      %3458 = vmatprep.subr.bf16.mxu0 0
      %3459 = vmatpush1.bf16.msra.mxu0 0
      %3460 = vmatprep.subr.bf16.mxu0 0
      %3461 = vmatpush1.bf16.msra.mxu0 0
      %3462 = vmatprep.subr.bf16.mxu0 0
      %3463 = vmatpush1.bf16.msra.mxu0 0
      %3464 = vmatprep.mubr.bf16.mxu0 0
      %3465 = vmatmul.mubr.bf16.gmra.mrb[0].mxu0 %v3380
      %v3466 = vpop.f32.mrb[0].mxu0
      %v3467 = vadd.f32 0.0, %v3466
      %v3468 = vpop.f32.mrb[0].mxu0
      %v3469 = vpop.f32.mrb[0].mxu0
      %v3470 = vpop.f32.mrb[0].mxu0
      %3471 = vdwg.mxu0
      %v3472 = vadd.f32 %v3362, %v3426
      %v3473 = vadd.f32 %v3363, %v3428
      %v3474 = vadd.f32 %v3364, %v3467
      %s3475 = scalar_lea.vmem %s1, 120
      %v3476 = vld [vmem:[%s3475] sm:$0xf]
      %3477 = vrot.lane.b32.xlu0 %v185, 38
      %v3478 = vpop.permute.xlu0 %3477
      %3479 = vrot.lane.b32.xlu0 %v193, 38
      %v3480 = vpop.permute.xlu0 %3479
      %3481 = vrot.lane.b32.xlu0 %v192, 38
      %v3482 = vpop.permute.xlu0 %3481
      %3483 = vrot.lane.b32.xlu0 %v194, 38
      %v3484 = vpop.permute.xlu0 %3483
      %vm3485 = vcmask 310272
      %v3486 = vsel %vm3485, %v3478, %v3480
      %v3487 = vsel %vm3485, %v3480, %v3482
      %v3488 = vsel %vm3485, %v3482, %v3484
      %v3490 = vsel %vm207, %v3476, 0
      %v3493 = vsel %vm211, %v3486, 0
      %v3496 = vsel %vm211, %v3487, 0
      %v3499 = vsel %vm211, %v3488, 0
      %3501 = vmatprep.subr.bf16.mxu0 %v3496
      %3502 = vmatpush1.bf16.msra.mxu0 %v3493
      %3503 = vmatprep.subr.bf16.mxu0 0
      %3504 = vmatpush1.bf16.msra.mxu0 0
      %3505 = vmatprep.subr.bf16.mxu0 0
      %3506 = vmatpush1.bf16.msra.mxu0 0
      %3507 = vmatprep.subr.bf16.mxu0 0
      %3508 = vmatpush1.bf16.msra.mxu0 0
      %3509 = vmatprep.subr.bf16.mxu0 0
      %3510 = vmatpush1.bf16.msra.mxu0 0
      %3511 = vmatprep.subr.bf16.mxu0 0
      %3512 = vmatpush1.bf16.msra.mxu0 0
      %3513 = vmatprep.subr.bf16.mxu0 0
      %3514 = vmatpush1.bf16.msra.mxu0 0
      %3515 = vmatprep.subr.bf16.mxu0 0
      %3516 = vmatpush1.bf16.msra.mxu0 0
      %3517 = vmatprep.subr.bf16.mxu0 0
      %3518 = vmatpush1.bf16.msra.mxu0 0
      %3519 = vmatprep.subr.bf16.mxu0 0
      %3520 = vmatpush1.bf16.msra.mxu0 0
      %3521 = vmatprep.subr.bf16.mxu0 0
      %3522 = vmatpush1.bf16.msra.mxu0 0
      %3523 = vmatprep.subr.bf16.mxu0 0
      %3524 = vmatpush1.bf16.msra.mxu0 0
      %3525 = vmatprep.subr.bf16.mxu0 0
      %3526 = vmatpush1.bf16.msra.mxu0 0
      %3527 = vmatprep.subr.bf16.mxu0 0
      %3528 = vmatpush1.bf16.msra.mxu0 0
      %3529 = vmatprep.subr.bf16.mxu0 0
      %3530 = vmatpush1.bf16.msra.mxu0 0
      %3531 = vmatprep.subr.bf16.mxu0 0
      %3532 = vmatpush1.bf16.msra.mxu0 0
      %3533 = vmatprep.mubr.bf16.mxu0 0
      %3534 = vmatmul.mubr.bf16.gmra.mrb[0].mxu0 %v3490
      %v3535 = vpop.f32.mrb[0].mxu0
      %v3536 = vadd.f32 0.0, %v3535
      %v3537 = vpop.f32.mrb[0].mxu0
      %v3538 = vadd.f32 0.0, %v3537
      %v3539 = vpop.f32.mrb[0].mxu0
      %v3540 = vpop.f32.mrb[0].mxu0
      %3541 = vdwg.mxu0
      %3542 = vmatprep.subr.bf16.mxu0 0
      %3543 = vmatpush1.bf16.msra.mxu0 %v3499
      %3544 = vmatprep.subr.bf16.mxu0 0
      %3545 = vmatpush1.bf16.msra.mxu0 0
      %3546 = vmatprep.subr.bf16.mxu0 0
      %3547 = vmatpush1.bf16.msra.mxu0 0
      %3548 = vmatprep.subr.bf16.mxu0 0
      %3549 = vmatpush1.bf16.msra.mxu0 0
      %3550 = vmatprep.subr.bf16.mxu0 0
      %3551 = vmatpush1.bf16.msra.mxu0 0
      %3552 = vmatprep.subr.bf16.mxu0 0
      %3553 = vmatpush1.bf16.msra.mxu0 0
      %3554 = vmatprep.subr.bf16.mxu0 0
      %3555 = vmatpush1.bf16.msra.mxu0 0
      %3556 = vmatprep.subr.bf16.mxu0 0
      %3557 = vmatpush1.bf16.msra.mxu0 0
      %3558 = vmatprep.subr.bf16.mxu0 0
      %3559 = vmatpush1.bf16.msra.mxu0 0
      %3560 = vmatprep.subr.bf16.mxu0 0
      %3561 = vmatpush1.bf16.msra.mxu0 0
      %3562 = vmatprep.subr.bf16.mxu0 0
      %3563 = vmatpush1.bf16.msra.mxu0 0
      %3564 = vmatprep.subr.bf16.mxu0 0
      %3565 = vmatpush1.bf16.msra.mxu0 0
      %3566 = vmatprep.subr.bf16.mxu0 0
      %3567 = vmatpush1.bf16.msra.mxu0 0
      %3568 = vmatprep.subr.bf16.mxu0 0
      %3569 = vmatpush1.bf16.msra.mxu0 0
      %3570 = vmatprep.subr.bf16.mxu0 0
      %3571 = vmatpush1.bf16.msra.mxu0 0
      %3572 = vmatprep.subr.bf16.mxu0 0
      %3573 = vmatpush1.bf16.msra.mxu0 0
      %3574 = vmatprep.mubr.bf16.mxu0 0
      %3575 = vmatmul.mubr.bf16.gmra.mrb[0].mxu0 %v3490
      %v3576 = vpop.f32.mrb[0].mxu0
      %v3577 = vadd.f32 0.0, %v3576
      %v3578 = vpop.f32.mrb[0].mxu0
      %v3579 = vpop.f32.mrb[0].mxu0
      %v3580 = vpop.f32.mrb[0].mxu0
      %3581 = vdwg.mxu0
      %v3582 = vadd.f32 %v3472, %v3536
      %v3583 = vadd.f32 %v3473, %v3538
      %v3584 = vadd.f32 %v3474, %v3577
      %s3585 = scalar_lea.vmem %s1, 124
      %v3586 = vld [vmem:[%s3585] sm:$0xf]
      %3587 = vrot.lane.b32.xlu0 %v185, 37
      %v3588 = vpop.permute.xlu0 %3587
      %3589 = vrot.lane.b32.xlu0 %v193, 37
      %v3590 = vpop.permute.xlu0 %3589
      %3591 = vrot.lane.b32.xlu0 %v192, 37
      %v3592 = vpop.permute.xlu0 %3591
      %3593 = vrot.lane.b32.xlu0 %v194, 37
      %v3594 = vpop.permute.xlu0 %3593
      %vm3595 = vcmask 302080
      %v3596 = vsel %vm3595, %v3588, %v3590
      %v3597 = vsel %vm3595, %v3590, %v3592
      %v3598 = vsel %vm3595, %v3592, %v3594
      %v3600 = vsel %vm207, %v3586, 0
      %v3603 = vsel %vm211, %v3596, 0
      %v3606 = vsel %vm211, %v3597, 0
      %v3609 = vsel %vm211, %v3598, 0
      %3611 = vmatprep.subr.bf16.mxu0 %v3606
      %3612 = vmatpush1.bf16.msra.mxu0 %v3603
      %3613 = vmatprep.subr.bf16.mxu0 0
      %3614 = vmatpush1.bf16.msra.mxu0 0
      %3615 = vmatprep.subr.bf16.mxu0 0
      %3616 = vmatpush1.bf16.msra.mxu0 0
      %3617 = vmatprep.subr.bf16.mxu0 0
      %3618 = vmatpush1.bf16.msra.mxu0 0
      %3619 = vmatprep.subr.bf16.mxu0 0
      %3620 = vmatpush1.bf16.msra.mxu0 0
      %3621 = vmatprep.subr.bf16.mxu0 0
      %3622 = vmatpush1.bf16.msra.mxu0 0
      %3623 = vmatprep.subr.bf16.mxu0 0
      %3624 = vmatpush1.bf16.msra.mxu0 0
      %3625 = vmatprep.subr.bf16.mxu0 0
      %3626 = vmatpush1.bf16.msra.mxu0 0
      %3627 = vmatprep.subr.bf16.mxu0 0
      %3628 = vmatpush1.bf16.msra.mxu0 0
      %3629 = vmatprep.subr.bf16.mxu0 0
      %3630 = vmatpush1.bf16.msra.mxu0 0
      %3631 = vmatprep.subr.bf16.mxu0 0
      %3632 = vmatpush1.bf16.msra.mxu0 0
      %3633 = vmatprep.subr.bf16.mxu0 0
      %3634 = vmatpush1.bf16.msra.mxu0 0
      %3635 = vmatprep.subr.bf16.mxu0 0
      %3636 = vmatpush1.bf16.msra.mxu0 0
      %3637 = vmatprep.subr.bf16.mxu0 0
      %3638 = vmatpush1.bf16.msra.mxu0 0
      %3639 = vmatprep.subr.bf16.mxu0 0
      %3640 = vmatpush1.bf16.msra.mxu0 0
      %3641 = vmatprep.subr.bf16.mxu0 0
      %3642 = vmatpush1.bf16.msra.mxu0 0
      %3643 = vmatprep.mubr.bf16.mxu0 0
      %3644 = vmatmul.mubr.bf16.gmra.mrb[0].mxu0 %v3600
      %v3645 = vpop.f32.mrb[0].mxu0
      %v3646 = vadd.f32 0.0, %v3645
      %v3647 = vpop.f32.mrb[0].mxu0
      %v3648 = vadd.f32 0.0, %v3647
      %v3649 = vpop.f32.mrb[0].mxu0
      %v3650 = vpop.f32.mrb[0].mxu0
      %3651 = vdwg.mxu0
      %3652 = vmatprep.subr.bf16.mxu0 0
      %3653 = vmatpush1.bf16.msra.mxu0 %v3609
      %3654 = vmatprep.subr.bf16.mxu0 0
      %3655 = vmatpush1.bf16.msra.mxu0 0
      %3656 = vmatprep.subr.bf16.mxu0 0
      %3657 = vmatpush1.bf16.msra.mxu0 0
      %3658 = vmatprep.subr.bf16.mxu0 0
      %3659 = vmatpush1.bf16.msra.mxu0 0
      %3660 = vmatprep.subr.bf16.mxu0 0
      %3661 = vmatpush1.bf16.msra.mxu0 0
      %3662 = vmatprep.subr.bf16.mxu0 0
      %3663 = vmatpush1.bf16.msra.mxu0 0
      %3664 = vmatprep.subr.bf16.mxu0 0
      %3665 = vmatpush1.bf16.msra.mxu0 0
      %3666 = vmatprep.subr.bf16.mxu0 0
      %3667 = vmatpush1.bf16.msra.mxu0 0
      %3668 = vmatprep.subr.bf16.mxu0 0
      %3669 = vmatpush1.bf16.msra.mxu0 0
      %3670 = vmatprep.subr.bf16.mxu0 0
      %3671 = vmatpush1.bf16.msra.mxu0 0
      %3672 = vmatprep.subr.bf16.mxu0 0
      %3673 = vmatpush1.bf16.msra.mxu0 0
      %3674 = vmatprep.subr.bf16.mxu0 0
      %3675 = vmatpush1.bf16.msra.mxu0 0
      %3676 = vmatprep.subr.bf16.mxu0 0
      %3677 = vmatpush1.bf16.msra.mxu0 0
      %3678 = vmatprep.subr.bf16.mxu0 0
      %3679 = vmatpush1.bf16.msra.mxu0 0
      %3680 = vmatprep.subr.bf16.mxu0 0
      %3681 = vmatpush1.bf16.msra.mxu0 0
      %3682 = vmatprep.subr.bf16.mxu0 0
      %3683 = vmatpush1.bf16.msra.mxu0 0
      %3684 = vmatprep.mubr.bf16.mxu0 0
      %3685 = vmatmul.mubr.bf16.gmra.mrb[0].mxu0 %v3600
      %v3686 = vpop.f32.mrb[0].mxu0
      %v3687 = vadd.f32 0.0, %v3686
      %v3688 = vpop.f32.mrb[0].mxu0
      %v3689 = vpop.f32.mrb[0].mxu0
      %v3690 = vpop.f32.mrb[0].mxu0
      %3691 = vdwg.mxu0
      %v3692 = vadd.f32 %v3582, %v3646
      %v3693 = vadd.f32 %v3583, %v3648
      %v3694 = vadd.f32 %v3584, %v3687
      %s3695 = scalar_lea.vmem %s1, 128
      %v3696 = vld [vmem:[%s3695] sm:$0xf]
      %3697 = vrot.lane.b32.xlu0 %v185, 36
      %v3698 = vpop.permute.xlu0 %3697
      %3699 = vrot.lane.b32.xlu0 %v193, 36
      %v3700 = vpop.permute.xlu0 %3699
      %3701 = vrot.lane.b32.xlu0 %v192, 36
      %v3702 = vpop.permute.xlu0 %3701
      %3703 = vrot.lane.b32.xlu0 %v194, 36
      %v3704 = vpop.permute.xlu0 %3703
      %vm3705 = vcmask 293888
      %v3706 = vsel %vm3705, %v3698, %v3700
      %v3707 = vsel %vm3705, %v3700, %v3702
      %v3708 = vsel %vm3705, %v3702, %v3704
      %v3710 = vsel %vm207, %v3696, 0
      %v3713 = vsel %vm211, %v3706, 0
      %v3716 = vsel %vm211, %v3707, 0
      %v3719 = vsel %vm211, %v3708, 0
      %3721 = vmatprep.subr.bf16.mxu0 %v3716
      %3722 = vmatpush1.bf16.msra.mxu0 %v3713
      %3723 = vmatprep.subr.bf16.mxu0 0
      %3724 = vmatpush1.bf16.msra.mxu0 0
      %3725 = vmatprep.subr.bf16.mxu0 0
      %3726 = vmatpush1.bf16.msra.mxu0 0
      %3727 = vmatprep.subr.bf16.mxu0 0
      %3728 = vmatpush1.bf16.msra.mxu0 0
      %3729 = vmatprep.subr.bf16.mxu0 0
      %3730 = vmatpush1.bf16.msra.mxu0 0
      %3731 = vmatprep.subr.bf16.mxu0 0
      %3732 = vmatpush1.bf16.msra.mxu0 0
      %3733 = vmatprep.subr.bf16.mxu0 0
      %3734 = vmatpush1.bf16.msra.mxu0 0
      %3735 = vmatprep.subr.bf16.mxu0 0
      %3736 = vmatpush1.bf16.msra.mxu0 0
      %3737 = vmatprep.subr.bf16.mxu0 0
      %3738 = vmatpush1.bf16.msra.mxu0 0
      %3739 = vmatprep.subr.bf16.mxu0 0
      %3740 = vmatpush1.bf16.msra.mxu0 0
      %3741 = vmatprep.subr.bf16.mxu0 0
      %3742 = vmatpush1.bf16.msra.mxu0 0
      %3743 = vmatprep.subr.bf16.mxu0 0
      %3744 = vmatpush1.bf16.msra.mxu0 0
      %3745 = vmatprep.subr.bf16.mxu0 0
      %3746 = vmatpush1.bf16.msra.mxu0 0
      %3747 = vmatprep.subr.bf16.mxu0 0
      %3748 = vmatpush1.bf16.msra.mxu0 0
      %3749 = vmatprep.subr.bf16.mxu0 0
      %3750 = vmatpush1.bf16.msra.mxu0 0
      %3751 = vmatprep.subr.bf16.mxu0 0
      %3752 = vmatpush1.bf16.msra.mxu0 0
      %3753 = vmatprep.mubr.bf16.mxu0 0
      %3754 = vmatmul.mubr.bf16.gmra.mrb[0].mxu0 %v3710
      %v3755 = vpop.f32.mrb[0].mxu0
      %v3756 = vadd.f32 0.0, %v3755
      %v3757 = vpop.f32.mrb[0].mxu0
      %v3758 = vadd.f32 0.0, %v3757
      %v3759 = vpop.f32.mrb[0].mxu0
      %v3760 = vpop.f32.mrb[0].mxu0
      %3761 = vdwg.mxu0
      %3762 = vmatprep.subr.bf16.mxu0 0
      %3763 = vmatpush1.bf16.msra.mxu0 %v3719
      %3764 = vmatprep.subr.bf16.mxu0 0
      %3765 = vmatpush1.bf16.msra.mxu0 0
      %3766 = vmatprep.subr.bf16.mxu0 0
      %3767 = vmatpush1.bf16.msra.mxu0 0
      %3768 = vmatprep.subr.bf16.mxu0 0
      %3769 = vmatpush1.bf16.msra.mxu0 0
      %3770 = vmatprep.subr.bf16.mxu0 0
      %3771 = vmatpush1.bf16.msra.mxu0 0
      %3772 = vmatprep.subr.bf16.mxu0 0
      %3773 = vmatpush1.bf16.msra.mxu0 0
      %3774 = vmatprep.subr.bf16.mxu0 0
      %3775 = vmatpush1.bf16.msra.mxu0 0
      %3776 = vmatprep.subr.bf16.mxu0 0
      %3777 = vmatpush1.bf16.msra.mxu0 0
      %3778 = vmatprep.subr.bf16.mxu0 0
      %3779 = vmatpush1.bf16.msra.mxu0 0
      %3780 = vmatprep.subr.bf16.mxu0 0
      %3781 = vmatpush1.bf16.msra.mxu0 0
      %3782 = vmatprep.subr.bf16.mxu0 0
      %3783 = vmatpush1.bf16.msra.mxu0 0
      %3784 = vmatprep.subr.bf16.mxu0 0
      %3785 = vmatpush1.bf16.msra.mxu0 0
      %3786 = vmatprep.subr.bf16.mxu0 0
      %3787 = vmatpush1.bf16.msra.mxu0 0
      %3788 = vmatprep.subr.bf16.mxu0 0
      %3789 = vmatpush1.bf16.msra.mxu0 0
      %3790 = vmatprep.subr.bf16.mxu0 0
      %3791 = vmatpush1.bf16.msra.mxu0 0
      %3792 = vmatprep.subr.bf16.mxu0 0
      %3793 = vmatpush1.bf16.msra.mxu0 0
      %3794 = vmatprep.mubr.bf16.mxu0 0
      %3795 = vmatmul.mubr.bf16.gmra.mrb[0].mxu0 %v3710
      %v3796 = vpop.f32.mrb[0].mxu0
      %v3797 = vadd.f32 0.0, %v3796
      %v3798 = vpop.f32.mrb[0].mxu0
      %v3799 = vpop.f32.mrb[0].mxu0
      %v3800 = vpop.f32.mrb[0].mxu0
      %3801 = vdwg.mxu0
      %v3802 = vadd.f32 %v3692, %v3756
      %v3803 = vadd.f32 %v3693, %v3758
      %v3804 = vadd.f32 %v3694, %v3797
      %s3805 = scalar_lea.vmem %s1, 132
      %v3806 = vld [vmem:[%s3805] sm:$0xf]
      %3807 = vrot.lane.b32.xlu0 %v185, 35
      %v3808 = vpop.permute.xlu0 %3807
      %3809 = vrot.lane.b32.xlu0 %v193, 35
      %v3810 = vpop.permute.xlu0 %3809
      %3811 = vrot.lane.b32.xlu0 %v192, 35
      %v3812 = vpop.permute.xlu0 %3811
      %3813 = vrot.lane.b32.xlu0 %v194, 35
      %v3814 = vpop.permute.xlu0 %3813
      %vm3815 = vcmask 285696
      %v3816 = vsel %vm3815, %v3808, %v3810
      %v3817 = vsel %vm3815, %v3810, %v3812
      %v3818 = vsel %vm3815, %v3812, %v3814
      %v3820 = vsel %vm207, %v3806, 0
      %v3823 = vsel %vm211, %v3816, 0
      %v3826 = vsel %vm211, %v3817, 0
      %v3829 = vsel %vm211, %v3818, 0
      %3831 = vmatprep.subr.bf16.mxu0 %v3826
      %3832 = vmatpush1.bf16.msra.mxu0 %v3823
      %3833 = vmatprep.subr.bf16.mxu0 0
      %3834 = vmatpush1.bf16.msra.mxu0 0
      %3835 = vmatprep.subr.bf16.mxu0 0
      %3836 = vmatpush1.bf16.msra.mxu0 0
      %3837 = vmatprep.subr.bf16.mxu0 0
      %3838 = vmatpush1.bf16.msra.mxu0 0
      %3839 = vmatprep.subr.bf16.mxu0 0
      %3840 = vmatpush1.bf16.msra.mxu0 0
      %3841 = vmatprep.subr.bf16.mxu0 0
      %3842 = vmatpush1.bf16.msra.mxu0 0
      %3843 = vmatprep.subr.bf16.mxu0 0
      %3844 = vmatpush1.bf16.msra.mxu0 0
      %3845 = vmatprep.subr.bf16.mxu0 0
      %3846 = vmatpush1.bf16.msra.mxu0 0
      %3847 = vmatprep.subr.bf16.mxu0 0
      %3848 = vmatpush1.bf16.msra.mxu0 0
      %3849 = vmatprep.subr.bf16.mxu0 0
      %3850 = vmatpush1.bf16.msra.mxu0 0
      %3851 = vmatprep.subr.bf16.mxu0 0
      %3852 = vmatpush1.bf16.msra.mxu0 0
      %3853 = vmatprep.subr.bf16.mxu0 0
      %3854 = vmatpush1.bf16.msra.mxu0 0
      %3855 = vmatprep.subr.bf16.mxu0 0
      %3856 = vmatpush1.bf16.msra.mxu0 0
      %3857 = vmatprep.subr.bf16.mxu0 0
      %3858 = vmatpush1.bf16.msra.mxu0 0
      %3859 = vmatprep.subr.bf16.mxu0 0
      %3860 = vmatpush1.bf16.msra.mxu0 0
      %3861 = vmatprep.subr.bf16.mxu0 0
      %3862 = vmatpush1.bf16.msra.mxu0 0
      %3863 = vmatprep.mubr.bf16.mxu0 0
      %3864 = vmatmul.mubr.bf16.gmra.mrb[0].mxu0 %v3820
      %v3865 = vpop.f32.mrb[0].mxu0
      %v3866 = vadd.f32 0.0, %v3865
      %v3867 = vpop.f32.mrb[0].mxu0
      %v3868 = vadd.f32 0.0, %v3867
      %v3869 = vpop.f32.mrb[0].mxu0
      %v3870 = vpop.f32.mrb[0].mxu0
      %3871 = vdwg.mxu0
      %3872 = vmatprep.subr.bf16.mxu0 0
      %3873 = vmatpush1.bf16.msra.mxu0 %v3829
      %3874 = vmatprep.subr.bf16.mxu0 0
      %3875 = vmatpush1.bf16.msra.mxu0 0
      %3876 = vmatprep.subr.bf16.mxu0 0
      %3877 = vmatpush1.bf16.msra.mxu0 0
      %3878 = vmatprep.subr.bf16.mxu0 0
      %3879 = vmatpush1.bf16.msra.mxu0 0
      %3880 = vmatprep.subr.bf16.mxu0 0
      %3881 = vmatpush1.bf16.msra.mxu0 0
      %3882 = vmatprep.subr.bf16.mxu0 0
      %3883 = vmatpush1.bf16.msra.mxu0 0
      %3884 = vmatprep.subr.bf16.mxu0 0
      %3885 = vmatpush1.bf16.msra.mxu0 0
      %3886 = vmatprep.subr.bf16.mxu0 0
      %3887 = vmatpush1.bf16.msra.mxu0 0
      %3888 = vmatprep.subr.bf16.mxu0 0
      %3889 = vmatpush1.bf16.msra.mxu0 0
      %3890 = vmatprep.subr.bf16.mxu0 0
      %3891 = vmatpush1.bf16.msra.mxu0 0
      %3892 = vmatprep.subr.bf16.mxu0 0
      %3893 = vmatpush1.bf16.msra.mxu0 0
      %3894 = vmatprep.subr.bf16.mxu0 0
      %3895 = vmatpush1.bf16.msra.mxu0 0
      %3896 = vmatprep.subr.bf16.mxu0 0
      %3897 = vmatpush1.bf16.msra.mxu0 0
      %3898 = vmatprep.subr.bf16.mxu0 0
      %3899 = vmatpush1.bf16.msra.mxu0 0
      %3900 = vmatprep.subr.bf16.mxu0 0
      %3901 = vmatpush1.bf16.msra.mxu0 0
      %3902 = vmatprep.subr.bf16.mxu0 0
      %3903 = vmatpush1.bf16.msra.mxu0 0
      %3904 = vmatprep.mubr.bf16.mxu0 0
      %3905 = vmatmul.mubr.bf16.gmra.mrb[0].mxu0 %v3820
      %v3906 = vpop.f32.mrb[0].mxu0
      %v3907 = vadd.f32 0.0, %v3906
      %v3908 = vpop.f32.mrb[0].mxu0
      %v3909 = vpop.f32.mrb[0].mxu0
      %v3910 = vpop.f32.mrb[0].mxu0
      %3911 = vdwg.mxu0
      %v3912 = vadd.f32 %v3802, %v3866
      %v3913 = vadd.f32 %v3803, %v3868
      %v3914 = vadd.f32 %v3804, %v3907
      %s3915 = scalar_lea.vmem %s1, 136
      %v3916 = vld [vmem:[%s3915] sm:$0xf]
      %3917 = vrot.lane.b32.xlu0 %v185, 34
      %v3918 = vpop.permute.xlu0 %3917
      %3919 = vrot.lane.b32.xlu0 %v193, 34
      %v3920 = vpop.permute.xlu0 %3919
      %3921 = vrot.lane.b32.xlu0 %v192, 34
      %v3922 = vpop.permute.xlu0 %3921
      %3923 = vrot.lane.b32.xlu0 %v194, 34
      %v3924 = vpop.permute.xlu0 %3923
      %vm3925 = vcmask 277504
      %v3926 = vsel %vm3925, %v3918, %v3920
      %v3927 = vsel %vm3925, %v3920, %v3922
      %v3928 = vsel %vm3925, %v3922, %v3924
      %v3930 = vsel %vm207, %v3916, 0
      %v3933 = vsel %vm211, %v3926, 0
      %v3936 = vsel %vm211, %v3927, 0
      %v3939 = vsel %vm211, %v3928, 0
      %3941 = vmatprep.subr.bf16.mxu0 %v3936
      %3942 = vmatpush1.bf16.msra.mxu0 %v3933
      %3943 = vmatprep.subr.bf16.mxu0 0
      %3944 = vmatpush1.bf16.msra.mxu0 0
      %3945 = vmatprep.subr.bf16.mxu0 0
      %3946 = vmatpush1.bf16.msra.mxu0 0
      %3947 = vmatprep.subr.bf16.mxu0 0
      %3948 = vmatpush1.bf16.msra.mxu0 0
      %3949 = vmatprep.subr.bf16.mxu0 0
      %3950 = vmatpush1.bf16.msra.mxu0 0
      %3951 = vmatprep.subr.bf16.mxu0 0
      %3952 = vmatpush1.bf16.msra.mxu0 0
      %3953 = vmatprep.subr.bf16.mxu0 0
      %3954 = vmatpush1.bf16.msra.mxu0 0
      %3955 = vmatprep.subr.bf16.mxu0 0
      %3956 = vmatpush1.bf16.msra.mxu0 0
      %3957 = vmatprep.subr.bf16.mxu0 0
      %3958 = vmatpush1.bf16.msra.mxu0 0
      %3959 = vmatprep.subr.bf16.mxu0 0
      %3960 = vmatpush1.bf16.msra.mxu0 0
      %3961 = vmatprep.subr.bf16.mxu0 0
      %3962 = vmatpush1.bf16.msra.mxu0 0
      %3963 = vmatprep.subr.bf16.mxu0 0
      %3964 = vmatpush1.bf16.msra.mxu0 0
      %3965 = vmatprep.subr.bf16.mxu0 0
      %3966 = vmatpush1.bf16.msra.mxu0 0
      %3967 = vmatprep.subr.bf16.mxu0 0
      %3968 = vmatpush1.bf16.msra.mxu0 0
      %3969 = vmatprep.subr.bf16.mxu0 0
      %3970 = vmatpush1.bf16.msra.mxu0 0
      %3971 = vmatprep.subr.bf16.mxu0 0
      %3972 = vmatpush1.bf16.msra.mxu0 0
      %3973 = vmatprep.mubr.bf16.mxu0 0
      %3974 = vmatmul.mubr.bf16.gmra.mrb[0].mxu0 %v3930
      %v3975 = vpop.f32.mrb[0].mxu0
      %v3976 = vadd.f32 0.0, %v3975
      %v3977 = vpop.f32.mrb[0].mxu0
      %v3978 = vadd.f32 0.0, %v3977
      %v3979 = vpop.f32.mrb[0].mxu0
      %v3980 = vpop.f32.mrb[0].mxu0
      %3981 = vdwg.mxu0
      %3982 = vmatprep.subr.bf16.mxu0 0
      %3983 = vmatpush1.bf16.msra.mxu0 %v3939
      %3984 = vmatprep.subr.bf16.mxu0 0
      %3985 = vmatpush1.bf16.msra.mxu0 0
      %3986 = vmatprep.subr.bf16.mxu0 0
      %3987 = vmatpush1.bf16.msra.mxu0 0
      %3988 = vmatprep.subr.bf16.mxu0 0
      %3989 = vmatpush1.bf16.msra.mxu0 0
      %3990 = vmatprep.subr.bf16.mxu0 0
      %3991 = vmatpush1.bf16.msra.mxu0 0
      %3992 = vmatprep.subr.bf16.mxu0 0
      %3993 = vmatpush1.bf16.msra.mxu0 0
      %3994 = vmatprep.subr.bf16.mxu0 0
      %3995 = vmatpush1.bf16.msra.mxu0 0
      %3996 = vmatprep.subr.bf16.mxu0 0
      %3997 = vmatpush1.bf16.msra.mxu0 0
      %3998 = vmatprep.subr.bf16.mxu0 0
      %3999 = vmatpush1.bf16.msra.mxu0 0
      %4000 = vmatprep.subr.bf16.mxu0 0
      %4001 = vmatpush1.bf16.msra.mxu0 0
      %4002 = vmatprep.subr.bf16.mxu0 0
      %4003 = vmatpush1.bf16.msra.mxu0 0
      %4004 = vmatprep.subr.bf16.mxu0 0
      %4005 = vmatpush1.bf16.msra.mxu0 0
      %4006 = vmatprep.subr.bf16.mxu0 0
      %4007 = vmatpush1.bf16.msra.mxu0 0
      %4008 = vmatprep.subr.bf16.mxu0 0
      %4009 = vmatpush1.bf16.msra.mxu0 0
      %4010 = vmatprep.subr.bf16.mxu0 0
      %4011 = vmatpush1.bf16.msra.mxu0 0
      %4012 = vmatprep.subr.bf16.mxu0 0
      %4013 = vmatpush1.bf16.msra.mxu0 0
      %4014 = vmatprep.mubr.bf16.mxu0 0
      %4015 = vmatmul.mubr.bf16.gmra.mrb[0].mxu0 %v3930
      %v4016 = vpop.f32.mrb[0].mxu0
      %v4017 = vadd.f32 0.0, %v4016
      %v4018 = vpop.f32.mrb[0].mxu0
      %v4019 = vpop.f32.mrb[0].mxu0
      %v4020 = vpop.f32.mrb[0].mxu0
      %4021 = vdwg.mxu0
      %v4022 = vadd.f32 %v3912, %v3976
      %v4023 = vadd.f32 %v3913, %v3978
      %v4024 = vadd.f32 %v3914, %v4017
      %s4025 = scalar_lea.vmem %s1, 140
      %v4026 = vld [vmem:[%s4025] sm:$0xf]
      %4027 = vrot.lane.b32.xlu0 %v185, 18
      %v4028 = vpop.permute.xlu0 %4027
      %4029 = vrot.lane.b32.xlu0 %v193, 18
      %v4030 = vpop.permute.xlu0 %4029
      %4031 = vrot.lane.b32.xlu0 %v192, 18
      %v4032 = vpop.permute.xlu0 %4031
      %4033 = vrot.lane.b32.xlu0 %v194, 18
      %v4034 = vpop.permute.xlu0 %4033
      %vm4035 = vcmask 146432
      %v4036 = vsel %vm4035, %v4028, %v4030
      %v4037 = vsel %vm4035, %v4030, %v4032
      %v4038 = vsel %vm4035, %v4032, %v4034
      %v4040 = vsel %vm207, %v4026, 0
      %v4043 = vsel %vm211, %v4036, 0
      %v4046 = vsel %vm211, %v4037, 0
      %v4049 = vsel %vm211, %v4038, 0
      %4051 = vmatprep.subr.bf16.mxu0 %v4046
      %4052 = vmatpush1.bf16.msra.mxu0 %v4043
      %4053 = vmatprep.subr.bf16.mxu0 0
      %4054 = vmatpush1.bf16.msra.mxu0 0
      %4055 = vmatprep.subr.bf16.mxu0 0
      %4056 = vmatpush1.bf16.msra.mxu0 0
      %4057 = vmatprep.subr.bf16.mxu0 0
      %4058 = vmatpush1.bf16.msra.mxu0 0
      %4059 = vmatprep.subr.bf16.mxu0 0
      %4060 = vmatpush1.bf16.msra.mxu0 0
      %4061 = vmatprep.subr.bf16.mxu0 0
      %4062 = vmatpush1.bf16.msra.mxu0 0
      %4063 = vmatprep.subr.bf16.mxu0 0
      %4064 = vmatpush1.bf16.msra.mxu0 0
      %4065 = vmatprep.subr.bf16.mxu0 0
      %4066 = vmatpush1.bf16.msra.mxu0 0
      %4067 = vmatprep.subr.bf16.mxu0 0
      %4068 = vmatpush1.bf16.msra.mxu0 0
      %4069 = vmatprep.subr.bf16.mxu0 0
      %4070 = vmatpush1.bf16.msra.mxu0 0
      %4071 = vmatprep.subr.bf16.mxu0 0
      %4072 = vmatpush1.bf16.msra.mxu0 0
      %4073 = vmatprep.subr.bf16.mxu0 0
      %4074 = vmatpush1.bf16.msra.mxu0 0
      %4075 = vmatprep.subr.bf16.mxu0 0
      %4076 = vmatpush1.bf16.msra.mxu0 0
      %4077 = vmatprep.subr.bf16.mxu0 0
      %4078 = vmatpush1.bf16.msra.mxu0 0
      %4079 = vmatprep.subr.bf16.mxu0 0
      %4080 = vmatpush1.bf16.msra.mxu0 0
      %4081 = vmatprep.subr.bf16.mxu0 0
      %4082 = vmatpush1.bf16.msra.mxu0 0
      %4083 = vmatprep.mubr.bf16.mxu0 0
      %4084 = vmatmul.mubr.bf16.gmra.mrb[0].mxu0 %v4040
      %v4085 = vpop.f32.mrb[0].mxu0
      %v4086 = vadd.f32 0.0, %v4085
      %v4087 = vpop.f32.mrb[0].mxu0
      %v4088 = vadd.f32 0.0, %v4087
      %v4089 = vpop.f32.mrb[0].mxu0
      %v4090 = vpop.f32.mrb[0].mxu0
      %4091 = vdwg.mxu0
      %4092 = vmatprep.subr.bf16.mxu0 0
      %4093 = vmatpush1.bf16.msra.mxu0 %v4049
      %4094 = vmatprep.subr.bf16.mxu0 0
      %4095 = vmatpush1.bf16.msra.mxu0 0
      %4096 = vmatprep.subr.bf16.mxu0 0
      %4097 = vmatpush1.bf16.msra.mxu0 0
      %4098 = vmatprep.subr.bf16.mxu0 0
      %4099 = vmatpush1.bf16.msra.mxu0 0
      %4100 = vmatprep.subr.bf16.mxu0 0
      %4101 = vmatpush1.bf16.msra.mxu0 0
      %4102 = vmatprep.subr.bf16.mxu0 0
      %4103 = vmatpush1.bf16.msra.mxu0 0
      %4104 = vmatprep.subr.bf16.mxu0 0
      %4105 = vmatpush1.bf16.msra.mxu0 0
      %4106 = vmatprep.subr.bf16.mxu0 0
      %4107 = vmatpush1.bf16.msra.mxu0 0
      %4108 = vmatprep.subr.bf16.mxu0 0
      %4109 = vmatpush1.bf16.msra.mxu0 0
      %4110 = vmatprep.subr.bf16.mxu0 0
      %4111 = vmatpush1.bf16.msra.mxu0 0
      %4112 = vmatprep.subr.bf16.mxu0 0
      %4113 = vmatpush1.bf16.msra.mxu0 0
      %4114 = vmatprep.subr.bf16.mxu0 0
      %4115 = vmatpush1.bf16.msra.mxu0 0
      %4116 = vmatprep.subr.bf16.mxu0 0
      %4117 = vmatpush1.bf16.msra.mxu0 0
      %4118 = vmatprep.subr.bf16.mxu0 0
      %4119 = vmatpush1.bf16.msra.mxu0 0
      %4120 = vmatprep.subr.bf16.mxu0 0
      %4121 = vmatpush1.bf16.msra.mxu0 0
      %4122 = vmatprep.subr.bf16.mxu0 0
      %4123 = vmatpush1.bf16.msra.mxu0 0
      %4124 = vmatprep.mubr.bf16.mxu0 0
      %4125 = vmatmul.mubr.bf16.gmra.mrb[0].mxu0 %v4040
      %v4126 = vpop.f32.mrb[0].mxu0
      %v4127 = vadd.f32 0.0, %v4126
      %v4128 = vpop.f32.mrb[0].mxu0
      %v4129 = vpop.f32.mrb[0].mxu0
      %v4130 = vpop.f32.mrb[0].mxu0
      %4131 = vdwg.mxu0
      %v4132 = vadd.f32 %v4022, %v4086
      %v4133 = vadd.f32 %v4023, %v4088
      %v4134 = vadd.f32 %v4024, %v4127
      %s4135 = scalar_lea.vmem %s1, 144
      %v4136 = vld [vmem:[%s4135] sm:$0xf]
      %4137 = vrot.lane.b32.xlu0 %v185, 17
      %v4138 = vpop.permute.xlu0 %4137
      %4139 = vrot.lane.b32.xlu0 %v193, 17
      %v4140 = vpop.permute.xlu0 %4139
      %4141 = vrot.lane.b32.xlu0 %v192, 17
      %v4142 = vpop.permute.xlu0 %4141
      %4143 = vrot.lane.b32.xlu0 %v194, 17
      %v4144 = vpop.permute.xlu0 %4143
      %vm4145 = vcmask 138240
      %v4146 = vsel %vm4145, %v4138, %v4140
      %v4147 = vsel %vm4145, %v4140, %v4142
      %v4148 = vsel %vm4145, %v4142, %v4144
      %v4150 = vsel %vm207, %v4136, 0
      %v4153 = vsel %vm211, %v4146, 0
      %v4156 = vsel %vm211, %v4147, 0
      %v4159 = vsel %vm211, %v4148, 0
      %4161 = vmatprep.subr.bf16.mxu0 %v4156
      %4162 = vmatpush1.bf16.msra.mxu0 %v4153
      %4163 = vmatprep.subr.bf16.mxu0 0
      %4164 = vmatpush1.bf16.msra.mxu0 0
      %4165 = vmatprep.subr.bf16.mxu0 0
      %4166 = vmatpush1.bf16.msra.mxu0 0
      %4167 = vmatprep.subr.bf16.mxu0 0
      %4168 = vmatpush1.bf16.msra.mxu0 0
      %4169 = vmatprep.subr.bf16.mxu0 0
      %4170 = vmatpush1.bf16.msra.mxu0 0
      %4171 = vmatprep.subr.bf16.mxu0 0
      %4172 = vmatpush1.bf16.msra.mxu0 0
      %4173 = vmatprep.subr.bf16.mxu0 0
      %4174 = vmatpush1.bf16.msra.mxu0 0
      %4175 = vmatprep.subr.bf16.mxu0 0
      %4176 = vmatpush1.bf16.msra.mxu0 0
      %4177 = vmatprep.subr.bf16.mxu0 0
      %4178 = vmatpush1.bf16.msra.mxu0 0
      %4179 = vmatprep.subr.bf16.mxu0 0
      %4180 = vmatpush1.bf16.msra.mxu0 0
      %4181 = vmatprep.subr.bf16.mxu0 0
      %4182 = vmatpush1.bf16.msra.mxu0 0
      %4183 = vmatprep.subr.bf16.mxu0 0
      %4184 = vmatpush1.bf16.msra.mxu0 0
      %4185 = vmatprep.subr.bf16.mxu0 0
      %4186 = vmatpush1.bf16.msra.mxu0 0
      %4187 = vmatprep.subr.bf16.mxu0 0
      %4188 = vmatpush1.bf16.msra.mxu0 0
      %4189 = vmatprep.subr.bf16.mxu0 0
      %4190 = vmatpush1.bf16.msra.mxu0 0
      %4191 = vmatprep.subr.bf16.mxu0 0
      %4192 = vmatpush1.bf16.msra.mxu0 0
      %4193 = vmatprep.mubr.bf16.mxu0 0
      %4194 = vmatmul.mubr.bf16.gmra.mrb[0].mxu0 %v4150
      %v4195 = vpop.f32.mrb[0].mxu0
      %v4196 = vadd.f32 0.0, %v4195
      %v4197 = vpop.f32.mrb[0].mxu0
      %v4198 = vadd.f32 0.0, %v4197
      %v4199 = vpop.f32.mrb[0].mxu0
      %v4200 = vpop.f32.mrb[0].mxu0
      %4201 = vdwg.mxu0
      %4202 = vmatprep.subr.bf16.mxu0 0
      %4203 = vmatpush1.bf16.msra.mxu0 %v4159
      %4204 = vmatprep.subr.bf16.mxu0 0
      %4205 = vmatpush1.bf16.msra.mxu0 0
      %4206 = vmatprep.subr.bf16.mxu0 0
      %4207 = vmatpush1.bf16.msra.mxu0 0
      %4208 = vmatprep.subr.bf16.mxu0 0
      %4209 = vmatpush1.bf16.msra.mxu0 0
      %4210 = vmatprep.subr.bf16.mxu0 0
      %4211 = vmatpush1.bf16.msra.mxu0 0
      %4212 = vmatprep.subr.bf16.mxu0 0
      %4213 = vmatpush1.bf16.msra.mxu0 0
      %4214 = vmatprep.subr.bf16.mxu0 0
      %4215 = vmatpush1.bf16.msra.mxu0 0
      %4216 = vmatprep.subr.bf16.mxu0 0
      %4217 = vmatpush1.bf16.msra.mxu0 0
      %4218 = vmatprep.subr.bf16.mxu0 0
      %4219 = vmatpush1.bf16.msra.mxu0 0
      %4220 = vmatprep.subr.bf16.mxu0 0
      %4221 = vmatpush1.bf16.msra.mxu0 0
      %4222 = vmatprep.subr.bf16.mxu0 0
      %4223 = vmatpush1.bf16.msra.mxu0 0
      %4224 = vmatprep.subr.bf16.mxu0 0
      %4225 = vmatpush1.bf16.msra.mxu0 0
      %4226 = vmatprep.subr.bf16.mxu0 0
      %4227 = vmatpush1.bf16.msra.mxu0 0
      %4228 = vmatprep.subr.bf16.mxu0 0
      %4229 = vmatpush1.bf16.msra.mxu0 0
      %4230 = vmatprep.subr.bf16.mxu0 0
      %4231 = vmatpush1.bf16.msra.mxu0 0
      %4232 = vmatprep.subr.bf16.mxu0 0
      %4233 = vmatpush1.bf16.msra.mxu0 0
      %4234 = vmatprep.mubr.bf16.mxu0 0
      %4235 = vmatmul.mubr.bf16.gmra.mrb[0].mxu0 %v4150
      %v4236 = vpop.f32.mrb[0].mxu0
      %v4237 = vadd.f32 0.0, %v4236
      %v4238 = vpop.f32.mrb[0].mxu0
      %v4239 = vpop.f32.mrb[0].mxu0
      %v4240 = vpop.f32.mrb[0].mxu0
      %4241 = vdwg.mxu0
      %v4242 = vadd.f32 %v4132, %v4196
      %v4243 = vadd.f32 %v4133, %v4198
      %v4244 = vadd.f32 %v4134, %v4237
      %s4245 = scalar_lea.vmem %s1, 148
      %v4246 = vld [vmem:[%s4245] sm:$0xf]
      %4247 = vrot.lane.b32.xlu0 %v185, 16
      %v4248 = vpop.permute.xlu0 %4247
      %4249 = vrot.lane.b32.xlu0 %v193, 16
      %v4250 = vpop.permute.xlu0 %4249
      %4251 = vrot.lane.b32.xlu0 %v192, 16
      %v4252 = vpop.permute.xlu0 %4251
      %4253 = vrot.lane.b32.xlu0 %v194, 16
      %v4254 = vpop.permute.xlu0 %4253
      %vm4255 = vcmask 130048
      %v4256 = vsel %vm4255, %v4248, %v4250
      %v4257 = vsel %vm4255, %v4250, %v4252
      %v4258 = vsel %vm4255, %v4252, %v4254
      %v4260 = vsel %vm207, %v4246, 0
      %v4263 = vsel %vm211, %v4256, 0
      %v4266 = vsel %vm211, %v4257, 0
      %v4269 = vsel %vm211, %v4258, 0
      %4271 = vmatprep.subr.bf16.mxu0 %v4266
      %4272 = vmatpush1.bf16.msra.mxu0 %v4263
      %4273 = vmatprep.subr.bf16.mxu0 0
      %4274 = vmatpush1.bf16.msra.mxu0 0
      %4275 = vmatprep.subr.bf16.mxu0 0
      %4276 = vmatpush1.bf16.msra.mxu0 0
      %4277 = vmatprep.subr.bf16.mxu0 0
      %4278 = vmatpush1.bf16.msra.mxu0 0
      %4279 = vmatprep.subr.bf16.mxu0 0
      %4280 = vmatpush1.bf16.msra.mxu0 0
      %4281 = vmatprep.subr.bf16.mxu0 0
      %4282 = vmatpush1.bf16.msra.mxu0 0
      %4283 = vmatprep.subr.bf16.mxu0 0
      %4284 = vmatpush1.bf16.msra.mxu0 0
      %4285 = vmatprep.subr.bf16.mxu0 0
      %4286 = vmatpush1.bf16.msra.mxu0 0
      %4287 = vmatprep.subr.bf16.mxu0 0
      %4288 = vmatpush1.bf16.msra.mxu0 0
      %4289 = vmatprep.subr.bf16.mxu0 0
      %4290 = vmatpush1.bf16.msra.mxu0 0
      %4291 = vmatprep.subr.bf16.mxu0 0
      %4292 = vmatpush1.bf16.msra.mxu0 0
      %4293 = vmatprep.subr.bf16.mxu0 0
      %4294 = vmatpush1.bf16.msra.mxu0 0
      %4295 = vmatprep.subr.bf16.mxu0 0
      %4296 = vmatpush1.bf16.msra.mxu0 0
      %4297 = vmatprep.subr.bf16.mxu0 0
      %4298 = vmatpush1.bf16.msra.mxu0 0
      %4299 = vmatprep.subr.bf16.mxu0 0
      %4300 = vmatpush1.bf16.msra.mxu0 0
      %4301 = vmatprep.subr.bf16.mxu0 0
      %4302 = vmatpush1.bf16.msra.mxu0 0
      %4303 = vmatprep.mubr.bf16.mxu0 0
      %4304 = vmatmul.mubr.bf16.gmra.mrb[0].mxu0 %v4260
      %v4305 = vpop.f32.mrb[0].mxu0
      %v4306 = vadd.f32 0.0, %v4305
      %v4307 = vpop.f32.mrb[0].mxu0
      %v4308 = vadd.f32 0.0, %v4307
      %v4309 = vpop.f32.mrb[0].mxu0
      %v4310 = vpop.f32.mrb[0].mxu0
      %4311 = vdwg.mxu0
      %4312 = vmatprep.subr.bf16.mxu0 0
      %4313 = vmatpush1.bf16.msra.mxu0 %v4269
      %4314 = vmatprep.subr.bf16.mxu0 0
      %4315 = vmatpush1.bf16.msra.mxu0 0
      %4316 = vmatprep.subr.bf16.mxu0 0
      %4317 = vmatpush1.bf16.msra.mxu0 0
      %4318 = vmatprep.subr.bf16.mxu0 0
      %4319 = vmatpush1.bf16.msra.mxu0 0
      %4320 = vmatprep.subr.bf16.mxu0 0
      %4321 = vmatpush1.bf16.msra.mxu0 0
      %4322 = vmatprep.subr.bf16.mxu0 0
      %4323 = vmatpush1.bf16.msra.mxu0 0
      %4324 = vmatprep.subr.bf16.mxu0 0
      %4325 = vmatpush1.bf16.msra.mxu0 0
      %4326 = vmatprep.subr.bf16.mxu0 0
      %4327 = vmatpush1.bf16.msra.mxu0 0
      %4328 = vmatprep.subr.bf16.mxu0 0
      %4329 = vmatpush1.bf16.msra.mxu0 0
      %4330 = vmatprep.subr.bf16.mxu0 0
      %4331 = vmatpush1.bf16.msra.mxu0 0
      %4332 = vmatprep.subr.bf16.mxu0 0
      %4333 = vmatpush1.bf16.msra.mxu0 0
      %4334 = vmatprep.subr.bf16.mxu0 0
      %4335 = vmatpush1.bf16.msra.mxu0 0
      %4336 = vmatprep.subr.bf16.mxu0 0
      %4337 = vmatpush1.bf16.msra.mxu0 0
      %4338 = vmatprep.subr.bf16.mxu0 0
      %4339 = vmatpush1.bf16.msra.mxu0 0
      %4340 = vmatprep.subr.bf16.mxu0 0
      %4341 = vmatpush1.bf16.msra.mxu0 0
      %4342 = vmatprep.subr.bf16.mxu0 0
      %4343 = vmatpush1.bf16.msra.mxu0 0
      %4344 = vmatprep.mubr.bf16.mxu0 0
      %4345 = vmatmul.mubr.bf16.gmra.mrb[0].mxu0 %v4260
      %v4346 = vpop.f32.mrb[0].mxu0
      %v4347 = vadd.f32 0.0, %v4346
      %v4348 = vpop.f32.mrb[0].mxu0
      %v4349 = vpop.f32.mrb[0].mxu0
      %v4350 = vpop.f32.mrb[0].mxu0
      %4351 = vdwg.mxu0
      %v4352 = vadd.f32 %v4242, %v4306
      %v4353 = vadd.f32 %v4243, %v4308
      %v4354 = vadd.f32 %v4244, %v4347
      %s4355 = scalar_lea.vmem %s1, 152
      %v4356 = vld [vmem:[%s4355] sm:$0xf]
      %4357 = vrot.lane.b32.xlu0 %v185, 15
      %v4358 = vpop.permute.xlu0 %4357
      %4359 = vrot.lane.b32.xlu0 %v193, 15
      %v4360 = vpop.permute.xlu0 %4359
      %4361 = vrot.lane.b32.xlu0 %v192, 15
      %v4362 = vpop.permute.xlu0 %4361
      %4363 = vrot.lane.b32.xlu0 %v194, 15
      %v4364 = vpop.permute.xlu0 %4363
      %vm4365 = vcmask 121856
      %v4366 = vsel %vm4365, %v4358, %v4360
      %v4367 = vsel %vm4365, %v4360, %v4362
      %v4368 = vsel %vm4365, %v4362, %v4364
      %v4370 = vsel %vm207, %v4356, 0
      %v4373 = vsel %vm211, %v4366, 0
      %v4376 = vsel %vm211, %v4367, 0
      %v4379 = vsel %vm211, %v4368, 0
      %4381 = vmatprep.subr.bf16.mxu0 %v4376
      %4382 = vmatpush1.bf16.msra.mxu0 %v4373
      %4383 = vmatprep.subr.bf16.mxu0 0
      %4384 = vmatpush1.bf16.msra.mxu0 0
      %4385 = vmatprep.subr.bf16.mxu0 0
      %4386 = vmatpush1.bf16.msra.mxu0 0
      %4387 = vmatprep.subr.bf16.mxu0 0
      %4388 = vmatpush1.bf16.msra.mxu0 0
      %4389 = vmatprep.subr.bf16.mxu0 0
      %4390 = vmatpush1.bf16.msra.mxu0 0
      %4391 = vmatprep.subr.bf16.mxu0 0
      %4392 = vmatpush1.bf16.msra.mxu0 0
      %4393 = vmatprep.subr.bf16.mxu0 0
      %4394 = vmatpush1.bf16.msra.mxu0 0
      %4395 = vmatprep.subr.bf16.mxu0 0
      %4396 = vmatpush1.bf16.msra.mxu0 0
      %4397 = vmatprep.subr.bf16.mxu0 0
      %4398 = vmatpush1.bf16.msra.mxu0 0
      %4399 = vmatprep.subr.bf16.mxu0 0
      %4400 = vmatpush1.bf16.msra.mxu0 0
      %4401 = vmatprep.subr.bf16.mxu0 0
      %4402 = vmatpush1.bf16.msra.mxu0 0
      %4403 = vmatprep.subr.bf16.mxu0 0
      %4404 = vmatpush1.bf16.msra.mxu0 0
      %4405 = vmatprep.subr.bf16.mxu0 0
      %4406 = vmatpush1.bf16.msra.mxu0 0
      %4407 = vmatprep.subr.bf16.mxu0 0
      %4408 = vmatpush1.bf16.msra.mxu0 0
      %4409 = vmatprep.subr.bf16.mxu0 0
      %4410 = vmatpush1.bf16.msra.mxu0 0
      %4411 = vmatprep.subr.bf16.mxu0 0
      %4412 = vmatpush1.bf16.msra.mxu0 0
      %4413 = vmatprep.mubr.bf16.mxu0 0
      %4414 = vmatmul.mubr.bf16.gmra.mrb[0].mxu0 %v4370
      %v4415 = vpop.f32.mrb[0].mxu0
      %v4416 = vadd.f32 0.0, %v4415
      %v4417 = vpop.f32.mrb[0].mxu0
      %v4418 = vadd.f32 0.0, %v4417
      %v4419 = vpop.f32.mrb[0].mxu0
      %v4420 = vpop.f32.mrb[0].mxu0
      %4421 = vdwg.mxu0
      %4422 = vmatprep.subr.bf16.mxu0 0
      %4423 = vmatpush1.bf16.msra.mxu0 %v4379
      %4424 = vmatprep.subr.bf16.mxu0 0
      %4425 = vmatpush1.bf16.msra.mxu0 0
      %4426 = vmatprep.subr.bf16.mxu0 0
      %4427 = vmatpush1.bf16.msra.mxu0 0
      %4428 = vmatprep.subr.bf16.mxu0 0
      %4429 = vmatpush1.bf16.msra.mxu0 0
      %4430 = vmatprep.subr.bf16.mxu0 0
      %4431 = vmatpush1.bf16.msra.mxu0 0
      %4432 = vmatprep.subr.bf16.mxu0 0
      %4433 = vmatpush1.bf16.msra.mxu0 0
      %4434 = vmatprep.subr.bf16.mxu0 0
      %4435 = vmatpush1.bf16.msra.mxu0 0
      %4436 = vmatprep.subr.bf16.mxu0 0
      %4437 = vmatpush1.bf16.msra.mxu0 0
      %4438 = vmatprep.subr.bf16.mxu0 0
      %4439 = vmatpush1.bf16.msra.mxu0 0
      %4440 = vmatprep.subr.bf16.mxu0 0
      %4441 = vmatpush1.bf16.msra.mxu0 0
      %4442 = vmatprep.subr.bf16.mxu0 0
      %4443 = vmatpush1.bf16.msra.mxu0 0
      %4444 = vmatprep.subr.bf16.mxu0 0
      %4445 = vmatpush1.bf16.msra.mxu0 0
      %4446 = vmatprep.subr.bf16.mxu0 0
      %4447 = vmatpush1.bf16.msra.mxu0 0
      %4448 = vmatprep.subr.bf16.mxu0 0
      %4449 = vmatpush1.bf16.msra.mxu0 0
      %4450 = vmatprep.subr.bf16.mxu0 0
      %4451 = vmatpush1.bf16.msra.mxu0 0
      %4452 = vmatprep.subr.bf16.mxu0 0
      %4453 = vmatpush1.bf16.msra.mxu0 0
      %4454 = vmatprep.mubr.bf16.mxu0 0
      %4455 = vmatmul.mubr.bf16.gmra.mrb[0].mxu0 %v4370
      %v4456 = vpop.f32.mrb[0].mxu0
      %v4457 = vadd.f32 0.0, %v4456
      %v4458 = vpop.f32.mrb[0].mxu0
      %v4459 = vpop.f32.mrb[0].mxu0
      %v4460 = vpop.f32.mrb[0].mxu0
      %4461 = vdwg.mxu0
      %v4462 = vadd.f32 %v4352, %v4416
      %v4463 = vadd.f32 %v4353, %v4418
      %v4464 = vadd.f32 %v4354, %v4457
      %s4465 = scalar_lea.vmem %s1, 156
      %v4466 = vld [vmem:[%s4465] sm:$0xf]
      %4467 = vrot.lane.b32.xlu0 %v185, 14
      %v4468 = vpop.permute.xlu0 %4467
      %4469 = vrot.lane.b32.xlu0 %v193, 14
      %v4470 = vpop.permute.xlu0 %4469
      %4471 = vrot.lane.b32.xlu0 %v192, 14
      %v4472 = vpop.permute.xlu0 %4471
      %4473 = vrot.lane.b32.xlu0 %v194, 14
      %v4474 = vpop.permute.xlu0 %4473
      %vm4475 = vcmask 113664
      %v4476 = vsel %vm4475, %v4468, %v4470
      %v4477 = vsel %vm4475, %v4470, %v4472
      %v4478 = vsel %vm4475, %v4472, %v4474
      %v4480 = vsel %vm207, %v4466, 0
      %v4483 = vsel %vm211, %v4476, 0
      %v4486 = vsel %vm211, %v4477, 0
      %v4489 = vsel %vm211, %v4478, 0
      %4491 = vmatprep.subr.bf16.mxu0 %v4486
      %4492 = vmatpush1.bf16.msra.mxu0 %v4483
      %4493 = vmatprep.subr.bf16.mxu0 0
      %4494 = vmatpush1.bf16.msra.mxu0 0
      %4495 = vmatprep.subr.bf16.mxu0 0
      %4496 = vmatpush1.bf16.msra.mxu0 0
      %4497 = vmatprep.subr.bf16.mxu0 0
      %4498 = vmatpush1.bf16.msra.mxu0 0
      %4499 = vmatprep.subr.bf16.mxu0 0
      %4500 = vmatpush1.bf16.msra.mxu0 0
      %4501 = vmatprep.subr.bf16.mxu0 0
      %4502 = vmatpush1.bf16.msra.mxu0 0
      %4503 = vmatprep.subr.bf16.mxu0 0
      %4504 = vmatpush1.bf16.msra.mxu0 0
      %4505 = vmatprep.subr.bf16.mxu0 0
      %4506 = vmatpush1.bf16.msra.mxu0 0
      %4507 = vmatprep.subr.bf16.mxu0 0
      %4508 = vmatpush1.bf16.msra.mxu0 0
      %4509 = vmatprep.subr.bf16.mxu0 0
      %4510 = vmatpush1.bf16.msra.mxu0 0
      %4511 = vmatprep.subr.bf16.mxu0 0
      %4512 = vmatpush1.bf16.msra.mxu0 0
      %4513 = vmatprep.subr.bf16.mxu0 0
      %4514 = vmatpush1.bf16.msra.mxu0 0
      %4515 = vmatprep.subr.bf16.mxu0 0
      %4516 = vmatpush1.bf16.msra.mxu0 0
      %4517 = vmatprep.subr.bf16.mxu0 0
      %4518 = vmatpush1.bf16.msra.mxu0 0
      %4519 = vmatprep.subr.bf16.mxu0 0
      %4520 = vmatpush1.bf16.msra.mxu0 0
      %4521 = vmatprep.subr.bf16.mxu0 0
      %4522 = vmatpush1.bf16.msra.mxu0 0
      %4523 = vmatprep.mubr.bf16.mxu0 0
      %4524 = vmatmul.mubr.bf16.gmra.mrb[0].mxu0 %v4480
      %v4525 = vpop.f32.mrb[0].mxu0
      %v4526 = vadd.f32 0.0, %v4525
      %v4527 = vpop.f32.mrb[0].mxu0
      %v4528 = vadd.f32 0.0, %v4527
      %v4529 = vpop.f32.mrb[0].mxu0
      %v4530 = vpop.f32.mrb[0].mxu0
      %4531 = vdwg.mxu0
      %4532 = vmatprep.subr.bf16.mxu0 0
      %4533 = vmatpush1.bf16.msra.mxu0 %v4489
      %4534 = vmatprep.subr.bf16.mxu0 0
      %4535 = vmatpush1.bf16.msra.mxu0 0
      %4536 = vmatprep.subr.bf16.mxu0 0
      %4537 = vmatpush1.bf16.msra.mxu0 0
      %4538 = vmatprep.subr.bf16.mxu0 0
      %4539 = vmatpush1.bf16.msra.mxu0 0
      %4540 = vmatprep.subr.bf16.mxu0 0
      %4541 = vmatpush1.bf16.msra.mxu0 0
      %4542 = vmatprep.subr.bf16.mxu0 0
      %4543 = vmatpush1.bf16.msra.mxu0 0
      %4544 = vmatprep.subr.bf16.mxu0 0
      %4545 = vmatpush1.bf16.msra.mxu0 0
      %4546 = vmatprep.subr.bf16.mxu0 0
      %4547 = vmatpush1.bf16.msra.mxu0 0
      %4548 = vmatprep.subr.bf16.mxu0 0
      %4549 = vmatpush1.bf16.msra.mxu0 0
      %4550 = vmatprep.subr.bf16.mxu0 0
      %4551 = vmatpush1.bf16.msra.mxu0 0
      %4552 = vmatprep.subr.bf16.mxu0 0
      %4553 = vmatpush1.bf16.msra.mxu0 0
      %4554 = vmatprep.subr.bf16.mxu0 0
      %4555 = vmatpush1.bf16.msra.mxu0 0
      %4556 = vmatprep.subr.bf16.mxu0 0
      %4557 = vmatpush1.bf16.msra.mxu0 0
      %4558 = vmatprep.subr.bf16.mxu0 0
      %4559 = vmatpush1.bf16.msra.mxu0 0
      %4560 = vmatprep.subr.bf16.mxu0 0
      %4561 = vmatpush1.bf16.msra.mxu0 0
      %4562 = vmatprep.subr.bf16.mxu0 0
      %4563 = vmatpush1.bf16.msra.mxu0 0
      %4564 = vmatprep.mubr.bf16.mxu0 0
      %4565 = vmatmul.mubr.bf16.gmra.mrb[0].mxu0 %v4480
      %v4566 = vpop.f32.mrb[0].mxu0
      %v4567 = vadd.f32 0.0, %v4566
      %v4568 = vpop.f32.mrb[0].mxu0
      %v4569 = vpop.f32.mrb[0].mxu0
      %v4570 = vpop.f32.mrb[0].mxu0
      %4571 = vdwg.mxu0
      %v4572 = vadd.f32 %v4462, %v4526
      %v4573 = vadd.f32 %v4463, %v4528
      %v4574 = vadd.f32 %v4464, %v4567
      %s4575 = scalar_lea.vmem %s1, 160
      %v4576 = vld [vmem:[%s4575] sm:$0xf]
      %4577 = vrot.lane.b32.xlu0 %v185, 13
      %v4578 = vpop.permute.xlu0 %4577
      %4579 = vrot.lane.b32.xlu0 %v193, 13
      %v4580 = vpop.permute.xlu0 %4579
      %4581 = vrot.lane.b32.xlu0 %v192, 13
      %v4582 = vpop.permute.xlu0 %4581
      %4583 = vrot.lane.b32.xlu0 %v194, 13
      %v4584 = vpop.permute.xlu0 %4583
      %vm4585 = vcmask 105472
      %v4586 = vsel %vm4585, %v4578, %v4580
      %v4587 = vsel %vm4585, %v4580, %v4582
      %v4588 = vsel %vm4585, %v4582, %v4584
      %v4590 = vsel %vm207, %v4576, 0
      %v4593 = vsel %vm211, %v4586, 0
      %v4596 = vsel %vm211, %v4587, 0
      %v4599 = vsel %vm211, %v4588, 0
      %4601 = vmatprep.subr.bf16.mxu0 %v4596
      %4602 = vmatpush1.bf16.msra.mxu0 %v4593
      %4603 = vmatprep.subr.bf16.mxu0 0
      %4604 = vmatpush1.bf16.msra.mxu0 0
      %4605 = vmatprep.subr.bf16.mxu0 0
      %4606 = vmatpush1.bf16.msra.mxu0 0
      %4607 = vmatprep.subr.bf16.mxu0 0
      %4608 = vmatpush1.bf16.msra.mxu0 0
      %4609 = vmatprep.subr.bf16.mxu0 0
      %4610 = vmatpush1.bf16.msra.mxu0 0
      %4611 = vmatprep.subr.bf16.mxu0 0
      %4612 = vmatpush1.bf16.msra.mxu0 0
      %4613 = vmatprep.subr.bf16.mxu0 0
      %4614 = vmatpush1.bf16.msra.mxu0 0
      %4615 = vmatprep.subr.bf16.mxu0 0
      %4616 = vmatpush1.bf16.msra.mxu0 0
      %4617 = vmatprep.subr.bf16.mxu0 0
      %4618 = vmatpush1.bf16.msra.mxu0 0
      %4619 = vmatprep.subr.bf16.mxu0 0
      %4620 = vmatpush1.bf16.msra.mxu0 0
      %4621 = vmatprep.subr.bf16.mxu0 0
      %4622 = vmatpush1.bf16.msra.mxu0 0
      %4623 = vmatprep.subr.bf16.mxu0 0
      %4624 = vmatpush1.bf16.msra.mxu0 0
      %4625 = vmatprep.subr.bf16.mxu0 0
      %4626 = vmatpush1.bf16.msra.mxu0 0
      %4627 = vmatprep.subr.bf16.mxu0 0
      %4628 = vmatpush1.bf16.msra.mxu0 0
      %4629 = vmatprep.subr.bf16.mxu0 0
      %4630 = vmatpush1.bf16.msra.mxu0 0
      %4631 = vmatprep.subr.bf16.mxu0 0
      %4632 = vmatpush1.bf16.msra.mxu0 0
      %4633 = vmatprep.mubr.bf16.mxu0 0
      %4634 = vmatmul.mubr.bf16.gmra.mrb[0].mxu0 %v4590
      %v4635 = vpop.f32.mrb[0].mxu0
      %v4636 = vadd.f32 0.0, %v4635
      %v4637 = vpop.f32.mrb[0].mxu0
      %v4638 = vadd.f32 0.0, %v4637
      %v4639 = vpop.f32.mrb[0].mxu0
      %v4640 = vpop.f32.mrb[0].mxu0
      %4641 = vdwg.mxu0
      %4642 = vmatprep.subr.bf16.mxu0 0
      %4643 = vmatpush1.bf16.msra.mxu0 %v4599
      %4644 = vmatprep.subr.bf16.mxu0 0
      %4645 = vmatpush1.bf16.msra.mxu0 0
      %4646 = vmatprep.subr.bf16.mxu0 0
      %4647 = vmatpush1.bf16.msra.mxu0 0
      %4648 = vmatprep.subr.bf16.mxu0 0
      %4649 = vmatpush1.bf16.msra.mxu0 0
      %4650 = vmatprep.subr.bf16.mxu0 0
      %4651 = vmatpush1.bf16.msra.mxu0 0
      %4652 = vmatprep.subr.bf16.mxu0 0
      %4653 = vmatpush1.bf16.msra.mxu0 0
      %4654 = vmatprep.subr.bf16.mxu0 0
      %4655 = vmatpush1.bf16.msra.mxu0 0
      %4656 = vmatprep.subr.bf16.mxu0 0
      %4657 = vmatpush1.bf16.msra.mxu0 0
      %4658 = vmatprep.subr.bf16.mxu0 0
      %4659 = vmatpush1.bf16.msra.mxu0 0
      %4660 = vmatprep.subr.bf16.mxu0 0
      %4661 = vmatpush1.bf16.msra.mxu0 0
      %4662 = vmatprep.subr.bf16.mxu0 0
      %4663 = vmatpush1.bf16.msra.mxu0 0
      %4664 = vmatprep.subr.bf16.mxu0 0
      %4665 = vmatpush1.bf16.msra.mxu0 0
      %4666 = vmatprep.subr.bf16.mxu0 0
      %4667 = vmatpush1.bf16.msra.mxu0 0
      %4668 = vmatprep.subr.bf16.mxu0 0
      %4669 = vmatpush1.bf16.msra.mxu0 0
      %4670 = vmatprep.subr.bf16.mxu0 0
      %4671 = vmatpush1.bf16.msra.mxu0 0
      %4672 = vmatprep.subr.bf16.mxu0 0
      %4673 = vmatpush1.bf16.msra.mxu0 0
      %4674 = vmatprep.mubr.bf16.mxu0 0
      %4675 = vmatmul.mubr.bf16.gmra.mrb[0].mxu0 %v4590
      %v4676 = vpop.f32.mrb[0].mxu0
      %v4677 = vadd.f32 0.0, %v4676
      %v4678 = vpop.f32.mrb[0].mxu0
      %v4679 = vpop.f32.mrb[0].mxu0
      %v4680 = vpop.f32.mrb[0].mxu0
      %4681 = vdwg.mxu0
      %v4682 = vadd.f32 %v4572, %v4636
      %v4683 = vadd.f32 %v4573, %v4638
      %v4684 = vadd.f32 %v4574, %v4677
      %s4685 = scalar_lea.vmem %s1, 164
      %v4686 = vld [vmem:[%s4685] sm:$0xf]
      %4687 = vrot.lane.b32.xlu0 %v185, 12
      %v4688 = vpop.permute.xlu0 %4687
      %4689 = vrot.lane.b32.xlu0 %v193, 12
      %v4690 = vpop.permute.xlu0 %4689
      %4691 = vrot.lane.b32.xlu0 %v192, 12
      %v4692 = vpop.permute.xlu0 %4691
      %4693 = vrot.lane.b32.xlu0 %v194, 12
      %v4694 = vpop.permute.xlu0 %4693
      %vm4695 = vcmask 97280
      %v4696 = vsel %vm4695, %v4688, %v4690
      %v4697 = vsel %vm4695, %v4690, %v4692
      %v4698 = vsel %vm4695, %v4692, %v4694
      %v4700 = vsel %vm207, %v4686, 0
      %v4703 = vsel %vm211, %v4696, 0
      %v4706 = vsel %vm211, %v4697, 0
      %v4709 = vsel %vm211, %v4698, 0
      %4711 = vmatprep.subr.bf16.mxu0 %v4706
      %4712 = vmatpush1.bf16.msra.mxu0 %v4703
      %4713 = vmatprep.subr.bf16.mxu0 0
      %4714 = vmatpush1.bf16.msra.mxu0 0
      %4715 = vmatprep.subr.bf16.mxu0 0
      %4716 = vmatpush1.bf16.msra.mxu0 0
      %4717 = vmatprep.subr.bf16.mxu0 0
      %4718 = vmatpush1.bf16.msra.mxu0 0
      %4719 = vmatprep.subr.bf16.mxu0 0
      %4720 = vmatpush1.bf16.msra.mxu0 0
      %4721 = vmatprep.subr.bf16.mxu0 0
      %4722 = vmatpush1.bf16.msra.mxu0 0
      %4723 = vmatprep.subr.bf16.mxu0 0
      %4724 = vmatpush1.bf16.msra.mxu0 0
      %4725 = vmatprep.subr.bf16.mxu0 0
      %4726 = vmatpush1.bf16.msra.mxu0 0
      %4727 = vmatprep.subr.bf16.mxu0 0
      %4728 = vmatpush1.bf16.msra.mxu0 0
      %4729 = vmatprep.subr.bf16.mxu0 0
      %4730 = vmatpush1.bf16.msra.mxu0 0
      %4731 = vmatprep.subr.bf16.mxu0 0
      %4732 = vmatpush1.bf16.msra.mxu0 0
      %4733 = vmatprep.subr.bf16.mxu0 0
      %4734 = vmatpush1.bf16.msra.mxu0 0
      %4735 = vmatprep.subr.bf16.mxu0 0
      %4736 = vmatpush1.bf16.msra.mxu0 0
      %4737 = vmatprep.subr.bf16.mxu0 0
      %4738 = vmatpush1.bf16.msra.mxu0 0
      %4739 = vmatprep.subr.bf16.mxu0 0
      %4740 = vmatpush1.bf16.msra.mxu0 0
      %4741 = vmatprep.subr.bf16.mxu0 0
      %4742 = vmatpush1.bf16.msra.mxu0 0
      %4743 = vmatprep.mubr.bf16.mxu0 0
      %4744 = vmatmul.mubr.bf16.gmra.mrb[0].mxu0 %v4700
      %v4745 = vpop.f32.mrb[0].mxu0
      %v4746 = vadd.f32 0.0, %v4745
      %v4747 = vpop.f32.mrb[0].mxu0
      %v4748 = vadd.f32 0.0, %v4747
      %v4749 = vpop.f32.mrb[0].mxu0
      %v4750 = vpop.f32.mrb[0].mxu0
      %4751 = vdwg.mxu0
      %4752 = vmatprep.subr.bf16.mxu0 0
      %4753 = vmatpush1.bf16.msra.mxu0 %v4709
      %4754 = vmatprep.subr.bf16.mxu0 0
      %4755 = vmatpush1.bf16.msra.mxu0 0
      %4756 = vmatprep.subr.bf16.mxu0 0
      %4757 = vmatpush1.bf16.msra.mxu0 0
      %4758 = vmatprep.subr.bf16.mxu0 0
      %4759 = vmatpush1.bf16.msra.mxu0 0
      %4760 = vmatprep.subr.bf16.mxu0 0
      %4761 = vmatpush1.bf16.msra.mxu0 0
      %4762 = vmatprep.subr.bf16.mxu0 0
      %4763 = vmatpush1.bf16.msra.mxu0 0
      %4764 = vmatprep.subr.bf16.mxu0 0
      %4765 = vmatpush1.bf16.msra.mxu0 0
      %4766 = vmatprep.subr.bf16.mxu0 0
      %4767 = vmatpush1.bf16.msra.mxu0 0
      %4768 = vmatprep.subr.bf16.mxu0 0
      %4769 = vmatpush1.bf16.msra.mxu0 0
      %4770 = vmatprep.subr.bf16.mxu0 0
      %4771 = vmatpush1.bf16.msra.mxu0 0
      %4772 = vmatprep.subr.bf16.mxu0 0
      %4773 = vmatpush1.bf16.msra.mxu0 0
      %4774 = vmatprep.subr.bf16.mxu0 0
      %4775 = vmatpush1.bf16.msra.mxu0 0
      %4776 = vmatprep.subr.bf16.mxu0 0
      %4777 = vmatpush1.bf16.msra.mxu0 0
      %4778 = vmatprep.subr.bf16.mxu0 0
      %4779 = vmatpush1.bf16.msra.mxu0 0
      %4780 = vmatprep.subr.bf16.mxu0 0
      %4781 = vmatpush1.bf16.msra.mxu0 0
      %4782 = vmatprep.subr.bf16.mxu0 0
      %4783 = vmatpush1.bf16.msra.mxu0 0
      %4784 = vmatprep.mubr.bf16.mxu0 0
      %4785 = vmatmul.mubr.bf16.gmra.mrb[0].mxu0 %v4700
      %v4786 = vpop.f32.mrb[0].mxu0
      %v4787 = vadd.f32 0.0, %v4786
      %v4788 = vpop.f32.mrb[0].mxu0
      %v4789 = vpop.f32.mrb[0].mxu0
      %v4790 = vpop.f32.mrb[0].mxu0
      %4791 = vdwg.mxu0
      %v4792 = vadd.f32 %v4682, %v4746
      %v4793 = vadd.f32 %v4683, %v4748
      %v4794 = vadd.f32 %v4684, %v4787
      %s4795 = scalar_lea.vmem %s1, 168
      %v4796 = vld [vmem:[%s4795] sm:$0xf]
      %v4799 = vunpack.c.l.s4 1983009808
      %v4800 = vunpack.c.0.s8 %v4799
      %v4801 = vlaneseq
      %v4802 = vshrl.u32 %v4801, 7
      %v4803 = vsub.s32 %v4800, %v4802
      %v4804 = vrot.slane %v173, %v4803
      %4805 = vrot.lane.b32.xlu0 %v4804, 124
      %v4806 = vpop.permute.xlu0 %4805
      %v4807 = vsel %vm625, %v624, %v4806
      %v4809 = vsel %vm207, %v4796, 0
      %v4812 = vsel %vm211, %v4807, 0
      %4814 = vmatprep.subr.bf16.mxu0 %v639
      %4815 = vmatpush1.bf16.msra.mxu0 %v636
      %4816 = vmatprep.subr.bf16.mxu0 0
      %4817 = vmatpush1.bf16.msra.mxu0 0
      %4818 = vmatprep.subr.bf16.mxu0 0
      %4819 = vmatpush1.bf16.msra.mxu0 0
      %4820 = vmatprep.subr.bf16.mxu0 0
      %4821 = vmatpush1.bf16.msra.mxu0 0
      %4822 = vmatprep.subr.bf16.mxu0 0
      %4823 = vmatpush1.bf16.msra.mxu0 0
      %4824 = vmatprep.subr.bf16.mxu0 0
      %4825 = vmatpush1.bf16.msra.mxu0 0
      %4826 = vmatprep.subr.bf16.mxu0 0
      %4827 = vmatpush1.bf16.msra.mxu0 0
      %4828 = vmatprep.subr.bf16.mxu0 0
      %4829 = vmatpush1.bf16.msra.mxu0 0
      %4830 = vmatprep.subr.bf16.mxu0 0
      %4831 = vmatpush1.bf16.msra.mxu0 0
      %4832 = vmatprep.subr.bf16.mxu0 0
      %4833 = vmatpush1.bf16.msra.mxu0 0
      %4834 = vmatprep.subr.bf16.mxu0 0
      %4835 = vmatpush1.bf16.msra.mxu0 0
      %4836 = vmatprep.subr.bf16.mxu0 0
      %4837 = vmatpush1.bf16.msra.mxu0 0
      %4838 = vmatprep.subr.bf16.mxu0 0
      %4839 = vmatpush1.bf16.msra.mxu0 0
      %4840 = vmatprep.subr.bf16.mxu0 0
      %4841 = vmatpush1.bf16.msra.mxu0 0
      %4842 = vmatprep.subr.bf16.mxu0 0
      %4843 = vmatpush1.bf16.msra.mxu0 0
      %4844 = vmatprep.subr.bf16.mxu0 0
      %4845 = vmatpush1.bf16.msra.mxu0 0
      %4846 = vmatprep.mubr.bf16.mxu0 0
      %4847 = vmatmul.mubr.bf16.gmra.mrb[0].mxu0 %v4809
      %v4848 = vpop.f32.mrb[0].mxu0
      %v4849 = vadd.f32 0.0, %v4848
      %v4850 = vpop.f32.mrb[0].mxu0
      %v4851 = vadd.f32 0.0, %v4850
      %v4852 = vpop.f32.mrb[0].mxu0
      %v4853 = vpop.f32.mrb[0].mxu0
      %4854 = vdwg.mxu0
      %4855 = vmatprep.subr.bf16.mxu0 0
      %4856 = vmatpush1.bf16.msra.mxu0 %v4812
      %4857 = vmatprep.subr.bf16.mxu0 0
      %4858 = vmatpush1.bf16.msra.mxu0 0
      %4859 = vmatprep.subr.bf16.mxu0 0
      %4860 = vmatpush1.bf16.msra.mxu0 0
      %4861 = vmatprep.subr.bf16.mxu0 0
      %4862 = vmatpush1.bf16.msra.mxu0 0
      %4863 = vmatprep.subr.bf16.mxu0 0
      %4864 = vmatpush1.bf16.msra.mxu0 0
      %4865 = vmatprep.subr.bf16.mxu0 0
      %4866 = vmatpush1.bf16.msra.mxu0 0
      %4867 = vmatprep.subr.bf16.mxu0 0
      %4868 = vmatpush1.bf16.msra.mxu0 0
      %4869 = vmatprep.subr.bf16.mxu0 0
      %4870 = vmatpush1.bf16.msra.mxu0 0
      %4871 = vmatprep.subr.bf16.mxu0 0
      %4872 = vmatpush1.bf16.msra.mxu0 0
      %4873 = vmatprep.subr.bf16.mxu0 0
      %4874 = vmatpush1.bf16.msra.mxu0 0
      %4875 = vmatprep.subr.bf16.mxu0 0
      %4876 = vmatpush1.bf16.msra.mxu0 0
      %4877 = vmatprep.subr.bf16.mxu0 0
      %4878 = vmatpush1.bf16.msra.mxu0 0
      %4879 = vmatprep.subr.bf16.mxu0 0
      %4880 = vmatpush1.bf16.msra.mxu0 0
      %4881 = vmatprep.subr.bf16.mxu0 0
      %4882 = vmatpush1.bf16.msra.mxu0 0
      %4883 = vmatprep.subr.bf16.mxu0 0
      %4884 = vmatpush1.bf16.msra.mxu0 0
      %4885 = vmatprep.subr.bf16.mxu0 0
      %4886 = vmatpush1.bf16.msra.mxu0 0
      %4887 = vmatprep.mubr.bf16.mxu0 0
      %4888 = vmatmul.mubr.bf16.gmra.mrb[0].mxu0 %v4809
      %v4889 = vpop.f32.mrb[0].mxu0
      %v4890 = vadd.f32 0.0, %v4889
      %v4891 = vpop.f32.mrb[0].mxu0
      %v4892 = vpop.f32.mrb[0].mxu0
      %v4893 = vpop.f32.mrb[0].mxu0
      %4894 = vdwg.mxu0
      %v4895 = vadd.f32 %v4792, %v4849
      %v4896 = vadd.f32 %v4793, %v4851
      %v4897 = vadd.f32 %v4794, %v4890
      %s4898 = scalar_lea.vmem %s1, 172
      %v4899 = vld [vmem:[%s4898] sm:$0xf]
      %4900 = vrot.lane.b32.xlu0 %v4804, 123
      %v4901 = vpop.permute.xlu0 %4900
      %v4902 = vsel %vm735, %v734, %v4901
      %v4904 = vsel %vm207, %v4899, 0
      %v4907 = vsel %vm211, %v4902, 0
      %4909 = vmatprep.subr.bf16.mxu0 %v749
      %4910 = vmatpush1.bf16.msra.mxu0 %v746
      %4911 = vmatprep.subr.bf16.mxu0 0
      %4912 = vmatpush1.bf16.msra.mxu0 0
      %4913 = vmatprep.subr.bf16.mxu0 0
      %4914 = vmatpush1.bf16.msra.mxu0 0
      %4915 = vmatprep.subr.bf16.mxu0 0
      %4916 = vmatpush1.bf16.msra.mxu0 0
      %4917 = vmatprep.subr.bf16.mxu0 0
      %4918 = vmatpush1.bf16.msra.mxu0 0
      %4919 = vmatprep.subr.bf16.mxu0 0
      %4920 = vmatpush1.bf16.msra.mxu0 0
      %4921 = vmatprep.subr.bf16.mxu0 0
      %4922 = vmatpush1.bf16.msra.mxu0 0
      %4923 = vmatprep.subr.bf16.mxu0 0
      %4924 = vmatpush1.bf16.msra.mxu0 0
      %4925 = vmatprep.subr.bf16.mxu0 0
      %4926 = vmatpush1.bf16.msra.mxu0 0
      %4927 = vmatprep.subr.bf16.mxu0 0
      %4928 = vmatpush1.bf16.msra.mxu0 0
      %4929 = vmatprep.subr.bf16.mxu0 0
      %4930 = vmatpush1.bf16.msra.mxu0 0
      %4931 = vmatprep.subr.bf16.mxu0 0
      %4932 = vmatpush1.bf16.msra.mxu0 0
      %4933 = vmatprep.subr.bf16.mxu0 0
      %4934 = vmatpush1.bf16.msra.mxu0 0
      %4935 = vmatprep.subr.bf16.mxu0 0
      %4936 = vmatpush1.bf16.msra.mxu0 0
      %4937 = vmatprep.subr.bf16.mxu0 0
      %4938 = vmatpush1.bf16.msra.mxu0 0
      %4939 = vmatprep.subr.bf16.mxu0 0
      %4940 = vmatpush1.bf16.msra.mxu0 0
      %4941 = vmatprep.mubr.bf16.mxu0 0
      %4942 = vmatmul.mubr.bf16.gmra.mrb[0].mxu0 %v4904
      %v4943 = vpop.f32.mrb[0].mxu0
      %v4944 = vadd.f32 0.0, %v4943
      %v4945 = vpop.f32.mrb[0].mxu0
      %v4946 = vadd.f32 0.0, %v4945
      %v4947 = vpop.f32.mrb[0].mxu0
      %v4948 = vpop.f32.mrb[0].mxu0
      %4949 = vdwg.mxu0
      %4950 = vmatprep.subr.bf16.mxu0 0
      %4951 = vmatpush1.bf16.msra.mxu0 %v4907
      %4952 = vmatprep.subr.bf16.mxu0 0
      %4953 = vmatpush1.bf16.msra.mxu0 0
      %4954 = vmatprep.subr.bf16.mxu0 0
      %4955 = vmatpush1.bf16.msra.mxu0 0
      %4956 = vmatprep.subr.bf16.mxu0 0
      %4957 = vmatpush1.bf16.msra.mxu0 0
      %4958 = vmatprep.subr.bf16.mxu0 0
      %4959 = vmatpush1.bf16.msra.mxu0 0
      %4960 = vmatprep.subr.bf16.mxu0 0
      %4961 = vmatpush1.bf16.msra.mxu0 0
      %4962 = vmatprep.subr.bf16.mxu0 0
      %4963 = vmatpush1.bf16.msra.mxu0 0
      %4964 = vmatprep.subr.bf16.mxu0 0
      %4965 = vmatpush1.bf16.msra.mxu0 0
      %4966 = vmatprep.subr.bf16.mxu0 0
      %4967 = vmatpush1.bf16.msra.mxu0 0
      %4968 = vmatprep.subr.bf16.mxu0 0
      %4969 = vmatpush1.bf16.msra.mxu0 0
      %4970 = vmatprep.subr.bf16.mxu0 0
      %4971 = vmatpush1.bf16.msra.mxu0 0
      %4972 = vmatprep.subr.bf16.mxu0 0
      %4973 = vmatpush1.bf16.msra.mxu0 0
      %4974 = vmatprep.subr.bf16.mxu0 0
      %4975 = vmatpush1.bf16.msra.mxu0 0
      %4976 = vmatprep.subr.bf16.mxu0 0
      %4977 = vmatpush1.bf16.msra.mxu0 0
      %4978 = vmatprep.subr.bf16.mxu0 0
      %4979 = vmatpush1.bf16.msra.mxu0 0
      %4980 = vmatprep.subr.bf16.mxu0 0
      %4981 = vmatpush1.bf16.msra.mxu0 0
      %4982 = vmatprep.mubr.bf16.mxu0 0
      %4983 = vmatmul.mubr.bf16.gmra.mrb[0].mxu0 %v4904
      %v4984 = vpop.f32.mrb[0].mxu0
      %v4985 = vadd.f32 0.0, %v4984
      %v4986 = vpop.f32.mrb[0].mxu0
      %v4987 = vpop.f32.mrb[0].mxu0
      %v4988 = vpop.f32.mrb[0].mxu0
      %4989 = vdwg.mxu0
      %v4990 = vadd.f32 %v4895, %v4944
      %v4991 = vadd.f32 %v4896, %v4946
      %v4992 = vadd.f32 %v4897, %v4985
      %s4993 = scalar_lea.vmem %s1, 176
      %v4994 = vld [vmem:[%s4993] sm:$0xf]
      %4995 = vrot.lane.b32.xlu0 %v4804, 122
      %v4996 = vpop.permute.xlu0 %4995
      %v4997 = vsel %vm845, %v844, %v4996
      %v4999 = vsel %vm207, %v4994, 0
      %v5002 = vsel %vm211, %v4997, 0
      %5004 = vmatprep.subr.bf16.mxu0 %v859
      %5005 = vmatpush1.bf16.msra.mxu0 %v856
      %5006 = vmatprep.subr.bf16.mxu0 0
      %5007 = vmatpush1.bf16.msra.mxu0 0
      %5008 = vmatprep.subr.bf16.mxu0 0
      %5009 = vmatpush1.bf16.msra.mxu0 0
      %5010 = vmatprep.subr.bf16.mxu0 0
      %5011 = vmatpush1.bf16.msra.mxu0 0
      %5012 = vmatprep.subr.bf16.mxu0 0
      %5013 = vmatpush1.bf16.msra.mxu0 0
      %5014 = vmatprep.subr.bf16.mxu0 0
      %5015 = vmatpush1.bf16.msra.mxu0 0
      %5016 = vmatprep.subr.bf16.mxu0 0
      %5017 = vmatpush1.bf16.msra.mxu0 0
      %5018 = vmatprep.subr.bf16.mxu0 0
      %5019 = vmatpush1.bf16.msra.mxu0 0
      %5020 = vmatprep.subr.bf16.mxu0 0
      %5021 = vmatpush1.bf16.msra.mxu0 0
      %5022 = vmatprep.subr.bf16.mxu0 0
      %5023 = vmatpush1.bf16.msra.mxu0 0
      %5024 = vmatprep.subr.bf16.mxu0 0
      %5025 = vmatpush1.bf16.msra.mxu0 0
      %5026 = vmatprep.subr.bf16.mxu0 0
      %5027 = vmatpush1.bf16.msra.mxu0 0
      %5028 = vmatprep.subr.bf16.mxu0 0
      %5029 = vmatpush1.bf16.msra.mxu0 0
      %5030 = vmatprep.subr.bf16.mxu0 0
      %5031 = vmatpush1.bf16.msra.mxu0 0
      %5032 = vmatprep.subr.bf16.mxu0 0
      %5033 = vmatpush1.bf16.msra.mxu0 0
      %5034 = vmatprep.subr.bf16.mxu0 0
      %5035 = vmatpush1.bf16.msra.mxu0 0
      %5036 = vmatprep.mubr.bf16.mxu0 0
      %5037 = vmatmul.mubr.bf16.gmra.mrb[0].mxu0 %v4999
      %v5038 = vpop.f32.mrb[0].mxu0
      %v5039 = vadd.f32 0.0, %v5038
      %v5040 = vpop.f32.mrb[0].mxu0
      %v5041 = vadd.f32 0.0, %v5040
      %v5042 = vpop.f32.mrb[0].mxu0
      %v5043 = vpop.f32.mrb[0].mxu0
      %5044 = vdwg.mxu0
      %5045 = vmatprep.subr.bf16.mxu0 0
      %5046 = vmatpush1.bf16.msra.mxu0 %v5002
      %5047 = vmatprep.subr.bf16.mxu0 0
      %5048 = vmatpush1.bf16.msra.mxu0 0
      %5049 = vmatprep.subr.bf16.mxu0 0
      %5050 = vmatpush1.bf16.msra.mxu0 0
      %5051 = vmatprep.subr.bf16.mxu0 0
      %5052 = vmatpush1.bf16.msra.mxu0 0
      %5053 = vmatprep.subr.bf16.mxu0 0
      %5054 = vmatpush1.bf16.msra.mxu0 0
      %5055 = vmatprep.subr.bf16.mxu0 0
      %5056 = vmatpush1.bf16.msra.mxu0 0
      %5057 = vmatprep.subr.bf16.mxu0 0
      %5058 = vmatpush1.bf16.msra.mxu0 0
      %5059 = vmatprep.subr.bf16.mxu0 0
      %5060 = vmatpush1.bf16.msra.mxu0 0
      %5061 = vmatprep.subr.bf16.mxu0 0
      %5062 = vmatpush1.bf16.msra.mxu0 0
      %5063 = vmatprep.subr.bf16.mxu0 0
      %5064 = vmatpush1.bf16.msra.mxu0 0
      %5065 = vmatprep.subr.bf16.mxu0 0
      %5066 = vmatpush1.bf16.msra.mxu0 0
      %5067 = vmatprep.subr.bf16.mxu0 0
      %5068 = vmatpush1.bf16.msra.mxu0 0
      %5069 = vmatprep.subr.bf16.mxu0 0
      %5070 = vmatpush1.bf16.msra.mxu0 0
      %5071 = vmatprep.subr.bf16.mxu0 0
      %5072 = vmatpush1.bf16.msra.mxu0 0
      %5073 = vmatprep.subr.bf16.mxu0 0
      %5074 = vmatpush1.bf16.msra.mxu0 0
      %5075 = vmatprep.subr.bf16.mxu0 0
      %5076 = vmatpush1.bf16.msra.mxu0 0
      %5077 = vmatprep.mubr.bf16.mxu0 0
      %5078 = vmatmul.mubr.bf16.gmra.mrb[0].mxu0 %v4999
      %v5079 = vpop.f32.mrb[0].mxu0
      %v5080 = vadd.f32 0.0, %v5079
      %v5081 = vpop.f32.mrb[0].mxu0
      %v5082 = vpop.f32.mrb[0].mxu0
      %v5083 = vpop.f32.mrb[0].mxu0
      %5084 = vdwg.mxu0
      %v5085 = vadd.f32 %v4990, %v5039
      %v5086 = vadd.f32 %v4991, %v5041
      %v5087 = vadd.f32 %v4992, %v5080
      %s5088 = scalar_lea.vmem %s1, 180
      %v5089 = vld [vmem:[%s5088] sm:$0xf]
      %5090 = vrot.lane.b32.xlu0 %v193, 121
      %v5091 = vpop.permute.xlu0 %5090
      %5092 = vrot.lane.b32.xlu0 %v192, 121
      %v5093 = vpop.permute.xlu0 %5092
      %5094 = vrot.lane.b32.xlu0 %v194, 121
      %v5095 = vpop.permute.xlu0 %5094
      %5096 = vrot.lane.b32.xlu0 %v4804, 121
      %v5097 = vpop.permute.xlu0 %5096
      %vm5098 = vcmask 990208
      %v5099 = vsel %vm5098, %v5091, %v5093
      %v5100 = vsel %vm5098, %v5093, %v5095
      %v5101 = vsel %vm5098, %v5095, %v5097
      %v5103 = vsel %vm207, %v5089, 0
      %v5106 = vsel %vm211, %v5099, 0
      %v5109 = vsel %vm211, %v5100, 0
      %v5112 = vsel %vm211, %v5101, 0
      %5114 = vmatprep.subr.bf16.mxu0 %v5109
      %5115 = vmatpush1.bf16.msra.mxu0 %v5106
      %5116 = vmatprep.subr.bf16.mxu0 0
      %5117 = vmatpush1.bf16.msra.mxu0 0
      %5118 = vmatprep.subr.bf16.mxu0 0
      %5119 = vmatpush1.bf16.msra.mxu0 0
      %5120 = vmatprep.subr.bf16.mxu0 0
      %5121 = vmatpush1.bf16.msra.mxu0 0
      %5122 = vmatprep.subr.bf16.mxu0 0
      %5123 = vmatpush1.bf16.msra.mxu0 0
      %5124 = vmatprep.subr.bf16.mxu0 0
      %5125 = vmatpush1.bf16.msra.mxu0 0
      %5126 = vmatprep.subr.bf16.mxu0 0
      %5127 = vmatpush1.bf16.msra.mxu0 0
      %5128 = vmatprep.subr.bf16.mxu0 0
      %5129 = vmatpush1.bf16.msra.mxu0 0
      %5130 = vmatprep.subr.bf16.mxu0 0
      %5131 = vmatpush1.bf16.msra.mxu0 0
      %5132 = vmatprep.subr.bf16.mxu0 0
      %5133 = vmatpush1.bf16.msra.mxu0 0
      %5134 = vmatprep.subr.bf16.mxu0 0
      %5135 = vmatpush1.bf16.msra.mxu0 0
      %5136 = vmatprep.subr.bf16.mxu0 0
      %5137 = vmatpush1.bf16.msra.mxu0 0
      %5138 = vmatprep.subr.bf16.mxu0 0
      %5139 = vmatpush1.bf16.msra.mxu0 0
      %5140 = vmatprep.subr.bf16.mxu0 0
      %5141 = vmatpush1.bf16.msra.mxu0 0
      %5142 = vmatprep.subr.bf16.mxu0 0
      %5143 = vmatpush1.bf16.msra.mxu0 0
      %5144 = vmatprep.subr.bf16.mxu0 0
      %5145 = vmatpush1.bf16.msra.mxu0 0
      %5146 = vmatprep.mubr.bf16.mxu0 0
      %5147 = vmatmul.mubr.bf16.gmra.mrb[0].mxu0 %v5103
      %v5148 = vpop.f32.mrb[0].mxu0
      %v5149 = vadd.f32 0.0, %v5148
      %v5150 = vpop.f32.mrb[0].mxu0
      %v5151 = vadd.f32 0.0, %v5150
      %v5152 = vpop.f32.mrb[0].mxu0
      %v5153 = vpop.f32.mrb[0].mxu0
      %5154 = vdwg.mxu0
      %5155 = vmatprep.subr.bf16.mxu0 0
      %5156 = vmatpush1.bf16.msra.mxu0 %v5112
      %5157 = vmatprep.subr.bf16.mxu0 0
      %5158 = vmatpush1.bf16.msra.mxu0 0
      %5159 = vmatprep.subr.bf16.mxu0 0
      %5160 = vmatpush1.bf16.msra.mxu0 0
      %5161 = vmatprep.subr.bf16.mxu0 0
      %5162 = vmatpush1.bf16.msra.mxu0 0
      %5163 = vmatprep.subr.bf16.mxu0 0
      %5164 = vmatpush1.bf16.msra.mxu0 0
      %5165 = vmatprep.subr.bf16.mxu0 0
      %5166 = vmatpush1.bf16.msra.mxu0 0
      %5167 = vmatprep.subr.bf16.mxu0 0
      %5168 = vmatpush1.bf16.msra.mxu0 0
      %5169 = vmatprep.subr.bf16.mxu0 0
      %5170 = vmatpush1.bf16.msra.mxu0 0
      %5171 = vmatprep.subr.bf16.mxu0 0
      %5172 = vmatpush1.bf16.msra.mxu0 0
      %5173 = vmatprep.subr.bf16.mxu0 0
      %5174 = vmatpush1.bf16.msra.mxu0 0
      %5175 = vmatprep.subr.bf16.mxu0 0
      %5176 = vmatpush1.bf16.msra.mxu0 0
      %5177 = vmatprep.subr.bf16.mxu0 0
      %5178 = vmatpush1.bf16.msra.mxu0 0
      %5179 = vmatprep.subr.bf16.mxu0 0
      %5180 = vmatpush1.bf16.msra.mxu0 0
      %5181 = vmatprep.subr.bf16.mxu0 0
      %5182 = vmatpush1.bf16.msra.mxu0 0
      %5183 = vmatprep.subr.bf16.mxu0 0
      %5184 = vmatpush1.bf16.msra.mxu0 0
      %5185 = vmatprep.subr.bf16.mxu0 0
      %5186 = vmatpush1.bf16.msra.mxu0 0
      %5187 = vmatprep.mubr.bf16.mxu0 0
      %5188 = vmatmul.mubr.bf16.gmra.mrb[0].mxu0 %v5103
      %v5189 = vpop.f32.mrb[0].mxu0
      %v5190 = vadd.f32 0.0, %v5189
      %v5191 = vpop.f32.mrb[0].mxu0
      %v5192 = vpop.f32.mrb[0].mxu0
      %v5193 = vpop.f32.mrb[0].mxu0
      %5194 = vdwg.mxu0
      %v5195 = vadd.f32 %v5085, %v5149
      %v5196 = vadd.f32 %v5086, %v5151
      %v5197 = vadd.f32 %v5087, %v5190
      %s5198 = scalar_lea.vmem %s1, 184
      %v5199 = vld [vmem:[%s5198] sm:$0xf]
      %5200 = vrot.lane.b32.xlu0 %v193, 120
      %v5201 = vpop.permute.xlu0 %5200
      %5202 = vrot.lane.b32.xlu0 %v192, 120
      %v5203 = vpop.permute.xlu0 %5202
      %5204 = vrot.lane.b32.xlu0 %v194, 120
      %v5205 = vpop.permute.xlu0 %5204
      %5206 = vrot.lane.b32.xlu0 %v4804, 120
      %v5207 = vpop.permute.xlu0 %5206
      %vm5208 = vcmask 982016
      %v5209 = vsel %vm5208, %v5201, %v5203
      %v5210 = vsel %vm5208, %v5203, %v5205
      %v5211 = vsel %vm5208, %v5205, %v5207
      %v5213 = vsel %vm207, %v5199, 0
      %v5216 = vsel %vm211, %v5209, 0
      %v5219 = vsel %vm211, %v5210, 0
      %v5222 = vsel %vm211, %v5211, 0
      %5224 = vmatprep.subr.bf16.mxu0 %v5219
      %5225 = vmatpush1.bf16.msra.mxu0 %v5216
      %5226 = vmatprep.subr.bf16.mxu0 0
      %5227 = vmatpush1.bf16.msra.mxu0 0
      %5228 = vmatprep.subr.bf16.mxu0 0
      %5229 = vmatpush1.bf16.msra.mxu0 0
      %5230 = vmatprep.subr.bf16.mxu0 0
      %5231 = vmatpush1.bf16.msra.mxu0 0
      %5232 = vmatprep.subr.bf16.mxu0 0
      %5233 = vmatpush1.bf16.msra.mxu0 0
      %5234 = vmatprep.subr.bf16.mxu0 0
      %5235 = vmatpush1.bf16.msra.mxu0 0
      %5236 = vmatprep.subr.bf16.mxu0 0
      %5237 = vmatpush1.bf16.msra.mxu0 0
      %5238 = vmatprep.subr.bf16.mxu0 0
      %5239 = vmatpush1.bf16.msra.mxu0 0
      %5240 = vmatprep.subr.bf16.mxu0 0
      %5241 = vmatpush1.bf16.msra.mxu0 0
      %5242 = vmatprep.subr.bf16.mxu0 0
      %5243 = vmatpush1.bf16.msra.mxu0 0
      %5244 = vmatprep.subr.bf16.mxu0 0
      %5245 = vmatpush1.bf16.msra.mxu0 0
      %5246 = vmatprep.subr.bf16.mxu0 0
      %5247 = vmatpush1.bf16.msra.mxu0 0
      %5248 = vmatprep.subr.bf16.mxu0 0
      %5249 = vmatpush1.bf16.msra.mxu0 0
      %5250 = vmatprep.subr.bf16.mxu0 0
      %5251 = vmatpush1.bf16.msra.mxu0 0
      %5252 = vmatprep.subr.bf16.mxu0 0
      %5253 = vmatpush1.bf16.msra.mxu0 0
      %5254 = vmatprep.subr.bf16.mxu0 0
      %5255 = vmatpush1.bf16.msra.mxu0 0
      %5256 = vmatprep.mubr.bf16.mxu0 0
      %5257 = vmatmul.mubr.bf16.gmra.mrb[0].mxu0 %v5213
      %v5258 = vpop.f32.mrb[0].mxu0
      %v5259 = vadd.f32 0.0, %v5258
      %v5260 = vpop.f32.mrb[0].mxu0
      %v5261 = vadd.f32 0.0, %v5260
      %v5262 = vpop.f32.mrb[0].mxu0
      %v5263 = vpop.f32.mrb[0].mxu0
      %5264 = vdwg.mxu0
      %5265 = vmatprep.subr.bf16.mxu0 0
      %5266 = vmatpush1.bf16.msra.mxu0 %v5222
      %5267 = vmatprep.subr.bf16.mxu0 0
      %5268 = vmatpush1.bf16.msra.mxu0 0
      %5269 = vmatprep.subr.bf16.mxu0 0
      %5270 = vmatpush1.bf16.msra.mxu0 0
      %5271 = vmatprep.subr.bf16.mxu0 0
      %5272 = vmatpush1.bf16.msra.mxu0 0
      %5273 = vmatprep.subr.bf16.mxu0 0
      %5274 = vmatpush1.bf16.msra.mxu0 0
      %5275 = vmatprep.subr.bf16.mxu0 0
      %5276 = vmatpush1.bf16.msra.mxu0 0
      %5277 = vmatprep.subr.bf16.mxu0 0
      %5278 = vmatpush1.bf16.msra.mxu0 0
      %5279 = vmatprep.subr.bf16.mxu0 0
      %5280 = vmatpush1.bf16.msra.mxu0 0
      %5281 = vmatprep.subr.bf16.mxu0 0
      %5282 = vmatpush1.bf16.msra.mxu0 0
      %5283 = vmatprep.subr.bf16.mxu0 0
      %5284 = vmatpush1.bf16.msra.mxu0 0
      %5285 = vmatprep.subr.bf16.mxu0 0
      %5286 = vmatpush1.bf16.msra.mxu0 0
      %5287 = vmatprep.subr.bf16.mxu0 0
      %5288 = vmatpush1.bf16.msra.mxu0 0
      %5289 = vmatprep.subr.bf16.mxu0 0
      %5290 = vmatpush1.bf16.msra.mxu0 0
      %5291 = vmatprep.subr.bf16.mxu0 0
      %5292 = vmatpush1.bf16.msra.mxu0 0
      %5293 = vmatprep.subr.bf16.mxu0 0
      %5294 = vmatpush1.bf16.msra.mxu0 0
      %5295 = vmatprep.subr.bf16.mxu0 0
      %5296 = vmatpush1.bf16.msra.mxu0 0
      %5297 = vmatprep.mubr.bf16.mxu0 0
      %5298 = vmatmul.mubr.bf16.gmra.mrb[0].mxu0 %v5213
      %v5299 = vpop.f32.mrb[0].mxu0
      %v5300 = vadd.f32 0.0, %v5299
      %v5301 = vpop.f32.mrb[0].mxu0
      %v5302 = vpop.f32.mrb[0].mxu0
      %v5303 = vpop.f32.mrb[0].mxu0
      %5304 = vdwg.mxu0
      %v5305 = vadd.f32 %v5195, %v5259
      %v5306 = vadd.f32 %v5196, %v5261
      %v5307 = vadd.f32 %v5197, %v5300
      %s5308 = scalar_lea.vmem %s1, 188
      %v5309 = vld [vmem:[%s5308] sm:$0xf]
      %5310 = vrot.lane.b32.xlu0 %v193, 119
      %v5311 = vpop.permute.xlu0 %5310
      %5312 = vrot.lane.b32.xlu0 %v192, 119
      %v5313 = vpop.permute.xlu0 %5312
      %5314 = vrot.lane.b32.xlu0 %v194, 119
      %v5315 = vpop.permute.xlu0 %5314
      %5316 = vrot.lane.b32.xlu0 %v4804, 119
      %v5317 = vpop.permute.xlu0 %5316
      %vm5318 = vcmask 973824
      %v5319 = vsel %vm5318, %v5311, %v5313
      %v5320 = vsel %vm5318, %v5313, %v5315
      %v5321 = vsel %vm5318, %v5315, %v5317
      %v5323 = vsel %vm207, %v5309, 0
      %v5326 = vsel %vm211, %v5319, 0
      %v5329 = vsel %vm211, %v5320, 0
      %v5332 = vsel %vm211, %v5321, 0
      %5334 = vmatprep.subr.bf16.mxu0 %v5329
      %5335 = vmatpush1.bf16.msra.mxu0 %v5326
      %5336 = vmatprep.subr.bf16.mxu0 0
      %5337 = vmatpush1.bf16.msra.mxu0 0
      %5338 = vmatprep.subr.bf16.mxu0 0
      %5339 = vmatpush1.bf16.msra.mxu0 0
      %5340 = vmatprep.subr.bf16.mxu0 0
      %5341 = vmatpush1.bf16.msra.mxu0 0
      %5342 = vmatprep.subr.bf16.mxu0 0
      %5343 = vmatpush1.bf16.msra.mxu0 0
      %5344 = vmatprep.subr.bf16.mxu0 0
      %5345 = vmatpush1.bf16.msra.mxu0 0
      %5346 = vmatprep.subr.bf16.mxu0 0
      %5347 = vmatpush1.bf16.msra.mxu0 0
      %5348 = vmatprep.subr.bf16.mxu0 0
      %5349 = vmatpush1.bf16.msra.mxu0 0
      %5350 = vmatprep.subr.bf16.mxu0 0
      %5351 = vmatpush1.bf16.msra.mxu0 0
      %5352 = vmatprep.subr.bf16.mxu0 0
      %5353 = vmatpush1.bf16.msra.mxu0 0
      %5354 = vmatprep.subr.bf16.mxu0 0
      %5355 = vmatpush1.bf16.msra.mxu0 0
      %5356 = vmatprep.subr.bf16.mxu0 0
      %5357 = vmatpush1.bf16.msra.mxu0 0
      %5358 = vmatprep.subr.bf16.mxu0 0
      %5359 = vmatpush1.bf16.msra.mxu0 0
      %5360 = vmatprep.subr.bf16.mxu0 0
      %5361 = vmatpush1.bf16.msra.mxu0 0
      %5362 = vmatprep.subr.bf16.mxu0 0
      %5363 = vmatpush1.bf16.msra.mxu0 0
      %5364 = vmatprep.subr.bf16.mxu0 0
      %5365 = vmatpush1.bf16.msra.mxu0 0
      %5366 = vmatprep.mubr.bf16.mxu0 0
      %5367 = vmatmul.mubr.bf16.gmra.mrb[0].mxu0 %v5323
      %v5368 = vpop.f32.mrb[0].mxu0
      %v5369 = vadd.f32 0.0, %v5368
      %v5370 = vpop.f32.mrb[0].mxu0
      %v5371 = vadd.f32 0.0, %v5370
      %v5372 = vpop.f32.mrb[0].mxu0
      %v5373 = vpop.f32.mrb[0].mxu0
      %5374 = vdwg.mxu0
      %5375 = vmatprep.subr.bf16.mxu0 0
      %5376 = vmatpush1.bf16.msra.mxu0 %v5332
      %5377 = vmatprep.subr.bf16.mxu0 0
      %5378 = vmatpush1.bf16.msra.mxu0 0
      %5379 = vmatprep.subr.bf16.mxu0 0
      %5380 = vmatpush1.bf16.msra.mxu0 0
      %5381 = vmatprep.subr.bf16.mxu0 0
      %5382 = vmatpush1.bf16.msra.mxu0 0
      %5383 = vmatprep.subr.bf16.mxu0 0
      %5384 = vmatpush1.bf16.msra.mxu0 0
      %5385 = vmatprep.subr.bf16.mxu0 0
      %5386 = vmatpush1.bf16.msra.mxu0 0
      %5387 = vmatprep.subr.bf16.mxu0 0
      %5388 = vmatpush1.bf16.msra.mxu0 0
      %5389 = vmatprep.subr.bf16.mxu0 0
      %5390 = vmatpush1.bf16.msra.mxu0 0
      %5391 = vmatprep.subr.bf16.mxu0 0
      %5392 = vmatpush1.bf16.msra.mxu0 0
      %5393 = vmatprep.subr.bf16.mxu0 0
      %5394 = vmatpush1.bf16.msra.mxu0 0
      %5395 = vmatprep.subr.bf16.mxu0 0
      %5396 = vmatpush1.bf16.msra.mxu0 0
      %5397 = vmatprep.subr.bf16.mxu0 0
      %5398 = vmatpush1.bf16.msra.mxu0 0
      %5399 = vmatprep.subr.bf16.mxu0 0
      %5400 = vmatpush1.bf16.msra.mxu0 0
      %5401 = vmatprep.subr.bf16.mxu0 0
      %5402 = vmatpush1.bf16.msra.mxu0 0
      %5403 = vmatprep.subr.bf16.mxu0 0
      %5404 = vmatpush1.bf16.msra.mxu0 0
      %5405 = vmatprep.subr.bf16.mxu0 0
      %5406 = vmatpush1.bf16.msra.mxu0 0
      %5407 = vmatprep.mubr.bf16.mxu0 0
      %5408 = vmatmul.mubr.bf16.gmra.mrb[0].mxu0 %v5323
      %v5409 = vpop.f32.mrb[0].mxu0
      %v5410 = vadd.f32 0.0, %v5409
      %v5411 = vpop.f32.mrb[0].mxu0
      %v5412 = vpop.f32.mrb[0].mxu0
      %v5413 = vpop.f32.mrb[0].mxu0
      %5414 = vdwg.mxu0
      %v5415 = vadd.f32 %v5305, %v5369
      %v5416 = vadd.f32 %v5306, %v5371
      %v5417 = vadd.f32 %v5307, %v5410
      %s5418 = scalar_lea.vmem %s1, 192
      %v5419 = vld [vmem:[%s5418] sm:$0xf]
      %5420 = vrot.lane.b32.xlu0 %v193, 118
      %v5421 = vpop.permute.xlu0 %5420
      %5422 = vrot.lane.b32.xlu0 %v192, 118
      %v5423 = vpop.permute.xlu0 %5422
      %5424 = vrot.lane.b32.xlu0 %v194, 118
      %v5425 = vpop.permute.xlu0 %5424
      %5426 = vrot.lane.b32.xlu0 %v4804, 118
      %v5427 = vpop.permute.xlu0 %5426
      %vm5428 = vcmask 965632
      %v5429 = vsel %vm5428, %v5421, %v5423
      %v5430 = vsel %vm5428, %v5423, %v5425
      %v5431 = vsel %vm5428, %v5425, %v5427
      %v5433 = vsel %vm207, %v5419, 0
      %v5436 = vsel %vm211, %v5429, 0
      %v5439 = vsel %vm211, %v5430, 0
      %v5442 = vsel %vm211, %v5431, 0
      %5444 = vmatprep.subr.bf16.mxu0 %v5439
      %5445 = vmatpush1.bf16.msra.mxu0 %v5436
      %5446 = vmatprep.subr.bf16.mxu0 0
      %5447 = vmatpush1.bf16.msra.mxu0 0
      %5448 = vmatprep.subr.bf16.mxu0 0
      %5449 = vmatpush1.bf16.msra.mxu0 0
      %5450 = vmatprep.subr.bf16.mxu0 0
      %5451 = vmatpush1.bf16.msra.mxu0 0
      %5452 = vmatprep.subr.bf16.mxu0 0
      %5453 = vmatpush1.bf16.msra.mxu0 0
      %5454 = vmatprep.subr.bf16.mxu0 0
      %5455 = vmatpush1.bf16.msra.mxu0 0
      %5456 = vmatprep.subr.bf16.mxu0 0
      %5457 = vmatpush1.bf16.msra.mxu0 0
      %5458 = vmatprep.subr.bf16.mxu0 0
      %5459 = vmatpush1.bf16.msra.mxu0 0
      %5460 = vmatprep.subr.bf16.mxu0 0
      %5461 = vmatpush1.bf16.msra.mxu0 0
      %5462 = vmatprep.subr.bf16.mxu0 0
      %5463 = vmatpush1.bf16.msra.mxu0 0
      %5464 = vmatprep.subr.bf16.mxu0 0
      %5465 = vmatpush1.bf16.msra.mxu0 0
      %5466 = vmatprep.subr.bf16.mxu0 0
      %5467 = vmatpush1.bf16.msra.mxu0 0
      %5468 = vmatprep.subr.bf16.mxu0 0
      %5469 = vmatpush1.bf16.msra.mxu0 0
      %5470 = vmatprep.subr.bf16.mxu0 0
      %5471 = vmatpush1.bf16.msra.mxu0 0
      %5472 = vmatprep.subr.bf16.mxu0 0
      %5473 = vmatpush1.bf16.msra.mxu0 0
      %5474 = vmatprep.subr.bf16.mxu0 0
      %5475 = vmatpush1.bf16.msra.mxu0 0
      %5476 = vmatprep.mubr.bf16.mxu0 0
      %5477 = vmatmul.mubr.bf16.gmra.mrb[0].mxu0 %v5433
      %v5478 = vpop.f32.mrb[0].mxu0
      %v5479 = vadd.f32 0.0, %v5478
      %v5480 = vpop.f32.mrb[0].mxu0
      %v5481 = vadd.f32 0.0, %v5480
      %v5482 = vpop.f32.mrb[0].mxu0
      %v5483 = vpop.f32.mrb[0].mxu0
      %5484 = vdwg.mxu0
      %5485 = vmatprep.subr.bf16.mxu0 0
      %5486 = vmatpush1.bf16.msra.mxu0 %v5442
      %5487 = vmatprep.subr.bf16.mxu0 0
      %5488 = vmatpush1.bf16.msra.mxu0 0
      %5489 = vmatprep.subr.bf16.mxu0 0
      %5490 = vmatpush1.bf16.msra.mxu0 0
      %5491 = vmatprep.subr.bf16.mxu0 0
      %5492 = vmatpush1.bf16.msra.mxu0 0
      %5493 = vmatprep.subr.bf16.mxu0 0
      %5494 = vmatpush1.bf16.msra.mxu0 0
      %5495 = vmatprep.subr.bf16.mxu0 0
      %5496 = vmatpush1.bf16.msra.mxu0 0
      %5497 = vmatprep.subr.bf16.mxu0 0
      %5498 = vmatpush1.bf16.msra.mxu0 0
      %5499 = vmatprep.subr.bf16.mxu0 0
      %5500 = vmatpush1.bf16.msra.mxu0 0
      %5501 = vmatprep.subr.bf16.mxu0 0
      %5502 = vmatpush1.bf16.msra.mxu0 0
      %5503 = vmatprep.subr.bf16.mxu0 0
      %5504 = vmatpush1.bf16.msra.mxu0 0
      %5505 = vmatprep.subr.bf16.mxu0 0
      %5506 = vmatpush1.bf16.msra.mxu0 0
      %5507 = vmatprep.subr.bf16.mxu0 0
      %5508 = vmatpush1.bf16.msra.mxu0 0
      %5509 = vmatprep.subr.bf16.mxu0 0
      %5510 = vmatpush1.bf16.msra.mxu0 0
      %5511 = vmatprep.subr.bf16.mxu0 0
      %5512 = vmatpush1.bf16.msra.mxu0 0
      %5513 = vmatprep.subr.bf16.mxu0 0
      %5514 = vmatpush1.bf16.msra.mxu0 0
      %5515 = vmatprep.subr.bf16.mxu0 0
      %5516 = vmatpush1.bf16.msra.mxu0 0
      %5517 = vmatprep.mubr.bf16.mxu0 0
      %5518 = vmatmul.mubr.bf16.gmra.mrb[0].mxu0 %v5433
      %v5519 = vpop.f32.mrb[0].mxu0
      %v5520 = vadd.f32 0.0, %v5519
      %v5521 = vpop.f32.mrb[0].mxu0
      %v5522 = vpop.f32.mrb[0].mxu0
      %v5523 = vpop.f32.mrb[0].mxu0
      %5524 = vdwg.mxu0
      %v5525 = vadd.f32 %v5415, %v5479
      %v5526 = vadd.f32 %v5416, %v5481
      %v5527 = vadd.f32 %v5417, %v5520
      %v5528 = vld [vmem:[%s2] sm:$0xff]
      %5530 = vset.pattern.permute.xlu0 0
      %5531 = vperm.xlu0 %5530, %v5528
      %v5532 = vpop.permute.xlu0 %5531
      %v5534 = vadd.f32 %v5525, %v5532
      %v5535 = vadd.f32 %v5526, %v5532
      %v5536 = vadd.f32 %v5527, %v5532
      %vm5537 = vcmp.gt.f32.partialorder %v5534, 0.0
      %vm5538 = vcmp.gt.f32.partialorder %v5535, 0.0
      %vm5539 = vcmp.gt.f32.partialorder %v5536, 0.0
      %v5540 = vmul.f32 %v5534, 0.01
      %v5541 = vmul.f32 %v5535, 0.01
      %v5542 = vmul.f32 %v5536, 0.01
      %v5543 = vsel %vm5537, %v5534, %v5540
      %v5544 = vsel %vm5538, %v5535, %v5541
      %v5545 = vsel %vm5539, %v5536, %v5542
      %v5546 = vpack.c.bf16 %v5543, %v5543
      %v5547 = vpack.c.bf16 %v5544, %v5544
      %v5548 = vpack.c.bf16 %v5545, %v5545
      %v5552 = vunpack.c.l.b16 %v5546
      %v5553 = vunpack.c.l.b16 %v5547
      %v5554 = vunpack.c.l.b16 %v5548
      %v5555 = vpack.c.b16 %v5553, %v5552
      %v5556 = vpack.c.b16 %v5554, %v5554
      %5559 = vst [vmem:[%s170] sm:$0xff] %v5555
      %5560 = vst [vmem:[%s170 + $0x8] sm:$0xf] %v5556
      %p5561 = scmp.lt.s32.totalorder %s14, 1
      %s5562 = scalar_select %p5561, %s14, 1
      %s5563 = smul.addr %s5562, 3
      %s5564 = smul.addr %s5563, 4
      %s5565 = scalar_lea.vmem %s3, %s5564
      // Predicated region
      $region33: #{encoder_content_reduce_forward.25} parent=31 // pred_check
        %p5566 = pneg %p100
      $region34: #{encoder_content_reduce_forward.25} parent=31 // pred_check_branch
        %5568 = sbr.rel (%p5566) target = $region36
      $region35: #{encoder_content_reduce_forward.25} parent=31 // pred_region
        _
      $region36: #{encoder_content_reduce_forward.25} parent=31 // pred_fallthru
        _
    $region32: #{encoder_content_reduce_forward.25} parent=5 // pred_fallthru
      _
    %p5569 = scmp.le.s32.totalorder 2, %s9
    // Predicated region
    $region37: #{encoder_content_reduce_forward.25} parent=5 // pred_check
      %p5570 = pneg %p5569
    $region38: #{encoder_content_reduce_forward.25} parent=5 // pred_check_branch
      %5572 = sbr.rel (%p5570) target = $region40
    $region39: #{encoder_content_reduce_forward.25} parent=5 // pred_region
      %s5573 = ssub.s32 %s9, 2
      // Predicated region
      $region41: #{encoder_content_reduce_forward.25} parent=39 // pred_check
        %p5574 = pneg %p106
      $region42: #{encoder_content_reduce_forward.25} parent=39 // pred_check_branch
        %5576 = sbr.rel (%p5574) target = $region44
      $region43: #{encoder_content_reduce_forward.25} parent=39 // pred_region
        %p5577 = scmp.lt.s32.totalorder %s15, 1
        %s5578 = scalar_select %p5577, %s15, 1
        %s5579 = smul.addr %s5578, 3
        %s5580 = smul.addr %s5579, 4
        %s5581 = scalar_lea.vmem %s3, %s5580
      $region44: #{encoder_content_reduce_forward.25} parent=39 // pred_fallthru
        _
    $region40: #{encoder_content_reduce_forward.25} parent=5 // pred_fallthru
      _
  $region6: #{encoder_content_reduce_forward.25} parent=0 // loop_footer
    %s13 = sadd.s32 1, %s9
  $region7: #{encoder_content_reduce_forward.25} parent=0 // loop_footer_branch
    %8 = sbr.rel target = $region3
  $region8: #{encoder_content_reduce_forward.25} parent=0 // loop_exit
    _

// kernel: encoder_content_reduce_forward.26
$region0: #{encoder_content_reduce_forward.26}
  #allocation0 [shape = 'u32[]', space=smem, size = 0x4, offset = 0x4, fixed_abs, tag = 'smem constant byte address 0x4 - core index']
  #allocation1 [shape = 'u32[144,128]{1,0:T(1,128)}', space=vmem, size = 0x12000, scoped, tag = 'internal scratch']
  %s0 = inlined_call_operand.vmem [shape: bf16[2,80,128], index: 0, kind: input, shape index: {}]
  %s1 = inlined_call_operand.vmem [shape: bf16[16,80], index: 1, kind: input, shape index: {}]
  %s2 = inlined_call_operand.vmem [shape: f32[16,1], index: 2, kind: input, shape index: {}]
  %s3 = inlined_call_operand.vmem [shape: f32[1,128], index: 3, kind: input, shape index: {}]
  %s4 = inlined_call_operand.vmem [shape: bf16[2,16,128], index: 4, kind: output, shape index: {}]
  %s5 = sld [smem:[#allocation0]]
  $region49: #{encoder_content_reduce_forward.26} parent=0
    _
  %s7 = ssub.s32 1, %s5
  %s8 = scalar_select 0, %s7, %s5
  loop: start=0, step=1, limit=4
  $region2: #{encoder_content_reduce_forward.26} parent=0 // loop_pre_header
    _
  $region3: #{encoder_content_reduce_forward.26} parent=0 // loop_header
    %s10 = sphi 0, %s14
    %p11 = scmp.ge.s32.totalorder %s10, 4
    %s20 = sphi 0, %s22
    %s23 = sphi 0, %s20
    %s24 = sphi 0, %s23
    %s40 = sphi 0, %s24
    %s44 = sphi 0, %s44
    %s46 = sphi 0, %s44
    %s47 = sphi 0, %s46
    %s61 = sphi 0, %s47
    %s65 = sphi 0, %s65
    %s67 = sphi 0, %s65
    %s68 = sphi 0, %s67
    %s82 = sphi 0, %s68
    %s86 = sphi 0, %s86
    %s88 = sphi 0, %s86
    %s89 = sphi 0, %s88
    %s103 = sphi 0, %s89
    %s109 = sphi 0, %s111
    %s112 = sphi 0, %s109
    %s113 = sphi 0, %s112
    %s129 = sphi 0, %s113
  $region4: #{encoder_content_reduce_forward.26} parent=0 // loop_header_branch
    %13 = sbr.rel (%p11) target = $region8
  $region5: #{encoder_content_reduce_forward.26} parent=0 // loop_body
    %s15 = ssub.s32 %s10, 1
    %s16 = ssub.s32 %s10, 2
    %s17 = sadd.s32 %s10, 1
    %s18 = ssub.s32 %s10, %s17
    %p19 = scmp.eq.s32.totalorder %s18, 0
    %s21 = sadd.s32 %s20, 1
    %s22 = scalar_select %p19, %s20, %s21
    %p25 = pneg %p19
    %p26 = scmp.eq.s32.totalorder %s10, 1
    %p27 = por %p25, %p26
    %p28 = scmp.ne.s32.totalorder %s20, %s23
    %p29 = scmp.eq.s32.totalorder %s10, 0
    %p30 = por %p28, %p29
    %p31 = scmp.ne.s32.totalorder %s20, %s23
    %p32 = scmp.eq.s32.totalorder %s15, 1
    %p33 = por %p31, %p32
    %p34 = scmp.ne.s32.totalorder %s23, %s24
    %p35 = scmp.eq.s32.totalorder %s15, 0
    %p36 = por %p34, %p35
    %p37 = scmp.ne.s32.totalorder %s23, %s24
    %p38 = scmp.eq.s32.totalorder %s16, 1
    %p39 = por %p37, %p38
    %p41 = scmp.ne.s32.totalorder %s24, %s40
    %p42 = scmp.eq.s32.totalorder %s16, 0
    %p43 = por %p41, %p42
    %s45 = sadd.s32 %s44, 1
    %p48 = scmp.eq.s32.totalorder %s10, 1
    %p49 = scmp.ne.s32.totalorder %s44, %s46
    %p50 = scmp.eq.s32.totalorder %s10, 0
    %p51 = por %p49, %p50
    %p52 = scmp.ne.s32.totalorder %s44, %s46
    %p53 = scmp.eq.s32.totalorder %s15, 1
    %p54 = por %p52, %p53
    %p55 = scmp.ne.s32.totalorder %s46, %s47
    %p56 = scmp.eq.s32.totalorder %s15, 0
    %p57 = por %p55, %p56
    %p58 = scmp.ne.s32.totalorder %s46, %s47
    %p59 = scmp.eq.s32.totalorder %s16, 1
    %p60 = por %p58, %p59
    %p62 = scmp.ne.s32.totalorder %s47, %s61
    %p63 = scmp.eq.s32.totalorder %s16, 0
    %p64 = por %p62, %p63
    %s66 = sadd.s32 %s65, 1
    %p69 = scmp.eq.s32.totalorder %s10, 1
    %p70 = scmp.ne.s32.totalorder %s65, %s67
    %p71 = scmp.eq.s32.totalorder %s10, 0
    %p72 = por %p70, %p71
    %p73 = scmp.ne.s32.totalorder %s65, %s67
    %p74 = scmp.eq.s32.totalorder %s15, 1
    %p75 = por %p73, %p74
    %p76 = scmp.ne.s32.totalorder %s67, %s68
    %p77 = scmp.eq.s32.totalorder %s15, 0
    %p78 = por %p76, %p77
    %p79 = scmp.ne.s32.totalorder %s67, %s68
    %p80 = scmp.eq.s32.totalorder %s16, 1
    %p81 = por %p79, %p80
    %p83 = scmp.ne.s32.totalorder %s68, %s82
    %p84 = scmp.eq.s32.totalorder %s16, 0
    %p85 = por %p83, %p84
    %s87 = sadd.s32 %s86, 1
    %p90 = scmp.eq.s32.totalorder %s10, 1
    %p91 = scmp.ne.s32.totalorder %s86, %s88
    %p92 = scmp.eq.s32.totalorder %s10, 0
    %p93 = por %p91, %p92
    %p94 = scmp.ne.s32.totalorder %s86, %s88
    %p95 = scmp.eq.s32.totalorder %s15, 1
    %p96 = por %p94, %p95
    %p97 = scmp.ne.s32.totalorder %s88, %s89
    %p98 = scmp.eq.s32.totalorder %s15, 0
    %p99 = por %p97, %p98
    %p100 = scmp.ne.s32.totalorder %s88, %s89
    %p101 = scmp.eq.s32.totalorder %s16, 1
    %p102 = por %p100, %p101
    %p104 = scmp.ne.s32.totalorder %s89, %s103
    %p105 = scmp.eq.s32.totalorder %s16, 0
    %p106 = por %p104, %p105
    %s107 = ssub.s32 %s10, %s17
    %p108 = scmp.eq.s32.totalorder %s107, 0
    %s110 = sadd.s32 %s109, 1
    %s111 = scalar_select %p108, %s109, %s110
    %p114 = pneg %p108
    %p115 = scmp.eq.s32.totalorder %s10, 1
    %p116 = por %p114, %p115
    %p117 = scmp.ne.s32.totalorder %s109, %s112
    %p118 = scmp.eq.s32.totalorder %s10, 0
    %p119 = por %p117, %p118
    %p120 = scmp.ne.s32.totalorder %s109, %s112
    %p121 = scmp.eq.s32.totalorder %s15, 1
    %p122 = por %p120, %p121
    %p123 = scmp.ne.s32.totalorder %s112, %s113
    %p124 = scmp.eq.s32.totalorder %s15, 0
    %p125 = por %p123, %p124
    %p126 = scmp.ne.s32.totalorder %s112, %s113
    %p127 = scmp.eq.s32.totalorder %s16, 1
    %p128 = por %p126, %p127
    %p130 = scmp.ne.s32.totalorder %s113, %s129
    %p131 = scmp.eq.s32.totalorder %s16, 0
    %p132 = por %p130, %p131
    %p133 = scmp.le.s32.totalorder 1, %s10
    %p134 = scmp.lt.s32.totalorder %s10, 3
    %p135 = pnand %p133, %p134
    %p136 = pneg %p135
    // Predicated region
    $region9: #{encoder_content_reduce_forward.26} parent=5 // pred_check
      _
    $region10: #{encoder_content_reduce_forward.26} parent=5 // pred_check_branch
      %138 = sbr.rel (%p135) target = $region12
    $region11: #{encoder_content_reduce_forward.26} parent=5 // pred_region
      %s139 = ssub.s32 %s10, 1
      // Predicated region
      $region13: #{encoder_content_reduce_forward.26} parent=11 // pred_check
        %p140 = pneg %p57
      $region14: #{encoder_content_reduce_forward.26} parent=11 // pred_check_branch
        %142 = sbr.rel (%p140) target = $region16
      $region15: #{encoder_content_reduce_forward.26} parent=11 // pred_region
        _
      $region16: #{encoder_content_reduce_forward.26} parent=11 // pred_fallthru
        _
      // Predicated region
      $region17: #{encoder_content_reduce_forward.26} parent=11 // pred_check
        %p143 = pneg %p78
      $region18: #{encoder_content_reduce_forward.26} parent=11 // pred_check_branch
        %145 = sbr.rel (%p143) target = $region20
      $region19: #{encoder_content_reduce_forward.26} parent=11 // pred_region
        _
      $region20: #{encoder_content_reduce_forward.26} parent=11 // pred_fallthru
        _
      // Predicated region
      $region21: #{encoder_content_reduce_forward.26} parent=11 // pred_check
        %p146 = pneg %p99
      $region22: #{encoder_content_reduce_forward.26} parent=11 // pred_check_branch
        %148 = sbr.rel (%p146) target = $region24
      $region23: #{encoder_content_reduce_forward.26} parent=11 // pred_region
        _
      $region24: #{encoder_content_reduce_forward.26} parent=11 // pred_fallthru
        _
    $region12: #{encoder_content_reduce_forward.26} parent=5 // pred_fallthru
      _
    %p149 = scmp.lt.s32.totalorder %s10, 2
    // Predicated region
    $region25: #{encoder_content_reduce_forward.26} parent=5 // pred_check
      %p150 = pneg %p149
    $region26: #{encoder_content_reduce_forward.26} parent=5 // pred_check_branch
      %152 = sbr.rel (%p150) target = $region28
    $region27: #{encoder_content_reduce_forward.26} parent=5 // pred_region
      // Predicated region
      $region29: #{encoder_content_reduce_forward.26} parent=27 // pred_check
        %p153 = pneg %p30
      $region30: #{encoder_content_reduce_forward.26} parent=27 // pred_check_branch
        %155 = sbr.rel (%p153) target = $region32
      $region31: #{encoder_content_reduce_forward.26} parent=27 // pred_region
        %p156 = scmp.lt.s32.totalorder %s10, 1
        %s157 = scalar_select %p156, %s10, 1
        %s158 = smul.addr %s157, 10
        %s159 = smul.addr %s158, 4
        %s160 = scalar_lea.vmem %s0, %s159
      $region32: #{encoder_content_reduce_forward.26} parent=27 // pred_fallthru
        _
    $region28: #{encoder_content_reduce_forward.26} parent=5 // pred_fallthru
      _
    %p161 = scmp.le.s32.totalorder 1, %s10
    %p162 = scmp.lt.s32.totalorder %s10, 3
    %p163 = pnand %p161, %p162
    %p164 = pneg %p163
    // Predicated region
    $region33: #{encoder_content_reduce_forward.26} parent=5 // pred_check
      _
    $region34: #{encoder_content_reduce_forward.26} parent=5 // pred_check_branch
      %166 = sbr.rel (%p163) target = $region36
    $region35: #{encoder_content_reduce_forward.26} parent=5 // pred_region
      %s167 = ssub.s32 %s10, 1
      %p168 = scmp.lt.s32.totalorder %s15, 1
      %s169 = scalar_select %p168, %s15, 1
      %s170 = smul.addr %s169, 10
      %s171 = smul.addr %s170, 4
      %s172 = scalar_lea.vmem %s0, %s171
      %p173 = pneg %p36
      %p174 = pneg %p33
      %p175 = pneg %p57
      %p176 = pneg %p54
      %p177 = pneg %p78
      %p178 = pneg %p75
      %p179 = pneg %p99
      %p180 = pneg %p96
      %p181 = pneg %p125
      %p182 = pneg %p122
      %p183 = scmp.lt.s32.totalorder %s15, 1
      %s184 = scalar_select %p183, %s15, 1
      %s185 = smul.addr %s184, 2
      %s186 = smul.addr %s185, 4
      %s187 = scalar_lea.vmem %s4, %s186
      %p188 = scmp.lt.s32.totalorder %s15, 1
      %s189 = scalar_select %p188, %s15, 1
      %s190 = smul.addr %s189, 10
      %s191 = smul.addr %s190, 4
      %s192 = scalar_lea.vmem %s0, %s191
      %p193 = scmp.lt.s32.totalorder %s15, 1
      %s194 = scalar_select %p193, %s15, 1
      %s195 = smul.addr %s194, 2
      %s196 = smul.addr %s195, 4
      %s197 = scalar_lea.vmem %s4, %s196
      %v199 = vld [vmem:[%s1] sm:$0xf]
      %v200 = vld [vmem:[%s1 + $0x4] sm:$0xf]
      %v201 = vld [vmem:[%s192] sm:$0xf]
      %v202 = vld [vmem:[%s192 + $0x4] sm:$0xf]
      %v203 = vld [vmem:[%s192 + $0x8] sm:$0xf]
      %v204 = vld [vmem:[%s192 + $0xc] sm:$0xf]
      %v205 = vld [vmem:[%s192 + $0x10] sm:$0xf]
      %v206 = vld [vmem:[%s192 + $0x14] sm:$0xf]
      %v207 = vld [vmem:[%s192 + $0x18] sm:$0xf]
      %v208 = vld [vmem:[%s192 + $0x1c] sm:$0xf]
      %v209 = vld [vmem:[%s192 + $0x20] sm:$0xf]
      %v210 = vld [vmem:[%s192 + $0x24] sm:$0xf]
      %v211 = vld [vmem:[%s2] sm:$0xff]
      %v212 = vld [vmem:[%s2 + $0x8] sm:$0xff]
      %214 = vset.pattern.permute.xlu0 0
      %215 = vperm.xlu0 %214, %v211
      %v216 = vpop.permute.xlu0 %215
      %219 = vset.pattern.permute.xlu0 0
      %220 = vperm.xlu0 %219, %v212
      %v221 = vpop.permute.xlu0 %220
      %v225 = vunpack.c.l.b16 %v199
      %v226 = vunpack.c.l.b16 %v200
      %v227 = vpack.c.b16 %v226, %v225
      %v238 = vunpack.c.l.b16 %v201
      %v239 = vunpack.c.l.b16 %v202
      %v240 = vunpack.c.l.b16 %v203
      %v241 = vunpack.c.l.b16 %v204
      %v242 = vunpack.c.l.b16 %v205
      %v243 = vunpack.c.l.b16 %v206
      %v244 = vunpack.c.l.b16 %v207
      %v245 = vunpack.c.l.b16 %v208
      %v246 = vunpack.c.l.b16 %v209
      %v247 = vunpack.c.l.b16 %v210
      %v248 = vpack.c.b16 %v239, %v238
      %v249 = vpack.c.b16 %v241, %v240
      %v250 = vpack.c.b16 %v243, %v242
      %v251 = vpack.c.b16 %v245, %v244
      %v252 = vpack.c.b16 %v247, %v246
      %vm258 = vcmask 654336
      %v260 = vsel %vm258, %v227, 0
      %262 = vmatprep.subr.bf16.mxu0 0
      %263 = vmatpush1.bf16.msra.mxu0 %v248
      %264 = vmatprep.subr.bf16.mxu0 0
      %265 = vmatpush1.bf16.msra.mxu0 %v249
      %266 = vmatprep.subr.bf16.mxu0 0
      %267 = vmatpush1.bf16.msra.mxu0 %v250
      %268 = vmatprep.subr.bf16.mxu0 0
      %269 = vmatpush1.bf16.msra.mxu0 %v251
      %270 = vmatprep.subr.bf16.mxu0 0
      %271 = vmatpush1.bf16.msra.mxu0 %v252
      %272 = vmatprep.subr.bf16.mxu0 0
      %273 = vmatpush1.bf16.msra.mxu0 0
      %274 = vmatprep.subr.bf16.mxu0 0
      %275 = vmatpush1.bf16.msra.mxu0 0
      %276 = vmatprep.subr.bf16.mxu0 0
      %277 = vmatpush1.bf16.msra.mxu0 0
      %278 = vmatprep.subr.bf16.mxu0 0
      %279 = vmatpush1.bf16.msra.mxu0 0
      %280 = vmatprep.subr.bf16.mxu0 0
      %281 = vmatpush1.bf16.msra.mxu0 0
      %282 = vmatprep.subr.bf16.mxu0 0
      %283 = vmatpush1.bf16.msra.mxu0 0
      %284 = vmatprep.subr.bf16.mxu0 0
      %285 = vmatpush1.bf16.msra.mxu0 0
      %286 = vmatprep.subr.bf16.mxu0 0
      %287 = vmatpush1.bf16.msra.mxu0 0
      %288 = vmatprep.subr.bf16.mxu0 0
      %289 = vmatpush1.bf16.msra.mxu0 0
      %290 = vmatprep.subr.bf16.mxu0 0
      %291 = vmatpush1.bf16.msra.mxu0 0
      %292 = vmatprep.subr.bf16.mxu0 0
      %293 = vmatpush1.bf16.msra.mxu0 0
      %294 = vmatprep.mubr.bf16.mxu0 0
      %295 = vmatmul.mubr.bf16.gmra.mrb[0].mxu0 %v260
      %v296 = vpop.f32.mrb[0].mxu0
      %v297 = vadd.f32 %v216, %v296
      %v298 = vpop.f32.mrb[0].mxu0
      %v299 = vpop.f32.mrb[0].mxu0
      %v300 = vadd.f32 %v221, %v299
      %v301 = vpop.f32.mrb[0].mxu0
      %302 = vdwg.mxu0
      %v303 = vld [vmem:[%s3] sm:$0x1]
      %v305 = vlaneseq
      %v306 = vshrl.u32 %v305, 7
      %v307 = vsub.s32 0, %v306
      %v308 = vrot.slane %v303, %v307
      %v310 = vmul.f32 %v297, %v308
      %v311 = vmul.f32 %v300, %v308
      %312 = vadd.xlane.f32.xlu0 %v310
      %v313 = vpop.xlane.xlu0 %312
      %314 = vadd.xlane.f32.xlu0 %v311
      %v315 = vpop.xlane.xlu0 %314
      %v316 = vmul.f32 %v310, %v310
      %v317 = vmul.f32 %v311, %v311
      %318 = vadd.xlane.f32.xlu0 %v316
      %v319 = vpop.xlane.xlu0 %318
      %320 = vadd.xlane.f32.xlu0 %v317
      %v321 = vpop.xlane.xlu0 %320
      %v322 = vmul.f32 %v313, 0.015625
      %v323 = vmul.f32 %v315, 0.015625
      %v324 = vmul.f32 %v319, 0.015625
      %v325 = vmul.f32 %v321, 0.015625
      %v326 = vmul.f32 %v322, %v322
      %v327 = vmul.f32 %v323, %v323
      %v328 = vsub.f32 %v324, %v326
      %v329 = vsub.f32 %v325, %v327
      %v330 = vmax.f32 %v328, 0.0
      %v331 = vmax.f32 %v329, 0.0
      %v332 = vsub.f32 %v297, %v322
      %v333 = vsub.f32 %v300, %v323
      %v334 = vadd.f32 %v330, 1e-05
      %v335 = vadd.f32 %v331, 1e-05
      %v336 = vrsqrt.pop %v334
      %v337 = vrsqrt.pop %v335
      %v338 = vmul.f32 %v332, %v336
      %v339 = vmul.f32 %v333, %v337
      %v340 = vmax.f32 %v338, 0.0
      %v341 = vmax.f32 %v339, 0.0
      %v342 = vpack.c.bf16 %v341, %v340
      %v344 = vunpack.c.l.b16 %v342
      %v345 = vunpack.c.h.b16 %v342
      %v346 = vpack.c.b16 %v344, %v344
      %v347 = vpack.c.b16 %v345, %v345
      %350 = vst [vmem:[%s197] sm:$0xf] %v346
      %351 = vst [vmem:[%s197 + $0x4] sm:$0xf] %v347
      %p352 = scmp.lt.s32.totalorder %s15, 1
      %s353 = scalar_select %p352, %s15, 1
      %s354 = smul.addr %s353, 2
      %s355 = smul.addr %s354, 4
      %s356 = scalar_lea.vmem %s4, %s355
      // Predicated region
      $region37: #{encoder_content_reduce_forward.26} parent=35 // pred_check
        %p357 = pneg %p122
      $region38: #{encoder_content_reduce_forward.26} parent=35 // pred_check_branch
        %359 = sbr.rel (%p357) target = $region40
      $region39: #{encoder_content_reduce_forward.26} parent=35 // pred_region
        _
      $region40: #{encoder_content_reduce_forward.26} parent=35 // pred_fallthru
        _
    $region36: #{encoder_content_reduce_forward.26} parent=5 // pred_fallthru
      _
    %p360 = scmp.le.s32.totalorder 2, %s10
    // Predicated region
    $region41: #{encoder_content_reduce_forward.26} parent=5 // pred_check
      %p361 = pneg %p360
    $region42: #{encoder_content_reduce_forward.26} parent=5 // pred_check_branch
      %363 = sbr.rel (%p361) target = $region44
    $region43: #{encoder_content_reduce_forward.26} parent=5 // pred_region
      %s364 = ssub.s32 %s10, 2
      // Predicated region
      $region45: #{encoder_content_reduce_forward.26} parent=43 // pred_check
        %p365 = pneg %p128
      $region46: #{encoder_content_reduce_forward.26} parent=43 // pred_check_branch
        %367 = sbr.rel (%p365) target = $region48
      $region47: #{encoder_content_reduce_forward.26} parent=43 // pred_region
        %p368 = scmp.lt.s32.totalorder %s16, 1
        %s369 = scalar_select %p368, %s16, 1
        %s370 = smul.addr %s369, 2
        %s371 = smul.addr %s370, 4
        %s372 = scalar_lea.vmem %s4, %s371
      $region48: #{encoder_content_reduce_forward.26} parent=43 // pred_fallthru
        _
    $region44: #{encoder_content_reduce_forward.26} parent=5 // pred_fallthru
      _
  $region6: #{encoder_content_reduce_forward.26} parent=0 // loop_footer
    %s14 = sadd.s32 1, %s10
  $region7: #{encoder_content_reduce_forward.26} parent=0 // loop_footer_branch
    %9 = sbr.rel target = $region3
  $region8: #{encoder_content_reduce_forward.26} parent=0 // loop_exit
    _

// kernel: encoder_content_reduce_forward.27
$region0: #{encoder_content_reduce_forward.27}
  #allocation0 [shape = 'u32[]', space=smem, size = 0x4, offset = 0x4, fixed_abs, tag = 'smem constant byte address 0x4 - core index']
  #allocation1 [shape = 'u32[144,128]{1,0:T(1,128)}', space=vmem, size = 0x12000, scoped, tag = 'internal scratch']
  %s0 = inlined_call_operand.vmem [shape: bf16[2,144,128], index: 0, kind: input, shape index: {}]
  %s1 = inlined_call_operand.vmem [shape: bf16[32,144], index: 1, kind: input, shape index: {}]
  %s2 = inlined_call_operand.vmem [shape: f32[32,1], index: 2, kind: input, shape index: {}]
  %s3 = inlined_call_operand.vmem [shape: f32[1,128], index: 3, kind: input, shape index: {}]
  %s4 = inlined_call_operand.vmem [shape: bf16[2,32,128], index: 4, kind: output, shape index: {}]
  %s5 = sld [smem:[#allocation0]]
  $region49: #{encoder_content_reduce_forward.27} parent=0
    _
  %s7 = ssub.s32 1, %s5
  %s8 = scalar_select 0, %s7, %s5
  loop: start=0, step=1, limit=4
  $region2: #{encoder_content_reduce_forward.27} parent=0 // loop_pre_header
    _
  $region3: #{encoder_content_reduce_forward.27} parent=0 // loop_header
    %s10 = sphi 0, %s14
    %p11 = scmp.ge.s32.totalorder %s10, 4
    %s20 = sphi 0, %s22
    %s23 = sphi 0, %s20
    %s24 = sphi 0, %s23
    %s40 = sphi 0, %s24
    %s44 = sphi 0, %s44
    %s46 = sphi 0, %s44
    %s47 = sphi 0, %s46
    %s61 = sphi 0, %s47
    %s65 = sphi 0, %s65
    %s67 = sphi 0, %s65
    %s68 = sphi 0, %s67
    %s82 = sphi 0, %s68
    %s86 = sphi 0, %s86
    %s88 = sphi 0, %s86
    %s89 = sphi 0, %s88
    %s103 = sphi 0, %s89
    %s109 = sphi 0, %s111
    %s112 = sphi 0, %s109
    %s113 = sphi 0, %s112
    %s129 = sphi 0, %s113
  $region4: #{encoder_content_reduce_forward.27} parent=0 // loop_header_branch
    %13 = sbr.rel (%p11) target = $region8
  $region5: #{encoder_content_reduce_forward.27} parent=0 // loop_body
    %s15 = ssub.s32 %s10, 1
    %s16 = ssub.s32 %s10, 2
    %s17 = sadd.s32 %s10, 1
    %s18 = ssub.s32 %s10, %s17
    %p19 = scmp.eq.s32.totalorder %s18, 0
    %s21 = sadd.s32 %s20, 1
    %s22 = scalar_select %p19, %s20, %s21
    %p25 = pneg %p19
    %p26 = scmp.eq.s32.totalorder %s10, 1
    %p27 = por %p25, %p26
    %p28 = scmp.ne.s32.totalorder %s20, %s23
    %p29 = scmp.eq.s32.totalorder %s10, 0
    %p30 = por %p28, %p29
    %p31 = scmp.ne.s32.totalorder %s20, %s23
    %p32 = scmp.eq.s32.totalorder %s15, 1
    %p33 = por %p31, %p32
    %p34 = scmp.ne.s32.totalorder %s23, %s24
    %p35 = scmp.eq.s32.totalorder %s15, 0
    %p36 = por %p34, %p35
    %p37 = scmp.ne.s32.totalorder %s23, %s24
    %p38 = scmp.eq.s32.totalorder %s16, 1
    %p39 = por %p37, %p38
    %p41 = scmp.ne.s32.totalorder %s24, %s40
    %p42 = scmp.eq.s32.totalorder %s16, 0
    %p43 = por %p41, %p42
    %s45 = sadd.s32 %s44, 1
    %p48 = scmp.eq.s32.totalorder %s10, 1
    %p49 = scmp.ne.s32.totalorder %s44, %s46
    %p50 = scmp.eq.s32.totalorder %s10, 0
    %p51 = por %p49, %p50
    %p52 = scmp.ne.s32.totalorder %s44, %s46
    %p53 = scmp.eq.s32.totalorder %s15, 1
    %p54 = por %p52, %p53
    %p55 = scmp.ne.s32.totalorder %s46, %s47
    %p56 = scmp.eq.s32.totalorder %s15, 0
    %p57 = por %p55, %p56
    %p58 = scmp.ne.s32.totalorder %s46, %s47
    %p59 = scmp.eq.s32.totalorder %s16, 1
    %p60 = por %p58, %p59
    %p62 = scmp.ne.s32.totalorder %s47, %s61
    %p63 = scmp.eq.s32.totalorder %s16, 0
    %p64 = por %p62, %p63
    %s66 = sadd.s32 %s65, 1
    %p69 = scmp.eq.s32.totalorder %s10, 1
    %p70 = scmp.ne.s32.totalorder %s65, %s67
    %p71 = scmp.eq.s32.totalorder %s10, 0
    %p72 = por %p70, %p71
    %p73 = scmp.ne.s32.totalorder %s65, %s67
    %p74 = scmp.eq.s32.totalorder %s15, 1
    %p75 = por %p73, %p74
    %p76 = scmp.ne.s32.totalorder %s67, %s68
    %p77 = scmp.eq.s32.totalorder %s15, 0
    %p78 = por %p76, %p77
    %p79 = scmp.ne.s32.totalorder %s67, %s68
    %p80 = scmp.eq.s32.totalorder %s16, 1
    %p81 = por %p79, %p80
    %p83 = scmp.ne.s32.totalorder %s68, %s82
    %p84 = scmp.eq.s32.totalorder %s16, 0
    %p85 = por %p83, %p84
    %s87 = sadd.s32 %s86, 1
    %p90 = scmp.eq.s32.totalorder %s10, 1
    %p91 = scmp.ne.s32.totalorder %s86, %s88
    %p92 = scmp.eq.s32.totalorder %s10, 0
    %p93 = por %p91, %p92
    %p94 = scmp.ne.s32.totalorder %s86, %s88
    %p95 = scmp.eq.s32.totalorder %s15, 1
    %p96 = por %p94, %p95
    %p97 = scmp.ne.s32.totalorder %s88, %s89
    %p98 = scmp.eq.s32.totalorder %s15, 0
    %p99 = por %p97, %p98
    %p100 = scmp.ne.s32.totalorder %s88, %s89
    %p101 = scmp.eq.s32.totalorder %s16, 1
    %p102 = por %p100, %p101
    %p104 = scmp.ne.s32.totalorder %s89, %s103
    %p105 = scmp.eq.s32.totalorder %s16, 0
    %p106 = por %p104, %p105
    %s107 = ssub.s32 %s10, %s17
    %p108 = scmp.eq.s32.totalorder %s107, 0
    %s110 = sadd.s32 %s109, 1
    %s111 = scalar_select %p108, %s109, %s110
    %p114 = pneg %p108
    %p115 = scmp.eq.s32.totalorder %s10, 1
    %p116 = por %p114, %p115
    %p117 = scmp.ne.s32.totalorder %s109, %s112
    %p118 = scmp.eq.s32.totalorder %s10, 0
    %p119 = por %p117, %p118
    %p120 = scmp.ne.s32.totalorder %s109, %s112
    %p121 = scmp.eq.s32.totalorder %s15, 1
    %p122 = por %p120, %p121
    %p123 = scmp.ne.s32.totalorder %s112, %s113
    %p124 = scmp.eq.s32.totalorder %s15, 0
    %p125 = por %p123, %p124
    %p126 = scmp.ne.s32.totalorder %s112, %s113
    %p127 = scmp.eq.s32.totalorder %s16, 1
    %p128 = por %p126, %p127
    %p130 = scmp.ne.s32.totalorder %s113, %s129
    %p131 = scmp.eq.s32.totalorder %s16, 0
    %p132 = por %p130, %p131
    %p133 = scmp.le.s32.totalorder 1, %s10
    %p134 = scmp.lt.s32.totalorder %s10, 3
    %p135 = pnand %p133, %p134
    %p136 = pneg %p135
    // Predicated region
    $region9: #{encoder_content_reduce_forward.27} parent=5 // pred_check
      _
    $region10: #{encoder_content_reduce_forward.27} parent=5 // pred_check_branch
      %138 = sbr.rel (%p135) target = $region12
    $region11: #{encoder_content_reduce_forward.27} parent=5 // pred_region
      %s139 = ssub.s32 %s10, 1
      // Predicated region
      $region13: #{encoder_content_reduce_forward.27} parent=11 // pred_check
        %p140 = pneg %p57
      $region14: #{encoder_content_reduce_forward.27} parent=11 // pred_check_branch
        %142 = sbr.rel (%p140) target = $region16
      $region15: #{encoder_content_reduce_forward.27} parent=11 // pred_region
        _
      $region16: #{encoder_content_reduce_forward.27} parent=11 // pred_fallthru
        _
      // Predicated region
      $region17: #{encoder_content_reduce_forward.27} parent=11 // pred_check
        %p143 = pneg %p78
      $region18: #{encoder_content_reduce_forward.27} parent=11 // pred_check_branch
        %145 = sbr.rel (%p143) target = $region20
      $region19: #{encoder_content_reduce_forward.27} parent=11 // pred_region
        _
      $region20: #{encoder_content_reduce_forward.27} parent=11 // pred_fallthru
        _
      // Predicated region
      $region21: #{encoder_content_reduce_forward.27} parent=11 // pred_check
        %p146 = pneg %p99
      $region22: #{encoder_content_reduce_forward.27} parent=11 // pred_check_branch
        %148 = sbr.rel (%p146) target = $region24
      $region23: #{encoder_content_reduce_forward.27} parent=11 // pred_region
        _
      $region24: #{encoder_content_reduce_forward.27} parent=11 // pred_fallthru
        _
    $region12: #{encoder_content_reduce_forward.27} parent=5 // pred_fallthru
      _
    %p149 = scmp.lt.s32.totalorder %s10, 2
    // Predicated region
    $region25: #{encoder_content_reduce_forward.27} parent=5 // pred_check
      %p150 = pneg %p149
    $region26: #{encoder_content_reduce_forward.27} parent=5 // pred_check_branch
      %152 = sbr.rel (%p150) target = $region28
    $region27: #{encoder_content_reduce_forward.27} parent=5 // pred_region
      // Predicated region
      $region29: #{encoder_content_reduce_forward.27} parent=27 // pred_check
        %p153 = pneg %p30
      $region30: #{encoder_content_reduce_forward.27} parent=27 // pred_check_branch
        %155 = sbr.rel (%p153) target = $region32
      $region31: #{encoder_content_reduce_forward.27} parent=27 // pred_region
        %p156 = scmp.lt.s32.totalorder %s10, 1
        %s157 = scalar_select %p156, %s10, 1
        %s158 = smul.addr %s157, 18
        %s159 = smul.addr %s158, 4
        %s160 = scalar_lea.vmem %s0, %s159
      $region32: #{encoder_content_reduce_forward.27} parent=27 // pred_fallthru
        _
    $region28: #{encoder_content_reduce_forward.27} parent=5 // pred_fallthru
      _
    %p161 = scmp.le.s32.totalorder 1, %s10
    %p162 = scmp.lt.s32.totalorder %s10, 3
    %p163 = pnand %p161, %p162
    %p164 = pneg %p163
    // Predicated region
    $region33: #{encoder_content_reduce_forward.27} parent=5 // pred_check
      _
    $region34: #{encoder_content_reduce_forward.27} parent=5 // pred_check_branch
      %166 = sbr.rel (%p163) target = $region36
    $region35: #{encoder_content_reduce_forward.27} parent=5 // pred_region
      %s167 = ssub.s32 %s10, 1
      %p168 = scmp.lt.s32.totalorder %s15, 1
      %s169 = scalar_select %p168, %s15, 1
      %s170 = smul.addr %s169, 18
      %s171 = smul.addr %s170, 4
      %s172 = scalar_lea.vmem %s0, %s171
      %p173 = pneg %p36
      %p174 = pneg %p33
      %p175 = pneg %p57
      %p176 = pneg %p54
      %p177 = pneg %p78
      %p178 = pneg %p75
      %p179 = pneg %p99
      %p180 = pneg %p96
      %p181 = pneg %p125
      %p182 = pneg %p122
      %p183 = scmp.lt.s32.totalorder %s15, 1
      %s184 = scalar_select %p183, %s15, 1
      %s185 = smul.addr %s184, 4
      %s186 = smul.addr %s185, 4
      %s187 = scalar_lea.vmem %s4, %s186
      %p188 = scmp.lt.s32.totalorder %s15, 1
      %s189 = scalar_select %p188, %s15, 1
      %s190 = smul.addr %s189, 18
      %s191 = smul.addr %s190, 4
      %s192 = scalar_lea.vmem %s0, %s191
      %p193 = scmp.lt.s32.totalorder %s15, 1
      %s194 = scalar_select %p193, %s15, 1
      %s195 = smul.addr %s194, 4
      %s196 = smul.addr %s195, 4
      %s197 = scalar_lea.vmem %s4, %s196
      %v199 = vld [vmem:[%s1] sm:$0xff]
      %v200 = vld [vmem:[%s1 + $0x8] sm:$0xff]
      %v201 = vld [vmem:[%s1 + $0x10] sm:$0xff]
      %v202 = vld [vmem:[%s1 + $0x18] sm:$0xff]
      %v203 = vld [vmem:[%s192] sm:$0xf]
      %v204 = vld [vmem:[%s192 + $0x4] sm:$0xf]
      %v205 = vld [vmem:[%s192 + $0x8] sm:$0xf]
      %v206 = vld [vmem:[%s192 + $0xc] sm:$0xf]
      %v207 = vld [vmem:[%s192 + $0x10] sm:$0xf]
      %v208 = vld [vmem:[%s192 + $0x14] sm:$0xf]
      %v209 = vld [vmem:[%s192 + $0x18] sm:$0xf]
      %v210 = vld [vmem:[%s192 + $0x1c] sm:$0xf]
      %v211 = vld [vmem:[%s192 + $0x20] sm:$0xf]
      %v212 = vld [vmem:[%s192 + $0x24] sm:$0xf]
      %v213 = vld [vmem:[%s192 + $0x28] sm:$0xf]
      %v214 = vld [vmem:[%s192 + $0x2c] sm:$0xf]
      %v215 = vld [vmem:[%s192 + $0x30] sm:$0xf]
      %v216 = vld [vmem:[%s192 + $0x34] sm:$0xf]
      %v217 = vld [vmem:[%s192 + $0x38] sm:$0xf]
      %v218 = vld [vmem:[%s192 + $0x3c] sm:$0xf]
      %v219 = vld [vmem:[%s192 + $0x40] sm:$0xf]
      %v220 = vld [vmem:[%s192 + $0x44] sm:$0xf]
      %v221 = vld [vmem:[%s2] sm:$0xff]
      %v222 = vld [vmem:[%s2 + $0x8] sm:$0xff]
      %v223 = vld [vmem:[%s2 + $0x10] sm:$0xff]
      %v224 = vld [vmem:[%s2 + $0x18] sm:$0xff]
      %226 = vset.pattern.permute.xlu0 0
      %227 = vperm.xlu0 %226, %v221
      %v228 = vpop.permute.xlu0 %227
      %231 = vset.pattern.permute.xlu0 0
      %232 = vperm.xlu0 %231, %v222
      %v233 = vpop.permute.xlu0 %232
      %236 = vset.pattern.permute.xlu0 0
      %237 = vperm.xlu0 %236, %v223
      %v238 = vpop.permute.xlu0 %237
      %241 = vset.pattern.permute.xlu0 0
      %242 = vperm.xlu0 %241, %v224
      %v243 = vpop.permute.xlu0 %242
      %v249 = vunpack.c.l.b16 %v199
      %v250 = vunpack.c.h.b16 %v199
      %v251 = vunpack.c.l.b16 %v200
      %v252 = vunpack.c.h.b16 %v200
      %v253 = vunpack.c.l.b16 %v201
      %v254 = vunpack.c.h.b16 %v201
      %v255 = vunpack.c.l.b16 %v202
      %v256 = vunpack.c.h.b16 %v202
      %v257 = vpack.c.b16 %v251, %v249
      %v258 = vpack.c.b16 %v252, %v250
      %v259 = vpack.c.b16 %v255, %v253
      %v260 = vpack.c.b16 %v256, %v254
      %v281 = vunpack.c.l.b16 %v203
      %v282 = vunpack.c.l.b16 %v204
      %v283 = vunpack.c.l.b16 %v205
      %v284 = vunpack.c.l.b16 %v206
      %v285 = vunpack.c.l.b16 %v207
      %v286 = vunpack.c.l.b16 %v208
      %v287 = vunpack.c.l.b16 %v209
      %v288 = vunpack.c.l.b16 %v210
      %v289 = vunpack.c.l.b16 %v211
      %v290 = vunpack.c.l.b16 %v212
      %v291 = vunpack.c.l.b16 %v213
      %v292 = vunpack.c.l.b16 %v214
      %v293 = vunpack.c.l.b16 %v215
      %v294 = vunpack.c.l.b16 %v216
      %v295 = vunpack.c.l.b16 %v217
      %v296 = vunpack.c.l.b16 %v218
      %v297 = vunpack.c.l.b16 %v219
      %v298 = vunpack.c.l.b16 %v220
      %v299 = vpack.c.b16 %v282, %v281
      %v300 = vpack.c.b16 %v284, %v283
      %v301 = vpack.c.b16 %v286, %v285
      %v302 = vpack.c.b16 %v288, %v287
      %v303 = vpack.c.b16 %v290, %v289
      %v304 = vpack.c.b16 %v292, %v291
      %v305 = vpack.c.b16 %v294, %v293
      %v306 = vpack.c.b16 %v296, %v295
      %v307 = vpack.c.b16 %v298, %v297
      %vm317 = vcmask 130048
      %v319 = vsel %vm317, %v258, 0
      %v322 = vsel %vm317, %v260, 0
      %324 = vmatprep.subr.bf16.mxu0 0
      %325 = vmatpush1.bf16.msra.mxu0 %v299
      %326 = vmatprep.subr.bf16.mxu0 0
      %327 = vmatpush1.bf16.msra.mxu0 %v300
      %328 = vmatprep.subr.bf16.mxu0 0
      %329 = vmatpush1.bf16.msra.mxu0 %v301
      %330 = vmatprep.subr.bf16.mxu0 0
      %331 = vmatpush1.bf16.msra.mxu0 %v302
      %332 = vmatprep.subr.bf16.mxu0 0
      %333 = vmatpush1.bf16.msra.mxu0 %v303
      %334 = vmatprep.subr.bf16.mxu0 0
      %335 = vmatpush1.bf16.msra.mxu0 %v304
      %336 = vmatprep.subr.bf16.mxu0 0
      %337 = vmatpush1.bf16.msra.mxu0 %v305
      %338 = vmatprep.subr.bf16.mxu0 0
      %339 = vmatpush1.bf16.msra.mxu0 %v306
      %340 = vmatprep.subr.bf16.mxu0 0
      %341 = vmatpush1.bf16.msra.mxu0 %v307
      %342 = vmatprep.subr.bf16.mxu0 0
      %343 = vmatpush1.bf16.msra.mxu0 0
      %344 = vmatprep.subr.bf16.mxu0 0
      %345 = vmatpush1.bf16.msra.mxu0 0
      %346 = vmatprep.subr.bf16.mxu0 0
      %347 = vmatpush1.bf16.msra.mxu0 0
      %348 = vmatprep.subr.bf16.mxu0 0
      %349 = vmatpush1.bf16.msra.mxu0 0
      %350 = vmatprep.subr.bf16.mxu0 0
      %351 = vmatpush1.bf16.msra.mxu0 0
      %352 = vmatprep.subr.bf16.mxu0 0
      %353 = vmatpush1.bf16.msra.mxu0 0
      %354 = vmatprep.subr.bf16.mxu0 0
      %355 = vmatpush1.bf16.msra.mxu0 0
      %356 = vmatprep.mubr.bf16.mxu0 %v319
      %357 = vmatmul.mubr.bf16.gmra.mrb[0].mxu0 %v257
      %v358 = vpop.f32.mrb[0].mxu0
      %v359 = vadd.f32 %v228, %v358
      %v360 = vpop.f32.mrb[0].mxu0
      %v361 = vpop.f32.mrb[0].mxu0
      %v362 = vadd.f32 %v233, %v361
      %v363 = vpop.f32.mrb[0].mxu0
      %364 = vmatprep.mubr.bf16.mxu0 %v322
      %365 = vmatmul.mubr.bf16.gmra.mrb[0].mxu0 %v259
      %v366 = vpop.f32.mrb[0].mxu0
      %v367 = vadd.f32 %v238, %v366
      %v368 = vpop.f32.mrb[0].mxu0
      %v369 = vpop.f32.mrb[0].mxu0
      %v370 = vadd.f32 %v243, %v369
      %v371 = vpop.f32.mrb[0].mxu0
      %372 = vdwg.mxu0
      %v373 = vld [vmem:[%s3] sm:$0x1]
      %v375 = vlaneseq
      %v376 = vshrl.u32 %v375, 7
      %v377 = vsub.s32 0, %v376
      %v378 = vrot.slane %v373, %v377
      %v380 = vmul.f32 %v359, %v378
      %v381 = vmul.f32 %v362, %v378
      %v382 = vmul.f32 %v367, %v378
      %v383 = vmul.f32 %v370, %v378
      %384 = vadd.xlane.f32.xlu0 %v380
      %v385 = vpop.xlane.xlu0 %384
      %386 = vadd.xlane.f32.xlu0 %v381
      %v387 = vpop.xlane.xlu0 %386
      %388 = vadd.xlane.f32.xlu0 %v382
      %v389 = vpop.xlane.xlu0 %388
      %390 = vadd.xlane.f32.xlu0 %v383
      %v391 = vpop.xlane.xlu0 %390
      %v392 = vmul.f32 %v380, %v380
      %v393 = vmul.f32 %v381, %v381
      %v394 = vmul.f32 %v382, %v382
      %v395 = vmul.f32 %v383, %v383
      %396 = vadd.xlane.f32.xlu0 %v392
      %v397 = vpop.xlane.xlu0 %396
      %398 = vadd.xlane.f32.xlu0 %v393
      %v399 = vpop.xlane.xlu0 %398
      %400 = vadd.xlane.f32.xlu0 %v394
      %v401 = vpop.xlane.xlu0 %400
      %402 = vadd.xlane.f32.xlu0 %v395
      %v403 = vpop.xlane.xlu0 %402
      %v404 = vmul.f32 %v385, 0.0625
      %v405 = vmul.f32 %v387, 0.0625
      %v406 = vmul.f32 %v389, 0.0625
      %v407 = vmul.f32 %v391, 0.0625
      %v408 = vmul.f32 %v397, 0.0625
      %v409 = vmul.f32 %v399, 0.0625
      %v410 = vmul.f32 %v401, 0.0625
      %v411 = vmul.f32 %v403, 0.0625
      %v412 = vmul.f32 %v404, %v404
      %v413 = vmul.f32 %v405, %v405
      %v414 = vmul.f32 %v406, %v406
      %v415 = vmul.f32 %v407, %v407
      %v416 = vsub.f32 %v408, %v412
      %v417 = vsub.f32 %v409, %v413
      %v418 = vsub.f32 %v410, %v414
      %v419 = vsub.f32 %v411, %v415
      %v420 = vmax.f32 %v416, 0.0
      %v421 = vmax.f32 %v417, 0.0
      %v422 = vmax.f32 %v418, 0.0
      %v423 = vmax.f32 %v419, 0.0
      %v424 = vsub.f32 %v359, %v404
      %v425 = vsub.f32 %v362, %v405
      %v426 = vsub.f32 %v367, %v406
      %v427 = vsub.f32 %v370, %v407
      %v428 = vadd.f32 %v420, 1e-05
      %v429 = vadd.f32 %v421, 1e-05
      %v430 = vadd.f32 %v422, 1e-05
      %v431 = vadd.f32 %v423, 1e-05
      %v432 = vrsqrt.pop %v428
      %v433 = vrsqrt.pop %v429
      %v434 = vrsqrt.pop %v430
      %v435 = vrsqrt.pop %v431
      %v436 = vmul.f32 %v424, %v432
      %v437 = vmul.f32 %v425, %v433
      %v438 = vmul.f32 %v426, %v434
      %v439 = vmul.f32 %v427, %v435
      %v440 = vmax.f32 %v436, 0.0
      %v441 = vmax.f32 %v437, 0.0
      %v442 = vmax.f32 %v438, 0.0
      %v443 = vmax.f32 %v439, 0.0
      %v444 = vpack.c.bf16 %v441, %v440
      %v445 = vpack.c.bf16 %v443, %v442
      %v448 = vunpack.c.l.b16 %v444
      %v449 = vunpack.c.h.b16 %v444
      %v450 = vunpack.c.l.b16 %v445
      %v451 = vunpack.c.h.b16 %v445
      %v452 = vpack.c.b16 %v448, %v448
      %v453 = vpack.c.b16 %v449, %v449
      %v454 = vpack.c.b16 %v450, %v450
      %v455 = vpack.c.b16 %v451, %v451
      %460 = vst [vmem:[%s197] sm:$0xf] %v452
      %461 = vst [vmem:[%s197 + $0x4] sm:$0xf] %v453
      %462 = vst [vmem:[%s197 + $0x8] sm:$0xf] %v454
      %463 = vst [vmem:[%s197 + $0xc] sm:$0xf] %v455
      %p464 = scmp.lt.s32.totalorder %s15, 1
      %s465 = scalar_select %p464, %s15, 1
      %s466 = smul.addr %s465, 4
      %s467 = smul.addr %s466, 4
      %s468 = scalar_lea.vmem %s4, %s467
      // Predicated region
      $region37: #{encoder_content_reduce_forward.27} parent=35 // pred_check
        %p469 = pneg %p122
      $region38: #{encoder_content_reduce_forward.27} parent=35 // pred_check_branch
        %471 = sbr.rel (%p469) target = $region40
      $region39: #{encoder_content_reduce_forward.27} parent=35 // pred_region
        _
      $region40: #{encoder_content_reduce_forward.27} parent=35 // pred_fallthru
        _
    $region36: #{encoder_content_reduce_forward.27} parent=5 // pred_fallthru
      _
    %p472 = scmp.le.s32.totalorder 2, %s10
    // Predicated region
    $region41: #{encoder_content_reduce_forward.27} parent=5 // pred_check
      %p473 = pneg %p472
    $region42: #{encoder_content_reduce_forward.27} parent=5 // pred_check_branch
      %475 = sbr.rel (%p473) target = $region44
    $region43: #{encoder_content_reduce_forward.27} parent=5 // pred_region
      %s476 = ssub.s32 %s10, 2
      // Predicated region
      $region45: #{encoder_content_reduce_forward.27} parent=43 // pred_check
        %p477 = pneg %p128
      $region46: #{encoder_content_reduce_forward.27} parent=43 // pred_check_branch
        %479 = sbr.rel (%p477) target = $region48
      $region47: #{encoder_content_reduce_forward.27} parent=43 // pred_region
        %p480 = scmp.lt.s32.totalorder %s16, 1
        %s481 = scalar_select %p480, %s16, 1
        %s482 = smul.addr %s481, 4
        %s483 = smul.addr %s482, 4
        %s484 = scalar_lea.vmem %s4, %s483
      $region48: #{encoder_content_reduce_forward.27} parent=43 // pred_fallthru
        _
    $region44: #{encoder_content_reduce_forward.27} parent=5 // pred_fallthru
      _
  $region6: #{encoder_content_reduce_forward.27} parent=0 // loop_footer
    %s14 = sadd.s32 1, %s10
  $region7: #{encoder_content_reduce_forward.27} parent=0 // loop_footer_branch
    %9 = sbr.rel target = $region3
  $region8: #{encoder_content_reduce_forward.27} parent=0 // loop_exit
    _

// kernel: encoder_content_reduce_forward.28
$region0: #{encoder_content_reduce_forward.28}
  #allocation0 [shape = 'u32[]', space=smem, size = 0x4, offset = 0x4, fixed_abs, tag = 'smem constant byte address 0x4 - core index']
  #allocation1 [shape = 'u32[144,128]{1,0:T(1,128)}', space=vmem, size = 0x12000, scoped, tag = 'internal scratch']
  %s0 = inlined_call_operand.vmem [shape: bf16[2,32,256], index: 0, kind: input, shape index: {}]
  %s1 = inlined_call_operand.vmem [shape: bf16[9,32,32], index: 1, kind: input, shape index: {}]
  %s2 = inlined_call_operand.vmem [shape: f32[32,1], index: 2, kind: input, shape index: {}]
  %s3 = inlined_call_operand.vmem [shape: f32[1,128], index: 3, kind: input, shape index: {}]
  %s4 = inlined_call_operand.vmem [shape: bf16[2,32,128], index: 4, kind: output, shape index: {}]
  %s5 = sld [smem:[#allocation0]]
  $region49: #{encoder_content_reduce_forward.28} parent=0
    _
  %s7 = ssub.s32 1, %s5
  %s8 = scalar_select 0, %s7, %s5
  loop: start=0, step=1, limit=4
  $region2: #{encoder_content_reduce_forward.28} parent=0 // loop_pre_header
    _
  $region3: #{encoder_content_reduce_forward.28} parent=0 // loop_header
    %s10 = sphi 0, %s14
    %p11 = scmp.ge.s32.totalorder %s10, 4
    %s20 = sphi 0, %s22
    %s23 = sphi 0, %s20
    %s24 = sphi 0, %s23
    %s40 = sphi 0, %s24
    %s44 = sphi 0, %s44
    %s46 = sphi 0, %s44
    %s47 = sphi 0, %s46
    %s61 = sphi 0, %s47
    %s65 = sphi 0, %s65
    %s67 = sphi 0, %s65
    %s68 = sphi 0, %s67
    %s82 = sphi 0, %s68
    %s86 = sphi 0, %s86
    %s88 = sphi 0, %s86
    %s89 = sphi 0, %s88
    %s103 = sphi 0, %s89
    %s109 = sphi 0, %s111
    %s112 = sphi 0, %s109
    %s113 = sphi 0, %s112
    %s129 = sphi 0, %s113
  $region4: #{encoder_content_reduce_forward.28} parent=0 // loop_header_branch
    %13 = sbr.rel (%p11) target = $region8
  $region5: #{encoder_content_reduce_forward.28} parent=0 // loop_body
    %s15 = ssub.s32 %s10, 1
    %s16 = ssub.s32 %s10, 2
    %s17 = sadd.s32 %s10, 1
    %s18 = ssub.s32 %s10, %s17
    %p19 = scmp.eq.s32.totalorder %s18, 0
    %s21 = sadd.s32 %s20, 1
    %s22 = scalar_select %p19, %s20, %s21
    %p25 = pneg %p19
    %p26 = scmp.eq.s32.totalorder %s10, 1
    %p27 = por %p25, %p26
    %p28 = scmp.ne.s32.totalorder %s20, %s23
    %p29 = scmp.eq.s32.totalorder %s10, 0
    %p30 = por %p28, %p29
    %p31 = scmp.ne.s32.totalorder %s20, %s23
    %p32 = scmp.eq.s32.totalorder %s15, 1
    %p33 = por %p31, %p32
    %p34 = scmp.ne.s32.totalorder %s23, %s24
    %p35 = scmp.eq.s32.totalorder %s15, 0
    %p36 = por %p34, %p35
    %p37 = scmp.ne.s32.totalorder %s23, %s24
    %p38 = scmp.eq.s32.totalorder %s16, 1
    %p39 = por %p37, %p38
    %p41 = scmp.ne.s32.totalorder %s24, %s40
    %p42 = scmp.eq.s32.totalorder %s16, 0
    %p43 = por %p41, %p42
    %s45 = sadd.s32 %s44, 1
    %p48 = scmp.eq.s32.totalorder %s10, 1
    %p49 = scmp.ne.s32.totalorder %s44, %s46
    %p50 = scmp.eq.s32.totalorder %s10, 0
    %p51 = por %p49, %p50
    %p52 = scmp.ne.s32.totalorder %s44, %s46
    %p53 = scmp.eq.s32.totalorder %s15, 1
    %p54 = por %p52, %p53
    %p55 = scmp.ne.s32.totalorder %s46, %s47
    %p56 = scmp.eq.s32.totalorder %s15, 0
    %p57 = por %p55, %p56
    %p58 = scmp.ne.s32.totalorder %s46, %s47
    %p59 = scmp.eq.s32.totalorder %s16, 1
    %p60 = por %p58, %p59
    %p62 = scmp.ne.s32.totalorder %s47, %s61
    %p63 = scmp.eq.s32.totalorder %s16, 0
    %p64 = por %p62, %p63
    %s66 = sadd.s32 %s65, 1
    %p69 = scmp.eq.s32.totalorder %s10, 1
    %p70 = scmp.ne.s32.totalorder %s65, %s67
    %p71 = scmp.eq.s32.totalorder %s10, 0
    %p72 = por %p70, %p71
    %p73 = scmp.ne.s32.totalorder %s65, %s67
    %p74 = scmp.eq.s32.totalorder %s15, 1
    %p75 = por %p73, %p74
    %p76 = scmp.ne.s32.totalorder %s67, %s68
    %p77 = scmp.eq.s32.totalorder %s15, 0
    %p78 = por %p76, %p77
    %p79 = scmp.ne.s32.totalorder %s67, %s68
    %p80 = scmp.eq.s32.totalorder %s16, 1
    %p81 = por %p79, %p80
    %p83 = scmp.ne.s32.totalorder %s68, %s82
    %p84 = scmp.eq.s32.totalorder %s16, 0
    %p85 = por %p83, %p84
    %s87 = sadd.s32 %s86, 1
    %p90 = scmp.eq.s32.totalorder %s10, 1
    %p91 = scmp.ne.s32.totalorder %s86, %s88
    %p92 = scmp.eq.s32.totalorder %s10, 0
    %p93 = por %p91, %p92
    %p94 = scmp.ne.s32.totalorder %s86, %s88
    %p95 = scmp.eq.s32.totalorder %s15, 1
    %p96 = por %p94, %p95
    %p97 = scmp.ne.s32.totalorder %s88, %s89
    %p98 = scmp.eq.s32.totalorder %s15, 0
    %p99 = por %p97, %p98
    %p100 = scmp.ne.s32.totalorder %s88, %s89
    %p101 = scmp.eq.s32.totalorder %s16, 1
    %p102 = por %p100, %p101
    %p104 = scmp.ne.s32.totalorder %s89, %s103
    %p105 = scmp.eq.s32.totalorder %s16, 0
    %p106 = por %p104, %p105
    %s107 = ssub.s32 %s10, %s17
    %p108 = scmp.eq.s32.totalorder %s107, 0
    %s110 = sadd.s32 %s109, 1
    %s111 = scalar_select %p108, %s109, %s110
    %p114 = pneg %p108
    %p115 = scmp.eq.s32.totalorder %s10, 1
    %p116 = por %p114, %p115
    %p117 = scmp.ne.s32.totalorder %s109, %s112
    %p118 = scmp.eq.s32.totalorder %s10, 0
    %p119 = por %p117, %p118
    %p120 = scmp.ne.s32.totalorder %s109, %s112
    %p121 = scmp.eq.s32.totalorder %s15, 1
    %p122 = por %p120, %p121
    %p123 = scmp.ne.s32.totalorder %s112, %s113
    %p124 = scmp.eq.s32.totalorder %s15, 0
    %p125 = por %p123, %p124
    %p126 = scmp.ne.s32.totalorder %s112, %s113
    %p127 = scmp.eq.s32.totalorder %s16, 1
    %p128 = por %p126, %p127
    %p130 = scmp.ne.s32.totalorder %s113, %s129
    %p131 = scmp.eq.s32.totalorder %s16, 0
    %p132 = por %p130, %p131
    %p133 = scmp.le.s32.totalorder 1, %s10
    %p134 = scmp.lt.s32.totalorder %s10, 3
    %p135 = pnand %p133, %p134
    %p136 = pneg %p135
    // Predicated region
    $region9: #{encoder_content_reduce_forward.28} parent=5 // pred_check
      _
    $region10: #{encoder_content_reduce_forward.28} parent=5 // pred_check_branch
      %138 = sbr.rel (%p135) target = $region12
    $region11: #{encoder_content_reduce_forward.28} parent=5 // pred_region
      %s139 = ssub.s32 %s10, 1
      // Predicated region
      $region13: #{encoder_content_reduce_forward.28} parent=11 // pred_check
        %p140 = pneg %p57
      $region14: #{encoder_content_reduce_forward.28} parent=11 // pred_check_branch
        %142 = sbr.rel (%p140) target = $region16
      $region15: #{encoder_content_reduce_forward.28} parent=11 // pred_region
        _
      $region16: #{encoder_content_reduce_forward.28} parent=11 // pred_fallthru
        _
      // Predicated region
      $region17: #{encoder_content_reduce_forward.28} parent=11 // pred_check
        %p143 = pneg %p78
      $region18: #{encoder_content_reduce_forward.28} parent=11 // pred_check_branch
        %145 = sbr.rel (%p143) target = $region20
      $region19: #{encoder_content_reduce_forward.28} parent=11 // pred_region
        _
      $region20: #{encoder_content_reduce_forward.28} parent=11 // pred_fallthru
        _
      // Predicated region
      $region21: #{encoder_content_reduce_forward.28} parent=11 // pred_check
        %p146 = pneg %p99
      $region22: #{encoder_content_reduce_forward.28} parent=11 // pred_check_branch
        %148 = sbr.rel (%p146) target = $region24
      $region23: #{encoder_content_reduce_forward.28} parent=11 // pred_region
        _
      $region24: #{encoder_content_reduce_forward.28} parent=11 // pred_fallthru
        _
    $region12: #{encoder_content_reduce_forward.28} parent=5 // pred_fallthru
      _
    %p149 = scmp.lt.s32.totalorder %s10, 2
    // Predicated region
    $region25: #{encoder_content_reduce_forward.28} parent=5 // pred_check
      %p150 = pneg %p149
    $region26: #{encoder_content_reduce_forward.28} parent=5 // pred_check_branch
      %152 = sbr.rel (%p150) target = $region28
    $region27: #{encoder_content_reduce_forward.28} parent=5 // pred_region
      // Predicated region
      $region29: #{encoder_content_reduce_forward.28} parent=27 // pred_check
        %p153 = pneg %p30
      $region30: #{encoder_content_reduce_forward.28} parent=27 // pred_check_branch
        %155 = sbr.rel (%p153) target = $region32
      $region31: #{encoder_content_reduce_forward.28} parent=27 // pred_region
        %p156 = scmp.lt.s32.totalorder %s10, 1
        %s157 = scalar_select %p156, %s10, 1
        %s158 = smul.addr %s157, 8
        %s159 = smul.addr %s158, 4
        %s160 = scalar_lea.vmem %s0, %s159
      $region32: #{encoder_content_reduce_forward.28} parent=27 // pred_fallthru
        _
    $region28: #{encoder_content_reduce_forward.28} parent=5 // pred_fallthru
      _
    %p161 = scmp.le.s32.totalorder 1, %s10
    %p162 = scmp.lt.s32.totalorder %s10, 3
    %p163 = pnand %p161, %p162
    %p164 = pneg %p163
    // Predicated region
    $region33: #{encoder_content_reduce_forward.28} parent=5 // pred_check
      _
    $region34: #{encoder_content_reduce_forward.28} parent=5 // pred_check_branch
      %166 = sbr.rel (%p163) target = $region36
    $region35: #{encoder_content_reduce_forward.28} parent=5 // pred_region
      %s167 = ssub.s32 %s10, 1
      %p168 = scmp.lt.s32.totalorder %s15, 1
      %s169 = scalar_select %p168, %s15, 1
      %s170 = smul.addr %s169, 8
      %s171 = smul.addr %s170, 4
      %s172 = scalar_lea.vmem %s0, %s171
      %p173 = pneg %p36
      %p174 = pneg %p33
      %p175 = pneg %p57
      %p176 = pneg %p54
      %p177 = pneg %p78
      %p178 = pneg %p75
      %p179 = pneg %p99
      %p180 = pneg %p96
      %p181 = pneg %p125
      %p182 = pneg %p122
      %p183 = scmp.lt.s32.totalorder %s15, 1
      %s184 = scalar_select %p183, %s15, 1
      %s185 = smul.addr %s184, 4
      %s186 = smul.addr %s185, 4
      %s187 = scalar_lea.vmem %s4, %s186
      %p188 = scmp.lt.s32.totalorder %s15, 1
      %s189 = scalar_select %p188, %s15, 1
      %s190 = smul.addr %s189, 8
      %s191 = smul.addr %s190, 4
      %s192 = scalar_lea.vmem %s0, %s191
      %p193 = scmp.lt.s32.totalorder %s15, 1
      %s194 = scalar_select %p193, %s15, 1
      %s195 = smul.addr %s194, 4
      %s196 = smul.addr %s195, 4
      %s197 = scalar_lea.vmem %s4, %s196
      %v199 = vld [vmem:[%s192] sm:$0xff]
      %v200 = vld [vmem:[%s192 + $0x8] sm:$0xff]
      %v201 = vld [vmem:[%s192 + $0x10] sm:$0xff]
      %v202 = vld [vmem:[%s192 + $0x18] sm:$0xff]
      %v203 = vld [vmem:[%s1] sm:$0xf]
      %v204 = vld [vmem:[%s1 + $0x4] sm:$0xf]
      %v205 = vld [vmem:[%s1 + $0x8] sm:$0xf]
      %v206 = vld [vmem:[%s1 + $0xc] sm:$0xf]
      %s207 = scalar_lea.vmem %s1, 16
      %v208 = vld [vmem:[%s207] sm:$0xf]
      %v209 = vld [vmem:[%s207 + $0x4] sm:$0xf]
      %v210 = vld [vmem:[%s207 + $0x8] sm:$0xf]
      %v211 = vld [vmem:[%s207 + $0xc] sm:$0xf]
      %v216 = vunpack.c.l.b16 %v208
      %v217 = vunpack.c.l.b16 %v209
      %v218 = vunpack.c.l.b16 %v210
      %v219 = vunpack.c.l.b16 %v211
      %v220 = vpack.c.b16 %v217, %v216
      %v221 = vpack.c.b16 %v219, %v218
      %v226 = vunpack.c.l.b16 %v199
      %v227 = vunpack.c.h.b16 %v199
      %v228 = vunpack.c.l.b16 %v200
      %v229 = vunpack.c.h.b16 %v200
      %v230 = vunpack.c.l.b16 %v201
      %v231 = vunpack.c.h.b16 %v201
      %v232 = vunpack.c.l.b16 %v202
      %v233 = vunpack.c.h.b16 %v202
      %v234 = vpack.c.b16 %v228, %v226
      %v235 = vpack.c.b16 %v229, %v227
      %v236 = vpack.c.b16 %v232, %v230
      %v237 = vpack.c.b16 %v233, %v231
      %238 = vrot.lane.b32.xlu0 %v234, 127
      %v239 = vpop.permute.xlu0 %238
      %240 = vrot.lane.b32.xlu0 %v235, 127
      %v241 = vpop.permute.xlu0 %240
      %242 = vrot.lane.b32.xlu0 %v236, 127
      %v243 = vpop.permute.xlu0 %242
      %244 = vrot.lane.b32.xlu0 %v237, 127
      %v245 = vpop.permute.xlu0 %244
      %vm246 = vcmask 1039360
      %v247 = vsel %vm246, %v239, %v241
      %v248 = vsel %vm246, %v243, %v245
      %vm251 = vcmask 261120
      %v253 = vsel %vm251, %v220, 0
      %v256 = vsel %vm251, %v221, 0
      %258 = vmatprep.subr.bf16.mxu0 0
      %259 = vmatpush1.bf16.msra.mxu0 %v247
      %260 = vmatprep.subr.bf16.mxu0 0
      %261 = vmatpush1.bf16.msra.mxu0 %v248
      %262 = vmatprep.subr.bf16.mxu0 0
      %263 = vmatpush1.bf16.msra.mxu0 0
      %264 = vmatprep.subr.bf16.mxu0 0
      %265 = vmatpush1.bf16.msra.mxu0 0
      %266 = vmatprep.subr.bf16.mxu0 0
      %267 = vmatpush1.bf16.msra.mxu0 0
      %268 = vmatprep.subr.bf16.mxu0 0
      %269 = vmatpush1.bf16.msra.mxu0 0
      %270 = vmatprep.subr.bf16.mxu0 0
      %271 = vmatpush1.bf16.msra.mxu0 0
      %272 = vmatprep.subr.bf16.mxu0 0
      %273 = vmatpush1.bf16.msra.mxu0 0
      %274 = vmatprep.subr.bf16.mxu0 0
      %275 = vmatpush1.bf16.msra.mxu0 0
      %276 = vmatprep.subr.bf16.mxu0 0
      %277 = vmatpush1.bf16.msra.mxu0 0
      %278 = vmatprep.subr.bf16.mxu0 0
      %279 = vmatpush1.bf16.msra.mxu0 0
      %280 = vmatprep.subr.bf16.mxu0 0
      %281 = vmatpush1.bf16.msra.mxu0 0
      %282 = vmatprep.subr.bf16.mxu0 0
      %283 = vmatpush1.bf16.msra.mxu0 0
      %284 = vmatprep.subr.bf16.mxu0 0
      %285 = vmatpush1.bf16.msra.mxu0 0
      %286 = vmatprep.subr.bf16.mxu0 0
      %287 = vmatpush1.bf16.msra.mxu0 0
      %288 = vmatprep.subr.bf16.mxu0 0
      %289 = vmatpush1.bf16.msra.mxu0 0
      %290 = vmatprep.mubr.bf16.mxu0 0
      %291 = vmatmul.mubr.bf16.gmra.mrb[0].mxu0 %v253
      %v292 = vpop.f32.mrb[0].mxu0
      %v293 = vadd.f32 0.0, %v292
      %v294 = vpop.f32.mrb[0].mxu0
      %v295 = vpop.f32.mrb[0].mxu0
      %v296 = vadd.f32 0.0, %v295
      %v297 = vpop.f32.mrb[0].mxu0
      %298 = vmatprep.mubr.bf16.mxu0 0
      %299 = vmatmul.mubr.bf16.gmra.mrb[0].mxu0 %v256
      %v300 = vpop.f32.mrb[0].mxu0
      %v301 = vadd.f32 0.0, %v300
      %v302 = vpop.f32.mrb[0].mxu0
      %v303 = vpop.f32.mrb[0].mxu0
      %v304 = vadd.f32 0.0, %v303
      %v305 = vpop.f32.mrb[0].mxu0
      %306 = vdwg.mxu0
      %v311 = vunpack.c.l.b16 %v203
      %v312 = vunpack.c.l.b16 %v204
      %v313 = vunpack.c.l.b16 %v205
      %v314 = vunpack.c.l.b16 %v206
      %v315 = vpack.c.b16 %v312, %v311
      %v316 = vpack.c.b16 %v314, %v313
      %v320 = vsel %vm251, %v315, 0
      %v323 = vsel %vm251, %v316, 0
      %325 = vmatprep.subr.bf16.mxu0 0
      %326 = vmatpush1.bf16.msra.mxu0 %v234
      %327 = vmatprep.subr.bf16.mxu0 0
      %328 = vmatpush1.bf16.msra.mxu0 %v236
      %329 = vmatprep.subr.bf16.mxu0 0
      %330 = vmatpush1.bf16.msra.mxu0 0
      %331 = vmatprep.subr.bf16.mxu0 0
      %332 = vmatpush1.bf16.msra.mxu0 0
      %333 = vmatprep.subr.bf16.mxu0 0
      %334 = vmatpush1.bf16.msra.mxu0 0
      %335 = vmatprep.subr.bf16.mxu0 0
      %336 = vmatpush1.bf16.msra.mxu0 0
      %337 = vmatprep.subr.bf16.mxu0 0
      %338 = vmatpush1.bf16.msra.mxu0 0
      %339 = vmatprep.subr.bf16.mxu0 0
      %340 = vmatpush1.bf16.msra.mxu0 0
      %341 = vmatprep.subr.bf16.mxu0 0
      %342 = vmatpush1.bf16.msra.mxu0 0
      %343 = vmatprep.subr.bf16.mxu0 0
      %344 = vmatpush1.bf16.msra.mxu0 0
      %345 = vmatprep.subr.bf16.mxu0 0
      %346 = vmatpush1.bf16.msra.mxu0 0
      %347 = vmatprep.subr.bf16.mxu0 0
      %348 = vmatpush1.bf16.msra.mxu0 0
      %349 = vmatprep.subr.bf16.mxu0 0
      %350 = vmatpush1.bf16.msra.mxu0 0
      %351 = vmatprep.subr.bf16.mxu0 0
      %352 = vmatpush1.bf16.msra.mxu0 0
      %353 = vmatprep.subr.bf16.mxu0 0
      %354 = vmatpush1.bf16.msra.mxu0 0
      %355 = vmatprep.subr.bf16.mxu0 0
      %356 = vmatpush1.bf16.msra.mxu0 0
      %357 = vmatprep.mubr.bf16.mxu0 0
      %358 = vmatmul.mubr.bf16.gmra.mrb[0].mxu0 %v320
      %v359 = vpop.f32.mrb[0].mxu0
      %v360 = vadd.f32 %v293, %v359
      %v361 = vpop.f32.mrb[0].mxu0
      %v362 = vpop.f32.mrb[0].mxu0
      %v363 = vadd.f32 %v296, %v362
      %v364 = vpop.f32.mrb[0].mxu0
      %365 = vmatprep.mubr.bf16.mxu0 0
      %366 = vmatmul.mubr.bf16.gmra.mrb[0].mxu0 %v323
      %v367 = vpop.f32.mrb[0].mxu0
      %v368 = vadd.f32 %v301, %v367
      %v369 = vpop.f32.mrb[0].mxu0
      %v370 = vpop.f32.mrb[0].mxu0
      %v371 = vadd.f32 %v304, %v370
      %v372 = vpop.f32.mrb[0].mxu0
      %373 = vdwg.mxu0
      %s374 = scalar_lea.vmem %s1, 32
      %v375 = vld [vmem:[%s374] sm:$0xf]
      %v376 = vld [vmem:[%s374 + $0x4] sm:$0xf]
      %v377 = vld [vmem:[%s374 + $0x8] sm:$0xf]
      %v378 = vld [vmem:[%s374 + $0xc] sm:$0xf]
      %v383 = vunpack.c.l.b16 %v375
      %v384 = vunpack.c.l.b16 %v376
      %v385 = vunpack.c.l.b16 %v377
      %v386 = vunpack.c.l.b16 %v378
      %v387 = vpack.c.b16 %v384, %v383
      %v388 = vpack.c.b16 %v386, %v385
      %389 = vrot.lane.b32.xlu0 %v234, 126
      %v390 = vpop.permute.xlu0 %389
      %391 = vrot.lane.b32.xlu0 %v235, 126
      %v392 = vpop.permute.xlu0 %391
      %393 = vrot.lane.b32.xlu0 %v236, 126
      %v394 = vpop.permute.xlu0 %393
      %395 = vrot.lane.b32.xlu0 %v237, 126
      %v396 = vpop.permute.xlu0 %395
      %vm397 = vcmask 1031168
      %v398 = vsel %vm397, %v390, %v392
      %v399 = vsel %vm397, %v394, %v396
      %v403 = vsel %vm251, %v387, 0
      %v406 = vsel %vm251, %v388, 0
      %408 = vmatprep.subr.bf16.mxu0 0
      %409 = vmatpush1.bf16.msra.mxu0 %v398
      %410 = vmatprep.subr.bf16.mxu0 0
      %411 = vmatpush1.bf16.msra.mxu0 %v399
      %412 = vmatprep.subr.bf16.mxu0 0
      %413 = vmatpush1.bf16.msra.mxu0 0
      %414 = vmatprep.subr.bf16.mxu0 0
      %415 = vmatpush1.bf16.msra.mxu0 0
      %416 = vmatprep.subr.bf16.mxu0 0
      %417 = vmatpush1.bf16.msra.mxu0 0
      %418 = vmatprep.subr.bf16.mxu0 0
      %419 = vmatpush1.bf16.msra.mxu0 0
      %420 = vmatprep.subr.bf16.mxu0 0
      %421 = vmatpush1.bf16.msra.mxu0 0
      %422 = vmatprep.subr.bf16.mxu0 0
      %423 = vmatpush1.bf16.msra.mxu0 0
      %424 = vmatprep.subr.bf16.mxu0 0
      %425 = vmatpush1.bf16.msra.mxu0 0
      %426 = vmatprep.subr.bf16.mxu0 0
      %427 = vmatpush1.bf16.msra.mxu0 0
      %428 = vmatprep.subr.bf16.mxu0 0
      %429 = vmatpush1.bf16.msra.mxu0 0
      %430 = vmatprep.subr.bf16.mxu0 0
      %431 = vmatpush1.bf16.msra.mxu0 0
      %432 = vmatprep.subr.bf16.mxu0 0
      %433 = vmatpush1.bf16.msra.mxu0 0
      %434 = vmatprep.subr.bf16.mxu0 0
      %435 = vmatpush1.bf16.msra.mxu0 0
      %436 = vmatprep.subr.bf16.mxu0 0
      %437 = vmatpush1.bf16.msra.mxu0 0
      %438 = vmatprep.subr.bf16.mxu0 0
      %439 = vmatpush1.bf16.msra.mxu0 0
      %440 = vmatprep.mubr.bf16.mxu0 0
      %441 = vmatmul.mubr.bf16.gmra.mrb[0].mxu0 %v403
      %v442 = vpop.f32.mrb[0].mxu0
      %v443 = vadd.f32 0.0, %v442
      %v444 = vpop.f32.mrb[0].mxu0
      %v445 = vpop.f32.mrb[0].mxu0
      %v446 = vadd.f32 0.0, %v445
      %v447 = vpop.f32.mrb[0].mxu0
      %448 = vmatprep.mubr.bf16.mxu0 0
      %449 = vmatmul.mubr.bf16.gmra.mrb[0].mxu0 %v406
      %v450 = vpop.f32.mrb[0].mxu0
      %v451 = vadd.f32 0.0, %v450
      %v452 = vpop.f32.mrb[0].mxu0
      %v453 = vpop.f32.mrb[0].mxu0
      %v454 = vadd.f32 0.0, %v453
      %v455 = vpop.f32.mrb[0].mxu0
      %456 = vdwg.mxu0
      %v457 = vadd.f32 %v360, %v443
      %v458 = vadd.f32 %v363, %v446
      %v459 = vadd.f32 %v368, %v451
      %v460 = vadd.f32 %v371, %v454
      %s461 = scalar_lea.vmem %s1, 48
      %v462 = vld [vmem:[%s461] sm:$0xf]
      %v463 = vld [vmem:[%s461 + $0x4] sm:$0xf]
      %v464 = vld [vmem:[%s461 + $0x8] sm:$0xf]
      %v465 = vld [vmem:[%s461 + $0xc] sm:$0xf]
      %v470 = vunpack.c.l.b16 %v462
      %v471 = vunpack.c.l.b16 %v463
      %v472 = vunpack.c.l.b16 %v464
      %v473 = vunpack.c.l.b16 %v465
      %v474 = vpack.c.b16 %v471, %v470
      %v475 = vpack.c.b16 %v473, %v472
      %476 = vrot.lane.b32.xlu0 %v234, 122
      %v477 = vpop.permute.xlu0 %476
      %478 = vrot.lane.b32.xlu0 %v235, 122
      %v479 = vpop.permute.xlu0 %478
      %480 = vrot.lane.b32.xlu0 %v236, 122
      %v481 = vpop.permute.xlu0 %480
      %482 = vrot.lane.b32.xlu0 %v237, 122
      %v483 = vpop.permute.xlu0 %482
      %vm484 = vcmask 998400
      %v485 = vsel %vm484, %v477, %v479
      %v486 = vsel %vm484, %v481, %v483
      %v490 = vsel %vm251, %v474, 0
      %v493 = vsel %vm251, %v475, 0
      %495 = vmatprep.subr.bf16.mxu0 0
      %496 = vmatpush1.bf16.msra.mxu0 %v485
      %497 = vmatprep.subr.bf16.mxu0 0
      %498 = vmatpush1.bf16.msra.mxu0 %v486
      %499 = vmatprep.subr.bf16.mxu0 0
      %500 = vmatpush1.bf16.msra.mxu0 0
      %501 = vmatprep.subr.bf16.mxu0 0
      %502 = vmatpush1.bf16.msra.mxu0 0
      %503 = vmatprep.subr.bf16.mxu0 0
      %504 = vmatpush1.bf16.msra.mxu0 0
      %505 = vmatprep.subr.bf16.mxu0 0
      %506 = vmatpush1.bf16.msra.mxu0 0
      %507 = vmatprep.subr.bf16.mxu0 0
      %508 = vmatpush1.bf16.msra.mxu0 0
      %509 = vmatprep.subr.bf16.mxu0 0
      %510 = vmatpush1.bf16.msra.mxu0 0
      %511 = vmatprep.subr.bf16.mxu0 0
      %512 = vmatpush1.bf16.msra.mxu0 0
      %513 = vmatprep.subr.bf16.mxu0 0
      %514 = vmatpush1.bf16.msra.mxu0 0
      %515 = vmatprep.subr.bf16.mxu0 0
      %516 = vmatpush1.bf16.msra.mxu0 0
      %517 = vmatprep.subr.bf16.mxu0 0
      %518 = vmatpush1.bf16.msra.mxu0 0
      %519 = vmatprep.subr.bf16.mxu0 0
      %520 = vmatpush1.bf16.msra.mxu0 0
      %521 = vmatprep.subr.bf16.mxu0 0
      %522 = vmatpush1.bf16.msra.mxu0 0
      %523 = vmatprep.subr.bf16.mxu0 0
      %524 = vmatpush1.bf16.msra.mxu0 0
      %525 = vmatprep.subr.bf16.mxu0 0
      %526 = vmatpush1.bf16.msra.mxu0 0
      %527 = vmatprep.mubr.bf16.mxu0 0
      %528 = vmatmul.mubr.bf16.gmra.mrb[0].mxu0 %v490
      %v529 = vpop.f32.mrb[0].mxu0
      %v530 = vadd.f32 0.0, %v529
      %v531 = vpop.f32.mrb[0].mxu0
      %v532 = vpop.f32.mrb[0].mxu0
      %v533 = vadd.f32 0.0, %v532
      %v534 = vpop.f32.mrb[0].mxu0
      %535 = vmatprep.mubr.bf16.mxu0 0
      %536 = vmatmul.mubr.bf16.gmra.mrb[0].mxu0 %v493
      %v537 = vpop.f32.mrb[0].mxu0
      %v538 = vadd.f32 0.0, %v537
      %v539 = vpop.f32.mrb[0].mxu0
      %v540 = vpop.f32.mrb[0].mxu0
      %v541 = vadd.f32 0.0, %v540
      %v542 = vpop.f32.mrb[0].mxu0
      %543 = vdwg.mxu0
      %v544 = vadd.f32 %v457, %v530
      %v545 = vadd.f32 %v458, %v533
      %v546 = vadd.f32 %v459, %v538
      %v547 = vadd.f32 %v460, %v541
      %s548 = scalar_lea.vmem %s1, 64
      %v549 = vld [vmem:[%s548] sm:$0xf]
      %v550 = vld [vmem:[%s548 + $0x4] sm:$0xf]
      %v551 = vld [vmem:[%s548 + $0x8] sm:$0xf]
      %v552 = vld [vmem:[%s548 + $0xc] sm:$0xf]
      %v557 = vunpack.c.l.b16 %v549
      %v558 = vunpack.c.l.b16 %v550
      %v559 = vunpack.c.l.b16 %v551
      %v560 = vunpack.c.l.b16 %v552
      %v561 = vpack.c.b16 %v558, %v557
      %v562 = vpack.c.b16 %v560, %v559
      %563 = vrot.lane.b32.xlu0 %v234, 121
      %v564 = vpop.permute.xlu0 %563
      %565 = vrot.lane.b32.xlu0 %v235, 121
      %v566 = vpop.permute.xlu0 %565
      %567 = vrot.lane.b32.xlu0 %v236, 121
      %v568 = vpop.permute.xlu0 %567
      %569 = vrot.lane.b32.xlu0 %v237, 121
      %v570 = vpop.permute.xlu0 %569
      %vm571 = vcmask 990208
      %v572 = vsel %vm571, %v564, %v566
      %v573 = vsel %vm571, %v568, %v570
      %v577 = vsel %vm251, %v561, 0
      %v580 = vsel %vm251, %v562, 0
      %582 = vmatprep.subr.bf16.mxu0 0
      %583 = vmatpush1.bf16.msra.mxu0 %v572
      %584 = vmatprep.subr.bf16.mxu0 0
      %585 = vmatpush1.bf16.msra.mxu0 %v573
      %586 = vmatprep.subr.bf16.mxu0 0
      %587 = vmatpush1.bf16.msra.mxu0 0
      %588 = vmatprep.subr.bf16.mxu0 0
      %589 = vmatpush1.bf16.msra.mxu0 0
      %590 = vmatprep.subr.bf16.mxu0 0
      %591 = vmatpush1.bf16.msra.mxu0 0
      %592 = vmatprep.subr.bf16.mxu0 0
      %593 = vmatpush1.bf16.msra.mxu0 0
      %594 = vmatprep.subr.bf16.mxu0 0
      %595 = vmatpush1.bf16.msra.mxu0 0
      %596 = vmatprep.subr.bf16.mxu0 0
      %597 = vmatpush1.bf16.msra.mxu0 0
      %598 = vmatprep.subr.bf16.mxu0 0
      %599 = vmatpush1.bf16.msra.mxu0 0
      %600 = vmatprep.subr.bf16.mxu0 0
      %601 = vmatpush1.bf16.msra.mxu0 0
      %602 = vmatprep.subr.bf16.mxu0 0
      %603 = vmatpush1.bf16.msra.mxu0 0
      %604 = vmatprep.subr.bf16.mxu0 0
      %605 = vmatpush1.bf16.msra.mxu0 0
      %606 = vmatprep.subr.bf16.mxu0 0
      %607 = vmatpush1.bf16.msra.mxu0 0
      %608 = vmatprep.subr.bf16.mxu0 0
      %609 = vmatpush1.bf16.msra.mxu0 0
      %610 = vmatprep.subr.bf16.mxu0 0
      %611 = vmatpush1.bf16.msra.mxu0 0
      %612 = vmatprep.subr.bf16.mxu0 0
      %613 = vmatpush1.bf16.msra.mxu0 0
      %614 = vmatprep.mubr.bf16.mxu0 0
      %615 = vmatmul.mubr.bf16.gmra.mrb[0].mxu0 %v577
      %v616 = vpop.f32.mrb[0].mxu0
      %v617 = vadd.f32 0.0, %v616
      %v618 = vpop.f32.mrb[0].mxu0
      %v619 = vpop.f32.mrb[0].mxu0
      %v620 = vadd.f32 0.0, %v619
      %v621 = vpop.f32.mrb[0].mxu0
      %622 = vmatprep.mubr.bf16.mxu0 0
      %623 = vmatmul.mubr.bf16.gmra.mrb[0].mxu0 %v580
      %v624 = vpop.f32.mrb[0].mxu0
      %v625 = vadd.f32 0.0, %v624
      %v626 = vpop.f32.mrb[0].mxu0
      %v627 = vpop.f32.mrb[0].mxu0
      %v628 = vadd.f32 0.0, %v627
      %v629 = vpop.f32.mrb[0].mxu0
      %630 = vdwg.mxu0
      %v631 = vadd.f32 %v544, %v617
      %v632 = vadd.f32 %v545, %v620
      %v633 = vadd.f32 %v546, %v625
      %v634 = vadd.f32 %v547, %v628
      %s635 = scalar_lea.vmem %s1, 80
      %v636 = vld [vmem:[%s635] sm:$0xf]
      %v637 = vld [vmem:[%s635 + $0x4] sm:$0xf]
      %v638 = vld [vmem:[%s635 + $0x8] sm:$0xf]
      %v639 = vld [vmem:[%s635 + $0xc] sm:$0xf]
      %v644 = vunpack.c.l.b16 %v636
      %v645 = vunpack.c.l.b16 %v637
      %v646 = vunpack.c.l.b16 %v638
      %v647 = vunpack.c.l.b16 %v639
      %v648 = vpack.c.b16 %v645, %v644
      %v649 = vpack.c.b16 %v647, %v646
      %650 = vrot.lane.b32.xlu0 %v234, 120
      %v651 = vpop.permute.xlu0 %650
      %652 = vrot.lane.b32.xlu0 %v235, 120
      %v653 = vpop.permute.xlu0 %652
      %654 = vrot.lane.b32.xlu0 %v236, 120
      %v655 = vpop.permute.xlu0 %654
      %656 = vrot.lane.b32.xlu0 %v237, 120
      %v657 = vpop.permute.xlu0 %656
      %vm658 = vcmask 982016
      %v659 = vsel %vm658, %v651, %v653
      %v660 = vsel %vm658, %v655, %v657
      %v664 = vsel %vm251, %v648, 0
      %v667 = vsel %vm251, %v649, 0
      %669 = vmatprep.subr.bf16.mxu0 0
      %670 = vmatpush1.bf16.msra.mxu0 %v659
      %671 = vmatprep.subr.bf16.mxu0 0
      %672 = vmatpush1.bf16.msra.mxu0 %v660
      %673 = vmatprep.subr.bf16.mxu0 0
      %674 = vmatpush1.bf16.msra.mxu0 0
      %675 = vmatprep.subr.bf16.mxu0 0
      %676 = vmatpush1.bf16.msra.mxu0 0
      %677 = vmatprep.subr.bf16.mxu0 0
      %678 = vmatpush1.bf16.msra.mxu0 0
      %679 = vmatprep.subr.bf16.mxu0 0
      %680 = vmatpush1.bf16.msra.mxu0 0
      %681 = vmatprep.subr.bf16.mxu0 0
      %682 = vmatpush1.bf16.msra.mxu0 0
      %683 = vmatprep.subr.bf16.mxu0 0
      %684 = vmatpush1.bf16.msra.mxu0 0
      %685 = vmatprep.subr.bf16.mxu0 0
      %686 = vmatpush1.bf16.msra.mxu0 0
      %687 = vmatprep.subr.bf16.mxu0 0
      %688 = vmatpush1.bf16.msra.mxu0 0
      %689 = vmatprep.subr.bf16.mxu0 0
      %690 = vmatpush1.bf16.msra.mxu0 0
      %691 = vmatprep.subr.bf16.mxu0 0
      %692 = vmatpush1.bf16.msra.mxu0 0
      %693 = vmatprep.subr.bf16.mxu0 0
      %694 = vmatpush1.bf16.msra.mxu0 0
      %695 = vmatprep.subr.bf16.mxu0 0
      %696 = vmatpush1.bf16.msra.mxu0 0
      %697 = vmatprep.subr.bf16.mxu0 0
      %698 = vmatpush1.bf16.msra.mxu0 0
      %699 = vmatprep.subr.bf16.mxu0 0
      %700 = vmatpush1.bf16.msra.mxu0 0
      %701 = vmatprep.mubr.bf16.mxu0 0
      %702 = vmatmul.mubr.bf16.gmra.mrb[0].mxu0 %v664
      %v703 = vpop.f32.mrb[0].mxu0
      %v704 = vadd.f32 0.0, %v703
      %v705 = vpop.f32.mrb[0].mxu0
      %v706 = vpop.f32.mrb[0].mxu0
      %v707 = vadd.f32 0.0, %v706
      %v708 = vpop.f32.mrb[0].mxu0
      %709 = vmatprep.mubr.bf16.mxu0 0
      %710 = vmatmul.mubr.bf16.gmra.mrb[0].mxu0 %v667
      %v711 = vpop.f32.mrb[0].mxu0
      %v712 = vadd.f32 0.0, %v711
      %v713 = vpop.f32.mrb[0].mxu0
      %v714 = vpop.f32.mrb[0].mxu0
      %v715 = vadd.f32 0.0, %v714
      %v716 = vpop.f32.mrb[0].mxu0
      %717 = vdwg.mxu0
      %v718 = vadd.f32 %v631, %v704
      %v719 = vadd.f32 %v632, %v707
      %v720 = vadd.f32 %v633, %v712
      %v721 = vadd.f32 %v634, %v715
      %s722 = scalar_lea.vmem %s1, 96
      %v723 = vld [vmem:[%s722] sm:$0xf]
      %v724 = vld [vmem:[%s722 + $0x4] sm:$0xf]
      %v725 = vld [vmem:[%s722 + $0x8] sm:$0xf]
      %v726 = vld [vmem:[%s722 + $0xc] sm:$0xf]
      %v731 = vunpack.c.l.b16 %v723
      %v732 = vunpack.c.l.b16 %v724
      %v733 = vunpack.c.l.b16 %v725
      %v734 = vunpack.c.l.b16 %v726
      %v735 = vpack.c.b16 %v732, %v731
      %v736 = vpack.c.b16 %v734, %v733
      %737 = vrot.lane.b32.xlu0 %v234, 116
      %v738 = vpop.permute.xlu0 %737
      %739 = vrot.lane.b32.xlu0 %v235, 116
      %v740 = vpop.permute.xlu0 %739
      %741 = vrot.lane.b32.xlu0 %v236, 116
      %v742 = vpop.permute.xlu0 %741
      %743 = vrot.lane.b32.xlu0 %v237, 116
      %v744 = vpop.permute.xlu0 %743
      %vm745 = vcmask 949248
      %v746 = vsel %vm745, %v738, %v740
      %v747 = vsel %vm745, %v742, %v744
      %v751 = vsel %vm251, %v735, 0
      %v754 = vsel %vm251, %v736, 0
      %756 = vmatprep.subr.bf16.mxu0 0
      %757 = vmatpush1.bf16.msra.mxu0 %v746
      %758 = vmatprep.subr.bf16.mxu0 0
      %759 = vmatpush1.bf16.msra.mxu0 %v747
      %760 = vmatprep.subr.bf16.mxu0 0
      %761 = vmatpush1.bf16.msra.mxu0 0
      %762 = vmatprep.subr.bf16.mxu0 0
      %763 = vmatpush1.bf16.msra.mxu0 0
      %764 = vmatprep.subr.bf16.mxu0 0
      %765 = vmatpush1.bf16.msra.mxu0 0
      %766 = vmatprep.subr.bf16.mxu0 0
      %767 = vmatpush1.bf16.msra.mxu0 0
      %768 = vmatprep.subr.bf16.mxu0 0
      %769 = vmatpush1.bf16.msra.mxu0 0
      %770 = vmatprep.subr.bf16.mxu0 0
      %771 = vmatpush1.bf16.msra.mxu0 0
      %772 = vmatprep.subr.bf16.mxu0 0
      %773 = vmatpush1.bf16.msra.mxu0 0
      %774 = vmatprep.subr.bf16.mxu0 0
      %775 = vmatpush1.bf16.msra.mxu0 0
      %776 = vmatprep.subr.bf16.mxu0 0
      %777 = vmatpush1.bf16.msra.mxu0 0
      %778 = vmatprep.subr.bf16.mxu0 0
      %779 = vmatpush1.bf16.msra.mxu0 0
      %780 = vmatprep.subr.bf16.mxu0 0
      %781 = vmatpush1.bf16.msra.mxu0 0
      %782 = vmatprep.subr.bf16.mxu0 0
      %783 = vmatpush1.bf16.msra.mxu0 0
      %784 = vmatprep.subr.bf16.mxu0 0
      %785 = vmatpush1.bf16.msra.mxu0 0
      %786 = vmatprep.subr.bf16.mxu0 0
      %787 = vmatpush1.bf16.msra.mxu0 0
      %788 = vmatprep.mubr.bf16.mxu0 0
      %789 = vmatmul.mubr.bf16.gmra.mrb[0].mxu0 %v751
      %v790 = vpop.f32.mrb[0].mxu0
      %v791 = vadd.f32 0.0, %v790
      %v792 = vpop.f32.mrb[0].mxu0
      %v793 = vpop.f32.mrb[0].mxu0
      %v794 = vadd.f32 0.0, %v793
      %v795 = vpop.f32.mrb[0].mxu0
      %796 = vmatprep.mubr.bf16.mxu0 0
      %797 = vmatmul.mubr.bf16.gmra.mrb[0].mxu0 %v754
      %v798 = vpop.f32.mrb[0].mxu0
      %v799 = vadd.f32 0.0, %v798
      %v800 = vpop.f32.mrb[0].mxu0
      %v801 = vpop.f32.mrb[0].mxu0
      %v802 = vadd.f32 0.0, %v801
      %v803 = vpop.f32.mrb[0].mxu0
      %804 = vdwg.mxu0
      %v805 = vadd.f32 %v718, %v791
      %v806 = vadd.f32 %v719, %v794
      %v807 = vadd.f32 %v720, %v799
      %v808 = vadd.f32 %v721, %v802
      %s809 = scalar_lea.vmem %s1, 112
      %v810 = vld [vmem:[%s809] sm:$0xf]
      %v811 = vld [vmem:[%s809 + $0x4] sm:$0xf]
      %v812 = vld [vmem:[%s809 + $0x8] sm:$0xf]
      %v813 = vld [vmem:[%s809 + $0xc] sm:$0xf]
      %v818 = vunpack.c.l.b16 %v810
      %v819 = vunpack.c.l.b16 %v811
      %v820 = vunpack.c.l.b16 %v812
      %v821 = vunpack.c.l.b16 %v813
      %v822 = vpack.c.b16 %v819, %v818
      %v823 = vpack.c.b16 %v821, %v820
      %824 = vrot.lane.b32.xlu0 %v234, 115
      %v825 = vpop.permute.xlu0 %824
      %826 = vrot.lane.b32.xlu0 %v235, 115
      %v827 = vpop.permute.xlu0 %826
      %828 = vrot.lane.b32.xlu0 %v236, 115
      %v829 = vpop.permute.xlu0 %828
      %830 = vrot.lane.b32.xlu0 %v237, 115
      %v831 = vpop.permute.xlu0 %830
      %vm832 = vcmask 941056
      %v833 = vsel %vm832, %v825, %v827
      %v834 = vsel %vm832, %v829, %v831
      %v838 = vsel %vm251, %v822, 0
      %v841 = vsel %vm251, %v823, 0
      %843 = vmatprep.subr.bf16.mxu0 0
      %844 = vmatpush1.bf16.msra.mxu0 %v833
      %845 = vmatprep.subr.bf16.mxu0 0
      %846 = vmatpush1.bf16.msra.mxu0 %v834
      %847 = vmatprep.subr.bf16.mxu0 0
      %848 = vmatpush1.bf16.msra.mxu0 0
      %849 = vmatprep.subr.bf16.mxu0 0
      %850 = vmatpush1.bf16.msra.mxu0 0
      %851 = vmatprep.subr.bf16.mxu0 0
      %852 = vmatpush1.bf16.msra.mxu0 0
      %853 = vmatprep.subr.bf16.mxu0 0
      %854 = vmatpush1.bf16.msra.mxu0 0
      %855 = vmatprep.subr.bf16.mxu0 0
      %856 = vmatpush1.bf16.msra.mxu0 0
      %857 = vmatprep.subr.bf16.mxu0 0
      %858 = vmatpush1.bf16.msra.mxu0 0
      %859 = vmatprep.subr.bf16.mxu0 0
      %860 = vmatpush1.bf16.msra.mxu0 0
      %861 = vmatprep.subr.bf16.mxu0 0
      %862 = vmatpush1.bf16.msra.mxu0 0
      %863 = vmatprep.subr.bf16.mxu0 0
      %864 = vmatpush1.bf16.msra.mxu0 0
      %865 = vmatprep.subr.bf16.mxu0 0
      %866 = vmatpush1.bf16.msra.mxu0 0
      %867 = vmatprep.subr.bf16.mxu0 0
      %868 = vmatpush1.bf16.msra.mxu0 0
      %869 = vmatprep.subr.bf16.mxu0 0
      %870 = vmatpush1.bf16.msra.mxu0 0
      %871 = vmatprep.subr.bf16.mxu0 0
      %872 = vmatpush1.bf16.msra.mxu0 0
      %873 = vmatprep.subr.bf16.mxu0 0
      %874 = vmatpush1.bf16.msra.mxu0 0
      %875 = vmatprep.mubr.bf16.mxu0 0
      %876 = vmatmul.mubr.bf16.gmra.mrb[0].mxu0 %v838
      %v877 = vpop.f32.mrb[0].mxu0
      %v878 = vadd.f32 0.0, %v877
      %v879 = vpop.f32.mrb[0].mxu0
      %v880 = vpop.f32.mrb[0].mxu0
      %v881 = vadd.f32 0.0, %v880
      %v882 = vpop.f32.mrb[0].mxu0
      %883 = vmatprep.mubr.bf16.mxu0 0
      %884 = vmatmul.mubr.bf16.gmra.mrb[0].mxu0 %v841
      %v885 = vpop.f32.mrb[0].mxu0
      %v886 = vadd.f32 0.0, %v885
      %v887 = vpop.f32.mrb[0].mxu0
      %v888 = vpop.f32.mrb[0].mxu0
      %v889 = vadd.f32 0.0, %v888
      %v890 = vpop.f32.mrb[0].mxu0
      %891 = vdwg.mxu0
      %v892 = vadd.f32 %v805, %v878
      %v893 = vadd.f32 %v806, %v881
      %v894 = vadd.f32 %v807, %v886
      %v895 = vadd.f32 %v808, %v889
      %s896 = scalar_lea.vmem %s1, 128
      %v897 = vld [vmem:[%s896] sm:$0xf]
      %v898 = vld [vmem:[%s896 + $0x4] sm:$0xf]
      %v899 = vld [vmem:[%s896 + $0x8] sm:$0xf]
      %v900 = vld [vmem:[%s896 + $0xc] sm:$0xf]
      %v905 = vunpack.c.l.b16 %v897
      %v906 = vunpack.c.l.b16 %v898
      %v907 = vunpack.c.l.b16 %v899
      %v908 = vunpack.c.l.b16 %v900
      %v909 = vpack.c.b16 %v906, %v905
      %v910 = vpack.c.b16 %v908, %v907
      %911 = vrot.lane.b32.xlu0 %v234, 114
      %v912 = vpop.permute.xlu0 %911
      %913 = vrot.lane.b32.xlu0 %v235, 114
      %v914 = vpop.permute.xlu0 %913
      %915 = vrot.lane.b32.xlu0 %v236, 114
      %v916 = vpop.permute.xlu0 %915
      %917 = vrot.lane.b32.xlu0 %v237, 114
      %v918 = vpop.permute.xlu0 %917
      %vm919 = vcmask 932864
      %v920 = vsel %vm919, %v912, %v914
      %v921 = vsel %vm919, %v916, %v918
      %v925 = vsel %vm251, %v909, 0
      %v928 = vsel %vm251, %v910, 0
      %930 = vmatprep.subr.bf16.mxu0 0
      %931 = vmatpush1.bf16.msra.mxu0 %v920
      %932 = vmatprep.subr.bf16.mxu0 0
      %933 = vmatpush1.bf16.msra.mxu0 %v921
      %934 = vmatprep.subr.bf16.mxu0 0
      %935 = vmatpush1.bf16.msra.mxu0 0
      %936 = vmatprep.subr.bf16.mxu0 0
      %937 = vmatpush1.bf16.msra.mxu0 0
      %938 = vmatprep.subr.bf16.mxu0 0
      %939 = vmatpush1.bf16.msra.mxu0 0
      %940 = vmatprep.subr.bf16.mxu0 0
      %941 = vmatpush1.bf16.msra.mxu0 0
      %942 = vmatprep.subr.bf16.mxu0 0
      %943 = vmatpush1.bf16.msra.mxu0 0
      %944 = vmatprep.subr.bf16.mxu0 0
      %945 = vmatpush1.bf16.msra.mxu0 0
      %946 = vmatprep.subr.bf16.mxu0 0
      %947 = vmatpush1.bf16.msra.mxu0 0
      %948 = vmatprep.subr.bf16.mxu0 0
      %949 = vmatpush1.bf16.msra.mxu0 0
      %950 = vmatprep.subr.bf16.mxu0 0
      %951 = vmatpush1.bf16.msra.mxu0 0
      %952 = vmatprep.subr.bf16.mxu0 0
      %953 = vmatpush1.bf16.msra.mxu0 0
      %954 = vmatprep.subr.bf16.mxu0 0
      %955 = vmatpush1.bf16.msra.mxu0 0
      %956 = vmatprep.subr.bf16.mxu0 0
      %957 = vmatpush1.bf16.msra.mxu0 0
      %958 = vmatprep.subr.bf16.mxu0 0
      %959 = vmatpush1.bf16.msra.mxu0 0
      %960 = vmatprep.subr.bf16.mxu0 0
      %961 = vmatpush1.bf16.msra.mxu0 0
      %962 = vmatprep.mubr.bf16.mxu0 0
      %963 = vmatmul.mubr.bf16.gmra.mrb[0].mxu0 %v925
      %v964 = vpop.f32.mrb[0].mxu0
      %v965 = vadd.f32 0.0, %v964
      %v966 = vpop.f32.mrb[0].mxu0
      %v967 = vpop.f32.mrb[0].mxu0
      %v968 = vadd.f32 0.0, %v967
      %v969 = vpop.f32.mrb[0].mxu0
      %970 = vmatprep.mubr.bf16.mxu0 0
      %971 = vmatmul.mubr.bf16.gmra.mrb[0].mxu0 %v928
      %v972 = vpop.f32.mrb[0].mxu0
      %v973 = vadd.f32 0.0, %v972
      %v974 = vpop.f32.mrb[0].mxu0
      %v975 = vpop.f32.mrb[0].mxu0
      %v976 = vadd.f32 0.0, %v975
      %v977 = vpop.f32.mrb[0].mxu0
      %978 = vdwg.mxu0
      %v979 = vadd.f32 %v892, %v965
      %v980 = vadd.f32 %v893, %v968
      %v981 = vadd.f32 %v894, %v973
      %v982 = vadd.f32 %v895, %v976
      %v983 = vld [vmem:[%s2] sm:$0xff]
      %v984 = vld [vmem:[%s2 + $0x8] sm:$0xff]
      %v985 = vld [vmem:[%s2 + $0x10] sm:$0xff]
      %v986 = vld [vmem:[%s2 + $0x18] sm:$0xff]
      %988 = vset.pattern.permute.xlu0 0
      %989 = vperm.xlu0 %988, %v983
      %v990 = vpop.permute.xlu0 %989
      %993 = vset.pattern.permute.xlu0 0
      %994 = vperm.xlu0 %993, %v984
      %v995 = vpop.permute.xlu0 %994
      %998 = vset.pattern.permute.xlu0 0
      %999 = vperm.xlu0 %998, %v985
      %v1000 = vpop.permute.xlu0 %999
      %1003 = vset.pattern.permute.xlu0 0
      %1004 = vperm.xlu0 %1003, %v986
      %v1005 = vpop.permute.xlu0 %1004
      %v1007 = vadd.f32 %v979, %v990
      %v1008 = vadd.f32 %v980, %v995
      %v1009 = vadd.f32 %v981, %v1000
      %v1010 = vadd.f32 %v982, %v1005
      %v1011 = vld [vmem:[%s3] sm:$0x1]
      %v1013 = vlaneseq
      %v1014 = vshrl.u32 %v1013, 7
      %v1015 = vsub.s32 0, %v1014
      %v1016 = vrot.slane %v1011, %v1015
      %v1018 = vmul.f32 %v1007, %v1016
      %v1019 = vmul.f32 %v1008, %v1016
      %v1020 = vmul.f32 %v1009, %v1016
      %v1021 = vmul.f32 %v1010, %v1016
      %1022 = vadd.xlane.f32.xlu0 %v1018
      %v1023 = vpop.xlane.xlu0 %1022
      %1024 = vadd.xlane.f32.xlu0 %v1019
      %v1025 = vpop.xlane.xlu0 %1024
      %1026 = vadd.xlane.f32.xlu0 %v1020
      %v1027 = vpop.xlane.xlu0 %1026
      %1028 = vadd.xlane.f32.xlu0 %v1021
      %v1029 = vpop.xlane.xlu0 %1028
      %v1030 = vmul.f32 %v1018, %v1018
      %v1031 = vmul.f32 %v1019, %v1019
      %v1032 = vmul.f32 %v1020, %v1020
      %v1033 = vmul.f32 %v1021, %v1021
      %1034 = vadd.xlane.f32.xlu0 %v1030
      %v1035 = vpop.xlane.xlu0 %1034
      %1036 = vadd.xlane.f32.xlu0 %v1031
      %v1037 = vpop.xlane.xlu0 %1036
      %1038 = vadd.xlane.f32.xlu0 %v1032
      %v1039 = vpop.xlane.xlu0 %1038
      %1040 = vadd.xlane.f32.xlu0 %v1033
      %v1041 = vpop.xlane.xlu0 %1040
      %v1042 = vmul.f32 %v1023, 0.0625
      %v1043 = vmul.f32 %v1025, 0.0625
      %v1044 = vmul.f32 %v1027, 0.0625
      %v1045 = vmul.f32 %v1029, 0.0625
      %v1046 = vmul.f32 %v1035, 0.0625
      %v1047 = vmul.f32 %v1037, 0.0625
      %v1048 = vmul.f32 %v1039, 0.0625
      %v1049 = vmul.f32 %v1041, 0.0625
      %v1050 = vmul.f32 %v1042, %v1042
      %v1051 = vmul.f32 %v1043, %v1043
      %v1052 = vmul.f32 %v1044, %v1044
      %v1053 = vmul.f32 %v1045, %v1045
      %v1054 = vsub.f32 %v1046, %v1050
      %v1055 = vsub.f32 %v1047, %v1051
      %v1056 = vsub.f32 %v1048, %v1052
      %v1057 = vsub.f32 %v1049, %v1053
      %v1058 = vmax.f32 %v1054, 0.0
      %v1059 = vmax.f32 %v1055, 0.0
      %v1060 = vmax.f32 %v1056, 0.0
      %v1061 = vmax.f32 %v1057, 0.0
      %v1062 = vsub.f32 %v1007, %v1042
      %v1063 = vsub.f32 %v1008, %v1043
      %v1064 = vsub.f32 %v1009, %v1044
      %v1065 = vsub.f32 %v1010, %v1045
      %v1066 = vadd.f32 %v1058, 1e-05
      %v1067 = vadd.f32 %v1059, 1e-05
      %v1068 = vadd.f32 %v1060, 1e-05
      %v1069 = vadd.f32 %v1061, 1e-05
      %v1070 = vrsqrt.pop %v1066
      %v1071 = vrsqrt.pop %v1067
      %v1072 = vrsqrt.pop %v1068
      %v1073 = vrsqrt.pop %v1069
      %v1074 = vmul.f32 %v1062, %v1070
      %v1075 = vmul.f32 %v1063, %v1071
      %v1076 = vmul.f32 %v1064, %v1072
      %v1077 = vmul.f32 %v1065, %v1073
      %v1078 = vmax.f32 %v1074, 0.0
      %v1079 = vmax.f32 %v1075, 0.0
      %v1080 = vmax.f32 %v1076, 0.0
      %v1081 = vmax.f32 %v1077, 0.0
      %v1082 = vpack.c.bf16 %v1079, %v1078
      %v1083 = vpack.c.bf16 %v1081, %v1080
      %v1086 = vunpack.c.l.b16 %v1082
      %v1087 = vunpack.c.h.b16 %v1082
      %v1088 = vunpack.c.l.b16 %v1083
      %v1089 = vunpack.c.h.b16 %v1083
      %v1090 = vpack.c.b16 %v1086, %v1086
      %v1091 = vpack.c.b16 %v1087, %v1087
      %v1092 = vpack.c.b16 %v1088, %v1088
      %v1093 = vpack.c.b16 %v1089, %v1089
      %1098 = vst [vmem:[%s197] sm:$0xf] %v1090
      %1099 = vst [vmem:[%s197 + $0x4] sm:$0xf] %v1091
      %1100 = vst [vmem:[%s197 + $0x8] sm:$0xf] %v1092
      %1101 = vst [vmem:[%s197 + $0xc] sm:$0xf] %v1093
      %p1102 = scmp.lt.s32.totalorder %s15, 1
      %s1103 = scalar_select %p1102, %s15, 1
      %s1104 = smul.addr %s1103, 4
      %s1105 = smul.addr %s1104, 4
      %s1106 = scalar_lea.vmem %s4, %s1105
      // Predicated region
      $region37: #{encoder_content_reduce_forward.28} parent=35 // pred_check
        %p1107 = pneg %p122
      $region38: #{encoder_content_reduce_forward.28} parent=35 // pred_check_branch
        %1109 = sbr.rel (%p1107) target = $region40
      $region39: #{encoder_content_reduce_forward.28} parent=35 // pred_region
        _
      $region40: #{encoder_content_reduce_forward.28} parent=35 // pred_fallthru
        _
    $region36: #{encoder_content_reduce_forward.28} parent=5 // pred_fallthru
      _
    %p1110 = scmp.le.s32.totalorder 2, %s10
    // Predicated region
    $region41: #{encoder_content_reduce_forward.28} parent=5 // pred_check
      %p1111 = pneg %p1110
    $region42: #{encoder_content_reduce_forward.28} parent=5 // pred_check_branch
      %1113 = sbr.rel (%p1111) target = $region44
    $region43: #{encoder_content_reduce_forward.28} parent=5 // pred_region
      %s1114 = ssub.s32 %s10, 2
      // Predicated region
      $region45: #{encoder_content_reduce_forward.28} parent=43 // pred_check
        %p1115 = pneg %p128
      $region46: #{encoder_content_reduce_forward.28} parent=43 // pred_check_branch
        %1117 = sbr.rel (%p1115) target = $region48
      $region47: #{encoder_content_reduce_forward.28} parent=43 // pred_region
        %p1118 = scmp.lt.s32.totalorder %s16, 1
        %s1119 = scalar_select %p1118, %s16, 1
        %s1120 = smul.addr %s1119, 4
        %s1121 = smul.addr %s1120, 4
        %s1122 = scalar_lea.vmem %s4, %s1121
      $region48: #{encoder_content_reduce_forward.28} parent=43 // pred_fallthru
        _
    $region44: #{encoder_content_reduce_forward.28} parent=5 // pred_fallthru
      _
  $region6: #{encoder_content_reduce_forward.28} parent=0 // loop_footer
    %s14 = sadd.s32 1, %s10
  $region7: #{encoder_content_reduce_forward.28} parent=0 // loop_footer_branch
    %9 = sbr.rel target = $region3
  $region8: #{encoder_content_reduce_forward.28} parent=0 // loop_exit
    _

// kernel: encoder_content_reduce_forward.29
$region0: #{encoder_content_reduce_forward.29}
  #allocation0 [shape = 'u32[]', space=smem, size = 0x4, offset = 0x4, fixed_abs, tag = 'smem constant byte address 0x4 - core index']
  #allocation1 [shape = 'u32[144,128]{1,0:T(1,128)}', space=vmem, size = 0x12000, scoped, tag = 'internal scratch']
  %s0 = inlined_call_operand.vmem [shape: bf16[2,32,256], index: 0, kind: input, shape index: {}]
  %s1 = inlined_call_operand.vmem [shape: bf16[9,32,32], index: 1, kind: input, shape index: {}]
  %s2 = inlined_call_operand.vmem [shape: f32[32,1], index: 2, kind: input, shape index: {}]
  %s3 = inlined_call_operand.vmem [shape: f32[1,128], index: 3, kind: input, shape index: {}]
  %s4 = inlined_call_operand.vmem [shape: bf16[2,32,128], index: 4, kind: input, shape index: {}]
  %s5 = inlined_call_operand.vmem [shape: bf16[2,32,128], index: 5, kind: output, shape index: {}]
  %s6 = sld [smem:[#allocation0]]
  $region53: #{encoder_content_reduce_forward.29} parent=0
    _
  %s8 = ssub.s32 1, %s6
  %s9 = scalar_select 0, %s8, %s6
  loop: start=0, step=1, limit=4
  $region2: #{encoder_content_reduce_forward.29} parent=0 // loop_pre_header
    _
  $region3: #{encoder_content_reduce_forward.29} parent=0 // loop_header
    %s11 = sphi 0, %s15
    %p12 = scmp.ge.s32.totalorder %s11, 4
    %s21 = sphi 0, %s23
    %s24 = sphi 0, %s21
    %s25 = sphi 0, %s24
    %s41 = sphi 0, %s25
    %s45 = sphi 0, %s45
    %s47 = sphi 0, %s45
    %s48 = sphi 0, %s47
    %s62 = sphi 0, %s48
    %s66 = sphi 0, %s66
    %s68 = sphi 0, %s66
    %s69 = sphi 0, %s68
    %s83 = sphi 0, %s69
    %s87 = sphi 0, %s87
    %s89 = sphi 0, %s87
    %s90 = sphi 0, %s89
    %s104 = sphi 0, %s90
    %s110 = sphi 0, %s112
    %s113 = sphi 0, %s110
    %s114 = sphi 0, %s113
    %s130 = sphi 0, %s114
    %s136 = sphi 0, %s138
    %s139 = sphi 0, %s136
    %s140 = sphi 0, %s139
    %s156 = sphi 0, %s140
  $region4: #{encoder_content_reduce_forward.29} parent=0 // loop_header_branch
    %14 = sbr.rel (%p12) target = $region8
  $region5: #{encoder_content_reduce_forward.29} parent=0 // loop_body
    %s16 = ssub.s32 %s11, 1
    %s17 = ssub.s32 %s11, 2
    %s18 = sadd.s32 %s11, 1
    %s19 = ssub.s32 %s11, %s18
    %p20 = scmp.eq.s32.totalorder %s19, 0
    %s22 = sadd.s32 %s21, 1
    %s23 = scalar_select %p20, %s21, %s22
    %p26 = pneg %p20
    %p27 = scmp.eq.s32.totalorder %s11, 1
    %p28 = por %p26, %p27
    %p29 = scmp.ne.s32.totalorder %s21, %s24
    %p30 = scmp.eq.s32.totalorder %s11, 0
    %p31 = por %p29, %p30
    %p32 = scmp.ne.s32.totalorder %s21, %s24
    %p33 = scmp.eq.s32.totalorder %s16, 1
    %p34 = por %p32, %p33
    %p35 = scmp.ne.s32.totalorder %s24, %s25
    %p36 = scmp.eq.s32.totalorder %s16, 0
    %p37 = por %p35, %p36
    %p38 = scmp.ne.s32.totalorder %s24, %s25
    %p39 = scmp.eq.s32.totalorder %s17, 1
    %p40 = por %p38, %p39
    %p42 = scmp.ne.s32.totalorder %s25, %s41
    %p43 = scmp.eq.s32.totalorder %s17, 0
    %p44 = por %p42, %p43
    %s46 = sadd.s32 %s45, 1
    %p49 = scmp.eq.s32.totalorder %s11, 1
    %p50 = scmp.ne.s32.totalorder %s45, %s47
    %p51 = scmp.eq.s32.totalorder %s11, 0
    %p52 = por %p50, %p51
    %p53 = scmp.ne.s32.totalorder %s45, %s47
    %p54 = scmp.eq.s32.totalorder %s16, 1
    %p55 = por %p53, %p54
    %p56 = scmp.ne.s32.totalorder %s47, %s48
    %p57 = scmp.eq.s32.totalorder %s16, 0
    %p58 = por %p56, %p57
    %p59 = scmp.ne.s32.totalorder %s47, %s48
    %p60 = scmp.eq.s32.totalorder %s17, 1
    %p61 = por %p59, %p60
    %p63 = scmp.ne.s32.totalorder %s48, %s62
    %p64 = scmp.eq.s32.totalorder %s17, 0
    %p65 = por %p63, %p64
    %s67 = sadd.s32 %s66, 1
    %p70 = scmp.eq.s32.totalorder %s11, 1
    %p71 = scmp.ne.s32.totalorder %s66, %s68
    %p72 = scmp.eq.s32.totalorder %s11, 0
    %p73 = por %p71, %p72
    %p74 = scmp.ne.s32.totalorder %s66, %s68
    %p75 = scmp.eq.s32.totalorder %s16, 1
    %p76 = por %p74, %p75
    %p77 = scmp.ne.s32.totalorder %s68, %s69
    %p78 = scmp.eq.s32.totalorder %s16, 0
    %p79 = por %p77, %p78
    %p80 = scmp.ne.s32.totalorder %s68, %s69
    %p81 = scmp.eq.s32.totalorder %s17, 1
    %p82 = por %p80, %p81
    %p84 = scmp.ne.s32.totalorder %s69, %s83
    %p85 = scmp.eq.s32.totalorder %s17, 0
    %p86 = por %p84, %p85
    %s88 = sadd.s32 %s87, 1
    %p91 = scmp.eq.s32.totalorder %s11, 1
    %p92 = scmp.ne.s32.totalorder %s87, %s89
    %p93 = scmp.eq.s32.totalorder %s11, 0
    %p94 = por %p92, %p93
    %p95 = scmp.ne.s32.totalorder %s87, %s89
    %p96 = scmp.eq.s32.totalorder %s16, 1
    %p97 = por %p95, %p96
    %p98 = scmp.ne.s32.totalorder %s89, %s90
    %p99 = scmp.eq.s32.totalorder %s16, 0
    %p100 = por %p98, %p99
    %p101 = scmp.ne.s32.totalorder %s89, %s90
    %p102 = scmp.eq.s32.totalorder %s17, 1
    %p103 = por %p101, %p102
    %p105 = scmp.ne.s32.totalorder %s90, %s104
    %p106 = scmp.eq.s32.totalorder %s17, 0
    %p107 = por %p105, %p106
    %s108 = ssub.s32 %s11, %s18
    %p109 = scmp.eq.s32.totalorder %s108, 0
    %s111 = sadd.s32 %s110, 1
    %s112 = scalar_select %p109, %s110, %s111
    %p115 = pneg %p109
    %p116 = scmp.eq.s32.totalorder %s11, 1
    %p117 = por %p115, %p116
    %p118 = scmp.ne.s32.totalorder %s110, %s113
    %p119 = scmp.eq.s32.totalorder %s11, 0
    %p120 = por %p118, %p119
    %p121 = scmp.ne.s32.totalorder %s110, %s113
    %p122 = scmp.eq.s32.totalorder %s16, 1
    %p123 = por %p121, %p122
    %p124 = scmp.ne.s32.totalorder %s113, %s114
    %p125 = scmp.eq.s32.totalorder %s16, 0
    %p126 = por %p124, %p125
    %p127 = scmp.ne.s32.totalorder %s113, %s114
    %p128 = scmp.eq.s32.totalorder %s17, 1
    %p129 = por %p127, %p128
    %p131 = scmp.ne.s32.totalorder %s114, %s130
    %p132 = scmp.eq.s32.totalorder %s17, 0
    %p133 = por %p131, %p132
    %s134 = ssub.s32 %s11, %s18
    %p135 = scmp.eq.s32.totalorder %s134, 0
    %s137 = sadd.s32 %s136, 1
    %s138 = scalar_select %p135, %s136, %s137
    %p141 = pneg %p135
    %p142 = scmp.eq.s32.totalorder %s11, 1
    %p143 = por %p141, %p142
    %p144 = scmp.ne.s32.totalorder %s136, %s139
    %p145 = scmp.eq.s32.totalorder %s11, 0
    %p146 = por %p144, %p145
    %p147 = scmp.ne.s32.totalorder %s136, %s139
    %p148 = scmp.eq.s32.totalorder %s16, 1
    %p149 = por %p147, %p148
    %p150 = scmp.ne.s32.totalorder %s139, %s140
    %p151 = scmp.eq.s32.totalorder %s16, 0
    %p152 = por %p150, %p151
    %p153 = scmp.ne.s32.totalorder %s139, %s140
    %p154 = scmp.eq.s32.totalorder %s17, 1
    %p155 = por %p153, %p154
    %p157 = scmp.ne.s32.totalorder %s140, %s156
    %p158 = scmp.eq.s32.totalorder %s17, 0
    %p159 = por %p157, %p158
    %p160 = scmp.le.s32.totalorder 1, %s11
    %p161 = scmp.lt.s32.totalorder %s11, 3
    %p162 = pnand %p160, %p161
    %p163 = pneg %p162
    // Predicated region
    $region9: #{encoder_content_reduce_forward.29} parent=5 // pred_check
      _
    $region10: #{encoder_content_reduce_forward.29} parent=5 // pred_check_branch
      %165 = sbr.rel (%p162) target = $region12
    $region11: #{encoder_content_reduce_forward.29} parent=5 // pred_region
      %s166 = ssub.s32 %s11, 1
      // Predicated region
      $region13: #{encoder_content_reduce_forward.29} parent=11 // pred_check
        %p167 = pneg %p58
      $region14: #{encoder_content_reduce_forward.29} parent=11 // pred_check_branch
        %169 = sbr.rel (%p167) target = $region16
      $region15: #{encoder_content_reduce_forward.29} parent=11 // pred_region
        _
      $region16: #{encoder_content_reduce_forward.29} parent=11 // pred_fallthru
        _
      // Predicated region
      $region17: #{encoder_content_reduce_forward.29} parent=11 // pred_check
        %p170 = pneg %p79
      $region18: #{encoder_content_reduce_forward.29} parent=11 // pred_check_branch
        %172 = sbr.rel (%p170) target = $region20
      $region19: #{encoder_content_reduce_forward.29} parent=11 // pred_region
        _
      $region20: #{encoder_content_reduce_forward.29} parent=11 // pred_fallthru
        _
      // Predicated region
      $region21: #{encoder_content_reduce_forward.29} parent=11 // pred_check
        %p173 = pneg %p100
      $region22: #{encoder_content_reduce_forward.29} parent=11 // pred_check_branch
        %175 = sbr.rel (%p173) target = $region24
      $region23: #{encoder_content_reduce_forward.29} parent=11 // pred_region
        _
      $region24: #{encoder_content_reduce_forward.29} parent=11 // pred_fallthru
        _
    $region12: #{encoder_content_reduce_forward.29} parent=5 // pred_fallthru
      _
    %p176 = scmp.lt.s32.totalorder %s11, 2
    // Predicated region
    $region25: #{encoder_content_reduce_forward.29} parent=5 // pred_check
      %p177 = pneg %p176
    $region26: #{encoder_content_reduce_forward.29} parent=5 // pred_check_branch
      %179 = sbr.rel (%p177) target = $region28
    $region27: #{encoder_content_reduce_forward.29} parent=5 // pred_region
      // Predicated region
      $region29: #{encoder_content_reduce_forward.29} parent=27 // pred_check
        %p180 = pneg %p31
      $region30: #{encoder_content_reduce_forward.29} parent=27 // pred_check_branch
        %182 = sbr.rel (%p180) target = $region32
      $region31: #{encoder_content_reduce_forward.29} parent=27 // pred_region
        %p183 = scmp.lt.s32.totalorder %s11, 1
        %s184 = scalar_select %p183, %s11, 1
        %s185 = smul.addr %s184, 8
        %s186 = smul.addr %s185, 4
        %s187 = scalar_lea.vmem %s0, %s186
      $region32: #{encoder_content_reduce_forward.29} parent=27 // pred_fallthru
        _
      // Predicated region
      $region33: #{encoder_content_reduce_forward.29} parent=27 // pred_check
        %p188 = pneg %p120
      $region34: #{encoder_content_reduce_forward.29} parent=27 // pred_check_branch
        %190 = sbr.rel (%p188) target = $region36
      $region35: #{encoder_content_reduce_forward.29} parent=27 // pred_region
        %p191 = scmp.lt.s32.totalorder %s11, 1
        %s192 = scalar_select %p191, %s11, 1
        %s193 = smul.addr %s192, 4
        %s194 = smul.addr %s193, 4
        %s195 = scalar_lea.vmem %s4, %s194
      $region36: #{encoder_content_reduce_forward.29} parent=27 // pred_fallthru
        _
    $region28: #{encoder_content_reduce_forward.29} parent=5 // pred_fallthru
      _
    %p196 = scmp.le.s32.totalorder 1, %s11
    %p197 = scmp.lt.s32.totalorder %s11, 3
    %p198 = pnand %p196, %p197
    %p199 = pneg %p198
    // Predicated region
    $region37: #{encoder_content_reduce_forward.29} parent=5 // pred_check
      _
    $region38: #{encoder_content_reduce_forward.29} parent=5 // pred_check_branch
      %201 = sbr.rel (%p198) target = $region40
    $region39: #{encoder_content_reduce_forward.29} parent=5 // pred_region
      %s202 = ssub.s32 %s11, 1
      %p203 = scmp.lt.s32.totalorder %s16, 1
      %s204 = scalar_select %p203, %s16, 1
      %s205 = smul.addr %s204, 8
      %s206 = smul.addr %s205, 4
      %s207 = scalar_lea.vmem %s0, %s206
      %p208 = pneg %p37
      %p209 = pneg %p34
      %p210 = pneg %p58
      %p211 = pneg %p55
      %p212 = pneg %p79
      %p213 = pneg %p76
      %p214 = pneg %p100
      %p215 = pneg %p97
      %p216 = scmp.lt.s32.totalorder %s16, 1
      %s217 = scalar_select %p216, %s16, 1
      %s218 = smul.addr %s217, 4
      %s219 = smul.addr %s218, 4
      %s220 = scalar_lea.vmem %s4, %s219
      %p221 = pneg %p126
      %p222 = pneg %p123
      %p223 = pneg %p152
      %p224 = pneg %p149
      %p225 = scmp.lt.s32.totalorder %s16, 1
      %s226 = scalar_select %p225, %s16, 1
      %s227 = smul.addr %s226, 4
      %s228 = smul.addr %s227, 4
      %s229 = scalar_lea.vmem %s5, %s228
      %p230 = scmp.lt.s32.totalorder %s16, 1
      %s231 = scalar_select %p230, %s16, 1
      %s232 = smul.addr %s231, 8
      %s233 = smul.addr %s232, 4
      %s234 = scalar_lea.vmem %s0, %s233
      %p235 = scmp.lt.s32.totalorder %s16, 1
      %s236 = scalar_select %p235, %s16, 1
      %s237 = smul.addr %s236, 4
      %s238 = smul.addr %s237, 4
      %s239 = scalar_lea.vmem %s4, %s238
      %p240 = scmp.lt.s32.totalorder %s16, 1
      %s241 = scalar_select %p240, %s16, 1
      %s242 = smul.addr %s241, 4
      %s243 = smul.addr %s242, 4
      %s244 = scalar_lea.vmem %s5, %s243
      %v246 = vld [vmem:[%s234] sm:$0xff]
      %v247 = vld [vmem:[%s234 + $0x8] sm:$0xff]
      %v248 = vld [vmem:[%s234 + $0x10] sm:$0xff]
      %v249 = vld [vmem:[%s234 + $0x18] sm:$0xff]
      %v250 = vld [vmem:[%s1] sm:$0xf]
      %v251 = vld [vmem:[%s1 + $0x4] sm:$0xf]
      %v252 = vld [vmem:[%s1 + $0x8] sm:$0xf]
      %v253 = vld [vmem:[%s1 + $0xc] sm:$0xf]
      %s254 = scalar_lea.vmem %s1, 16
      %v255 = vld [vmem:[%s254] sm:$0xf]
      %v256 = vld [vmem:[%s254 + $0x4] sm:$0xf]
      %v257 = vld [vmem:[%s254 + $0x8] sm:$0xf]
      %v258 = vld [vmem:[%s254 + $0xc] sm:$0xf]
      %v263 = vunpack.c.l.b16 %v255
      %v264 = vunpack.c.l.b16 %v256
      %v265 = vunpack.c.l.b16 %v257
      %v266 = vunpack.c.l.b16 %v258
      %v267 = vpack.c.b16 %v264, %v263
      %v268 = vpack.c.b16 %v266, %v265
      %v273 = vunpack.c.l.b16 %v246
      %v274 = vunpack.c.h.b16 %v246
      %v275 = vunpack.c.l.b16 %v247
      %v276 = vunpack.c.h.b16 %v247
      %v277 = vunpack.c.l.b16 %v248
      %v278 = vunpack.c.h.b16 %v248
      %v279 = vunpack.c.l.b16 %v249
      %v280 = vunpack.c.h.b16 %v249
      %v281 = vpack.c.b16 %v275, %v273
      %v282 = vpack.c.b16 %v276, %v274
      %v283 = vpack.c.b16 %v279, %v277
      %v284 = vpack.c.b16 %v280, %v278
      %285 = vrot.lane.b32.xlu0 %v281, 127
      %v286 = vpop.permute.xlu0 %285
      %287 = vrot.lane.b32.xlu0 %v282, 127
      %v288 = vpop.permute.xlu0 %287
      %289 = vrot.lane.b32.xlu0 %v283, 127
      %v290 = vpop.permute.xlu0 %289
      %291 = vrot.lane.b32.xlu0 %v284, 127
      %v292 = vpop.permute.xlu0 %291
      %vm293 = vcmask 1039360
      %v294 = vsel %vm293, %v286, %v288
      %v295 = vsel %vm293, %v290, %v292
      %vm298 = vcmask 261120
      %v300 = vsel %vm298, %v267, 0
      %v303 = vsel %vm298, %v268, 0
      %305 = vmatprep.subr.bf16.mxu0 0
      %306 = vmatpush1.bf16.msra.mxu0 %v294
      %307 = vmatprep.subr.bf16.mxu0 0
      %308 = vmatpush1.bf16.msra.mxu0 %v295
      %309 = vmatprep.subr.bf16.mxu0 0
      %310 = vmatpush1.bf16.msra.mxu0 0
      %311 = vmatprep.subr.bf16.mxu0 0
      %312 = vmatpush1.bf16.msra.mxu0 0
      %313 = vmatprep.subr.bf16.mxu0 0
      %314 = vmatpush1.bf16.msra.mxu0 0
      %315 = vmatprep.subr.bf16.mxu0 0
      %316 = vmatpush1.bf16.msra.mxu0 0
      %317 = vmatprep.subr.bf16.mxu0 0
      %318 = vmatpush1.bf16.msra.mxu0 0
      %319 = vmatprep.subr.bf16.mxu0 0
      %320 = vmatpush1.bf16.msra.mxu0 0
      %321 = vmatprep.subr.bf16.mxu0 0
      %322 = vmatpush1.bf16.msra.mxu0 0
      %323 = vmatprep.subr.bf16.mxu0 0
      %324 = vmatpush1.bf16.msra.mxu0 0
      %325 = vmatprep.subr.bf16.mxu0 0
      %326 = vmatpush1.bf16.msra.mxu0 0
      %327 = vmatprep.subr.bf16.mxu0 0
      %328 = vmatpush1.bf16.msra.mxu0 0
      %329 = vmatprep.subr.bf16.mxu0 0
      %330 = vmatpush1.bf16.msra.mxu0 0
      %331 = vmatprep.subr.bf16.mxu0 0
      %332 = vmatpush1.bf16.msra.mxu0 0
      %333 = vmatprep.subr.bf16.mxu0 0
      %334 = vmatpush1.bf16.msra.mxu0 0
      %335 = vmatprep.subr.bf16.mxu0 0
      %336 = vmatpush1.bf16.msra.mxu0 0
      %337 = vmatprep.mubr.bf16.mxu0 0
      %338 = vmatmul.mubr.bf16.gmra.mrb[0].mxu0 %v300
      %v339 = vpop.f32.mrb[0].mxu0
      %v340 = vadd.f32 0.0, %v339
      %v341 = vpop.f32.mrb[0].mxu0
      %v342 = vpop.f32.mrb[0].mxu0
      %v343 = vadd.f32 0.0, %v342
      %v344 = vpop.f32.mrb[0].mxu0
      %345 = vmatprep.mubr.bf16.mxu0 0
      %346 = vmatmul.mubr.bf16.gmra.mrb[0].mxu0 %v303
      %v347 = vpop.f32.mrb[0].mxu0
      %v348 = vadd.f32 0.0, %v347
      %v349 = vpop.f32.mrb[0].mxu0
      %v350 = vpop.f32.mrb[0].mxu0
      %v351 = vadd.f32 0.0, %v350
      %v352 = vpop.f32.mrb[0].mxu0
      %353 = vdwg.mxu0
      %v358 = vunpack.c.l.b16 %v250
      %v359 = vunpack.c.l.b16 %v251
      %v360 = vunpack.c.l.b16 %v252
      %v361 = vunpack.c.l.b16 %v253
      %v362 = vpack.c.b16 %v359, %v358
      %v363 = vpack.c.b16 %v361, %v360
      %v367 = vsel %vm298, %v362, 0
      %v370 = vsel %vm298, %v363, 0
      %372 = vmatprep.subr.bf16.mxu0 0
      %373 = vmatpush1.bf16.msra.mxu0 %v281
      %374 = vmatprep.subr.bf16.mxu0 0
      %375 = vmatpush1.bf16.msra.mxu0 %v283
      %376 = vmatprep.subr.bf16.mxu0 0
      %377 = vmatpush1.bf16.msra.mxu0 0
      %378 = vmatprep.subr.bf16.mxu0 0
      %379 = vmatpush1.bf16.msra.mxu0 0
      %380 = vmatprep.subr.bf16.mxu0 0
      %381 = vmatpush1.bf16.msra.mxu0 0
      %382 = vmatprep.subr.bf16.mxu0 0
      %383 = vmatpush1.bf16.msra.mxu0 0
      %384 = vmatprep.subr.bf16.mxu0 0
      %385 = vmatpush1.bf16.msra.mxu0 0
      %386 = vmatprep.subr.bf16.mxu0 0
      %387 = vmatpush1.bf16.msra.mxu0 0
      %388 = vmatprep.subr.bf16.mxu0 0
      %389 = vmatpush1.bf16.msra.mxu0 0
      %390 = vmatprep.subr.bf16.mxu0 0
      %391 = vmatpush1.bf16.msra.mxu0 0
      %392 = vmatprep.subr.bf16.mxu0 0
      %393 = vmatpush1.bf16.msra.mxu0 0
      %394 = vmatprep.subr.bf16.mxu0 0
      %395 = vmatpush1.bf16.msra.mxu0 0
      %396 = vmatprep.subr.bf16.mxu0 0
      %397 = vmatpush1.bf16.msra.mxu0 0
      %398 = vmatprep.subr.bf16.mxu0 0
      %399 = vmatpush1.bf16.msra.mxu0 0
      %400 = vmatprep.subr.bf16.mxu0 0
      %401 = vmatpush1.bf16.msra.mxu0 0
      %402 = vmatprep.subr.bf16.mxu0 0
      %403 = vmatpush1.bf16.msra.mxu0 0
      %404 = vmatprep.mubr.bf16.mxu0 0
      %405 = vmatmul.mubr.bf16.gmra.mrb[0].mxu0 %v367
      %v406 = vpop.f32.mrb[0].mxu0
      %v407 = vadd.f32 %v340, %v406
      %v408 = vpop.f32.mrb[0].mxu0
      %v409 = vpop.f32.mrb[0].mxu0
      %v410 = vadd.f32 %v343, %v409
      %v411 = vpop.f32.mrb[0].mxu0
      %412 = vmatprep.mubr.bf16.mxu0 0
      %413 = vmatmul.mubr.bf16.gmra.mrb[0].mxu0 %v370
      %v414 = vpop.f32.mrb[0].mxu0
      %v415 = vadd.f32 %v348, %v414
      %v416 = vpop.f32.mrb[0].mxu0
      %v417 = vpop.f32.mrb[0].mxu0
      %v418 = vadd.f32 %v351, %v417
      %v419 = vpop.f32.mrb[0].mxu0
      %420 = vdwg.mxu0
      %s421 = scalar_lea.vmem %s1, 32
      %v422 = vld [vmem:[%s421] sm:$0xf]
      %v423 = vld [vmem:[%s421 + $0x4] sm:$0xf]
      %v424 = vld [vmem:[%s421 + $0x8] sm:$0xf]
      %v425 = vld [vmem:[%s421 + $0xc] sm:$0xf]
      %v430 = vunpack.c.l.b16 %v422
      %v431 = vunpack.c.l.b16 %v423
      %v432 = vunpack.c.l.b16 %v424
      %v433 = vunpack.c.l.b16 %v425
      %v434 = vpack.c.b16 %v431, %v430
      %v435 = vpack.c.b16 %v433, %v432
      %436 = vrot.lane.b32.xlu0 %v281, 126
      %v437 = vpop.permute.xlu0 %436
      %438 = vrot.lane.b32.xlu0 %v282, 126
      %v439 = vpop.permute.xlu0 %438
      %440 = vrot.lane.b32.xlu0 %v283, 126
      %v441 = vpop.permute.xlu0 %440
      %442 = vrot.lane.b32.xlu0 %v284, 126
      %v443 = vpop.permute.xlu0 %442
      %vm444 = vcmask 1031168
      %v445 = vsel %vm444, %v437, %v439
      %v446 = vsel %vm444, %v441, %v443
      %v450 = vsel %vm298, %v434, 0
      %v453 = vsel %vm298, %v435, 0
      %455 = vmatprep.subr.bf16.mxu0 0
      %456 = vmatpush1.bf16.msra.mxu0 %v445
      %457 = vmatprep.subr.bf16.mxu0 0
      %458 = vmatpush1.bf16.msra.mxu0 %v446
      %459 = vmatprep.subr.bf16.mxu0 0
      %460 = vmatpush1.bf16.msra.mxu0 0
      %461 = vmatprep.subr.bf16.mxu0 0
      %462 = vmatpush1.bf16.msra.mxu0 0
      %463 = vmatprep.subr.bf16.mxu0 0
      %464 = vmatpush1.bf16.msra.mxu0 0
      %465 = vmatprep.subr.bf16.mxu0 0
      %466 = vmatpush1.bf16.msra.mxu0 0
      %467 = vmatprep.subr.bf16.mxu0 0
      %468 = vmatpush1.bf16.msra.mxu0 0
      %469 = vmatprep.subr.bf16.mxu0 0
      %470 = vmatpush1.bf16.msra.mxu0 0
      %471 = vmatprep.subr.bf16.mxu0 0
      %472 = vmatpush1.bf16.msra.mxu0 0
      %473 = vmatprep.subr.bf16.mxu0 0
      %474 = vmatpush1.bf16.msra.mxu0 0
      %475 = vmatprep.subr.bf16.mxu0 0
      %476 = vmatpush1.bf16.msra.mxu0 0
      %477 = vmatprep.subr.bf16.mxu0 0
      %478 = vmatpush1.bf16.msra.mxu0 0
      %479 = vmatprep.subr.bf16.mxu0 0
      %480 = vmatpush1.bf16.msra.mxu0 0
      %481 = vmatprep.subr.bf16.mxu0 0
      %482 = vmatpush1.bf16.msra.mxu0 0
      %483 = vmatprep.subr.bf16.mxu0 0
      %484 = vmatpush1.bf16.msra.mxu0 0
      %485 = vmatprep.subr.bf16.mxu0 0
      %486 = vmatpush1.bf16.msra.mxu0 0
      %487 = vmatprep.mubr.bf16.mxu0 0
      %488 = vmatmul.mubr.bf16.gmra.mrb[0].mxu0 %v450
      %v489 = vpop.f32.mrb[0].mxu0
      %v490 = vadd.f32 0.0, %v489
      %v491 = vpop.f32.mrb[0].mxu0
      %v492 = vpop.f32.mrb[0].mxu0
      %v493 = vadd.f32 0.0, %v492
      %v494 = vpop.f32.mrb[0].mxu0
      %495 = vmatprep.mubr.bf16.mxu0 0
      %496 = vmatmul.mubr.bf16.gmra.mrb[0].mxu0 %v453
      %v497 = vpop.f32.mrb[0].mxu0
      %v498 = vadd.f32 0.0, %v497
      %v499 = vpop.f32.mrb[0].mxu0
      %v500 = vpop.f32.mrb[0].mxu0
      %v501 = vadd.f32 0.0, %v500
      %v502 = vpop.f32.mrb[0].mxu0
      %503 = vdwg.mxu0
      %v504 = vadd.f32 %v407, %v490
      %v505 = vadd.f32 %v410, %v493
      %v506 = vadd.f32 %v415, %v498
      %v507 = vadd.f32 %v418, %v501
      %s508 = scalar_lea.vmem %s1, 48
      %v509 = vld [vmem:[%s508] sm:$0xf]
      %v510 = vld [vmem:[%s508 + $0x4] sm:$0xf]
      %v511 = vld [vmem:[%s508 + $0x8] sm:$0xf]
      %v512 = vld [vmem:[%s508 + $0xc] sm:$0xf]
      %v517 = vunpack.c.l.b16 %v509
      %v518 = vunpack.c.l.b16 %v510
      %v519 = vunpack.c.l.b16 %v511
      %v520 = vunpack.c.l.b16 %v512
      %v521 = vpack.c.b16 %v518, %v517
      %v522 = vpack.c.b16 %v520, %v519
      %523 = vrot.lane.b32.xlu0 %v281, 122
      %v524 = vpop.permute.xlu0 %523
      %525 = vrot.lane.b32.xlu0 %v282, 122
      %v526 = vpop.permute.xlu0 %525
      %527 = vrot.lane.b32.xlu0 %v283, 122
      %v528 = vpop.permute.xlu0 %527
      %529 = vrot.lane.b32.xlu0 %v284, 122
      %v530 = vpop.permute.xlu0 %529
      %vm531 = vcmask 998400
      %v532 = vsel %vm531, %v524, %v526
      %v533 = vsel %vm531, %v528, %v530
      %v537 = vsel %vm298, %v521, 0
      %v540 = vsel %vm298, %v522, 0
      %542 = vmatprep.subr.bf16.mxu0 0
      %543 = vmatpush1.bf16.msra.mxu0 %v532
      %544 = vmatprep.subr.bf16.mxu0 0
      %545 = vmatpush1.bf16.msra.mxu0 %v533
      %546 = vmatprep.subr.bf16.mxu0 0
      %547 = vmatpush1.bf16.msra.mxu0 0
      %548 = vmatprep.subr.bf16.mxu0 0
      %549 = vmatpush1.bf16.msra.mxu0 0
      %550 = vmatprep.subr.bf16.mxu0 0
      %551 = vmatpush1.bf16.msra.mxu0 0
      %552 = vmatprep.subr.bf16.mxu0 0
      %553 = vmatpush1.bf16.msra.mxu0 0
      %554 = vmatprep.subr.bf16.mxu0 0
      %555 = vmatpush1.bf16.msra.mxu0 0
      %556 = vmatprep.subr.bf16.mxu0 0
      %557 = vmatpush1.bf16.msra.mxu0 0
      %558 = vmatprep.subr.bf16.mxu0 0
      %559 = vmatpush1.bf16.msra.mxu0 0
      %560 = vmatprep.subr.bf16.mxu0 0
      %561 = vmatpush1.bf16.msra.mxu0 0
      %562 = vmatprep.subr.bf16.mxu0 0
      %563 = vmatpush1.bf16.msra.mxu0 0
      %564 = vmatprep.subr.bf16.mxu0 0
      %565 = vmatpush1.bf16.msra.mxu0 0
      %566 = vmatprep.subr.bf16.mxu0 0
      %567 = vmatpush1.bf16.msra.mxu0 0
      %568 = vmatprep.subr.bf16.mxu0 0
      %569 = vmatpush1.bf16.msra.mxu0 0
      %570 = vmatprep.subr.bf16.mxu0 0
      %571 = vmatpush1.bf16.msra.mxu0 0
      %572 = vmatprep.subr.bf16.mxu0 0
      %573 = vmatpush1.bf16.msra.mxu0 0
      %574 = vmatprep.mubr.bf16.mxu0 0
      %575 = vmatmul.mubr.bf16.gmra.mrb[0].mxu0 %v537
      %v576 = vpop.f32.mrb[0].mxu0
      %v577 = vadd.f32 0.0, %v576
      %v578 = vpop.f32.mrb[0].mxu0
      %v579 = vpop.f32.mrb[0].mxu0
      %v580 = vadd.f32 0.0, %v579
      %v581 = vpop.f32.mrb[0].mxu0
      %582 = vmatprep.mubr.bf16.mxu0 0
      %583 = vmatmul.mubr.bf16.gmra.mrb[0].mxu0 %v540
      %v584 = vpop.f32.mrb[0].mxu0
      %v585 = vadd.f32 0.0, %v584
      %v586 = vpop.f32.mrb[0].mxu0
      %v587 = vpop.f32.mrb[0].mxu0
      %v588 = vadd.f32 0.0, %v587
      %v589 = vpop.f32.mrb[0].mxu0
      %590 = vdwg.mxu0
      %v591 = vadd.f32 %v504, %v577
      %v592 = vadd.f32 %v505, %v580
      %v593 = vadd.f32 %v506, %v585
      %v594 = vadd.f32 %v507, %v588
      %s595 = scalar_lea.vmem %s1, 64
      %v596 = vld [vmem:[%s595] sm:$0xf]
      %v597 = vld [vmem:[%s595 + $0x4] sm:$0xf]
      %v598 = vld [vmem:[%s595 + $0x8] sm:$0xf]
      %v599 = vld [vmem:[%s595 + $0xc] sm:$0xf]
      %v604 = vunpack.c.l.b16 %v596
      %v605 = vunpack.c.l.b16 %v597
      %v606 = vunpack.c.l.b16 %v598
      %v607 = vunpack.c.l.b16 %v599
      %v608 = vpack.c.b16 %v605, %v604
      %v609 = vpack.c.b16 %v607, %v606
      %610 = vrot.lane.b32.xlu0 %v281, 121
      %v611 = vpop.permute.xlu0 %610
      %612 = vrot.lane.b32.xlu0 %v282, 121
      %v613 = vpop.permute.xlu0 %612
      %614 = vrot.lane.b32.xlu0 %v283, 121
      %v615 = vpop.permute.xlu0 %614
      %616 = vrot.lane.b32.xlu0 %v284, 121
      %v617 = vpop.permute.xlu0 %616
      %vm618 = vcmask 990208
      %v619 = vsel %vm618, %v611, %v613
      %v620 = vsel %vm618, %v615, %v617
      %v624 = vsel %vm298, %v608, 0
      %v627 = vsel %vm298, %v609, 0
      %629 = vmatprep.subr.bf16.mxu0 0
      %630 = vmatpush1.bf16.msra.mxu0 %v619
      %631 = vmatprep.subr.bf16.mxu0 0
      %632 = vmatpush1.bf16.msra.mxu0 %v620
      %633 = vmatprep.subr.bf16.mxu0 0
      %634 = vmatpush1.bf16.msra.mxu0 0
      %635 = vmatprep.subr.bf16.mxu0 0
      %636 = vmatpush1.bf16.msra.mxu0 0
      %637 = vmatprep.subr.bf16.mxu0 0
      %638 = vmatpush1.bf16.msra.mxu0 0
      %639 = vmatprep.subr.bf16.mxu0 0
      %640 = vmatpush1.bf16.msra.mxu0 0
      %641 = vmatprep.subr.bf16.mxu0 0
      %642 = vmatpush1.bf16.msra.mxu0 0
      %643 = vmatprep.subr.bf16.mxu0 0
      %644 = vmatpush1.bf16.msra.mxu0 0
      %645 = vmatprep.subr.bf16.mxu0 0
      %646 = vmatpush1.bf16.msra.mxu0 0
      %647 = vmatprep.subr.bf16.mxu0 0
      %648 = vmatpush1.bf16.msra.mxu0 0
      %649 = vmatprep.subr.bf16.mxu0 0
      %650 = vmatpush1.bf16.msra.mxu0 0
      %651 = vmatprep.subr.bf16.mxu0 0
      %652 = vmatpush1.bf16.msra.mxu0 0
      %653 = vmatprep.subr.bf16.mxu0 0
      %654 = vmatpush1.bf16.msra.mxu0 0
      %655 = vmatprep.subr.bf16.mxu0 0
      %656 = vmatpush1.bf16.msra.mxu0 0
      %657 = vmatprep.subr.bf16.mxu0 0
      %658 = vmatpush1.bf16.msra.mxu0 0
      %659 = vmatprep.subr.bf16.mxu0 0
      %660 = vmatpush1.bf16.msra.mxu0 0
      %661 = vmatprep.mubr.bf16.mxu0 0
      %662 = vmatmul.mubr.bf16.gmra.mrb[0].mxu0 %v624
      %v663 = vpop.f32.mrb[0].mxu0
      %v664 = vadd.f32 0.0, %v663
      %v665 = vpop.f32.mrb[0].mxu0
      %v666 = vpop.f32.mrb[0].mxu0
      %v667 = vadd.f32 0.0, %v666
      %v668 = vpop.f32.mrb[0].mxu0
      %669 = vmatprep.mubr.bf16.mxu0 0
      %670 = vmatmul.mubr.bf16.gmra.mrb[0].mxu0 %v627
      %v671 = vpop.f32.mrb[0].mxu0
      %v672 = vadd.f32 0.0, %v671
      %v673 = vpop.f32.mrb[0].mxu0
      %v674 = vpop.f32.mrb[0].mxu0
      %v675 = vadd.f32 0.0, %v674
      %v676 = vpop.f32.mrb[0].mxu0
      %677 = vdwg.mxu0
      %v678 = vadd.f32 %v591, %v664
      %v679 = vadd.f32 %v592, %v667
      %v680 = vadd.f32 %v593, %v672
      %v681 = vadd.f32 %v594, %v675
      %s682 = scalar_lea.vmem %s1, 80
      %v683 = vld [vmem:[%s682] sm:$0xf]
      %v684 = vld [vmem:[%s682 + $0x4] sm:$0xf]
      %v685 = vld [vmem:[%s682 + $0x8] sm:$0xf]
      %v686 = vld [vmem:[%s682 + $0xc] sm:$0xf]
      %v691 = vunpack.c.l.b16 %v683
      %v692 = vunpack.c.l.b16 %v684
      %v693 = vunpack.c.l.b16 %v685
      %v694 = vunpack.c.l.b16 %v686
      %v695 = vpack.c.b16 %v692, %v691
      %v696 = vpack.c.b16 %v694, %v693
      %697 = vrot.lane.b32.xlu0 %v281, 120
      %v698 = vpop.permute.xlu0 %697
      %699 = vrot.lane.b32.xlu0 %v282, 120
      %v700 = vpop.permute.xlu0 %699
      %701 = vrot.lane.b32.xlu0 %v283, 120
      %v702 = vpop.permute.xlu0 %701
      %703 = vrot.lane.b32.xlu0 %v284, 120
      %v704 = vpop.permute.xlu0 %703
      %vm705 = vcmask 982016
      %v706 = vsel %vm705, %v698, %v700
      %v707 = vsel %vm705, %v702, %v704
      %v711 = vsel %vm298, %v695, 0
      %v714 = vsel %vm298, %v696, 0
      %716 = vmatprep.subr.bf16.mxu0 0
      %717 = vmatpush1.bf16.msra.mxu0 %v706
      %718 = vmatprep.subr.bf16.mxu0 0
      %719 = vmatpush1.bf16.msra.mxu0 %v707
      %720 = vmatprep.subr.bf16.mxu0 0
      %721 = vmatpush1.bf16.msra.mxu0 0
      %722 = vmatprep.subr.bf16.mxu0 0
      %723 = vmatpush1.bf16.msra.mxu0 0
      %724 = vmatprep.subr.bf16.mxu0 0
      %725 = vmatpush1.bf16.msra.mxu0 0
      %726 = vmatprep.subr.bf16.mxu0 0
      %727 = vmatpush1.bf16.msra.mxu0 0
      %728 = vmatprep.subr.bf16.mxu0 0
      %729 = vmatpush1.bf16.msra.mxu0 0
      %730 = vmatprep.subr.bf16.mxu0 0
      %731 = vmatpush1.bf16.msra.mxu0 0
      %732 = vmatprep.subr.bf16.mxu0 0
      %733 = vmatpush1.bf16.msra.mxu0 0
      %734 = vmatprep.subr.bf16.mxu0 0
      %735 = vmatpush1.bf16.msra.mxu0 0
      %736 = vmatprep.subr.bf16.mxu0 0
      %737 = vmatpush1.bf16.msra.mxu0 0
      %738 = vmatprep.subr.bf16.mxu0 0
      %739 = vmatpush1.bf16.msra.mxu0 0
      %740 = vmatprep.subr.bf16.mxu0 0
      %741 = vmatpush1.bf16.msra.mxu0 0
      %742 = vmatprep.subr.bf16.mxu0 0
      %743 = vmatpush1.bf16.msra.mxu0 0
      %744 = vmatprep.subr.bf16.mxu0 0
      %745 = vmatpush1.bf16.msra.mxu0 0
      %746 = vmatprep.subr.bf16.mxu0 0
      %747 = vmatpush1.bf16.msra.mxu0 0
      %748 = vmatprep.mubr.bf16.mxu0 0
      %749 = vmatmul.mubr.bf16.gmra.mrb[0].mxu0 %v711
      %v750 = vpop.f32.mrb[0].mxu0
      %v751 = vadd.f32 0.0, %v750
      %v752 = vpop.f32.mrb[0].mxu0
      %v753 = vpop.f32.mrb[0].mxu0
      %v754 = vadd.f32 0.0, %v753
      %v755 = vpop.f32.mrb[0].mxu0
      %756 = vmatprep.mubr.bf16.mxu0 0
      %757 = vmatmul.mubr.bf16.gmra.mrb[0].mxu0 %v714
      %v758 = vpop.f32.mrb[0].mxu0
      %v759 = vadd.f32 0.0, %v758
      %v760 = vpop.f32.mrb[0].mxu0
      %v761 = vpop.f32.mrb[0].mxu0
      %v762 = vadd.f32 0.0, %v761
      %v763 = vpop.f32.mrb[0].mxu0
      %764 = vdwg.mxu0
      %v765 = vadd.f32 %v678, %v751
      %v766 = vadd.f32 %v679, %v754
      %v767 = vadd.f32 %v680, %v759
      %v768 = vadd.f32 %v681, %v762
      %s769 = scalar_lea.vmem %s1, 96
      %v770 = vld [vmem:[%s769] sm:$0xf]
      %v771 = vld [vmem:[%s769 + $0x4] sm:$0xf]
      %v772 = vld [vmem:[%s769 + $0x8] sm:$0xf]
      %v773 = vld [vmem:[%s769 + $0xc] sm:$0xf]
      %v778 = vunpack.c.l.b16 %v770
      %v779 = vunpack.c.l.b16 %v771
      %v780 = vunpack.c.l.b16 %v772
      %v781 = vunpack.c.l.b16 %v773
      %v782 = vpack.c.b16 %v779, %v778
      %v783 = vpack.c.b16 %v781, %v780
      %784 = vrot.lane.b32.xlu0 %v281, 116
      %v785 = vpop.permute.xlu0 %784
      %786 = vrot.lane.b32.xlu0 %v282, 116
      %v787 = vpop.permute.xlu0 %786
      %788 = vrot.lane.b32.xlu0 %v283, 116
      %v789 = vpop.permute.xlu0 %788
      %790 = vrot.lane.b32.xlu0 %v284, 116
      %v791 = vpop.permute.xlu0 %790
      %vm792 = vcmask 949248
      %v793 = vsel %vm792, %v785, %v787
      %v794 = vsel %vm792, %v789, %v791
      %v798 = vsel %vm298, %v782, 0
      %v801 = vsel %vm298, %v783, 0
      %803 = vmatprep.subr.bf16.mxu0 0
      %804 = vmatpush1.bf16.msra.mxu0 %v793
      %805 = vmatprep.subr.bf16.mxu0 0
      %806 = vmatpush1.bf16.msra.mxu0 %v794
      %807 = vmatprep.subr.bf16.mxu0 0
      %808 = vmatpush1.bf16.msra.mxu0 0
      %809 = vmatprep.subr.bf16.mxu0 0
      %810 = vmatpush1.bf16.msra.mxu0 0
      %811 = vmatprep.subr.bf16.mxu0 0
      %812 = vmatpush1.bf16.msra.mxu0 0
      %813 = vmatprep.subr.bf16.mxu0 0
      %814 = vmatpush1.bf16.msra.mxu0 0
      %815 = vmatprep.subr.bf16.mxu0 0
      %816 = vmatpush1.bf16.msra.mxu0 0
      %817 = vmatprep.subr.bf16.mxu0 0
      %818 = vmatpush1.bf16.msra.mxu0 0
      %819 = vmatprep.subr.bf16.mxu0 0
      %820 = vmatpush1.bf16.msra.mxu0 0
      %821 = vmatprep.subr.bf16.mxu0 0
      %822 = vmatpush1.bf16.msra.mxu0 0
      %823 = vmatprep.subr.bf16.mxu0 0
      %824 = vmatpush1.bf16.msra.mxu0 0
      %825 = vmatprep.subr.bf16.mxu0 0
      %826 = vmatpush1.bf16.msra.mxu0 0
      %827 = vmatprep.subr.bf16.mxu0 0
      %828 = vmatpush1.bf16.msra.mxu0 0
      %829 = vmatprep.subr.bf16.mxu0 0
      %830 = vmatpush1.bf16.msra.mxu0 0
      %831 = vmatprep.subr.bf16.mxu0 0
      %832 = vmatpush1.bf16.msra.mxu0 0
      %833 = vmatprep.subr.bf16.mxu0 0
      %834 = vmatpush1.bf16.msra.mxu0 0
      %835 = vmatprep.mubr.bf16.mxu0 0
      %836 = vmatmul.mubr.bf16.gmra.mrb[0].mxu0 %v798
      %v837 = vpop.f32.mrb[0].mxu0
      %v838 = vadd.f32 0.0, %v837
      %v839 = vpop.f32.mrb[0].mxu0
      %v840 = vpop.f32.mrb[0].mxu0
      %v841 = vadd.f32 0.0, %v840
      %v842 = vpop.f32.mrb[0].mxu0
      %843 = vmatprep.mubr.bf16.mxu0 0
      %844 = vmatmul.mubr.bf16.gmra.mrb[0].mxu0 %v801
      %v845 = vpop.f32.mrb[0].mxu0
      %v846 = vadd.f32 0.0, %v845
      %v847 = vpop.f32.mrb[0].mxu0
      %v848 = vpop.f32.mrb[0].mxu0
      %v849 = vadd.f32 0.0, %v848
      %v850 = vpop.f32.mrb[0].mxu0
      %851 = vdwg.mxu0
      %v852 = vadd.f32 %v765, %v838
      %v853 = vadd.f32 %v766, %v841
      %v854 = vadd.f32 %v767, %v846
      %v855 = vadd.f32 %v768, %v849
      %s856 = scalar_lea.vmem %s1, 112
      %v857 = vld [vmem:[%s856] sm:$0xf]
      %v858 = vld [vmem:[%s856 + $0x4] sm:$0xf]
      %v859 = vld [vmem:[%s856 + $0x8] sm:$0xf]
      %v860 = vld [vmem:[%s856 + $0xc] sm:$0xf]
      %v865 = vunpack.c.l.b16 %v857
      %v866 = vunpack.c.l.b16 %v858
      %v867 = vunpack.c.l.b16 %v859
      %v868 = vunpack.c.l.b16 %v860
      %v869 = vpack.c.b16 %v866, %v865
      %v870 = vpack.c.b16 %v868, %v867
      %871 = vrot.lane.b32.xlu0 %v281, 115
      %v872 = vpop.permute.xlu0 %871
      %873 = vrot.lane.b32.xlu0 %v282, 115
      %v874 = vpop.permute.xlu0 %873
      %875 = vrot.lane.b32.xlu0 %v283, 115
      %v876 = vpop.permute.xlu0 %875
      %877 = vrot.lane.b32.xlu0 %v284, 115
      %v878 = vpop.permute.xlu0 %877
      %vm879 = vcmask 941056
      %v880 = vsel %vm879, %v872, %v874
      %v881 = vsel %vm879, %v876, %v878
      %v885 = vsel %vm298, %v869, 0
      %v888 = vsel %vm298, %v870, 0
      %890 = vmatprep.subr.bf16.mxu0 0
      %891 = vmatpush1.bf16.msra.mxu0 %v880
      %892 = vmatprep.subr.bf16.mxu0 0
      %893 = vmatpush1.bf16.msra.mxu0 %v881
      %894 = vmatprep.subr.bf16.mxu0 0
      %895 = vmatpush1.bf16.msra.mxu0 0
      %896 = vmatprep.subr.bf16.mxu0 0
      %897 = vmatpush1.bf16.msra.mxu0 0
      %898 = vmatprep.subr.bf16.mxu0 0
      %899 = vmatpush1.bf16.msra.mxu0 0
      %900 = vmatprep.subr.bf16.mxu0 0
      %901 = vmatpush1.bf16.msra.mxu0 0
      %902 = vmatprep.subr.bf16.mxu0 0
      %903 = vmatpush1.bf16.msra.mxu0 0
      %904 = vmatprep.subr.bf16.mxu0 0
      %905 = vmatpush1.bf16.msra.mxu0 0
      %906 = vmatprep.subr.bf16.mxu0 0
      %907 = vmatpush1.bf16.msra.mxu0 0
      %908 = vmatprep.subr.bf16.mxu0 0
      %909 = vmatpush1.bf16.msra.mxu0 0
      %910 = vmatprep.subr.bf16.mxu0 0
      %911 = vmatpush1.bf16.msra.mxu0 0
      %912 = vmatprep.subr.bf16.mxu0 0
      %913 = vmatpush1.bf16.msra.mxu0 0
      %914 = vmatprep.subr.bf16.mxu0 0
      %915 = vmatpush1.bf16.msra.mxu0 0
      %916 = vmatprep.subr.bf16.mxu0 0
      %917 = vmatpush1.bf16.msra.mxu0 0
      %918 = vmatprep.subr.bf16.mxu0 0
      %919 = vmatpush1.bf16.msra.mxu0 0
      %920 = vmatprep.subr.bf16.mxu0 0
      %921 = vmatpush1.bf16.msra.mxu0 0
      %922 = vmatprep.mubr.bf16.mxu0 0
      %923 = vmatmul.mubr.bf16.gmra.mrb[0].mxu0 %v885
      %v924 = vpop.f32.mrb[0].mxu0
      %v925 = vadd.f32 0.0, %v924
      %v926 = vpop.f32.mrb[0].mxu0
      %v927 = vpop.f32.mrb[0].mxu0
      %v928 = vadd.f32 0.0, %v927
      %v929 = vpop.f32.mrb[0].mxu0
      %930 = vmatprep.mubr.bf16.mxu0 0
      %931 = vmatmul.mubr.bf16.gmra.mrb[0].mxu0 %v888
      %v932 = vpop.f32.mrb[0].mxu0
      %v933 = vadd.f32 0.0, %v932
      %v934 = vpop.f32.mrb[0].mxu0
      %v935 = vpop.f32.mrb[0].mxu0
      %v936 = vadd.f32 0.0, %v935
      %v937 = vpop.f32.mrb[0].mxu0
      %938 = vdwg.mxu0
      %v939 = vadd.f32 %v852, %v925
      %v940 = vadd.f32 %v853, %v928
      %v941 = vadd.f32 %v854, %v933
      %v942 = vadd.f32 %v855, %v936
      %s943 = scalar_lea.vmem %s1, 128
      %v944 = vld [vmem:[%s943] sm:$0xf]
      %v945 = vld [vmem:[%s943 + $0x4] sm:$0xf]
      %v946 = vld [vmem:[%s943 + $0x8] sm:$0xf]
      %v947 = vld [vmem:[%s943 + $0xc] sm:$0xf]
      %v952 = vunpack.c.l.b16 %v944
      %v953 = vunpack.c.l.b16 %v945
      %v954 = vunpack.c.l.b16 %v946
      %v955 = vunpack.c.l.b16 %v947
      %v956 = vpack.c.b16 %v953, %v952
      %v957 = vpack.c.b16 %v955, %v954
      %958 = vrot.lane.b32.xlu0 %v281, 114
      %v959 = vpop.permute.xlu0 %958
      %960 = vrot.lane.b32.xlu0 %v282, 114
      %v961 = vpop.permute.xlu0 %960
      %962 = vrot.lane.b32.xlu0 %v283, 114
      %v963 = vpop.permute.xlu0 %962
      %964 = vrot.lane.b32.xlu0 %v284, 114
      %v965 = vpop.permute.xlu0 %964
      %vm966 = vcmask 932864
      %v967 = vsel %vm966, %v959, %v961
      %v968 = vsel %vm966, %v963, %v965
      %v972 = vsel %vm298, %v956, 0
      %v975 = vsel %vm298, %v957, 0
      %977 = vmatprep.subr.bf16.mxu0 0
      %978 = vmatpush1.bf16.msra.mxu0 %v967
      %979 = vmatprep.subr.bf16.mxu0 0
      %980 = vmatpush1.bf16.msra.mxu0 %v968
      %981 = vmatprep.subr.bf16.mxu0 0
      %982 = vmatpush1.bf16.msra.mxu0 0
      %983 = vmatprep.subr.bf16.mxu0 0
      %984 = vmatpush1.bf16.msra.mxu0 0
      %985 = vmatprep.subr.bf16.mxu0 0
      %986 = vmatpush1.bf16.msra.mxu0 0
      %987 = vmatprep.subr.bf16.mxu0 0
      %988 = vmatpush1.bf16.msra.mxu0 0
      %989 = vmatprep.subr.bf16.mxu0 0
      %990 = vmatpush1.bf16.msra.mxu0 0
      %991 = vmatprep.subr.bf16.mxu0 0
      %992 = vmatpush1.bf16.msra.mxu0 0
      %993 = vmatprep.subr.bf16.mxu0 0
      %994 = vmatpush1.bf16.msra.mxu0 0
      %995 = vmatprep.subr.bf16.mxu0 0
      %996 = vmatpush1.bf16.msra.mxu0 0
      %997 = vmatprep.subr.bf16.mxu0 0
      %998 = vmatpush1.bf16.msra.mxu0 0
      %999 = vmatprep.subr.bf16.mxu0 0
      %1000 = vmatpush1.bf16.msra.mxu0 0
      %1001 = vmatprep.subr.bf16.mxu0 0
      %1002 = vmatpush1.bf16.msra.mxu0 0
      %1003 = vmatprep.subr.bf16.mxu0 0
      %1004 = vmatpush1.bf16.msra.mxu0 0
      %1005 = vmatprep.subr.bf16.mxu0 0
      %1006 = vmatpush1.bf16.msra.mxu0 0
      %1007 = vmatprep.subr.bf16.mxu0 0
      %1008 = vmatpush1.bf16.msra.mxu0 0
      %1009 = vmatprep.mubr.bf16.mxu0 0
      %1010 = vmatmul.mubr.bf16.gmra.mrb[0].mxu0 %v972
      %v1011 = vpop.f32.mrb[0].mxu0
      %v1012 = vadd.f32 0.0, %v1011
      %v1013 = vpop.f32.mrb[0].mxu0
      %v1014 = vpop.f32.mrb[0].mxu0
      %v1015 = vadd.f32 0.0, %v1014
      %v1016 = vpop.f32.mrb[0].mxu0
      %1017 = vmatprep.mubr.bf16.mxu0 0
      %1018 = vmatmul.mubr.bf16.gmra.mrb[0].mxu0 %v975
      %v1019 = vpop.f32.mrb[0].mxu0
      %v1020 = vadd.f32 0.0, %v1019
      %v1021 = vpop.f32.mrb[0].mxu0
      %v1022 = vpop.f32.mrb[0].mxu0
      %v1023 = vadd.f32 0.0, %v1022
      %v1024 = vpop.f32.mrb[0].mxu0
      %1025 = vdwg.mxu0
      %v1026 = vadd.f32 %v939, %v1012
      %v1027 = vadd.f32 %v940, %v1015
      %v1028 = vadd.f32 %v941, %v1020
      %v1029 = vadd.f32 %v942, %v1023
      %v1030 = vld [vmem:[%s2] sm:$0xff]
      %v1031 = vld [vmem:[%s2 + $0x8] sm:$0xff]
      %v1032 = vld [vmem:[%s2 + $0x10] sm:$0xff]
      %v1033 = vld [vmem:[%s2 + $0x18] sm:$0xff]
      %1035 = vset.pattern.permute.xlu0 0
      %1036 = vperm.xlu0 %1035, %v1030
      %v1037 = vpop.permute.xlu0 %1036
      %1040 = vset.pattern.permute.xlu0 0
      %1041 = vperm.xlu0 %1040, %v1031
      %v1042 = vpop.permute.xlu0 %1041
      %1045 = vset.pattern.permute.xlu0 0
      %1046 = vperm.xlu0 %1045, %v1032
      %v1047 = vpop.permute.xlu0 %1046
      %1050 = vset.pattern.permute.xlu0 0
      %1051 = vperm.xlu0 %1050, %v1033
      %v1052 = vpop.permute.xlu0 %1051
      %v1054 = vadd.f32 %v1026, %v1037
      %v1055 = vadd.f32 %v1027, %v1042
      %v1056 = vadd.f32 %v1028, %v1047
      %v1057 = vadd.f32 %v1029, %v1052
      %v1058 = vld [vmem:[%s3] sm:$0x1]
      %v1060 = vlaneseq
      %v1061 = vshrl.u32 %v1060, 7
      %v1062 = vsub.s32 0, %v1061
      %v1063 = vrot.slane %v1058, %v1062
      %v1065 = vmul.f32 %v1054, %v1063
      %v1066 = vmul.f32 %v1055, %v1063
      %v1067 = vmul.f32 %v1056, %v1063
      %v1068 = vmul.f32 %v1057, %v1063
      %1069 = vadd.xlane.f32.xlu0 %v1065
      %v1070 = vpop.xlane.xlu0 %1069
      %1071 = vadd.xlane.f32.xlu0 %v1066
      %v1072 = vpop.xlane.xlu0 %1071
      %1073 = vadd.xlane.f32.xlu0 %v1067
      %v1074 = vpop.xlane.xlu0 %1073
      %1075 = vadd.xlane.f32.xlu0 %v1068
      %v1076 = vpop.xlane.xlu0 %1075
      %v1077 = vmul.f32 %v1065, %v1065
      %v1078 = vmul.f32 %v1066, %v1066
      %v1079 = vmul.f32 %v1067, %v1067
      %v1080 = vmul.f32 %v1068, %v1068
      %1081 = vadd.xlane.f32.xlu0 %v1077
      %v1082 = vpop.xlane.xlu0 %1081
      %1083 = vadd.xlane.f32.xlu0 %v1078
      %v1084 = vpop.xlane.xlu0 %1083
      %1085 = vadd.xlane.f32.xlu0 %v1079
      %v1086 = vpop.xlane.xlu0 %1085
      %1087 = vadd.xlane.f32.xlu0 %v1080
      %v1088 = vpop.xlane.xlu0 %1087
      %v1089 = vmul.f32 %v1070, 0.0625
      %v1090 = vmul.f32 %v1072, 0.0625
      %v1091 = vmul.f32 %v1074, 0.0625
      %v1092 = vmul.f32 %v1076, 0.0625
      %v1093 = vmul.f32 %v1082, 0.0625
      %v1094 = vmul.f32 %v1084, 0.0625
      %v1095 = vmul.f32 %v1086, 0.0625
      %v1096 = vmul.f32 %v1088, 0.0625
      %v1097 = vmul.f32 %v1089, %v1089
      %v1098 = vmul.f32 %v1090, %v1090
      %v1099 = vmul.f32 %v1091, %v1091
      %v1100 = vmul.f32 %v1092, %v1092
      %v1101 = vsub.f32 %v1093, %v1097
      %v1102 = vsub.f32 %v1094, %v1098
      %v1103 = vsub.f32 %v1095, %v1099
      %v1104 = vsub.f32 %v1096, %v1100
      %v1105 = vmax.f32 %v1101, 0.0
      %v1106 = vmax.f32 %v1102, 0.0
      %v1107 = vmax.f32 %v1103, 0.0
      %v1108 = vmax.f32 %v1104, 0.0
      %v1109 = vsub.f32 %v1054, %v1089
      %v1110 = vsub.f32 %v1055, %v1090
      %v1111 = vsub.f32 %v1056, %v1091
      %v1112 = vsub.f32 %v1057, %v1092
      %v1113 = vadd.f32 %v1105, 1e-05
      %v1114 = vadd.f32 %v1106, 1e-05
      %v1115 = vadd.f32 %v1107, 1e-05
      %v1116 = vadd.f32 %v1108, 1e-05
      %v1117 = vrsqrt.pop %v1113
      %v1118 = vrsqrt.pop %v1114
      %v1119 = vrsqrt.pop %v1115
      %v1120 = vrsqrt.pop %v1116
      %v1121 = vmul.f32 %v1109, %v1117
      %v1122 = vmul.f32 %v1110, %v1118
      %v1123 = vmul.f32 %v1111, %v1119
      %v1124 = vmul.f32 %v1112, %v1120
      %v1125 = vld [vmem:[%s239] sm:$0xf]
      %v1126 = vld [vmem:[%s239 + $0x4] sm:$0xf]
      %v1127 = vld [vmem:[%s239 + $0x8] sm:$0xf]
      %v1128 = vld [vmem:[%s239 + $0xc] sm:$0xf]
      %v1129 = vunpack.c.l.bf16 %v1125
      %v1130 = vunpack.c.l.bf16 %v1126
      %v1131 = vunpack.c.l.bf16 %v1127
      %v1132 = vunpack.c.l.bf16 %v1128
      %v1133 = vadd.f32 %v1121, %v1129
      %v1134 = vadd.f32 %v1122, %v1130
      %v1135 = vadd.f32 %v1123, %v1131
      %v1136 = vadd.f32 %v1124, %v1132
      %v1137 = vpack.c.bf16 %v1134, %v1133
      %v1138 = vpack.c.bf16 %v1136, %v1135
      %v1141 = vunpack.c.l.b16 %v1137
      %v1142 = vunpack.c.h.b16 %v1137
      %v1143 = vunpack.c.l.b16 %v1138
      %v1144 = vunpack.c.h.b16 %v1138
      %v1145 = vpack.c.b16 %v1141, %v1141
      %v1146 = vpack.c.b16 %v1142, %v1142
      %v1147 = vpack.c.b16 %v1143, %v1143
      %v1148 = vpack.c.b16 %v1144, %v1144
      %1153 = vst [vmem:[%s244] sm:$0xf] %v1145
      %1154 = vst [vmem:[%s244 + $0x4] sm:$0xf] %v1146
      %1155 = vst [vmem:[%s244 + $0x8] sm:$0xf] %v1147
      %1156 = vst [vmem:[%s244 + $0xc] sm:$0xf] %v1148
      %p1157 = scmp.lt.s32.totalorder %s16, 1
      %s1158 = scalar_select %p1157, %s16, 1
      %s1159 = smul.addr %s1158, 4
      %s1160 = smul.addr %s1159, 4
      %s1161 = scalar_lea.vmem %s5, %s1160
      // Predicated region
      $region41: #{encoder_content_reduce_forward.29} parent=39 // pred_check
        %p1162 = pneg %p149
      $region42: #{encoder_content_reduce_forward.29} parent=39 // pred_check_branch
        %1164 = sbr.rel (%p1162) target = $region44
      $region43: #{encoder_content_reduce_forward.29} parent=39 // pred_region
        _
      $region44: #{encoder_content_reduce_forward.29} parent=39 // pred_fallthru
        _
    $region40: #{encoder_content_reduce_forward.29} parent=5 // pred_fallthru
      _
    %p1165 = scmp.le.s32.totalorder 2, %s11
    // Predicated region
    $region45: #{encoder_content_reduce_forward.29} parent=5 // pred_check
      %p1166 = pneg %p1165
    $region46: #{encoder_content_reduce_forward.29} parent=5 // pred_check_branch
      %1168 = sbr.rel (%p1166) target = $region48
    $region47: #{encoder_content_reduce_forward.29} parent=5 // pred_region
      %s1169 = ssub.s32 %s11, 2
      // Predicated region
      $region49: #{encoder_content_reduce_forward.29} parent=47 // pred_check
        %p1170 = pneg %p155
      $region50: #{encoder_content_reduce_forward.29} parent=47 // pred_check_branch
        %1172 = sbr.rel (%p1170) target = $region52
      $region51: #{encoder_content_reduce_forward.29} parent=47 // pred_region
        %p1173 = scmp.lt.s32.totalorder %s17, 1
        %s1174 = scalar_select %p1173, %s17, 1
        %s1175 = smul.addr %s1174, 4
        %s1176 = smul.addr %s1175, 4
        %s1177 = scalar_lea.vmem %s5, %s1176
      $region52: #{encoder_content_reduce_forward.29} parent=47 // pred_fallthru
        _
    $region48: #{encoder_content_reduce_forward.29} parent=5 // pred_fallthru
      _
  $region6: #{encoder_content_reduce_forward.29} parent=0 // loop_footer
    %s15 = sadd.s32 1, %s11
  $region7: #{encoder_content_reduce_forward.29} parent=0 // loop_footer_branch
    %10 = sbr.rel target = $region3
  $region8: #{encoder_content_reduce_forward.29} parent=0 // loop_exit
    _

</llo_original>
